<compile_context>
chip_gen: v6e
topology: v6e:2x2x1
jax: 0.10.0
libtpu: 0.0.40
codegen_flags: <defaults>
</compile_context>

<pallas_src>
import jax
import jax.numpy as jnp
from jax import lax
from jax.experimental import pallas as pl
from jax.experimental.pallas import tpu as pltpu


# --------------------------- shared LSTM cell --------------------------------

def _lstm_step(xh, c, w_ref, b_ref, H):
    """One LSTM step on a pre-packed [B, E+H] bf16 input.

    xh:    [B, E+H] bf16  (x | h) packed input
    c:     [B, H]   f32   previous cell state
    w_ref: [E+H, 4H] bf16 merged (W_ih ; W_hh)
    b_ref: [1, 4H]  f32   combined bias (b_ih + b_hh)
    Gate order follows PyTorch: i, f, g, o.  Gate math stays float32.
    """
    gates = (jnp.dot(xh, w_ref[...], preferred_element_type=jnp.float32)
             + b_ref[...])
    i_g = jax.nn.sigmoid(gates[:, 0 * H:1 * H])
    f_g = jax.nn.sigmoid(gates[:, 1 * H:2 * H])
    g_g = jnp.tanh(gates[:, 2 * H:3 * H])
    o_g = jax.nn.sigmoid(gates[:, 3 * H:4 * H])
    c_new = f_g * c + i_g * g_g
    h_new = o_g * jnp.tanh(c_new)
    return h_new, c_new


# ------------------------- fused encoder+decoder -----------------------------

def seq2seq_kernel(tf_ref,                     # SMEM [T] int32 teacher-force mask
                   src_emb_ref,                # VMEM [S, B, E] bf16
                   tgt_emb_ref,                # VMEM [T, B, E] bf16
                   emb_tbl_ref,                # VMEM [V, E]    bf16 decoder table
                   enc_w_ref, enc_b_ref,       # [E+H, 4H] bf16 / [1, 4H] f32
                   dec_w_ref, dec_b_ref,       # [E+H, 4H] bf16 / [1, 4H] f32
                   fc_w_ref, fc_b_ref,         # [H, V] bf16 / [1, V] f32
                   out_ref,                    # VMEM [T, B, V] f32 outputs
                   c_sc, xh_sc):               # scratch: [B,H] f32, [B,E+H] bf16
    S, B, E = src_emb_ref.shape
    T = tgt_emb_ref.shape[0]
    H = c_sc.shape[1]
    V = out_ref.shape[2]

    # ------------------------------ encoder ----------------------------------
    c_sc[...] = jnp.zeros_like(c_sc)
    xh_sc[:, E:] = jnp.zeros((B, H), xh_sc.dtype)        # h0 = 0

    def enc_step(t, carry):
        xh_sc[:, :E] = src_emb_ref[t]
        h_new, c_new = _lstm_step(xh_sc[...], c_sc[...], enc_w_ref, enc_b_ref, H)
        c_sc[...] = c_new
        xh_sc[:, E:] = h_new.astype(xh_sc.dtype)
        return carry

    lax.fori_loop(0, S, enc_step, 0, unroll=True)

    # ------------------------------ decoder ----------------------------------
    out_ref[0] = jnp.zeros((B, V), jnp.float32)          # outputs[0] stays zero
    xh_sc[:, :E] = tgt_emb_ref[0]                        # x = target[0]
    # xh_sc[:, E:] and c_sc already hold the encoder final (h, c).

    def dec_step(i, carry):
        h_new, c_new = _lstm_step(xh_sc[...], c_sc[...], dec_w_ref, dec_b_ref, H)
        c_sc[...] = c_new
        xh_sc[:, E:] = h_new.astype(xh_sc.dtype)

        # output projection (lane-dense [B, V] store)
        logits = (jnp.dot(h_new.astype(fc_w_ref.dtype), fc_w_ref[...],
                          preferred_element_type=jnp.float32)
                  + fc_b_ref[...])
        out_ref[i + 1] = logits

        # next-token selection; skipped entirely on the final decode step.
        not_last = i < (T - 2)
        tf = tf_ref[i + 1]

        @pl.when(jnp.logical_and(not_last, tf != 0))
        def _():                                         # teacher forcing
            xh_sc[:, :E] = tgt_emb_ref[i + 1]

        @pl.when(jnp.logical_and(not_last, tf == 0))
        def _():                                         # greedy argmax path
            row_max = jnp.max(logits, axis=1, keepdims=True)
            lane = lax.broadcasted_iota(jnp.int32, (B, V), 1)
            # first index of the row max == argmax tie-breaking
            best = jnp.min(jnp.where(logits == row_max, lane, V), axis=1)
            onehot = (lane == best[:, None]).astype(emb_tbl_ref.dtype)
            guess = jnp.dot(onehot, emb_tbl_ref[...],
                            preferred_element_type=jnp.float32)
            xh_sc[:, :E] = guess.astype(xh_sc.dtype)

        return carry

    lax.fori_loop(0, T - 1, dec_step, 0, unroll=True)


def seq2seq_pallas(params, src_emb, tgt_emb, tf_mask):
    """src_emb [S,B,E] bf16, tgt_emb [T,B,E] bf16, tf_mask [T] int32
    -> outputs [T, B, V] float32 (row 0 is zeros)."""
    S, B, E = src_emb.shape
    T = tgt_emb.shape[0]
    H = params["enc_b"].shape[1] // 4
    V = params["dec_fc_b"].shape[1]

    vmem = pl.BlockSpec(memory_space=pltpu.MemorySpace.VMEM)
    smem = pl.BlockSpec(memory_space=pltpu.MemorySpace.SMEM)

    return pl.pallas_call(
        seq2seq_kernel,
        out_shape=jax.ShapeDtypeStruct((T, B, V), jnp.float32),
        in_specs=[
            smem,   # tf_mask
            vmem,   # src_emb
            vmem,   # tgt_emb
            vmem,   # decoder embedding table
            vmem,   # enc_w
            vmem,   # enc_b
            vmem,   # dec_w
            vmem,   # dec_b
            vmem,   # fc_w
            vmem,   # fc_b
        ],
        out_specs=vmem,
        scratch_shapes=[
            pltpu.VMEM((B, H), jnp.float32),        # c carry
            pltpu.VMEM((B, E + H), jnp.bfloat16),   # packed (x | h) carry
        ],
    )(tf_mask, src_emb, tgt_emb, params["dec_embedding"],
      params["enc_w"], params["enc_b"], params["dec_w"], params["dec_b"],
      params["dec_fc_w"], params["dec_fc_b"])


# --------------------------- model definition --------------------------------

def init_params(key, src_vocab, tgt_vocab, emb, hidden):
    """LSTM input/hidden weights pre-merged to [(E+H), 4H] bf16; embedding
    tables / fc weight bf16 (MXU-friendly, halves resident VMEM); biases f32."""
    ks = jax.random.split(key, 10)
    s = 0.1

    def init(k, shape, dtype=jnp.float32):
        return (jax.random.normal(k, shape, dtype=jnp.float32) * s).astype(dtype)

    return {
        # encoder
        "enc_embedding": init(ks[0], (src_vocab, emb), jnp.bfloat16),
        "enc_w": init(ks[1], (emb + hidden, 4 * hidden), jnp.bfloat16),
        "enc_b": init(ks[2], (1, 4 * hidden)),
        # decoder
        "dec_embedding": init(ks[3], (tgt_vocab, emb), jnp.bfloat16),
        "dec_w": init(ks[4], (emb + hidden, 4 * hidden), jnp.bfloat16),
        "dec_b": init(ks[5], (1, 4 * hidden)),
        "dec_fc_w": init(ks[6], (hidden, tgt_vocab), jnp.bfloat16),
        "dec_fc_b": init(ks[7], (1, tgt_vocab)),
    }


@jax.jit
def seq2seq_forward(params, source, target, tf_mask):
    """Mirrors Seq2Seq.forward.

    source:  [src_len, batch] int32
    target:  [tgt_len, batch] int32
    tf_mask: [tgt_len] int32 (precomputed teacher-forcing decisions, one per
             decode step, standing in for python `random.random() < ratio`)
    returns outputs: [tgt_len, batch, tgt_vocab] float32 (row 0 stays zero).
    """
    # one-shot embedding gathers (plain XLA, outside the recurrent hot loop)
    src_emb = jnp.take(params["enc_embedding"], source, axis=0)  # [S, B, E] bf16
    tgt_emb = jnp.take(params["dec_embedding"], target, axis=0)  # [T, B, E] bf16
    return seq2seq_pallas(params, src_emb, tgt_emb, tf_mask)


# --------------------------------- main ---------------------------------------

if __name__ == "__main__":
    SRC_VOCAB = 128
    TGT_VOCAB = 128
    EMB = 128
    HIDDEN = 128
    BATCH = 8
    SRC_LEN = 8
    TGT_LEN = 8

    key = jax.random.PRNGKey(0)
    k_params, k_src, k_tgt, k_tf = jax.random.split(key, 4)

    params = init_params(k_params, SRC_VOCAB, TGT_VOCAB, EMB, HIDDEN)

    source = jax.random.randint(k_src, (SRC_LEN, BATCH), 0, SRC_VOCAB,
                                dtype=jnp.int32)
    target = jax.random.randint(k_tgt, (TGT_LEN, BATCH), 0, TGT_VOCAB,
                                dtype=jnp.int32)
    # TODO(synk): python random.random() per-step host RNG has no in-kernel
    # equivalent; replaced by a deterministic precomputed decision mask.
    tf_mask = (jax.random.uniform(k_tf, (TGT_LEN,), dtype=jnp.float32)
               < 0.5).astype(jnp.int32)

    outputs = seq2seq_forward(params, source, target, tf_mask)
    outputs = jax.block_until_ready(outputs)

    assert outputs.shape == (TGT_LEN, BATCH, TGT_VOCAB)
    assert bool(jnp.all(outputs[0] == 0.0))
    assert bool(jnp.all(jnp.isfinite(outputs)))
    print("KERNEL_OK")
</pallas_src>

<mosaic_0001>
module attributes {stable_mosaic.version = 11 : i64} {
  func.func @seq2seq_kernel(%arg0: memref<8xi32, #tpu.memory_space<smem>>, %arg1: memref<8x8x128xbf16, #tpu.memory_space<vmem>>, %arg2: memref<8x8x128xbf16, #tpu.memory_space<vmem>>, %arg3: memref<128x128xbf16, #tpu.memory_space<vmem>>, %arg4: memref<256x512xbf16, #tpu.memory_space<vmem>>, %arg5: memref<1x512xf32, #tpu.memory_space<vmem>>, %arg6: memref<256x512xbf16, #tpu.memory_space<vmem>>, %arg7: memref<1x512xf32, #tpu.memory_space<vmem>>, %arg8: memref<128x128xbf16, #tpu.memory_space<vmem>>, %arg9: memref<1x128xf32, #tpu.memory_space<vmem>>, %arg10: memref<8x8x128xf32, #tpu.memory_space<vmem>>, %arg11: memref<8x128xf32, #tpu.memory_space<vmem>>, %arg12: memref<8x256xbf16, #tpu.memory_space<vmem>>) attributes {dimension_semantics = [], scalar_prefetch = 0 : i64, scratch_operands = 2 : i64, tpu.core_type = #tpu.core_type<tc>} {
    %cst = arith.constant 0.000000e+00 : f32
    %0 = vector.broadcast %cst : f32 to vector<8x128xf32>
    %c0 = arith.constant 0 : index
    %c0_0 = arith.constant 0 : index
    %1 = vector.load %arg11[%c0, %c0_0] : memref<8x128xf32, #tpu.memory_space<vmem>>, vector<8x128xf32>
    tpu.vector_store %arg11[%c0, %c0_0], %0 {strides = array<i32>} : memref<8x128xf32, #tpu.memory_space<vmem>>, vector<8x128xf32>,
    %cst_1 = arith.constant 0.000000e+00 : bf16
    %2 = vector.broadcast %cst_1 : bf16 to vector<8x128xbf16>
    %c0_2 = arith.constant 0 : index
    %c128 = arith.constant 128 : index
    %3 = vector.load %arg12[%c0_2, %c128] : memref<8x256xbf16, #tpu.memory_space<vmem>>, vector<8x128xbf16>
    tpu.vector_store %arg12[%c0_2, %c128], %2 {strides = array<i32>} : memref<8x256xbf16, #tpu.memory_space<vmem>>, vector<8x128xbf16>,
    %c0_i32 = arith.constant 0 : i32
    %4 = arith.index_cast %c0_i32 : i32 to index
    %c0_3 = arith.constant 0 : index
    %c0_4 = arith.constant 0 : index
    %5 = vector.load %arg1[%4, %c0_3, %c0_4] : memref<8x8x128xbf16, #tpu.memory_space<vmem>>, vector<1x8x128xbf16>
    %6 = vector.shape_cast %5 : vector<1x8x128xbf16> to vector<8x128xbf16>
    %c0_5 = arith.constant 0 : index
    %c0_6 = arith.constant 0 : index
    %7 = vector.load %arg12[%c0_5, %c0_6] : memref<8x256xbf16, #tpu.memory_space<vmem>>, vector<8x128xbf16>
    tpu.vector_store %arg12[%c0_5, %c0_6], %6 {strides = array<i32>} : memref<8x256xbf16, #tpu.memory_space<vmem>>, vector<8x128xbf16>,
    %c0_7 = arith.constant 0 : index
    %c0_8 = arith.constant 0 : index
    %8 = vector.load %arg12[%c0_7, %c0_8] : memref<8x256xbf16, #tpu.memory_space<vmem>>, vector<8x256xbf16>
    %c0_9 = arith.constant 0 : index
    %c0_10 = arith.constant 0 : index
    %9 = vector.load %arg11[%c0_9, %c0_10] : memref<8x128xf32, #tpu.memory_space<vmem>>, vector<8x128xf32>
    %c0_11 = arith.constant 0 : index
    %c0_12 = arith.constant 0 : index
    %10 = vector.load %arg4[%c0_11, %c0_12] : memref<256x512xbf16, #tpu.memory_space<vmem>>, vector<256x512xbf16>
    %cst_13 = arith.constant dense<0.000000e+00> : vector<8x512xf32>
    %11 = tpu.matmul %8, %10, %cst_13 {dimension_numbers = #tpu.dot_dimension_numbers<[1], [0], [0], [1], [0, 0, 1, 1], [], []>} : vector<8x256xbf16>, vector<256x512xbf16>, vector<8x512xf32> -> vector<8x512xf32>
    %c0_14 = arith.constant 0 : index
    %c0_15 = arith.constant 0 : index
    %12 = vector.load %arg5[%c0_14, %c0_15] : memref<1x512xf32, #tpu.memory_space<vmem>>, vector<1x512xf32>
    %13 = vector.broadcast %12 : vector<1x512xf32> to vector<8x512xf32>
    %14 = arith.addf %11, %13 : vector<8x512xf32>
    %15 = vector.extract_strided_slice %14 {offsets = [0, 0], sizes = [8, 128], strides = [1, 1]} : vector<8x512xf32> to vector<8x128xf32>
    %16 = arith.negf %15 : vector<8x128xf32>
    %17 = math.exp %16 : vector<8x128xf32>
    %cst_16 = arith.constant 1.000000e+00 : f32
    %18 = vector.broadcast %cst_16 : f32 to vector<8x128xf32>
    %19 = arith.addf %18, %17 : vector<8x128xf32>
    %20 = arith.divf %18, %19 : vector<8x128xf32>
    %21 = vector.extract_strided_slice %14 {offsets = [0, 128], sizes = [8, 128], strides = [1, 1]} : vector<8x512xf32> to vector<8x128xf32>
    %22 = arith.negf %21 : vector<8x128xf32>
    %23 = math.exp %22 : vector<8x128xf32>
    %cst_17 = arith.constant 1.000000e+00 : f32
    %24 = vector.broadcast %cst_17 : f32 to vector<8x128xf32>
    %25 = arith.addf %24, %23 : vector<8x128xf32>
    %26 = arith.divf %24, %25 : vector<8x128xf32>
    %27 = vector.extract_strided_slice %14 {offsets = [0, 256], sizes = [8, 128], strides = [1, 1]} : vector<8x512xf32> to vector<8x128xf32>
    %28 = math.tanh %27 : vector<8x128xf32>
    %29 = vector.extract_strided_slice %14 {offsets = [0, 384], sizes = [8, 128], strides = [1, 1]} : vector<8x512xf32> to vector<8x128xf32>
    %30 = arith.negf %29 : vector<8x128xf32>
    %31 = math.exp %30 : vector<8x128xf32>
    %cst_18 = arith.constant 1.000000e+00 : f32
    %32 = vector.broadcast %cst_18 : f32 to vector<8x128xf32>
    %33 = arith.addf %32, %31 : vector<8x128xf32>
    %34 = arith.divf %32, %33 : vector<8x128xf32>
    %35 = arith.mulf %26, %9 : vector<8x128xf32>
    %36 = arith.mulf %20, %28 : vector<8x128xf32>
    %37 = arith.addf %35, %36 : vector<8x128xf32>
    %38 = math.tanh %37 : vector<8x128xf32>
    %39 = arith.mulf %34, %38 : vector<8x128xf32>
    %c0_19 = arith.constant 0 : index
    %c0_20 = arith.constant 0 : index
    %40 = vector.load %arg11[%c0_19, %c0_20] : memref<8x128xf32, #tpu.memory_space<vmem>>, vector<8x128xf32>
    tpu.vector_store %arg11[%c0_19, %c0_20], %37 {strides = array<i32>} : memref<8x128xf32, #tpu.memory_space<vmem>>, vector<8x128xf32>,
    %41 = arith.truncf %39 : vector<8x128xf32> to vector<8x128xbf16>
    %c0_21 = arith.constant 0 : index
    %c128_22 = arith.constant 128 : index
    %42 = vector.load %arg12[%c0_21, %c128_22] : memref<8x256xbf16, #tpu.memory_space<vmem>>, vector<8x128xbf16>
    tpu.vector_store %arg12[%c0_21, %c128_22], %41 {strides = array<i32>} : memref<8x256xbf16, #tpu.memory_space<vmem>>, vector<8x128xbf16>,
    %c1_i32 = arith.constant 1 : i32
    %43 = arith.index_cast %c1_i32 : i32 to index
    %c0_23 = arith.constant 0 : index
    %c0_24 = arith.constant 0 : index
    %44 = vector.load %arg1[%43, %c0_23, %c0_24] : memref<8x8x128xbf16, #tpu.memory_space<vmem>>, vector<1x8x128xbf16>
    %45 = vector.shape_cast %44 : vector<1x8x128xbf16> to vector<8x128xbf16>
    %c0_25 = arith.constant 0 : index
    %c0_26 = arith.constant 0 : index
    %46 = vector.load %arg12[%c0_25, %c0_26] : memref<8x256xbf16, #tpu.memory_space<vmem>>, vector<8x128xbf16>
    tpu.vector_store %arg12[%c0_25, %c0_26], %45 {strides = array<i32>} : memref<8x256xbf16, #tpu.memory_space<vmem>>, vector<8x128xbf16>,
    %c0_27 = arith.constant 0 : index
    %c0_28 = arith.constant 0 : index
    %47 = vector.load %arg12[%c0_27, %c0_28] : memref<8x256xbf16, #tpu.memory_space<vmem>>, vector<8x256xbf16>
    %c0_29 = arith.constant 0 : index
    %c0_30 = arith.constant 0 : index
    %48 = vector.load %arg11[%c0_29, %c0_30] : memref<8x128xf32, #tpu.memory_space<vmem>>, vector<8x128xf32>
    %c0_31 = arith.constant 0 : index
    %c0_32 = arith.constant 0 : index
    %49 = vector.load %arg4[%c0_31, %c0_32] : memref<256x512xbf16, #tpu.memory_space<vmem>>, vector<256x512xbf16>
    %cst_33 = arith.constant dense<0.000000e+00> : vector<8x512xf32>
    %50 = tpu.matmul %47, %49, %cst_33 {dimension_numbers = #tpu.dot_dimension_numbers<[1], [0], [0], [1], [0, 0, 1, 1], [], []>} : vector<8x256xbf16>, vector<256x512xbf16>, vector<8x512xf32> -> vector<8x512xf32>
    %c0_34 = arith.constant 0 : index
    %c0_35 = arith.constant 0 : index
    %51 = vector.load %arg5[%c0_34, %c0_35] : memref<1x512xf32, #tpu.memory_space<vmem>>, vector<1x512xf32>
    %52 = vector.broadcast %51 : vector<1x512xf32> to vector<8x512xf32>
    %53 = arith.addf %50, %52 : vector<8x512xf32>
    %54 = vector.extract_strided_slice %53 {offsets = [0, 0], sizes = [8, 128], strides = [1, 1]} : vector<8x512xf32> to vector<8x128xf32>
    %55 = arith.negf %54 : vector<8x128xf32>
    %56 = math.exp %55 : vector<8x128xf32>
    %cst_36 = arith.constant 1.000000e+00 : f32
    %57 = vector.broadcast %cst_36 : f32 to vector<8x128xf32>
    %58 = arith.addf %57, %56 : vector<8x128xf32>
    %59 = arith.divf %57, %58 : vector<8x128xf32>
    %60 = vector.extract_strided_slice %53 {offsets = [0, 128], sizes = [8, 128], strides = [1, 1]} : vector<8x512xf32> to vector<8x128xf32>
    %61 = arith.negf %60 : vector<8x128xf32>
    %62 = math.exp %61 : vector<8x128xf32>
    %cst_37 = arith.constant 1.000000e+00 : f32
    %63 = vector.broadcast %cst_37 : f32 to vector<8x128xf32>
    %64 = arith.addf %63, %62 : vector<8x128xf32>
    %65 = arith.divf %63, %64 : vector<8x128xf32>
    %66 = vector.extract_strided_slice %53 {offsets = [0, 256], sizes = [8, 128], strides = [1, 1]} : vector<8x512xf32> to vector<8x128xf32>
    %67 = math.tanh %66 : vector<8x128xf32>
    %68 = vector.extract_strided_slice %53 {offsets = [0, 384], sizes = [8, 128], strides = [1, 1]} : vector<8x512xf32> to vector<8x128xf32>
    %69 = arith.negf %68 : vector<8x128xf32>
    %70 = math.exp %69 : vector<8x128xf32>
    %cst_38 = arith.constant 1.000000e+00 : f32
    %71 = vector.broadcast %cst_38 : f32 to vector<8x128xf32>
    %72 = arith.addf %71, %70 : vector<8x128xf32>
    %73 = arith.divf %71, %72 : vector<8x128xf32>
    %74 = arith.mulf %65, %48 : vector<8x128xf32>
    %75 = arith.mulf %59, %67 : vector<8x128xf32>
    %76 = arith.addf %74, %75 : vector<8x128xf32>
    %77 = math.tanh %76 : vector<8x128xf32>
    %78 = arith.mulf %73, %77 : vector<8x128xf32>
    %c0_39 = arith.constant 0 : index
    %c0_40 = arith.constant 0 : index
    %79 = vector.load %arg11[%c0_39, %c0_40] : memref<8x128xf32, #tpu.memory_space<vmem>>, vector<8x128xf32>
    tpu.vector_store %arg11[%c0_39, %c0_40], %76 {strides = array<i32>} : memref<8x128xf32, #tpu.memory_space<vmem>>, vector<8x128xf32>,
    %80 = arith.truncf %78 : vector<8x128xf32> to vector<8x128xbf16>
    %c0_41 = arith.constant 0 : index
    %c128_42 = arith.constant 128 : index
    %81 = vector.load %arg12[%c0_41, %c128_42] : memref<8x256xbf16, #tpu.memory_space<vmem>>, vector<8x128xbf16>
    tpu.vector_store %arg12[%c0_41, %c128_42], %80 {strides = array<i32>} : memref<8x256xbf16, #tpu.memory_space<vmem>>, vector<8x128xbf16>,
    %c2_i32 = arith.constant 2 : i32
    %82 = arith.index_cast %c2_i32 : i32 to index
    %c0_43 = arith.constant 0 : index
    %c0_44 = arith.constant 0 : index
    %83 = vector.load %arg1[%82, %c0_43, %c0_44] : memref<8x8x128xbf16, #tpu.memory_space<vmem>>, vector<1x8x128xbf16>
    %84 = vector.shape_cast %83 : vector<1x8x128xbf16> to vector<8x128xbf16>
    %c0_45 = arith.constant 0 : index
    %c0_46 = arith.constant 0 : index
    %85 = vector.load %arg12[%c0_45, %c0_46] : memref<8x256xbf16, #tpu.memory_space<vmem>>, vector<8x128xbf16>
    tpu.vector_store %arg12[%c0_45, %c0_46], %84 {strides = array<i32>} : memref<8x256xbf16, #tpu.memory_space<vmem>>, vector<8x128xbf16>,
    %c0_47 = arith.constant 0 : index
    %c0_48 = arith.constant 0 : index
    %86 = vector.load %arg12[%c0_47, %c0_48] : memref<8x256xbf16, #tpu.memory_space<vmem>>, vector<8x256xbf16>
    %c0_49 = arith.constant 0 : index
    %c0_50 = arith.constant 0 : index
    %87 = vector.load %arg11[%c0_49, %c0_50] : memref<8x128xf32, #tpu.memory_space<vmem>>, vector<8x128xf32>
    %c0_51 = arith.constant 0 : index
    %c0_52 = arith.constant 0 : index
    %88 = vector.load %arg4[%c0_51, %c0_52] : memref<256x512xbf16, #tpu.memory_space<vmem>>, vector<256x512xbf16>
    %cst_53 = arith.constant dense<0.000000e+00> : vector<8x512xf32>
    %89 = tpu.matmul %86, %88, %cst_53 {dimension_numbers = #tpu.dot_dimension_numbers<[1], [0], [0], [1], [0, 0, 1, 1], [], []>} : vector<8x256xbf16>, vector<256x512xbf16>, vector<8x512xf32> -> vector<8x512xf32>
    %c0_54 = arith.constant 0 : index
    %c0_55 = arith.constant 0 : index
    %90 = vector.load %arg5[%c0_54, %c0_55] : memref<1x512xf32, #tpu.memory_space<vmem>>, vector<1x512xf32>
    %91 = vector.broadcast %90 : vector<1x512xf32> to vector<8x512xf32>
    %92 = arith.addf %89, %91 : vector<8x512xf32>
    %93 = vector.extract_strided_slice %92 {offsets = [0, 0], sizes = [8, 128], strides = [1, 1]} : vector<8x512xf32> to vector<8x128xf32>
    %94 = arith.negf %93 : vector<8x128xf32>
    %95 = math.exp %94 : vector<8x128xf32>
    %cst_56 = arith.constant 1.000000e+00 : f32
    %96 = vector.broadcast %cst_56 : f32 to vector<8x128xf32>
    %97 = arith.addf %96, %95 : vector<8x128xf32>
    %98 = arith.divf %96, %97 : vector<8x128xf32>
    %99 = vector.extract_strided_slice %92 {offsets = [0, 128], sizes = [8, 128], strides = [1, 1]} : vector<8x512xf32> to vector<8x128xf32>
    %100 = arith.negf %99 : vector<8x128xf32>
    %101 = math.exp %100 : vector<8x128xf32>
    %cst_57 = arith.constant 1.000000e+00 : f32
    %102 = vector.broadcast %cst_57 : f32 to vector<8x128xf32>
    %103 = arith.addf %102, %101 : vector<8x128xf32>
    %104 = arith.divf %102, %103 : vector<8x128xf32>
    %105 = vector.extract_strided_slice %92 {offsets = [0, 256], sizes = [8, 128], strides = [1, 1]} : vector<8x512xf32> to vector<8x128xf32>
    %106 = math.tanh %105 : vector<8x128xf32>
    %107 = vector.extract_strided_slice %92 {offsets = [0, 384], sizes = [8, 128], strides = [1, 1]} : vector<8x512xf32> to vector<8x128xf32>
    %108 = arith.negf %107 : vector<8x128xf32>
    %109 = math.exp %108 : vector<8x128xf32>
    %cst_58 = arith.constant 1.000000e+00 : f32
    %110 = vector.broadcast %cst_58 : f32 to vector<8x128xf32>
    %111 = arith.addf %110, %109 : vector<8x128xf32>
    %112 = arith.divf %110, %111 : vector<8x128xf32>
    %113 = arith.mulf %104, %87 : vector<8x128xf32>
    %114 = arith.mulf %98, %106 : vector<8x128xf32>
    %115 = arith.addf %113, %114 : vector<8x128xf32>
    %116 = math.tanh %115 : vector<8x128xf32>
    %117 = arith.mulf %112, %116 : vector<8x128xf32>
    %c0_59 = arith.constant 0 : index
    %c0_60 = arith.constant 0 : index
    %118 = vector.load %arg11[%c0_59, %c0_60] : memref<8x128xf32, #tpu.memory_space<vmem>>, vector<8x128xf32>
    tpu.vector_store %arg11[%c0_59, %c0_60], %115 {strides = array<i32>} : memref<8x128xf32, #tpu.memory_space<vmem>>, vector<8x128xf32>,
    %119 = arith.truncf %117 : vector<8x128xf32> to vector<8x128xbf16>
    %c0_61 = arith.constant 0 : index
    %c128_62 = arith.constant 128 : index
    %120 = vector.load %arg12[%c0_61, %c128_62] : memref<8x256xbf16, #tpu.memory_space<vmem>>, vector<8x128xbf16>
    tpu.vector_store %arg12[%c0_61, %c128_62], %119 {strides = array<i32>} : memref<8x256xbf16, #tpu.memory_space<vmem>>, vector<8x128xbf16>,
    %c3_i32 = arith.constant 3 : i32
    %121 = arith.index_cast %c3_i32 : i32 to index
    %c0_63 = arith.constant 0 : index
    %c0_64 = arith.constant 0 : index
    %122 = vector.load %arg1[%121, %c0_63, %c0_64] : memref<8x8x128xbf16, #tpu.memory_space<vmem>>, vector<1x8x128xbf16>
    %123 = vector.shape_cast %122 : vector<1x8x128xbf16> to vector<8x128xbf16>
    %c0_65 = arith.constant 0 : index
    %c0_66 = arith.constant 0 : index
    %124 = vector.load %arg12[%c0_65, %c0_66] : memref<8x256xbf16, #tpu.memory_space<vmem>>, vector<8x128xbf16>
    tpu.vector_store %arg12[%c0_65, %c0_66], %123 {strides = array<i32>} : memref<8x256xbf16, #tpu.memory_space<vmem>>, vector<8x128xbf16>,
    %c0_67 = arith.constant 0 : index
    %c0_68 = arith.constant 0 : index
    %125 = vector.load %arg12[%c0_67, %c0_68] : memref<8x256xbf16, #tpu.memory_space<vmem>>, vector<8x256xbf16>
    %c0_69 = arith.constant 0 : index
    %c0_70 = arith.constant 0 : index
    %126 = vector.load %arg11[%c0_69, %c0_70] : memref<8x128xf32, #tpu.memory_space<vmem>>, vector<8x128xf32>
    %c0_71 = arith.constant 0 : index
    %c0_72 = arith.constant 0 : index
    %127 = vector.load %arg4[%c0_71, %c0_72] : memref<256x512xbf16, #tpu.memory_space<vmem>>, vector<256x512xbf16>
    %cst_73 = arith.constant dense<0.000000e+00> : vector<8x512xf32>
    %128 = tpu.matmul %125, %127, %cst_73 {dimension_numbers = #tpu.dot_dimension_numbers<[1], [0], [0], [1], [0, 0, 1, 1], [], []>} : vector<8x256xbf16>, vector<256x512xbf16>, vector<8x512xf32> -> vector<8x512xf32>
    %c0_74 = arith.constant 0 : index
    %c0_75 = arith.constant 0 : index
    %129 = vector.load %arg5[%c0_74, %c0_75] : memref<1x512xf32, #tpu.memory_space<vmem>>, vector<1x512xf32>
    %130 = vector.broadcast %129 : vector<1x512xf32> to vector<8x512xf32>
    %131 = arith.addf %128, %130 : vector<8x512xf32>
    %132 = vector.extract_strided_slice %131 {offsets = [0, 0], sizes = [8, 128], strides = [1, 1]} : vector<8x512xf32> to vector<8x128xf32>
    %133 = arith.negf %132 : vector<8x128xf32>
    %134 = math.exp %133 : vector<8x128xf32>
    %cst_76 = arith.constant 1.000000e+00 : f32
    %135 = vector.broadcast %cst_76 : f32 to vector<8x128xf32>
    %136 = arith.addf %135, %134 : vector<8x128xf32>
    %137 = arith.divf %135, %136 : vector<8x128xf32>
    %138 = vector.extract_strided_slice %131 {offsets = [0, 128], sizes = [8, 128], strides = [1, 1]} : vector<8x512xf32> to vector<8x128xf32>
    %139 = arith.negf %138 : vector<8x128xf32>
    %140 = math.exp %139 : vector<8x128xf32>
    %cst_77 = arith.constant 1.000000e+00 : f32
    %141 = vector.broadcast %cst_77 : f32 to vector<8x128xf32>
    %142 = arith.addf %141, %140 : vector<8x128xf32>
    %143 = arith.divf %141, %142 : vector<8x128xf32>
    %144 = vector.extract_strided_slice %131 {offsets = [0, 256], sizes = [8, 128], strides = [1, 1]} : vector<8x512xf32> to vector<8x128xf32>
    %145 = math.tanh %144 : vector<8x128xf32>
    %146 = vector.extract_strided_slice %131 {offsets = [0, 384], sizes = [8, 128], strides = [1, 1]} : vector<8x512xf32> to vector<8x128xf32>
    %147 = arith.negf %146 : vector<8x128xf32>
    %148 = math.exp %147 : vector<8x128xf32>
    %cst_78 = arith.constant 1.000000e+00 : f32
    %149 = vector.broadcast %cst_78 : f32 to vector<8x128xf32>
    %150 = arith.addf %149, %148 : vector<8x128xf32>
    %151 = arith.divf %149, %150 : vector<8x128xf32>
    %152 = arith.mulf %143, %126 : vector<8x128xf32>
    %153 = arith.mulf %137, %145 : vector<8x128xf32>
    %154 = arith.addf %152, %153 : vector<8x128xf32>
    %155 = math.tanh %154 : vector<8x128xf32>
    %156 = arith.mulf %151, %155 : vector<8x128xf32>
    %c0_79 = arith.constant 0 : index
    %c0_80 = arith.constant 0 : index
    %157 = vector.load %arg11[%c0_79, %c0_80] : memref<8x128xf32, #tpu.memory_space<vmem>>, vector<8x128xf32>
    tpu.vector_store %arg11[%c0_79, %c0_80], %154 {strides = array<i32>} : memref<8x128xf32, #tpu.memory_space<vmem>>, vector<8x128xf32>,
    %158 = arith.truncf %156 : vector<8x128xf32> to vector<8x128xbf16>
    %c0_81 = arith.constant 0 : index
    %c128_82 = arith.constant 128 : index
    %159 = vector.load %arg12[%c0_81, %c128_82] : memref<8x256xbf16, #tpu.memory_space<vmem>>, vector<8x128xbf16>
    tpu.vector_store %arg12[%c0_81, %c128_82], %158 {strides = array<i32>} : memref<8x256xbf16, #tpu.memory_space<vmem>>, vector<8x128xbf16>,
    %c4_i32 = arith.constant 4 : i32
    %160 = arith.index_cast %c4_i32 : i32 to index
    %c0_83 = arith.constant 0 : index
    %c0_84 = arith.constant 0 : index
    %161 = vector.load %arg1[%160, %c0_83, %c0_84] : memref<8x8x128xbf16, #tpu.memory_space<vmem>>, vector<1x8x128xbf16>
    %162 = vector.shape_cast %161 : vector<1x8x128xbf16> to vector<8x128xbf16>
    %c0_85 = arith.constant 0 : index
    %c0_86 = arith.constant 0 : index
    %163 = vector.load %arg12[%c0_85, %c0_86] : memref<8x256xbf16, #tpu.memory_space<vmem>>, vector<8x128xbf16>
    tpu.vector_store %arg12[%c0_85, %c0_86], %162 {strides = array<i32>} : memref<8x256xbf16, #tpu.memory_space<vmem>>, vector<8x128xbf16>,
    %c0_87 = arith.constant 0 : index
    %c0_88 = arith.constant 0 : index
    %164 = vector.load %arg12[%c0_87, %c0_88] : memref<8x256xbf16, #tpu.memory_space<vmem>>, vector<8x256xbf16>
    %c0_89 = arith.constant 0 : index
    %c0_90 = arith.constant 0 : index
    %165 = vector.load %arg11[%c0_89, %c0_90] : memref<8x128xf32, #tpu.memory_space<vmem>>, vector<8x128xf32>
    %c0_91 = arith.constant 0 : index
    %c0_92 = arith.constant 0 : index
    %166 = vector.load %arg4[%c0_91, %c0_92] : memref<256x512xbf16, #tpu.memory_space<vmem>>, vector<256x512xbf16>
    %cst_93 = arith.constant dense<0.000000e+00> : vector<8x512xf32>
    %167 = tpu.matmul %164, %166, %cst_93 {dimension_numbers = #tpu.dot_dimension_numbers<[1], [0], [0], [1], [0, 0, 1, 1], [], []>} : vector<8x256xbf16>, vector<256x512xbf16>, vector<8x512xf32> -> vector<8x512xf32>
    %c0_94 = arith.constant 0 : index
    %c0_95 = arith.constant 0 : index
    %168 = vector.load %arg5[%c0_94, %c0_95] : memref<1x512xf32, #tpu.memory_space<vmem>>, vector<1x512xf32>
    %169 = vector.broadcast %168 : vector<1x512xf32> to vector<8x512xf32>
    %170 = arith.addf %167, %169 : vector<8x512xf32>
    %171 = vector.extract_strided_slice %170 {offsets = [0, 0], sizes = [8, 128], strides = [1, 1]} : vector<8x512xf32> to vector<8x128xf32>
    %172 = arith.negf %171 : vector<8x128xf32>
    %173 = math.exp %172 : vector<8x128xf32>
    %cst_96 = arith.constant 1.000000e+00 : f32
    %174 = vector.broadcast %cst_96 : f32 to vector<8x128xf32>
    %175 = arith.addf %174, %173 : vector<8x128xf32>
    %176 = arith.divf %174, %175 : vector<8x128xf32>
    %177 = vector.extract_strided_slice %170 {offsets = [0, 128], sizes = [8, 128], strides = [1, 1]} : vector<8x512xf32> to vector<8x128xf32>
    %178 = arith.negf %177 : vector<8x128xf32>
    %179 = math.exp %178 : vector<8x128xf32>
    %cst_97 = arith.constant 1.000000e+00 : f32
    %180 = vector.broadcast %cst_97 : f32 to vector<8x128xf32>
    %181 = arith.addf %180, %179 : vector<8x128xf32>
    %182 = arith.divf %180, %181 : vector<8x128xf32>
    %183 = vector.extract_strided_slice %170 {offsets = [0, 256], sizes = [8, 128], strides = [1, 1]} : vector<8x512xf32> to vector<8x128xf32>
    %184 = math.tanh %183 : vector<8x128xf32>
    %185 = vector.extract_strided_slice %170 {offsets = [0, 384], sizes = [8, 128], strides = [1, 1]} : vector<8x512xf32> to vector<8x128xf32>
    %186 = arith.negf %185 : vector<8x128xf32>
    %187 = math.exp %186 : vector<8x128xf32>
    %cst_98 = arith.constant 1.000000e+00 : f32
    %188 = vector.broadcast %cst_98 : f32 to vector<8x128xf32>
    %189 = arith.addf %188, %187 : vector<8x128xf32>
    %190 = arith.divf %188, %189 : vector<8x128xf32>
    %191 = arith.mulf %182, %165 : vector<8x128xf32>
    %192 = arith.mulf %176, %184 : vector<8x128xf32>
    %193 = arith.addf %191, %192 : vector<8x128xf32>
    %194 = math.tanh %193 : vector<8x128xf32>
    %195 = arith.mulf %190, %194 : vector<8x128xf32>
    %c0_99 = arith.constant 0 : index
    %c0_100 = arith.constant 0 : index
    %196 = vector.load %arg11[%c0_99, %c0_100] : memref<8x128xf32, #tpu.memory_space<vmem>>, vector<8x128xf32>
    tpu.vector_store %arg11[%c0_99, %c0_100], %193 {strides = array<i32>} : memref<8x128xf32, #tpu.memory_space<vmem>>, vector<8x128xf32>,
    %197 = arith.truncf %195 : vector<8x128xf32> to vector<8x128xbf16>
    %c0_101 = arith.constant 0 : index
    %c128_102 = arith.constant 128 : index
    %198 = vector.load %arg12[%c0_101, %c128_102] : memref<8x256xbf16, #tpu.memory_space<vmem>>, vector<8x128xbf16>
    tpu.vector_store %arg12[%c0_101, %c128_102], %197 {strides = array<i32>} : memref<8x256xbf16, #tpu.memory_space<vmem>>, vector<8x128xbf16>,
    %c5_i32 = arith.constant 5 : i32
    %199 = arith.index_cast %c5_i32 : i32 to index
    %c0_103 = arith.constant 0 : index
    %c0_104 = arith.constant 0 : index
    %200 = vector.load %arg1[%199, %c0_103, %c0_104] : memref<8x8x128xbf16, #tpu.memory_space<vmem>>, vector<1x8x128xbf16>
    %201 = vector.shape_cast %200 : vector<1x8x128xbf16> to vector<8x128xbf16>
    %c0_105 = arith.constant 0 : index
    %c0_106 = arith.constant 0 : index
    %202 = vector.load %arg12[%c0_105, %c0_106] : memref<8x256xbf16, #tpu.memory_space<vmem>>, vector<8x128xbf16>
    tpu.vector_store %arg12[%c0_105, %c0_106], %201 {strides = array<i32>} : memref<8x256xbf16, #tpu.memory_space<vmem>>, vector<8x128xbf16>,
    %c0_107 = arith.constant 0 : index
    %c0_108 = arith.constant 0 : index
    %203 = vector.load %arg12[%c0_107, %c0_108] : memref<8x256xbf16, #tpu.memory_space<vmem>>, vector<8x256xbf16>
    %c0_109 = arith.constant 0 : index
    %c0_110 = arith.constant 0 : index
    %204 = vector.load %arg11[%c0_109, %c0_110] : memref<8x128xf32, #tpu.memory_space<vmem>>, vector<8x128xf32>
    %c0_111 = arith.constant 0 : index
    %c0_112 = arith.constant 0 : index
    %205 = vector.load %arg4[%c0_111, %c0_112] : memref<256x512xbf16, #tpu.memory_space<vmem>>, vector<256x512xbf16>
    %cst_113 = arith.constant dense<0.000000e+00> : vector<8x512xf32>
    %206 = tpu.matmul %203, %205, %cst_113 {dimension_numbers = #tpu.dot_dimension_numbers<[1], [0], [0], [1], [0, 0, 1, 1], [], []>} : vector<8x256xbf16>, vector<256x512xbf16>, vector<8x512xf32> -> vector<8x512xf32>
    %c0_114 = arith.constant 0 : index
    %c0_115 = arith.constant 0 : index
    %207 = vector.load %arg5[%c0_114, %c0_115] : memref<1x512xf32, #tpu.memory_space<vmem>>, vector<1x512xf32>
    %208 = vector.broadcast %207 : vector<1x512xf32> to vector<8x512xf32>
    %209 = arith.addf %206, %208 : vector<8x512xf32>
    %210 = vector.extract_strided_slice %209 {offsets = [0, 0], sizes = [8, 128], strides = [1, 1]} : vector<8x512xf32> to vector<8x128xf32>
    %211 = arith.negf %210 : vector<8x128xf32>
    %212 = math.exp %211 : vector<8x128xf32>
    %cst_116 = arith.constant 1.000000e+00 : f32
    %213 = vector.broadcast %cst_116 : f32 to vector<8x128xf32>
    %214 = arith.addf %213, %212 : vector<8x128xf32>
    %215 = arith.divf %213, %214 : vector<8x128xf32>
    %216 = vector.extract_strided_slice %209 {offsets = [0, 128], sizes = [8, 128], strides = [1, 1]} : vector<8x512xf32> to vector<8x128xf32>
    %217 = arith.negf %216 : vector<8x128xf32>
    %218 = math.exp %217 : vector<8x128xf32>
    %cst_117 = arith.constant 1.000000e+00 : f32
    %219 = vector.broadcast %cst_117 : f32 to vector<8x128xf32>
    %220 = arith.addf %219, %218 : vector<8x128xf32>
    %221 = arith.divf %219, %220 : vector<8x128xf32>
    %222 = vector.extract_strided_slice %209 {offsets = [0, 256], sizes = [8, 128], strides = [1, 1]} : vector<8x512xf32> to vector<8x128xf32>
    %223 = math.tanh %222 : vector<8x128xf32>
    %224 = vector.extract_strided_slice %209 {offsets = [0, 384], sizes = [8, 128], strides = [1, 1]} : vector<8x512xf32> to vector<8x128xf32>
    %225 = arith.negf %224 : vector<8x128xf32>
    %226 = math.exp %225 : vector<8x128xf32>
    %cst_118 = arith.constant 1.000000e+00 : f32
    %227 = vector.broadcast %cst_118 : f32 to vector<8x128xf32>
    %228 = arith.addf %227, %226 : vector<8x128xf32>
    %229 = arith.divf %227, %228 : vector<8x128xf32>
    %230 = arith.mulf %221, %204 : vector<8x128xf32>
    %231 = arith.mulf %215, %223 : vector<8x128xf32>
    %232 = arith.addf %230, %231 : vector<8x128xf32>
    %233 = math.tanh %232 : vector<8x128xf32>
    %234 = arith.mulf %229, %233 : vector<8x128xf32>
    %c0_119 = arith.constant 0 : index
    %c0_120 = arith.constant 0 : index
    %235 = vector.load %arg11[%c0_119, %c0_120] : memref<8x128xf32, #tpu.memory_space<vmem>>, vector<8x128xf32>
    tpu.vector_store %arg11[%c0_119, %c0_120], %232 {strides = array<i32>} : memref<8x128xf32, #tpu.memory_space<vmem>>, vector<8x128xf32>,
    %236 = arith.truncf %234 : vector<8x128xf32> to vector<8x128xbf16>
    %c0_121 = arith.constant 0 : index
    %c128_122 = arith.constant 128 : index
    %237 = vector.load %arg12[%c0_121, %c128_122] : memref<8x256xbf16, #tpu.memory_space<vmem>>, vector<8x128xbf16>
    tpu.vector_store %arg12[%c0_121, %c128_122], %236 {strides = array<i32>} : memref<8x256xbf16, #tpu.memory_space<vmem>>, vector<8x128xbf16>,
    %c6_i32 = arith.constant 6 : i32
    %238 = arith.index_cast %c6_i32 : i32 to index
    %c0_123 = arith.constant 0 : index
    %c0_124 = arith.constant 0 : index
    %239 = vector.load %arg1[%238, %c0_123, %c0_124] : memref<8x8x128xbf16, #tpu.memory_space<vmem>>, vector<1x8x128xbf16>
    %240 = vector.shape_cast %239 : vector<1x8x128xbf16> to vector<8x128xbf16>
    %c0_125 = arith.constant 0 : index
    %c0_126 = arith.constant 0 : index
    %241 = vector.load %arg12[%c0_125, %c0_126] : memref<8x256xbf16, #tpu.memory_space<vmem>>, vector<8x128xbf16>
    tpu.vector_store %arg12[%c0_125, %c0_126], %240 {strides = array<i32>} : memref<8x256xbf16, #tpu.memory_space<vmem>>, vector<8x128xbf16>,
    %c0_127 = arith.constant 0 : index
    %c0_128 = arith.constant 0 : index
    %242 = vector.load %arg12[%c0_127, %c0_128] : memref<8x256xbf16, #tpu.memory_space<vmem>>, vector<8x256xbf16>
    %c0_129 = arith.constant 0 : index
    %c0_130 = arith.constant 0 : index
    %243 = vector.load %arg11[%c0_129, %c0_130] : memref<8x128xf32, #tpu.memory_space<vmem>>, vector<8x128xf32>
    %c0_131 = arith.constant 0 : index
    %c0_132 = arith.constant 0 : index
    %244 = vector.load %arg4[%c0_131, %c0_132] : memref<256x512xbf16, #tpu.memory_space<vmem>>, vector<256x512xbf16>
    %cst_133 = arith.constant dense<0.000000e+00> : vector<8x512xf32>
    %245 = tpu.matmul %242, %244, %cst_133 {dimension_numbers = #tpu.dot_dimension_numbers<[1], [0], [0], [1], [0, 0, 1, 1], [], []>} : vector<8x256xbf16>, vector<256x512xbf16>, vector<8x512xf32> -> vector<8x512xf32>
    %c0_134 = arith.constant 0 : index
    %c0_135 = arith.constant 0 : index
    %246 = vector.load %arg5[%c0_134, %c0_135] : memref<1x512xf32, #tpu.memory_space<vmem>>, vector<1x512xf32>
    %247 = vector.broadcast %246 : vector<1x512xf32> to vector<8x512xf32>
    %248 = arith.addf %245, %247 : vector<8x512xf32>
    %249 = vector.extract_strided_slice %248 {offsets = [0, 0], sizes = [8, 128], strides = [1, 1]} : vector<8x512xf32> to vector<8x128xf32>
    %250 = arith.negf %249 : vector<8x128xf32>
    %251 = math.exp %250 : vector<8x128xf32>
    %cst_136 = arith.constant 1.000000e+00 : f32
    %252 = vector.broadcast %cst_136 : f32 to vector<8x128xf32>
    %253 = arith.addf %252, %251 : vector<8x128xf32>
    %254 = arith.divf %252, %253 : vector<8x128xf32>
    %255 = vector.extract_strided_slice %248 {offsets = [0, 128], sizes = [8, 128], strides = [1, 1]} : vector<8x512xf32> to vector<8x128xf32>
    %256 = arith.negf %255 : vector<8x128xf32>
    %257 = math.exp %256 : vector<8x128xf32>
    %cst_137 = arith.constant 1.000000e+00 : f32
    %258 = vector.broadcast %cst_137 : f32 to vector<8x128xf32>
    %259 = arith.addf %258, %257 : vector<8x128xf32>
    %260 = arith.divf %258, %259 : vector<8x128xf32>
    %261 = vector.extract_strided_slice %248 {offsets = [0, 256], sizes = [8, 128], strides = [1, 1]} : vector<8x512xf32> to vector<8x128xf32>
    %262 = math.tanh %261 : vector<8x128xf32>
    %263 = vector.extract_strided_slice %248 {offsets = [0, 384], sizes = [8, 128], strides = [1, 1]} : vector<8x512xf32> to vector<8x128xf32>
    %264 = arith.negf %263 : vector<8x128xf32>
    %265 = math.exp %264 : vector<8x128xf32>
    %cst_138 = arith.constant 1.000000e+00 : f32
    %266 = vector.broadcast %cst_138 : f32 to vector<8x128xf32>
    %267 = arith.addf %266, %265 : vector<8x128xf32>
    %268 = arith.divf %266, %267 : vector<8x128xf32>
    %269 = arith.mulf %260, %243 : vector<8x128xf32>
    %270 = arith.mulf %254, %262 : vector<8x128xf32>
    %271 = arith.addf %269, %270 : vector<8x128xf32>
    %272 = math.tanh %271 : vector<8x128xf32>
    %273 = arith.mulf %268, %272 : vector<8x128xf32>
    %c0_139 = arith.constant 0 : index
    %c0_140 = arith.constant 0 : index
    %274 = vector.load %arg11[%c0_139, %c0_140] : memref<8x128xf32, #tpu.memory_space<vmem>>, vector<8x128xf32>
    tpu.vector_store %arg11[%c0_139, %c0_140], %271 {strides = array<i32>} : memref<8x128xf32, #tpu.memory_space<vmem>>, vector<8x128xf32>,
    %275 = arith.truncf %273 : vector<8x128xf32> to vector<8x128xbf16>
    %c0_141 = arith.constant 0 : index
    %c128_142 = arith.constant 128 : index
    %276 = vector.load %arg12[%c0_141, %c128_142] : memref<8x256xbf16, #tpu.memory_space<vmem>>, vector<8x128xbf16>
    tpu.vector_store %arg12[%c0_141, %c128_142], %275 {strides = array<i32>} : memref<8x256xbf16, #tpu.memory_space<vmem>>, vector<8x128xbf16>,
    %c7_i32 = arith.constant 7 : i32
    %277 = arith.index_cast %c7_i32 : i32 to index
    %c0_143 = arith.constant 0 : index
    %c0_144 = arith.constant 0 : index
    %278 = vector.load %arg1[%277, %c0_143, %c0_144] : memref<8x8x128xbf16, #tpu.memory_space<vmem>>, vector<1x8x128xbf16>
    %279 = vector.shape_cast %278 : vector<1x8x128xbf16> to vector<8x128xbf16>
    %c0_145 = arith.constant 0 : index
    %c0_146 = arith.constant 0 : index
    %280 = vector.load %arg12[%c0_145, %c0_146] : memref<8x256xbf16, #tpu.memory_space<vmem>>, vector<8x128xbf16>
    tpu.vector_store %arg12[%c0_145, %c0_146], %279 {strides = array<i32>} : memref<8x256xbf16, #tpu.memory_space<vmem>>, vector<8x128xbf16>,
    %c0_147 = arith.constant 0 : index
    %c0_148 = arith.constant 0 : index
    %281 = vector.load %arg12[%c0_147, %c0_148] : memref<8x256xbf16, #tpu.memory_space<vmem>>, vector<8x256xbf16>
    %c0_149 = arith.constant 0 : index
    %c0_150 = arith.constant 0 : index
    %282 = vector.load %arg11[%c0_149, %c0_150] : memref<8x128xf32, #tpu.memory_space<vmem>>, vector<8x128xf32>
    %c0_151 = arith.constant 0 : index
    %c0_152 = arith.constant 0 : index
    %283 = vector.load %arg4[%c0_151, %c0_152] : memref<256x512xbf16, #tpu.memory_space<vmem>>, vector<256x512xbf16>
    %cst_153 = arith.constant dense<0.000000e+00> : vector<8x512xf32>
    %284 = tpu.matmul %281, %283, %cst_153 {dimension_numbers = #tpu.dot_dimension_numbers<[1], [0], [0], [1], [0, 0, 1, 1], [], []>} : vector<8x256xbf16>, vector<256x512xbf16>, vector<8x512xf32> -> vector<8x512xf32>
    %c0_154 = arith.constant 0 : index
    %c0_155 = arith.constant 0 : index
    %285 = vector.load %arg5[%c0_154, %c0_155] : memref<1x512xf32, #tpu.memory_space<vmem>>, vector<1x512xf32>
    %286 = vector.broadcast %285 : vector<1x512xf32> to vector<8x512xf32>
    %287 = arith.addf %284, %286 : vector<8x512xf32>
    %288 = vector.extract_strided_slice %287 {offsets = [0, 0], sizes = [8, 128], strides = [1, 1]} : vector<8x512xf32> to vector<8x128xf32>
    %289 = arith.negf %288 : vector<8x128xf32>
    %290 = math.exp %289 : vector<8x128xf32>
    %cst_156 = arith.constant 1.000000e+00 : f32
    %291 = vector.broadcast %cst_156 : f32 to vector<8x128xf32>
    %292 = arith.addf %291, %290 : vector<8x128xf32>
    %293 = arith.divf %291, %292 : vector<8x128xf32>
    %294 = vector.extract_strided_slice %287 {offsets = [0, 128], sizes = [8, 128], strides = [1, 1]} : vector<8x512xf32> to vector<8x128xf32>
    %295 = arith.negf %294 : vector<8x128xf32>
    %296 = math.exp %295 : vector<8x128xf32>
    %cst_157 = arith.constant 1.000000e+00 : f32
    %297 = vector.broadcast %cst_157 : f32 to vector<8x128xf32>
    %298 = arith.addf %297, %296 : vector<8x128xf32>
    %299 = arith.divf %297, %298 : vector<8x128xf32>
    %300 = vector.extract_strided_slice %287 {offsets = [0, 256], sizes = [8, 128], strides = [1, 1]} : vector<8x512xf32> to vector<8x128xf32>
    %301 = math.tanh %300 : vector<8x128xf32>
    %302 = vector.extract_strided_slice %287 {offsets = [0, 384], sizes = [8, 128], strides = [1, 1]} : vector<8x512xf32> to vector<8x128xf32>
    %303 = arith.negf %302 : vector<8x128xf32>
    %304 = math.exp %303 : vector<8x128xf32>
    %cst_158 = arith.constant 1.000000e+00 : f32
    %305 = vector.broadcast %cst_158 : f32 to vector<8x128xf32>
    %306 = arith.addf %305, %304 : vector<8x128xf32>
    %307 = arith.divf %305, %306 : vector<8x128xf32>
    %308 = arith.mulf %299, %282 : vector<8x128xf32>
    %309 = arith.mulf %293, %301 : vector<8x128xf32>
    %310 = arith.addf %308, %309 : vector<8x128xf32>
    %311 = math.tanh %310 : vector<8x128xf32>
    %312 = arith.mulf %307, %311 : vector<8x128xf32>
    %c0_159 = arith.constant 0 : index
    %c0_160 = arith.constant 0 : index
    %313 = vector.load %arg11[%c0_159, %c0_160] : memref<8x128xf32, #tpu.memory_space<vmem>>, vector<8x128xf32>
    tpu.vector_store %arg11[%c0_159, %c0_160], %310 {strides = array<i32>} : memref<8x128xf32, #tpu.memory_space<vmem>>, vector<8x128xf32>,
    %314 = arith.truncf %312 : vector<8x128xf32> to vector<8x128xbf16>
    %c0_161 = arith.constant 0 : index
    %c128_162 = arith.constant 128 : index
    %315 = vector.load %arg12[%c0_161, %c128_162] : memref<8x256xbf16, #tpu.memory_space<vmem>>, vector<8x128xbf16>
    tpu.vector_store %arg12[%c0_161, %c128_162], %314 {strides = array<i32>} : memref<8x256xbf16, #tpu.memory_space<vmem>>, vector<8x128xbf16>,
    %c8_i32 = arith.constant 8 : i32
    %cst_163 = arith.constant 0.000000e+00 : f32
    %316 = vector.broadcast %cst_163 : f32 to vector<8x128xf32>
    %c0_164 = arith.constant 0 : index
    %c0_165 = arith.constant 0 : index
    %c0_166 = arith.constant 0 : index
    %317 = vector.load %arg10[%c0_164, %c0_165, %c0_166] : memref<8x8x128xf32, #tpu.memory_space<vmem>>, vector<1x8x128xf32>
    %318 = vector.shape_cast %317 : vector<1x8x128xf32> to vector<8x128xf32>
    %319 = vector.shape_cast %316 : vector<8x128xf32> to vector<1x8x128xf32>
    tpu.vector_store %arg10[%c0_164, %c0_165, %c0_166], %319 {strides = array<i32>} : memref<8x8x128xf32, #tpu.memory_space<vmem>>, vector<1x8x128xf32>,
    %c0_167 = arith.constant 0 : index
    %c0_168 = arith.constant 0 : index
    %c0_169 = arith.constant 0 : index
    %320 = vector.load %arg2[%c0_167, %c0_168, %c0_169] : memref<8x8x128xbf16, #tpu.memory_space<vmem>>, vector<1x8x128xbf16>
    %321 = vector.shape_cast %320 : vector<1x8x128xbf16> to vector<8x128xbf16>
    %c0_170 = arith.constant 0 : index
    %c0_171 = arith.constant 0 : index
    %322 = vector.load %arg12[%c0_170, %c0_171] : memref<8x256xbf16, #tpu.memory_space<vmem>>, vector<8x128xbf16>
    tpu.vector_store %arg12[%c0_170, %c0_171], %321 {strides = array<i32>} : memref<8x256xbf16, #tpu.memory_space<vmem>>, vector<8x128xbf16>,
    %c0_i32_172 = arith.constant 0 : i32
    %c0_173 = arith.constant 0 : index
    %c0_174 = arith.constant 0 : index
    %323 = vector.load %arg12[%c0_173, %c0_174] : memref<8x256xbf16, #tpu.memory_space<vmem>>, vector<8x256xbf16>
    %c0_175 = arith.constant 0 : index
    %c0_176 = arith.constant 0 : index
    %324 = vector.load %arg11[%c0_175, %c0_176] : memref<8x128xf32, #tpu.memory_space<vmem>>, vector<8x128xf32>
    %c0_177 = arith.constant 0 : index
    %c0_178 = arith.constant 0 : index
    %325 = vector.load %arg6[%c0_177, %c0_178] : memref<256x512xbf16, #tpu.memory_space<vmem>>, vector<256x512xbf16>
    %cst_179 = arith.constant dense<0.000000e+00> : vector<8x512xf32>
    %326 = tpu.matmul %323, %325, %cst_179 {dimension_numbers = #tpu.dot_dimension_numbers<[1], [0], [0], [1], [0, 0, 1, 1], [], []>} : vector<8x256xbf16>, vector<256x512xbf16>, vector<8x512xf32> -> vector<8x512xf32>
    %c0_180 = arith.constant 0 : index
    %c0_181 = arith.constant 0 : index
    %327 = vector.load %arg7[%c0_180, %c0_181] : memref<1x512xf32, #tpu.memory_space<vmem>>, vector<1x512xf32>
    %328 = vector.broadcast %327 : vector<1x512xf32> to vector<8x512xf32>
    %329 = arith.addf %326, %328 : vector<8x512xf32>
    %330 = vector.extract_strided_slice %329 {offsets = [0, 0], sizes = [8, 128], strides = [1, 1]} : vector<8x512xf32> to vector<8x128xf32>
    %331 = arith.negf %330 : vector<8x128xf32>
    %332 = math.exp %331 : vector<8x128xf32>
    %cst_182 = arith.constant 1.000000e+00 : f32
    %333 = vector.broadcast %cst_182 : f32 to vector<8x128xf32>
    %334 = arith.addf %333, %332 : vector<8x128xf32>
    %335 = arith.divf %333, %334 : vector<8x128xf32>
    %336 = vector.extract_strided_slice %329 {offsets = [0, 128], sizes = [8, 128], strides = [1, 1]} : vector<8x512xf32> to vector<8x128xf32>
    %337 = arith.negf %336 : vector<8x128xf32>
    %338 = math.exp %337 : vector<8x128xf32>
    %cst_183 = arith.constant 1.000000e+00 : f32
    %339 = vector.broadcast %cst_183 : f32 to vector<8x128xf32>
    %340 = arith.addf %339, %338 : vector<8x128xf32>
    %341 = arith.divf %339, %340 : vector<8x128xf32>
    %342 = vector.extract_strided_slice %329 {offsets = [0, 256], sizes = [8, 128], strides = [1, 1]} : vector<8x512xf32> to vector<8x128xf32>
    %343 = math.tanh %342 : vector<8x128xf32>
    %344 = vector.extract_strided_slice %329 {offsets = [0, 384], sizes = [8, 128], strides = [1, 1]} : vector<8x512xf32> to vector<8x128xf32>
    %345 = arith.negf %344 : vector<8x128xf32>
    %346 = math.exp %345 : vector<8x128xf32>
    %cst_184 = arith.constant 1.000000e+00 : f32
    %347 = vector.broadcast %cst_184 : f32 to vector<8x128xf32>
    %348 = arith.addf %347, %346 : vector<8x128xf32>
    %349 = arith.divf %347, %348 : vector<8x128xf32>
    %350 = arith.mulf %341, %324 : vector<8x128xf32>
    %351 = arith.mulf %335, %343 : vector<8x128xf32>
    %352 = arith.addf %350, %351 : vector<8x128xf32>
    %353 = math.tanh %352 : vector<8x128xf32>
    %354 = arith.mulf %349, %353 : vector<8x128xf32>
    %c0_185 = arith.constant 0 : index
    %c0_186 = arith.constant 0 : index
    %355 = vector.load %arg11[%c0_185, %c0_186] : memref<8x128xf32, #tpu.memory_space<vmem>>, vector<8x128xf32>
    tpu.vector_store %arg11[%c0_185, %c0_186], %352 {strides = array<i32>} : memref<8x128xf32, #tpu.memory_space<vmem>>, vector<8x128xf32>,
    %356 = arith.truncf %354 : vector<8x128xf32> to vector<8x128xbf16>
    %c0_187 = arith.constant 0 : index
    %c128_188 = arith.constant 128 : index
    %357 = vector.load %arg12[%c0_187, %c128_188] : memref<8x256xbf16, #tpu.memory_space<vmem>>, vector<8x128xbf16>
    tpu.vector_store %arg12[%c0_187, %c128_188], %356 {strides = array<i32>} : memref<8x256xbf16, #tpu.memory_space<vmem>>, vector<8x128xbf16>,
    %358 = arith.truncf %354 : vector<8x128xf32> to vector<8x128xbf16>
    %c0_189 = arith.constant 0 : index
    %c0_190 = arith.constant 0 : index
    %359 = vector.load %arg8[%c0_189, %c0_190] : memref<128x128xbf16, #tpu.memory_space<vmem>>, vector<128x128xbf16>
    %cst_191 = arith.constant dense<0.000000e+00> : vector<8x128xf32>
    %360 = tpu.matmul %358, %359, %cst_191 {dimension_numbers = #tpu.dot_dimension_numbers<[1], [0], [0], [1], [0, 0, 1, 1], [], []>} : vector<8x128xbf16>, vector<128x128xbf16>, vector<8x128xf32> -> vector<8x128xf32>
    %c0_192 = arith.constant 0 : index
    %c0_193 = arith.constant 0 : index
    %361 = vector.load %arg9[%c0_192, %c0_193] : memref<1x128xf32, #tpu.memory_space<vmem>>, vector<1x128xf32>
    %362 = vector.broadcast %361 : vector<1x128xf32> to vector<8x128xf32>
    %363 = arith.addf %360, %362 : vector<8x128xf32>
    %c1_i32_194 = arith.constant 1 : i32
    %364 = arith.addi %c0_i32_172, %c1_i32_194 : i32
    %365 = arith.index_cast %364 : i32 to index
    %c0_195 = arith.constant 0 : index
    %c0_196 = arith.constant 0 : index
    %366 = vector.load %arg10[%365, %c0_195, %c0_196] : memref<8x8x128xf32, #tpu.memory_space<vmem>>, vector<1x8x128xf32>
    %367 = vector.shape_cast %366 : vector<1x8x128xf32> to vector<8x128xf32>
    %368 = vector.shape_cast %363 : vector<8x128xf32> to vector<1x8x128xf32>
    tpu.vector_store %arg10[%365, %c0_195, %c0_196], %368 {strides = array<i32>} : memref<8x8x128xf32, #tpu.memory_space<vmem>>, vector<1x8x128xf32>,
    %c6_i32_197 = arith.constant 6 : i32
    %369 = arith.cmpi slt, %c0_i32_172, %c6_i32_197 : i32
    %c1_i32_198 = arith.constant 1 : i32
    %370 = arith.addi %c0_i32_172, %c1_i32_198 : i32
    %371 = arith.index_cast %370 : i32 to index
    %372 = memref.load %arg0[%371] : memref<8xi32, #tpu.memory_space<smem>>
    %c0_i32_199 = arith.constant 0 : i32
    %373 = arith.cmpi ne, %372, %c0_i32_199 : i32
    %374 = arith.andi %369, %373 : i1
    %375 = arith.extui %374 : i1 to i32
    %c0_i32_200 = arith.constant 0 : i32
    %376 = arith.cmpi ne, %375, %c0_i32_200 : i32
    scf.if %376 {
      %c1_i32_390 = arith.constant 1 : i32
      %729 = arith.addi %c0_i32_172, %c1_i32_390 : i32
      %730 = arith.index_cast %729 : i32 to index
      %c0_391 = arith.constant 0 : index
      %c0_392 = arith.constant 0 : index
      %731 = vector.load %arg2[%730, %c0_391, %c0_392] : memref<8x8x128xbf16, #tpu.memory_space<vmem>>, vector<1x8x128xbf16>
      %732 = vector.shape_cast %731 : vector<1x8x128xbf16> to vector<8x128xbf16>
      %c0_393 = arith.constant 0 : index
      %c0_394 = arith.constant 0 : index
      %733 = vector.load %arg12[%c0_393, %c0_394] : memref<8x256xbf16, #tpu.memory_space<vmem>>, vector<8x128xbf16>
      tpu.vector_store %arg12[%c0_393, %c0_394], %732 {strides = array<i32>} : memref<8x256xbf16, #tpu.memory_space<vmem>>, vector<8x128xbf16>,
    } else {
    }
    %c0_i32_201 = arith.constant 0 : i32
    %377 = arith.cmpi eq, %372, %c0_i32_201 : i32
    %378 = arith.andi %369, %377 : i1
    %379 = arith.extui %378 : i1 to i32
    %c0_i32_202 = arith.constant 0 : i32
    %380 = arith.cmpi ne, %379, %c0_i32_202 : i32
    scf.if %380 {
      %cst_390 = arith.constant dense<0xFF800000> : vector<8xf32>
      %729 = vector.multi_reduction <maximumf>, %363, %cst_390 [1] : vector<8x128xf32> to vector<8xf32>
      %730 = vector.shape_cast %729 : vector<8xf32> to vector<8x1xf32>
      %731 = tpu.iota {dimensions = array<i32: 1>} : vector<8x128xi32>
      %732 = vector.broadcast %730 : vector<8x1xf32> to vector<8x128xf32>
      %733 = arith.cmpf oeq, %363, %732 : vector<8x128xf32>
      %c128_i32 = arith.constant 128 : i32
      %734 = vector.broadcast %c128_i32 : i32 to vector<8x128xi32>
      %735 = arith.select %733, %731, %734 : vector<8x128xi1>, vector<8x128xi32>
      %cst_391 = arith.constant dense<2147483647> : vector<8xi32>
      %736 = vector.multi_reduction <minsi>, %735, %cst_391 [1] : vector<8x128xi32> to vector<8xi32>
      %737 = vector.shape_cast %736 : vector<8xi32> to vector<8x1xi32>
      %738 = vector.broadcast %737 : vector<8x1xi32> to vector<8x128xi32>
      %739 = arith.cmpi eq, %731, %738 : vector<8x128xi32>
      %740 = arith.extui %739 : vector<8x128xi1> to vector<8x128xi32>
      %741 = arith.sitofp %740 : vector<8x128xi32> to vector<8x128xf32>
      %742 = arith.truncf %741 : vector<8x128xf32> to vector<8x128xbf16>
      %c0_392 = arith.constant 0 : index
      %c0_393 = arith.constant 0 : index
      %743 = vector.load %arg3[%c0_392, %c0_393] : memref<128x128xbf16, #tpu.memory_space<vmem>>, vector<128x128xbf16>
      %cst_394 = arith.constant dense<0.000000e+00> : vector<8x128xf32>
      %744 = tpu.matmul %742, %743, %cst_394 {dimension_numbers = #tpu.dot_dimension_numbers<[1], [0], [0], [1], [0, 0, 1, 1], [], []>} : vector<8x128xbf16>, vector<128x128xbf16>, vector<8x128xf32> -> vector<8x128xf32>
      %745 = arith.truncf %744 : vector<8x128xf32> to vector<8x128xbf16>
      %c0_395 = arith.constant 0 : index
      %c0_396 = arith.constant 0 : index
      %746 = vector.load %arg12[%c0_395, %c0_396] : memref<8x256xbf16, #tpu.memory_space<vmem>>, vector<8x128xbf16>
      tpu.vector_store %arg12[%c0_395, %c0_396], %745 {strides = array<i32>} : memref<8x256xbf16, #tpu.memory_space<vmem>>, vector<8x128xbf16>,
    } else {
    }
    %c1_i32_203 = arith.constant 1 : i32
    %c0_204 = arith.constant 0 : index
    %c0_205 = arith.constant 0 : index
    %381 = vector.load %arg12[%c0_204, %c0_205] : memref<8x256xbf16, #tpu.memory_space<vmem>>, vector<8x256xbf16>
    %c0_206 = arith.constant 0 : index
    %c0_207 = arith.constant 0 : index
    %382 = vector.load %arg11[%c0_206, %c0_207] : memref<8x128xf32, #tpu.memory_space<vmem>>, vector<8x128xf32>
    %c0_208 = arith.constant 0 : index
    %c0_209 = arith.constant 0 : index
    %383 = vector.load %arg6[%c0_208, %c0_209] : memref<256x512xbf16, #tpu.memory_space<vmem>>, vector<256x512xbf16>
    %cst_210 = arith.constant dense<0.000000e+00> : vector<8x512xf32>
    %384 = tpu.matmul %381, %383, %cst_210 {dimension_numbers = #tpu.dot_dimension_numbers<[1], [0], [0], [1], [0, 0, 1, 1], [], []>} : vector<8x256xbf16>, vector<256x512xbf16>, vector<8x512xf32> -> vector<8x512xf32>
    %c0_211 = arith.constant 0 : index
    %c0_212 = arith.constant 0 : index
    %385 = vector.load %arg7[%c0_211, %c0_212] : memref<1x512xf32, #tpu.memory_space<vmem>>, vector<1x512xf32>
    %386 = vector.broadcast %385 : vector<1x512xf32> to vector<8x512xf32>
    %387 = arith.addf %384, %386 : vector<8x512xf32>
    %388 = vector.extract_strided_slice %387 {offsets = [0, 0], sizes = [8, 128], strides = [1, 1]} : vector<8x512xf32> to vector<8x128xf32>
    %389 = arith.negf %388 : vector<8x128xf32>
    %390 = math.exp %389 : vector<8x128xf32>
    %cst_213 = arith.constant 1.000000e+00 : f32
    %391 = vector.broadcast %cst_213 : f32 to vector<8x128xf32>
    %392 = arith.addf %391, %390 : vector<8x128xf32>
    %393 = arith.divf %391, %392 : vector<8x128xf32>
    %394 = vector.extract_strided_slice %387 {offsets = [0, 128], sizes = [8, 128], strides = [1, 1]} : vector<8x512xf32> to vector<8x128xf32>
    %395 = arith.negf %394 : vector<8x128xf32>
    %396 = math.exp %395 : vector<8x128xf32>
    %cst_214 = arith.constant 1.000000e+00 : f32
    %397 = vector.broadcast %cst_214 : f32 to vector<8x128xf32>
    %398 = arith.addf %397, %396 : vector<8x128xf32>
    %399 = arith.divf %397, %398 : vector<8x128xf32>
    %400 = vector.extract_strided_slice %387 {offsets = [0, 256], sizes = [8, 128], strides = [1, 1]} : vector<8x512xf32> to vector<8x128xf32>
    %401 = math.tanh %400 : vector<8x128xf32>
    %402 = vector.extract_strided_slice %387 {offsets = [0, 384], sizes = [8, 128], strides = [1, 1]} : vector<8x512xf32> to vector<8x128xf32>
    %403 = arith.negf %402 : vector<8x128xf32>
    %404 = math.exp %403 : vector<8x128xf32>
    %cst_215 = arith.constant 1.000000e+00 : f32
    %405 = vector.broadcast %cst_215 : f32 to vector<8x128xf32>
    %406 = arith.addf %405, %404 : vector<8x128xf32>
    %407 = arith.divf %405, %406 : vector<8x128xf32>
    %408 = arith.mulf %399, %382 : vector<8x128xf32>
    %409 = arith.mulf %393, %401 : vector<8x128xf32>
    %410 = arith.addf %408, %409 : vector<8x128xf32>
    %411 = math.tanh %410 : vector<8x128xf32>
    %412 = arith.mulf %407, %411 : vector<8x128xf32>
    %c0_216 = arith.constant 0 : index
    %c0_217 = arith.constant 0 : index
    %413 = vector.load %arg11[%c0_216, %c0_217] : memref<8x128xf32, #tpu.memory_space<vmem>>, vector<8x128xf32>
    tpu.vector_store %arg11[%c0_216, %c0_217], %410 {strides = array<i32>} : memref<8x128xf32, #tpu.memory_space<vmem>>, vector<8x128xf32>,
    %414 = arith.truncf %412 : vector<8x128xf32> to vector<8x128xbf16>
    %c0_218 = arith.constant 0 : index
    %c128_219 = arith.constant 128 : index
    %415 = vector.load %arg12[%c0_218, %c128_219] : memref<8x256xbf16, #tpu.memory_space<vmem>>, vector<8x128xbf16>
    tpu.vector_store %arg12[%c0_218, %c128_219], %414 {strides = array<i32>} : memref<8x256xbf16, #tpu.memory_space<vmem>>, vector<8x128xbf16>,
    %416 = arith.truncf %412 : vector<8x128xf32> to vector<8x128xbf16>
    %c0_220 = arith.constant 0 : index
    %c0_221 = arith.constant 0 : index
    %417 = vector.load %arg8[%c0_220, %c0_221] : memref<128x128xbf16, #tpu.memory_space<vmem>>, vector<128x128xbf16>
    %cst_222 = arith.constant dense<0.000000e+00> : vector<8x128xf32>
    %418 = tpu.matmul %416, %417, %cst_222 {dimension_numbers = #tpu.dot_dimension_numbers<[1], [0], [0], [1], [0, 0, 1, 1], [], []>} : vector<8x128xbf16>, vector<128x128xbf16>, vector<8x128xf32> -> vector<8x128xf32>
    %c0_223 = arith.constant 0 : index
    %c0_224 = arith.constant 0 : index
    %419 = vector.load %arg9[%c0_223, %c0_224] : memref<1x128xf32, #tpu.memory_space<vmem>>, vector<1x128xf32>
    %420 = vector.broadcast %419 : vector<1x128xf32> to vector<8x128xf32>
    %421 = arith.addf %418, %420 : vector<8x128xf32>
    %c1_i32_225 = arith.constant 1 : i32
    %422 = arith.addi %c1_i32_203, %c1_i32_225 : i32
    %423 = arith.index_cast %422 : i32 to index
    %c0_226 = arith.constant 0 : index
    %c0_227 = arith.constant 0 : index
    %424 = vector.load %arg10[%423, %c0_226, %c0_227] : memref<8x8x128xf32, #tpu.memory_space<vmem>>, vector<1x8x128xf32>
    %425 = vector.shape_cast %424 : vector<1x8x128xf32> to vector<8x128xf32>
    %426 = vector.shape_cast %421 : vector<8x128xf32> to vector<1x8x128xf32>
    tpu.vector_store %arg10[%423, %c0_226, %c0_227], %426 {strides = array<i32>} : memref<8x8x128xf32, #tpu.memory_space<vmem>>, vector<1x8x128xf32>,
    %c6_i32_228 = arith.constant 6 : i32
    %427 = arith.cmpi slt, %c1_i32_203, %c6_i32_228 : i32
    %c1_i32_229 = arith.constant 1 : i32
    %428 = arith.addi %c1_i32_203, %c1_i32_229 : i32
    %429 = arith.index_cast %428 : i32 to index
    %430 = memref.load %arg0[%429] : memref<8xi32, #tpu.memory_space<smem>>
    %c0_i32_230 = arith.constant 0 : i32
    %431 = arith.cmpi ne, %430, %c0_i32_230 : i32
    %432 = arith.andi %427, %431 : i1
    %433 = arith.extui %432 : i1 to i32
    %c0_i32_231 = arith.constant 0 : i32
    %434 = arith.cmpi ne, %433, %c0_i32_231 : i32
    scf.if %434 {
      %c1_i32_390 = arith.constant 1 : i32
      %729 = arith.addi %c1_i32_203, %c1_i32_390 : i32
      %730 = arith.index_cast %729 : i32 to index
      %c0_391 = arith.constant 0 : index
      %c0_392 = arith.constant 0 : index
      %731 = vector.load %arg2[%730, %c0_391, %c0_392] : memref<8x8x128xbf16, #tpu.memory_space<vmem>>, vector<1x8x128xbf16>
      %732 = vector.shape_cast %731 : vector<1x8x128xbf16> to vector<8x128xbf16>
      %c0_393 = arith.constant 0 : index
      %c0_394 = arith.constant 0 : index
      %733 = vector.load %arg12[%c0_393, %c0_394] : memref<8x256xbf16, #tpu.memory_space<vmem>>, vector<8x128xbf16>
      tpu.vector_store %arg12[%c0_393, %c0_394], %732 {strides = array<i32>} : memref<8x256xbf16, #tpu.memory_space<vmem>>, vector<8x128xbf16>,
    } else {
    }
    %c0_i32_232 = arith.constant 0 : i32
    %435 = arith.cmpi eq, %430, %c0_i32_232 : i32
    %436 = arith.andi %427, %435 : i1
    %437 = arith.extui %436 : i1 to i32
    %c0_i32_233 = arith.constant 0 : i32
    %438 = arith.cmpi ne, %437, %c0_i32_233 : i32
    scf.if %438 {
      %cst_390 = arith.constant dense<0xFF800000> : vector<8xf32>
      %729 = vector.multi_reduction <maximumf>, %421, %cst_390 [1] : vector<8x128xf32> to vector<8xf32>
      %730 = vector.shape_cast %729 : vector<8xf32> to vector<8x1xf32>
      %731 = tpu.iota {dimensions = array<i32: 1>} : vector<8x128xi32>
      %732 = vector.broadcast %730 : vector<8x1xf32> to vector<8x128xf32>
      %733 = arith.cmpf oeq, %421, %732 : vector<8x128xf32>
      %c128_i32 = arith.constant 128 : i32
      %734 = vector.broadcast %c128_i32 : i32 to vector<8x128xi32>
      %735 = arith.select %733, %731, %734 : vector<8x128xi1>, vector<8x128xi32>
      %cst_391 = arith.constant dense<2147483647> : vector<8xi32>
      %736 = vector.multi_reduction <minsi>, %735, %cst_391 [1] : vector<8x128xi32> to vector<8xi32>
      %737 = vector.shape_cast %736 : vector<8xi32> to vector<8x1xi32>
      %738 = vector.broadcast %737 : vector<8x1xi32> to vector<8x128xi32>
      %739 = arith.cmpi eq, %731, %738 : vector<8x128xi32>
      %740 = arith.extui %739 : vector<8x128xi1> to vector<8x128xi32>
      %741 = arith.sitofp %740 : vector<8x128xi32> to vector<8x128xf32>
      %742 = arith.truncf %741 : vector<8x128xf32> to vector<8x128xbf16>
      %c0_392 = arith.constant 0 : index
      %c0_393 = arith.constant 0 : index
      %743 = vector.load %arg3[%c0_392, %c0_393] : memref<128x128xbf16, #tpu.memory_space<vmem>>, vector<128x128xbf16>
      %cst_394 = arith.constant dense<0.000000e+00> : vector<8x128xf32>
      %744 = tpu.matmul %742, %743, %cst_394 {dimension_numbers = #tpu.dot_dimension_numbers<[1], [0], [0], [1], [0, 0, 1, 1], [], []>} : vector<8x128xbf16>, vector<128x128xbf16>, vector<8x128xf32> -> vector<8x128xf32>
      %745 = arith.truncf %744 : vector<8x128xf32> to vector<8x128xbf16>
      %c0_395 = arith.constant 0 : index
      %c0_396 = arith.constant 0 : index
      %746 = vector.load %arg12[%c0_395, %c0_396] : memref<8x256xbf16, #tpu.memory_space<vmem>>, vector<8x128xbf16>
      tpu.vector_store %arg12[%c0_395, %c0_396], %745 {strides = array<i32>} : memref<8x256xbf16, #tpu.memory_space<vmem>>, vector<8x128xbf16>,
    } else {
    }
    %c2_i32_234 = arith.constant 2 : i32
    %c0_235 = arith.constant 0 : index
    %c0_236 = arith.constant 0 : index
    %439 = vector.load %arg12[%c0_235, %c0_236] : memref<8x256xbf16, #tpu.memory_space<vmem>>, vector<8x256xbf16>
    %c0_237 = arith.constant 0 : index
    %c0_238 = arith.constant 0 : index
    %440 = vector.load %arg11[%c0_237, %c0_238] : memref<8x128xf32, #tpu.memory_space<vmem>>, vector<8x128xf32>
    %c0_239 = arith.constant 0 : index
    %c0_240 = arith.constant 0 : index
    %441 = vector.load %arg6[%c0_239, %c0_240] : memref<256x512xbf16, #tpu.memory_space<vmem>>, vector<256x512xbf16>
    %cst_241 = arith.constant dense<0.000000e+00> : vector<8x512xf32>
    %442 = tpu.matmul %439, %441, %cst_241 {dimension_numbers = #tpu.dot_dimension_numbers<[1], [0], [0], [1], [0, 0, 1, 1], [], []>} : vector<8x256xbf16>, vector<256x512xbf16>, vector<8x512xf32> -> vector<8x512xf32>
    %c0_242 = arith.constant 0 : index
    %c0_243 = arith.constant 0 : index
    %443 = vector.load %arg7[%c0_242, %c0_243] : memref<1x512xf32, #tpu.memory_space<vmem>>, vector<1x512xf32>
    %444 = vector.broadcast %443 : vector<1x512xf32> to vector<8x512xf32>
    %445 = arith.addf %442, %444 : vector<8x512xf32>
    %446 = vector.extract_strided_slice %445 {offsets = [0, 0], sizes = [8, 128], strides = [1, 1]} : vector<8x512xf32> to vector<8x128xf32>
    %447 = arith.negf %446 : vector<8x128xf32>
    %448 = math.exp %447 : vector<8x128xf32>
    %cst_244 = arith.constant 1.000000e+00 : f32
    %449 = vector.broadcast %cst_244 : f32 to vector<8x128xf32>
    %450 = arith.addf %449, %448 : vector<8x128xf32>
    %451 = arith.divf %449, %450 : vector<8x128xf32>
    %452 = vector.extract_strided_slice %445 {offsets = [0, 128], sizes = [8, 128], strides = [1, 1]} : vector<8x512xf32> to vector<8x128xf32>
    %453 = arith.negf %452 : vector<8x128xf32>
    %454 = math.exp %453 : vector<8x128xf32>
    %cst_245 = arith.constant 1.000000e+00 : f32
    %455 = vector.broadcast %cst_245 : f32 to vector<8x128xf32>
    %456 = arith.addf %455, %454 : vector<8x128xf32>
    %457 = arith.divf %455, %456 : vector<8x128xf32>
    %458 = vector.extract_strided_slice %445 {offsets = [0, 256], sizes = [8, 128], strides = [1, 1]} : vector<8x512xf32> to vector<8x128xf32>
    %459 = math.tanh %458 : vector<8x128xf32>
    %460 = vector.extract_strided_slice %445 {offsets = [0, 384], sizes = [8, 128], strides = [1, 1]} : vector<8x512xf32> to vector<8x128xf32>
    %461 = arith.negf %460 : vector<8x128xf32>
    %462 = math.exp %461 : vector<8x128xf32>
    %cst_246 = arith.constant 1.000000e+00 : f32
    %463 = vector.broadcast %cst_246 : f32 to vector<8x128xf32>
    %464 = arith.addf %463, %462 : vector<8x128xf32>
    %465 = arith.divf %463, %464 : vector<8x128xf32>
    %466 = arith.mulf %457, %440 : vector<8x128xf32>
    %467 = arith.mulf %451, %459 : vector<8x128xf32>
    %468 = arith.addf %466, %467 : vector<8x128xf32>
    %469 = math.tanh %468 : vector<8x128xf32>
    %470 = arith.mulf %465, %469 : vector<8x128xf32>
    %c0_247 = arith.constant 0 : index
    %c0_248 = arith.constant 0 : index
    %471 = vector.load %arg11[%c0_247, %c0_248] : memref<8x128xf32, #tpu.memory_space<vmem>>, vector<8x128xf32>
    tpu.vector_store %arg11[%c0_247, %c0_248], %468 {strides = array<i32>} : memref<8x128xf32, #tpu.memory_space<vmem>>, vector<8x128xf32>,
    %472 = arith.truncf %470 : vector<8x128xf32> to vector<8x128xbf16>
    %c0_249 = arith.constant 0 : index
    %c128_250 = arith.constant 128 : index
    %473 = vector.load %arg12[%c0_249, %c128_250] : memref<8x256xbf16, #tpu.memory_space<vmem>>, vector<8x128xbf16>
    tpu.vector_store %arg12[%c0_249, %c128_250], %472 {strides = array<i32>} : memref<8x256xbf16, #tpu.memory_space<vmem>>, vector<8x128xbf16>,
    %474 = arith.truncf %470 : vector<8x128xf32> to vector<8x128xbf16>
    %c0_251 = arith.constant 0 : index
    %c0_252 = arith.constant 0 : index
    %475 = vector.load %arg8[%c0_251, %c0_252] : memref<128x128xbf16, #tpu.memory_space<vmem>>, vector<128x128xbf16>
    %cst_253 = arith.constant dense<0.000000e+00> : vector<8x128xf32>
    %476 = tpu.matmul %474, %475, %cst_253 {dimension_numbers = #tpu.dot_dimension_numbers<[1], [0], [0], [1], [0, 0, 1, 1], [], []>} : vector<8x128xbf16>, vector<128x128xbf16>, vector<8x128xf32> -> vector<8x128xf32>
    %c0_254 = arith.constant 0 : index
    %c0_255 = arith.constant 0 : index
    %477 = vector.load %arg9[%c0_254, %c0_255] : memref<1x128xf32, #tpu.memory_space<vmem>>, vector<1x128xf32>
    %478 = vector.broadcast %477 : vector<1x128xf32> to vector<8x128xf32>
    %479 = arith.addf %476, %478 : vector<8x128xf32>
    %c1_i32_256 = arith.constant 1 : i32
    %480 = arith.addi %c2_i32_234, %c1_i32_256 : i32
    %481 = arith.index_cast %480 : i32 to index
    %c0_257 = arith.constant 0 : index
    %c0_258 = arith.constant 0 : index
    %482 = vector.load %arg10[%481, %c0_257, %c0_258] : memref<8x8x128xf32, #tpu.memory_space<vmem>>, vector<1x8x128xf32>
    %483 = vector.shape_cast %482 : vector<1x8x128xf32> to vector<8x128xf32>
    %484 = vector.shape_cast %479 : vector<8x128xf32> to vector<1x8x128xf32>
    tpu.vector_store %arg10[%481, %c0_257, %c0_258], %484 {strides = array<i32>} : memref<8x8x128xf32, #tpu.memory_space<vmem>>, vector<1x8x128xf32>,
    %c6_i32_259 = arith.constant 6 : i32
    %485 = arith.cmpi slt, %c2_i32_234, %c6_i32_259 : i32
    %c1_i32_260 = arith.constant 1 : i32
    %486 = arith.addi %c2_i32_234, %c1_i32_260 : i32
    %487 = arith.index_cast %486 : i32 to index
    %488 = memref.load %arg0[%487] : memref<8xi32, #tpu.memory_space<smem>>
    %c0_i32_261 = arith.constant 0 : i32
    %489 = arith.cmpi ne, %488, %c0_i32_261 : i32
    %490 = arith.andi %485, %489 : i1
    %491 = arith.extui %490 : i1 to i32
    %c0_i32_262 = arith.constant 0 : i32
    %492 = arith.cmpi ne, %491, %c0_i32_262 : i32
    scf.if %492 {
      %c1_i32_390 = arith.constant 1 : i32
      %729 = arith.addi %c2_i32_234, %c1_i32_390 : i32
      %730 = arith.index_cast %729 : i32 to index
      %c0_391 = arith.constant 0 : index
      %c0_392 = arith.constant 0 : index
      %731 = vector.load %arg2[%730, %c0_391, %c0_392] : memref<8x8x128xbf16, #tpu.memory_space<vmem>>, vector<1x8x128xbf16>
      %732 = vector.shape_cast %731 : vector<1x8x128xbf16> to vector<8x128xbf16>
      %c0_393 = arith.constant 0 : index
      %c0_394 = arith.constant 0 : index
      %733 = vector.load %arg12[%c0_393, %c0_394] : memref<8x256xbf16, #tpu.memory_space<vmem>>, vector<8x128xbf16>
      tpu.vector_store %arg12[%c0_393, %c0_394], %732 {strides = array<i32>} : memref<8x256xbf16, #tpu.memory_space<vmem>>, vector<8x128xbf16>,
    } else {
    }
    %c0_i32_263 = arith.constant 0 : i32
    %493 = arith.cmpi eq, %488, %c0_i32_263 : i32
    %494 = arith.andi %485, %493 : i1
    %495 = arith.extui %494 : i1 to i32
    %c0_i32_264 = arith.constant 0 : i32
    %496 = arith.cmpi ne, %495, %c0_i32_264 : i32
    scf.if %496 {
      %cst_390 = arith.constant dense<0xFF800000> : vector<8xf32>
      %729 = vector.multi_reduction <maximumf>, %479, %cst_390 [1] : vector<8x128xf32> to vector<8xf32>
      %730 = vector.shape_cast %729 : vector<8xf32> to vector<8x1xf32>
      %731 = tpu.iota {dimensions = array<i32: 1>} : vector<8x128xi32>
      %732 = vector.broadcast %730 : vector<8x1xf32> to vector<8x128xf32>
      %733 = arith.cmpf oeq, %479, %732 : vector<8x128xf32>
      %c128_i32 = arith.constant 128 : i32
      %734 = vector.broadcast %c128_i32 : i32 to vector<8x128xi32>
      %735 = arith.select %733, %731, %734 : vector<8x128xi1>, vector<8x128xi32>
      %cst_391 = arith.constant dense<2147483647> : vector<8xi32>
      %736 = vector.multi_reduction <minsi>, %735, %cst_391 [1] : vector<8x128xi32> to vector<8xi32>
      %737 = vector.shape_cast %736 : vector<8xi32> to vector<8x1xi32>
      %738 = vector.broadcast %737 : vector<8x1xi32> to vector<8x128xi32>
      %739 = arith.cmpi eq, %731, %738 : vector<8x128xi32>
      %740 = arith.extui %739 : vector<8x128xi1> to vector<8x128xi32>
      %741 = arith.sitofp %740 : vector<8x128xi32> to vector<8x128xf32>
      %742 = arith.truncf %741 : vector<8x128xf32> to vector<8x128xbf16>
      %c0_392 = arith.constant 0 : index
      %c0_393 = arith.constant 0 : index
      %743 = vector.load %arg3[%c0_392, %c0_393] : memref<128x128xbf16, #tpu.memory_space<vmem>>, vector<128x128xbf16>
      %cst_394 = arith.constant dense<0.000000e+00> : vector<8x128xf32>
      %744 = tpu.matmul %742, %743, %cst_394 {dimension_numbers = #tpu.dot_dimension_numbers<[1], [0], [0], [1], [0, 0, 1, 1], [], []>} : vector<8x128xbf16>, vector<128x128xbf16>, vector<8x128xf32> -> vector<8x128xf32>
      %745 = arith.truncf %744 : vector<8x128xf32> to vector<8x128xbf16>
      %c0_395 = arith.constant 0 : index
      %c0_396 = arith.constant 0 : index
      %746 = vector.load %arg12[%c0_395, %c0_396] : memref<8x256xbf16, #tpu.memory_space<vmem>>, vector<8x128xbf16>
      tpu.vector_store %arg12[%c0_395, %c0_396], %745 {strides = array<i32>} : memref<8x256xbf16, #tpu.memory_space<vmem>>, vector<8x128xbf16>,
    } else {
    }
    %c3_i32_265 = arith.constant 3 : i32
    %c0_266 = arith.constant 0 : index
    %c0_267 = arith.constant 0 : index
    %497 = vector.load %arg12[%c0_266, %c0_267] : memref<8x256xbf16, #tpu.memory_space<vmem>>, vector<8x256xbf16>
    %c0_268 = arith.constant 0 : index
    %c0_269 = arith.constant 0 : index
    %498 = vector.load %arg11[%c0_268, %c0_269] : memref<8x128xf32, #tpu.memory_space<vmem>>, vector<8x128xf32>
    %c0_270 = arith.constant 0 : index
    %c0_271 = arith.constant 0 : index
    %499 = vector.load %arg6[%c0_270, %c0_271] : memref<256x512xbf16, #tpu.memory_space<vmem>>, vector<256x512xbf16>
    %cst_272 = arith.constant dense<0.000000e+00> : vector<8x512xf32>
    %500 = tpu.matmul %497, %499, %cst_272 {dimension_numbers = #tpu.dot_dimension_numbers<[1], [0], [0], [1], [0, 0, 1, 1], [], []>} : vector<8x256xbf16>, vector<256x512xbf16>, vector<8x512xf32> -> vector<8x512xf32>
    %c0_273 = arith.constant 0 : index
    %c0_274 = arith.constant 0 : index
    %501 = vector.load %arg7[%c0_273, %c0_274] : memref<1x512xf32, #tpu.memory_space<vmem>>, vector<1x512xf32>
    %502 = vector.broadcast %501 : vector<1x512xf32> to vector<8x512xf32>
    %503 = arith.addf %500, %502 : vector<8x512xf32>
    %504 = vector.extract_strided_slice %503 {offsets = [0, 0], sizes = [8, 128], strides = [1, 1]} : vector<8x512xf32> to vector<8x128xf32>
    %505 = arith.negf %504 : vector<8x128xf32>
    %506 = math.exp %505 : vector<8x128xf32>
    %cst_275 = arith.constant 1.000000e+00 : f32
    %507 = vector.broadcast %cst_275 : f32 to vector<8x128xf32>
    %508 = arith.addf %507, %506 : vector<8x128xf32>
    %509 = arith.divf %507, %508 : vector<8x128xf32>
    %510 = vector.extract_strided_slice %503 {offsets = [0, 128], sizes = [8, 128], strides = [1, 1]} : vector<8x512xf32> to vector<8x128xf32>
    %511 = arith.negf %510 : vector<8x128xf32>
    %512 = math.exp %511 : vector<8x128xf32>
    %cst_276 = arith.constant 1.000000e+00 : f32
    %513 = vector.broadcast %cst_276 : f32 to vector<8x128xf32>
    %514 = arith.addf %513, %512 : vector<8x128xf32>
    %515 = arith.divf %513, %514 : vector<8x128xf32>
    %516 = vector.extract_strided_slice %503 {offsets = [0, 256], sizes = [8, 128], strides = [1, 1]} : vector<8x512xf32> to vector<8x128xf32>
    %517 = math.tanh %516 : vector<8x128xf32>
    %518 = vector.extract_strided_slice %503 {offsets = [0, 384], sizes = [8, 128], strides = [1, 1]} : vector<8x512xf32> to vector<8x128xf32>
    %519 = arith.negf %518 : vector<8x128xf32>
    %520 = math.exp %519 : vector<8x128xf32>
    %cst_277 = arith.constant 1.000000e+00 : f32
    %521 = vector.broadcast %cst_277 : f32 to vector<8x128xf32>
    %522 = arith.addf %521, %520 : vector<8x128xf32>
    %523 = arith.divf %521, %522 : vector<8x128xf32>
    %524 = arith.mulf %515, %498 : vector<8x128xf32>
    %525 = arith.mulf %509, %517 : vector<8x128xf32>
    %526 = arith.addf %524, %525 : vector<8x128xf32>
    %527 = math.tanh %526 : vector<8x128xf32>
    %528 = arith.mulf %523, %527 : vector<8x128xf32>
    %c0_278 = arith.constant 0 : index
    %c0_279 = arith.constant 0 : index
    %529 = vector.load %arg11[%c0_278, %c0_279] : memref<8x128xf32, #tpu.memory_space<vmem>>, vector<8x128xf32>
    tpu.vector_store %arg11[%c0_278, %c0_279], %526 {strides = array<i32>} : memref<8x128xf32, #tpu.memory_space<vmem>>, vector<8x128xf32>,
    %530 = arith.truncf %528 : vector<8x128xf32> to vector<8x128xbf16>
    %c0_280 = arith.constant 0 : index
    %c128_281 = arith.constant 128 : index
    %531 = vector.load %arg12[%c0_280, %c128_281] : memref<8x256xbf16, #tpu.memory_space<vmem>>, vector<8x128xbf16>
    tpu.vector_store %arg12[%c0_280, %c128_281], %530 {strides = array<i32>} : memref<8x256xbf16, #tpu.memory_space<vmem>>, vector<8x128xbf16>,
    %532 = arith.truncf %528 : vector<8x128xf32> to vector<8x128xbf16>
    %c0_282 = arith.constant 0 : index
    %c0_283 = arith.constant 0 : index
    %533 = vector.load %arg8[%c0_282, %c0_283] : memref<128x128xbf16, #tpu.memory_space<vmem>>, vector<128x128xbf16>
    %cst_284 = arith.constant dense<0.000000e+00> : vector<8x128xf32>
    %534 = tpu.matmul %532, %533, %cst_284 {dimension_numbers = #tpu.dot_dimension_numbers<[1], [0], [0], [1], [0, 0, 1, 1], [], []>} : vector<8x128xbf16>, vector<128x128xbf16>, vector<8x128xf32> -> vector<8x128xf32>
    %c0_285 = arith.constant 0 : index
    %c0_286 = arith.constant 0 : index
    %535 = vector.load %arg9[%c0_285, %c0_286] : memref<1x128xf32, #tpu.memory_space<vmem>>, vector<1x128xf32>
    %536 = vector.broadcast %535 : vector<1x128xf32> to vector<8x128xf32>
    %537 = arith.addf %534, %536 : vector<8x128xf32>
    %c1_i32_287 = arith.constant 1 : i32
    %538 = arith.addi %c3_i32_265, %c1_i32_287 : i32
    %539 = arith.index_cast %538 : i32 to index
    %c0_288 = arith.constant 0 : index
    %c0_289 = arith.constant 0 : index
    %540 = vector.load %arg10[%539, %c0_288, %c0_289] : memref<8x8x128xf32, #tpu.memory_space<vmem>>, vector<1x8x128xf32>
    %541 = vector.shape_cast %540 : vector<1x8x128xf32> to vector<8x128xf32>
    %542 = vector.shape_cast %537 : vector<8x128xf32> to vector<1x8x128xf32>
    tpu.vector_store %arg10[%539, %c0_288, %c0_289], %542 {strides = array<i32>} : memref<8x8x128xf32, #tpu.memory_space<vmem>>, vector<1x8x128xf32>,
    %c6_i32_290 = arith.constant 6 : i32
    %543 = arith.cmpi slt, %c3_i32_265, %c6_i32_290 : i32
    %c1_i32_291 = arith.constant 1 : i32
    %544 = arith.addi %c3_i32_265, %c1_i32_291 : i32
    %545 = arith.index_cast %544 : i32 to index
    %546 = memref.load %arg0[%545] : memref<8xi32, #tpu.memory_space<smem>>
    %c0_i32_292 = arith.constant 0 : i32
    %547 = arith.cmpi ne, %546, %c0_i32_292 : i32
    %548 = arith.andi %543, %547 : i1
    %549 = arith.extui %548 : i1 to i32
    %c0_i32_293 = arith.constant 0 : i32
    %550 = arith.cmpi ne, %549, %c0_i32_293 : i32
    scf.if %550 {
      %c1_i32_390 = arith.constant 1 : i32
      %729 = arith.addi %c3_i32_265, %c1_i32_390 : i32
      %730 = arith.index_cast %729 : i32 to index
      %c0_391 = arith.constant 0 : index
      %c0_392 = arith.constant 0 : index
      %731 = vector.load %arg2[%730, %c0_391, %c0_392] : memref<8x8x128xbf16, #tpu.memory_space<vmem>>, vector<1x8x128xbf16>
      %732 = vector.shape_cast %731 : vector<1x8x128xbf16> to vector<8x128xbf16>
      %c0_393 = arith.constant 0 : index
      %c0_394 = arith.constant 0 : index
      %733 = vector.load %arg12[%c0_393, %c0_394] : memref<8x256xbf16, #tpu.memory_space<vmem>>, vector<8x128xbf16>
      tpu.vector_store %arg12[%c0_393, %c0_394], %732 {strides = array<i32>} : memref<8x256xbf16, #tpu.memory_space<vmem>>, vector<8x128xbf16>,
    } else {
    }
    %c0_i32_294 = arith.constant 0 : i32
    %551 = arith.cmpi eq, %546, %c0_i32_294 : i32
    %552 = arith.andi %543, %551 : i1
    %553 = arith.extui %552 : i1 to i32
    %c0_i32_295 = arith.constant 0 : i32
    %554 = arith.cmpi ne, %553, %c0_i32_295 : i32
    scf.if %554 {
      %cst_390 = arith.constant dense<0xFF800000> : vector<8xf32>
      %729 = vector.multi_reduction <maximumf>, %537, %cst_390 [1] : vector<8x128xf32> to vector<8xf32>
      %730 = vector.shape_cast %729 : vector<8xf32> to vector<8x1xf32>
      %731 = tpu.iota {dimensions = array<i32: 1>} : vector<8x128xi32>
      %732 = vector.broadcast %730 : vector<8x1xf32> to vector<8x128xf32>
      %733 = arith.cmpf oeq, %537, %732 : vector<8x128xf32>
      %c128_i32 = arith.constant 128 : i32
      %734 = vector.broadcast %c128_i32 : i32 to vector<8x128xi32>
      %735 = arith.select %733, %731, %734 : vector<8x128xi1>, vector<8x128xi32>
      %cst_391 = arith.constant dense<2147483647> : vector<8xi32>
      %736 = vector.multi_reduction <minsi>, %735, %cst_391 [1] : vector<8x128xi32> to vector<8xi32>
      %737 = vector.shape_cast %736 : vector<8xi32> to vector<8x1xi32>
      %738 = vector.broadcast %737 : vector<8x1xi32> to vector<8x128xi32>
      %739 = arith.cmpi eq, %731, %738 : vector<8x128xi32>
      %740 = arith.extui %739 : vector<8x128xi1> to vector<8x128xi32>
      %741 = arith.sitofp %740 : vector<8x128xi32> to vector<8x128xf32>
      %742 = arith.truncf %741 : vector<8x128xf32> to vector<8x128xbf16>
      %c0_392 = arith.constant 0 : index
      %c0_393 = arith.constant 0 : index
      %743 = vector.load %arg3[%c0_392, %c0_393] : memref<128x128xbf16, #tpu.memory_space<vmem>>, vector<128x128xbf16>
      %cst_394 = arith.constant dense<0.000000e+00> : vector<8x128xf32>
      %744 = tpu.matmul %742, %743, %cst_394 {dimension_numbers = #tpu.dot_dimension_numbers<[1], [0], [0], [1], [0, 0, 1, 1], [], []>} : vector<8x128xbf16>, vector<128x128xbf16>, vector<8x128xf32> -> vector<8x128xf32>
      %745 = arith.truncf %744 : vector<8x128xf32> to vector<8x128xbf16>
      %c0_395 = arith.constant 0 : index
      %c0_396 = arith.constant 0 : index
      %746 = vector.load %arg12[%c0_395, %c0_396] : memref<8x256xbf16, #tpu.memory_space<vmem>>, vector<8x128xbf16>
      tpu.vector_store %arg12[%c0_395, %c0_396], %745 {strides = array<i32>} : memref<8x256xbf16, #tpu.memory_space<vmem>>, vector<8x128xbf16>,
    } else {
    }
    %c4_i32_296 = arith.constant 4 : i32
    %c0_297 = arith.constant 0 : index
    %c0_298 = arith.constant 0 : index
    %555 = vector.load %arg12[%c0_297, %c0_298] : memref<8x256xbf16, #tpu.memory_space<vmem>>, vector<8x256xbf16>
    %c0_299 = arith.constant 0 : index
    %c0_300 = arith.constant 0 : index
    %556 = vector.load %arg11[%c0_299, %c0_300] : memref<8x128xf32, #tpu.memory_space<vmem>>, vector<8x128xf32>
    %c0_301 = arith.constant 0 : index
    %c0_302 = arith.constant 0 : index
    %557 = vector.load %arg6[%c0_301, %c0_302] : memref<256x512xbf16, #tpu.memory_space<vmem>>, vector<256x512xbf16>
    %cst_303 = arith.constant dense<0.000000e+00> : vector<8x512xf32>
    %558 = tpu.matmul %555, %557, %cst_303 {dimension_numbers = #tpu.dot_dimension_numbers<[1], [0], [0], [1], [0, 0, 1, 1], [], []>} : vector<8x256xbf16>, vector<256x512xbf16>, vector<8x512xf32> -> vector<8x512xf32>
    %c0_304 = arith.constant 0 : index
    %c0_305 = arith.constant 0 : index
    %559 = vector.load %arg7[%c0_304, %c0_305] : memref<1x512xf32, #tpu.memory_space<vmem>>, vector<1x512xf32>
    %560 = vector.broadcast %559 : vector<1x512xf32> to vector<8x512xf32>
    %561 = arith.addf %558, %560 : vector<8x512xf32>
    %562 = vector.extract_strided_slice %561 {offsets = [0, 0], sizes = [8, 128], strides = [1, 1]} : vector<8x512xf32> to vector<8x128xf32>
    %563 = arith.negf %562 : vector<8x128xf32>
    %564 = math.exp %563 : vector<8x128xf32>
    %cst_306 = arith.constant 1.000000e+00 : f32
    %565 = vector.broadcast %cst_306 : f32 to vector<8x128xf32>
    %566 = arith.addf %565, %564 : vector<8x128xf32>
    %567 = arith.divf %565, %566 : vector<8x128xf32>
    %568 = vector.extract_strided_slice %561 {offsets = [0, 128], sizes = [8, 128], strides = [1, 1]} : vector<8x512xf32> to vector<8x128xf32>
    %569 = arith.negf %568 : vector<8x128xf32>
    %570 = math.exp %569 : vector<8x128xf32>
    %cst_307 = arith.constant 1.000000e+00 : f32
    %571 = vector.broadcast %cst_307 : f32 to vector<8x128xf32>
    %572 = arith.addf %571, %570 : vector<8x128xf32>
    %573 = arith.divf %571, %572 : vector<8x128xf32>
    %574 = vector.extract_strided_slice %561 {offsets = [0, 256], sizes = [8, 128], strides = [1, 1]} : vector<8x512xf32> to vector<8x128xf32>
    %575 = math.tanh %574 : vector<8x128xf32>
    %576 = vector.extract_strided_slice %561 {offsets = [0, 384], sizes = [8, 128], strides = [1, 1]} : vector<8x512xf32> to vector<8x128xf32>
    %577 = arith.negf %576 : vector<8x128xf32>
    %578 = math.exp %577 : vector<8x128xf32>
    %cst_308 = arith.constant 1.000000e+00 : f32
    %579 = vector.broadcast %cst_308 : f32 to vector<8x128xf32>
    %580 = arith.addf %579, %578 : vector<8x128xf32>
    %581 = arith.divf %579, %580 : vector<8x128xf32>
    %582 = arith.mulf %573, %556 : vector<8x128xf32>
    %583 = arith.mulf %567, %575 : vector<8x128xf32>
    %584 = arith.addf %582, %583 : vector<8x128xf32>
    %585 = math.tanh %584 : vector<8x128xf32>
    %586 = arith.mulf %581, %585 : vector<8x128xf32>
    %c0_309 = arith.constant 0 : index
    %c0_310 = arith.constant 0 : index
    %587 = vector.load %arg11[%c0_309, %c0_310] : memref<8x128xf32, #tpu.memory_space<vmem>>, vector<8x128xf32>
    tpu.vector_store %arg11[%c0_309, %c0_310], %584 {strides = array<i32>} : memref<8x128xf32, #tpu.memory_space<vmem>>, vector<8x128xf32>,
    %588 = arith.truncf %586 : vector<8x128xf32> to vector<8x128xbf16>
    %c0_311 = arith.constant 0 : index
    %c128_312 = arith.constant 128 : index
    %589 = vector.load %arg12[%c0_311, %c128_312] : memref<8x256xbf16, #tpu.memory_space<vmem>>, vector<8x128xbf16>
    tpu.vector_store %arg12[%c0_311, %c128_312], %588 {strides = array<i32>} : memref<8x256xbf16, #tpu.memory_space<vmem>>, vector<8x128xbf16>,
    %590 = arith.truncf %586 : vector<8x128xf32> to vector<8x128xbf16>
    %c0_313 = arith.constant 0 : index
    %c0_314 = arith.constant 0 : index
    %591 = vector.load %arg8[%c0_313, %c0_314] : memref<128x128xbf16, #tpu.memory_space<vmem>>, vector<128x128xbf16>
    %cst_315 = arith.constant dense<0.000000e+00> : vector<8x128xf32>
    %592 = tpu.matmul %590, %591, %cst_315 {dimension_numbers = #tpu.dot_dimension_numbers<[1], [0], [0], [1], [0, 0, 1, 1], [], []>} : vector<8x128xbf16>, vector<128x128xbf16>, vector<8x128xf32> -> vector<8x128xf32>
    %c0_316 = arith.constant 0 : index
    %c0_317 = arith.constant 0 : index
    %593 = vector.load %arg9[%c0_316, %c0_317] : memref<1x128xf32, #tpu.memory_space<vmem>>, vector<1x128xf32>
    %594 = vector.broadcast %593 : vector<1x128xf32> to vector<8x128xf32>
    %595 = arith.addf %592, %594 : vector<8x128xf32>
    %c1_i32_318 = arith.constant 1 : i32
    %596 = arith.addi %c4_i32_296, %c1_i32_318 : i32
    %597 = arith.index_cast %596 : i32 to index
    %c0_319 = arith.constant 0 : index
    %c0_320 = arith.constant 0 : index
    %598 = vector.load %arg10[%597, %c0_319, %c0_320] : memref<8x8x128xf32, #tpu.memory_space<vmem>>, vector<1x8x128xf32>
    %599 = vector.shape_cast %598 : vector<1x8x128xf32> to vector<8x128xf32>
    %600 = vector.shape_cast %595 : vector<8x128xf32> to vector<1x8x128xf32>
    tpu.vector_store %arg10[%597, %c0_319, %c0_320], %600 {strides = array<i32>} : memref<8x8x128xf32, #tpu.memory_space<vmem>>, vector<1x8x128xf32>,
    %c6_i32_321 = arith.constant 6 : i32
    %601 = arith.cmpi slt, %c4_i32_296, %c6_i32_321 : i32
    %c1_i32_322 = arith.constant 1 : i32
    %602 = arith.addi %c4_i32_296, %c1_i32_322 : i32
    %603 = arith.index_cast %602 : i32 to index
    %604 = memref.load %arg0[%603] : memref<8xi32, #tpu.memory_space<smem>>
    %c0_i32_323 = arith.constant 0 : i32
    %605 = arith.cmpi ne, %604, %c0_i32_323 : i32
    %606 = arith.andi %601, %605 : i1
    %607 = arith.extui %606 : i1 to i32
    %c0_i32_324 = arith.constant 0 : i32
    %608 = arith.cmpi ne, %607, %c0_i32_324 : i32
    scf.if %608 {
      %c1_i32_390 = arith.constant 1 : i32
      %729 = arith.addi %c4_i32_296, %c1_i32_390 : i32
      %730 = arith.index_cast %729 : i32 to index
      %c0_391 = arith.constant 0 : index
      %c0_392 = arith.constant 0 : index
      %731 = vector.load %arg2[%730, %c0_391, %c0_392] : memref<8x8x128xbf16, #tpu.memory_space<vmem>>, vector<1x8x128xbf16>
      %732 = vector.shape_cast %731 : vector<1x8x128xbf16> to vector<8x128xbf16>
      %c0_393 = arith.constant 0 : index
      %c0_394 = arith.constant 0 : index
      %733 = vector.load %arg12[%c0_393, %c0_394] : memref<8x256xbf16, #tpu.memory_space<vmem>>, vector<8x128xbf16>
      tpu.vector_store %arg12[%c0_393, %c0_394], %732 {strides = array<i32>} : memref<8x256xbf16, #tpu.memory_space<vmem>>, vector<8x128xbf16>,
    } else {
    }
    %c0_i32_325 = arith.constant 0 : i32
    %609 = arith.cmpi eq, %604, %c0_i32_325 : i32
    %610 = arith.andi %601, %609 : i1
    %611 = arith.extui %610 : i1 to i32
    %c0_i32_326 = arith.constant 0 : i32
    %612 = arith.cmpi ne, %611, %c0_i32_326 : i32
    scf.if %612 {
      %cst_390 = arith.constant dense<0xFF800000> : vector<8xf32>
      %729 = vector.multi_reduction <maximumf>, %595, %cst_390 [1] : vector<8x128xf32> to vector<8xf32>
      %730 = vector.shape_cast %729 : vector<8xf32> to vector<8x1xf32>
      %731 = tpu.iota {dimensions = array<i32: 1>} : vector<8x128xi32>
      %732 = vector.broadcast %730 : vector<8x1xf32> to vector<8x128xf32>
      %733 = arith.cmpf oeq, %595, %732 : vector<8x128xf32>
      %c128_i32 = arith.constant 128 : i32
      %734 = vector.broadcast %c128_i32 : i32 to vector<8x128xi32>
      %735 = arith.select %733, %731, %734 : vector<8x128xi1>, vector<8x128xi32>
      %cst_391 = arith.constant dense<2147483647> : vector<8xi32>
      %736 = vector.multi_reduction <minsi>, %735, %cst_391 [1] : vector<8x128xi32> to vector<8xi32>
      %737 = vector.shape_cast %736 : vector<8xi32> to vector<8x1xi32>
      %738 = vector.broadcast %737 : vector<8x1xi32> to vector<8x128xi32>
      %739 = arith.cmpi eq, %731, %738 : vector<8x128xi32>
      %740 = arith.extui %739 : vector<8x128xi1> to vector<8x128xi32>
      %741 = arith.sitofp %740 : vector<8x128xi32> to vector<8x128xf32>
      %742 = arith.truncf %741 : vector<8x128xf32> to vector<8x128xbf16>
      %c0_392 = arith.constant 0 : index
      %c0_393 = arith.constant 0 : index
      %743 = vector.load %arg3[%c0_392, %c0_393] : memref<128x128xbf16, #tpu.memory_space<vmem>>, vector<128x128xbf16>
      %cst_394 = arith.constant dense<0.000000e+00> : vector<8x128xf32>
      %744 = tpu.matmul %742, %743, %cst_394 {dimension_numbers = #tpu.dot_dimension_numbers<[1], [0], [0], [1], [0, 0, 1, 1], [], []>} : vector<8x128xbf16>, vector<128x128xbf16>, vector<8x128xf32> -> vector<8x128xf32>
      %745 = arith.truncf %744 : vector<8x128xf32> to vector<8x128xbf16>
      %c0_395 = arith.constant 0 : index
      %c0_396 = arith.constant 0 : index
      %746 = vector.load %arg12[%c0_395, %c0_396] : memref<8x256xbf16, #tpu.memory_space<vmem>>, vector<8x128xbf16>
      tpu.vector_store %arg12[%c0_395, %c0_396], %745 {strides = array<i32>} : memref<8x256xbf16, #tpu.memory_space<vmem>>, vector<8x128xbf16>,
    } else {
    }
    %c5_i32_327 = arith.constant 5 : i32
    %c0_328 = arith.constant 0 : index
    %c0_329 = arith.constant 0 : index
    %613 = vector.load %arg12[%c0_328, %c0_329] : memref<8x256xbf16, #tpu.memory_space<vmem>>, vector<8x256xbf16>
    %c0_330 = arith.constant 0 : index
    %c0_331 = arith.constant 0 : index
    %614 = vector.load %arg11[%c0_330, %c0_331] : memref<8x128xf32, #tpu.memory_space<vmem>>, vector<8x128xf32>
    %c0_332 = arith.constant 0 : index
    %c0_333 = arith.constant 0 : index
    %615 = vector.load %arg6[%c0_332, %c0_333] : memref<256x512xbf16, #tpu.memory_space<vmem>>, vector<256x512xbf16>
    %cst_334 = arith.constant dense<0.000000e+00> : vector<8x512xf32>
    %616 = tpu.matmul %613, %615, %cst_334 {dimension_numbers = #tpu.dot_dimension_numbers<[1], [0], [0], [1], [0, 0, 1, 1], [], []>} : vector<8x256xbf16>, vector<256x512xbf16>, vector<8x512xf32> -> vector<8x512xf32>
    %c0_335 = arith.constant 0 : index
    %c0_336 = arith.constant 0 : index
    %617 = vector.load %arg7[%c0_335, %c0_336] : memref<1x512xf32, #tpu.memory_space<vmem>>, vector<1x512xf32>
    %618 = vector.broadcast %617 : vector<1x512xf32> to vector<8x512xf32>
    %619 = arith.addf %616, %618 : vector<8x512xf32>
    %620 = vector.extract_strided_slice %619 {offsets = [0, 0], sizes = [8, 128], strides = [1, 1]} : vector<8x512xf32> to vector<8x128xf32>
    %621 = arith.negf %620 : vector<8x128xf32>
    %622 = math.exp %621 : vector<8x128xf32>
    %cst_337 = arith.constant 1.000000e+00 : f32
    %623 = vector.broadcast %cst_337 : f32 to vector<8x128xf32>
    %624 = arith.addf %623, %622 : vector<8x128xf32>
    %625 = arith.divf %623, %624 : vector<8x128xf32>
    %626 = vector.extract_strided_slice %619 {offsets = [0, 128], sizes = [8, 128], strides = [1, 1]} : vector<8x512xf32> to vector<8x128xf32>
    %627 = arith.negf %626 : vector<8x128xf32>
    %628 = math.exp %627 : vector<8x128xf32>
    %cst_338 = arith.constant 1.000000e+00 : f32
    %629 = vector.broadcast %cst_338 : f32 to vector<8x128xf32>
    %630 = arith.addf %629, %628 : vector<8x128xf32>
    %631 = arith.divf %629, %630 : vector<8x128xf32>
    %632 = vector.extract_strided_slice %619 {offsets = [0, 256], sizes = [8, 128], strides = [1, 1]} : vector<8x512xf32> to vector<8x128xf32>
    %633 = math.tanh %632 : vector<8x128xf32>
    %634 = vector.extract_strided_slice %619 {offsets = [0, 384], sizes = [8, 128], strides = [1, 1]} : vector<8x512xf32> to vector<8x128xf32>
    %635 = arith.negf %634 : vector<8x128xf32>
    %636 = math.exp %635 : vector<8x128xf32>
    %cst_339 = arith.constant 1.000000e+00 : f32
    %637 = vector.broadcast %cst_339 : f32 to vector<8x128xf32>
    %638 = arith.addf %637, %636 : vector<8x128xf32>
    %639 = arith.divf %637, %638 : vector<8x128xf32>
    %640 = arith.mulf %631, %614 : vector<8x128xf32>
    %641 = arith.mulf %625, %633 : vector<8x128xf32>
    %642 = arith.addf %640, %641 : vector<8x128xf32>
    %643 = math.tanh %642 : vector<8x128xf32>
    %644 = arith.mulf %639, %643 : vector<8x128xf32>
    %c0_340 = arith.constant 0 : index
    %c0_341 = arith.constant 0 : index
    %645 = vector.load %arg11[%c0_340, %c0_341] : memref<8x128xf32, #tpu.memory_space<vmem>>, vector<8x128xf32>
    tpu.vector_store %arg11[%c0_340, %c0_341], %642 {strides = array<i32>} : memref<8x128xf32, #tpu.memory_space<vmem>>, vector<8x128xf32>,
    %646 = arith.truncf %644 : vector<8x128xf32> to vector<8x128xbf16>
    %c0_342 = arith.constant 0 : index
    %c128_343 = arith.constant 128 : index
    %647 = vector.load %arg12[%c0_342, %c128_343] : memref<8x256xbf16, #tpu.memory_space<vmem>>, vector<8x128xbf16>
    tpu.vector_store %arg12[%c0_342, %c128_343], %646 {strides = array<i32>} : memref<8x256xbf16, #tpu.memory_space<vmem>>, vector<8x128xbf16>,
    %648 = arith.truncf %644 : vector<8x128xf32> to vector<8x128xbf16>
    %c0_344 = arith.constant 0 : index
    %c0_345 = arith.constant 0 : index
    %649 = vector.load %arg8[%c0_344, %c0_345] : memref<128x128xbf16, #tpu.memory_space<vmem>>, vector<128x128xbf16>
    %cst_346 = arith.constant dense<0.000000e+00> : vector<8x128xf32>
    %650 = tpu.matmul %648, %649, %cst_346 {dimension_numbers = #tpu.dot_dimension_numbers<[1], [0], [0], [1], [0, 0, 1, 1], [], []>} : vector<8x128xbf16>, vector<128x128xbf16>, vector<8x128xf32> -> vector<8x128xf32>
    %c0_347 = arith.constant 0 : index
    %c0_348 = arith.constant 0 : index
    %651 = vector.load %arg9[%c0_347, %c0_348] : memref<1x128xf32, #tpu.memory_space<vmem>>, vector<1x128xf32>
    %652 = vector.broadcast %651 : vector<1x128xf32> to vector<8x128xf32>
    %653 = arith.addf %650, %652 : vector<8x128xf32>
    %c1_i32_349 = arith.constant 1 : i32
    %654 = arith.addi %c5_i32_327, %c1_i32_349 : i32
    %655 = arith.index_cast %654 : i32 to index
    %c0_350 = arith.constant 0 : index
    %c0_351 = arith.constant 0 : index
    %656 = vector.load %arg10[%655, %c0_350, %c0_351] : memref<8x8x128xf32, #tpu.memory_space<vmem>>, vector<1x8x128xf32>
    %657 = vector.shape_cast %656 : vector<1x8x128xf32> to vector<8x128xf32>
    %658 = vector.shape_cast %653 : vector<8x128xf32> to vector<1x8x128xf32>
    tpu.vector_store %arg10[%655, %c0_350, %c0_351], %658 {strides = array<i32>} : memref<8x8x128xf32, #tpu.memory_space<vmem>>, vector<1x8x128xf32>,
    %c6_i32_352 = arith.constant 6 : i32
    %659 = arith.cmpi slt, %c5_i32_327, %c6_i32_352 : i32
    %c1_i32_353 = arith.constant 1 : i32
    %660 = arith.addi %c5_i32_327, %c1_i32_353 : i32
    %661 = arith.index_cast %660 : i32 to index
    %662 = memref.load %arg0[%661] : memref<8xi32, #tpu.memory_space<smem>>
    %c0_i32_354 = arith.constant 0 : i32
    %663 = arith.cmpi ne, %662, %c0_i32_354 : i32
    %664 = arith.andi %659, %663 : i1
    %665 = arith.extui %664 : i1 to i32
    %c0_i32_355 = arith.constant 0 : i32
    %666 = arith.cmpi ne, %665, %c0_i32_355 : i32
    scf.if %666 {
      %c1_i32_390 = arith.constant 1 : i32
      %729 = arith.addi %c5_i32_327, %c1_i32_390 : i32
      %730 = arith.index_cast %729 : i32 to index
      %c0_391 = arith.constant 0 : index
      %c0_392 = arith.constant 0 : index
      %731 = vector.load %arg2[%730, %c0_391, %c0_392] : memref<8x8x128xbf16, #tpu.memory_space<vmem>>, vector<1x8x128xbf16>
      %732 = vector.shape_cast %731 : vector<1x8x128xbf16> to vector<8x128xbf16>
      %c0_393 = arith.constant 0 : index
      %c0_394 = arith.constant 0 : index
      %733 = vector.load %arg12[%c0_393, %c0_394] : memref<8x256xbf16, #tpu.memory_space<vmem>>, vector<8x128xbf16>
      tpu.vector_store %arg12[%c0_393, %c0_394], %732 {strides = array<i32>} : memref<8x256xbf16, #tpu.memory_space<vmem>>, vector<8x128xbf16>,
    } else {
    }
    %c0_i32_356 = arith.constant 0 : i32
    %667 = arith.cmpi eq, %662, %c0_i32_356 : i32
    %668 = arith.andi %659, %667 : i1
    %669 = arith.extui %668 : i1 to i32
    %c0_i32_357 = arith.constant 0 : i32
    %670 = arith.cmpi ne, %669, %c0_i32_357 : i32
    scf.if %670 {
      %cst_390 = arith.constant dense<0xFF800000> : vector<8xf32>
      %729 = vector.multi_reduction <maximumf>, %653, %cst_390 [1] : vector<8x128xf32> to vector<8xf32>
      %730 = vector.shape_cast %729 : vector<8xf32> to vector<8x1xf32>
      %731 = tpu.iota {dimensions = array<i32: 1>} : vector<8x128xi32>
      %732 = vector.broadcast %730 : vector<8x1xf32> to vector<8x128xf32>
      %733 = arith.cmpf oeq, %653, %732 : vector<8x128xf32>
      %c128_i32 = arith.constant 128 : i32
      %734 = vector.broadcast %c128_i32 : i32 to vector<8x128xi32>
      %735 = arith.select %733, %731, %734 : vector<8x128xi1>, vector<8x128xi32>
      %cst_391 = arith.constant dense<2147483647> : vector<8xi32>
      %736 = vector.multi_reduction <minsi>, %735, %cst_391 [1] : vector<8x128xi32> to vector<8xi32>
      %737 = vector.shape_cast %736 : vector<8xi32> to vector<8x1xi32>
      %738 = vector.broadcast %737 : vector<8x1xi32> to vector<8x128xi32>
      %739 = arith.cmpi eq, %731, %738 : vector<8x128xi32>
      %740 = arith.extui %739 : vector<8x128xi1> to vector<8x128xi32>
      %741 = arith.sitofp %740 : vector<8x128xi32> to vector<8x128xf32>
      %742 = arith.truncf %741 : vector<8x128xf32> to vector<8x128xbf16>
      %c0_392 = arith.constant 0 : index
      %c0_393 = arith.constant 0 : index
      %743 = vector.load %arg3[%c0_392, %c0_393] : memref<128x128xbf16, #tpu.memory_space<vmem>>, vector<128x128xbf16>
      %cst_394 = arith.constant dense<0.000000e+00> : vector<8x128xf32>
      %744 = tpu.matmul %742, %743, %cst_394 {dimension_numbers = #tpu.dot_dimension_numbers<[1], [0], [0], [1], [0, 0, 1, 1], [], []>} : vector<8x128xbf16>, vector<128x128xbf16>, vector<8x128xf32> -> vector<8x128xf32>
      %745 = arith.truncf %744 : vector<8x128xf32> to vector<8x128xbf16>
      %c0_395 = arith.constant 0 : index
      %c0_396 = arith.constant 0 : index
      %746 = vector.load %arg12[%c0_395, %c0_396] : memref<8x256xbf16, #tpu.memory_space<vmem>>, vector<8x128xbf16>
      tpu.vector_store %arg12[%c0_395, %c0_396], %745 {strides = array<i32>} : memref<8x256xbf16, #tpu.memory_space<vmem>>, vector<8x128xbf16>,
    } else {
    }
    %c6_i32_358 = arith.constant 6 : i32
    %c0_359 = arith.constant 0 : index
    %c0_360 = arith.constant 0 : index
    %671 = vector.load %arg12[%c0_359, %c0_360] : memref<8x256xbf16, #tpu.memory_space<vmem>>, vector<8x256xbf16>
    %c0_361 = arith.constant 0 : index
    %c0_362 = arith.constant 0 : index
    %672 = vector.load %arg11[%c0_361, %c0_362] : memref<8x128xf32, #tpu.memory_space<vmem>>, vector<8x128xf32>
    %c0_363 = arith.constant 0 : index
    %c0_364 = arith.constant 0 : index
    %673 = vector.load %arg6[%c0_363, %c0_364] : memref<256x512xbf16, #tpu.memory_space<vmem>>, vector<256x512xbf16>
    %cst_365 = arith.constant dense<0.000000e+00> : vector<8x512xf32>
    %674 = tpu.matmul %671, %673, %cst_365 {dimension_numbers = #tpu.dot_dimension_numbers<[1], [0], [0], [1], [0, 0, 1, 1], [], []>} : vector<8x256xbf16>, vector<256x512xbf16>, vector<8x512xf32> -> vector<8x512xf32>
    %c0_366 = arith.constant 0 : index
    %c0_367 = arith.constant 0 : index
    %675 = vector.load %arg7[%c0_366, %c0_367] : memref<1x512xf32, #tpu.memory_space<vmem>>, vector<1x512xf32>
    %676 = vector.broadcast %675 : vector<1x512xf32> to vector<8x512xf32>
    %677 = arith.addf %674, %676 : vector<8x512xf32>
    %678 = vector.extract_strided_slice %677 {offsets = [0, 0], sizes = [8, 128], strides = [1, 1]} : vector<8x512xf32> to vector<8x128xf32>
    %679 = arith.negf %678 : vector<8x128xf32>
    %680 = math.exp %679 : vector<8x128xf32>
    %cst_368 = arith.constant 1.000000e+00 : f32
    %681 = vector.broadcast %cst_368 : f32 to vector<8x128xf32>
    %682 = arith.addf %681, %680 : vector<8x128xf32>
    %683 = arith.divf %681, %682 : vector<8x128xf32>
    %684 = vector.extract_strided_slice %677 {offsets = [0, 128], sizes = [8, 128], strides = [1, 1]} : vector<8x512xf32> to vector<8x128xf32>
    %685 = arith.negf %684 : vector<8x128xf32>
    %686 = math.exp %685 : vector<8x128xf32>
    %cst_369 = arith.constant 1.000000e+00 : f32
    %687 = vector.broadcast %cst_369 : f32 to vector<8x128xf32>
    %688 = arith.addf %687, %686 : vector<8x128xf32>
    %689 = arith.divf %687, %688 : vector<8x128xf32>
    %690 = vector.extract_strided_slice %677 {offsets = [0, 256], sizes = [8, 128], strides = [1, 1]} : vector<8x512xf32> to vector<8x128xf32>
    %691 = math.tanh %690 : vector<8x128xf32>
    %692 = vector.extract_strided_slice %677 {offsets = [0, 384], sizes = [8, 128], strides = [1, 1]} : vector<8x512xf32> to vector<8x128xf32>
    %693 = arith.negf %692 : vector<8x128xf32>
    %694 = math.exp %693 : vector<8x128xf32>
    %cst_370 = arith.constant 1.000000e+00 : f32
    %695 = vector.broadcast %cst_370 : f32 to vector<8x128xf32>
    %696 = arith.addf %695, %694 : vector<8x128xf32>
    %697 = arith.divf %695, %696 : vector<8x128xf32>
    %698 = arith.mulf %689, %672 : vector<8x128xf32>
    %699 = arith.mulf %683, %691 : vector<8x128xf32>
    %700 = arith.addf %698, %699 : vector<8x128xf32>
    %701 = math.tanh %700 : vector<8x128xf32>
    %702 = arith.mulf %697, %701 : vector<8x128xf32>
    %c0_371 = arith.constant 0 : index
    %c0_372 = arith.constant 0 : index
    %703 = vector.load %arg11[%c0_371, %c0_372] : memref<8x128xf32, #tpu.memory_space<vmem>>, vector<8x128xf32>
    tpu.vector_store %arg11[%c0_371, %c0_372], %700 {strides = array<i32>} : memref<8x128xf32, #tpu.memory_space<vmem>>, vector<8x128xf32>,
    %704 = arith.truncf %702 : vector<8x128xf32> to vector<8x128xbf16>
    %c0_373 = arith.constant 0 : index
    %c128_374 = arith.constant 128 : index
    %705 = vector.load %arg12[%c0_373, %c128_374] : memref<8x256xbf16, #tpu.memory_space<vmem>>, vector<8x128xbf16>
    tpu.vector_store %arg12[%c0_373, %c128_374], %704 {strides = array<i32>} : memref<8x256xbf16, #tpu.memory_space<vmem>>, vector<8x128xbf16>,
    %706 = arith.truncf %702 : vector<8x128xf32> to vector<8x128xbf16>
    %c0_375 = arith.constant 0 : index
    %c0_376 = arith.constant 0 : index
    %707 = vector.load %arg8[%c0_375, %c0_376] : memref<128x128xbf16, #tpu.memory_space<vmem>>, vector<128x128xbf16>
    %cst_377 = arith.constant dense<0.000000e+00> : vector<8x128xf32>
    %708 = tpu.matmul %706, %707, %cst_377 {dimension_numbers = #tpu.dot_dimension_numbers<[1], [0], [0], [1], [0, 0, 1, 1], [], []>} : vector<8x128xbf16>, vector<128x128xbf16>, vector<8x128xf32> -> vector<8x128xf32>
    %c0_378 = arith.constant 0 : index
    %c0_379 = arith.constant 0 : index
    %709 = vector.load %arg9[%c0_378, %c0_379] : memref<1x128xf32, #tpu.memory_space<vmem>>, vector<1x128xf32>
    %710 = vector.broadcast %709 : vector<1x128xf32> to vector<8x128xf32>
    %711 = arith.addf %708, %710 : vector<8x128xf32>
    %c1_i32_380 = arith.constant 1 : i32
    %712 = arith.addi %c6_i32_358, %c1_i32_380 : i32
    %713 = arith.index_cast %712 : i32 to index
    %c0_381 = arith.constant 0 : index
    %c0_382 = arith.constant 0 : index
    %714 = vector.load %arg10[%713, %c0_381, %c0_382] : memref<8x8x128xf32, #tpu.memory_space<vmem>>, vector<1x8x128xf32>
    %715 = vector.shape_cast %714 : vector<1x8x128xf32> to vector<8x128xf32>
    %716 = vector.shape_cast %711 : vector<8x128xf32> to vector<1x8x128xf32>
    tpu.vector_store %arg10[%713, %c0_381, %c0_382], %716 {strides = array<i32>} : memref<8x8x128xf32, #tpu.memory_space<vmem>>, vector<1x8x128xf32>,
    %c6_i32_383 = arith.constant 6 : i32
    %717 = arith.cmpi slt, %c6_i32_358, %c6_i32_383 : i32
    %c1_i32_384 = arith.constant 1 : i32
    %718 = arith.addi %c6_i32_358, %c1_i32_384 : i32
    %719 = arith.index_cast %718 : i32 to index
    %720 = memref.load %arg0[%719] : memref<8xi32, #tpu.memory_space<smem>>
    %c0_i32_385 = arith.constant 0 : i32
    %721 = arith.cmpi ne, %720, %c0_i32_385 : i32
    %722 = arith.andi %717, %721 : i1
    %723 = arith.extui %722 : i1 to i32
    %c0_i32_386 = arith.constant 0 : i32
    %724 = arith.cmpi ne, %723, %c0_i32_386 : i32
    scf.if %724 {
      %c1_i32_390 = arith.constant 1 : i32
      %729 = arith.addi %c6_i32_358, %c1_i32_390 : i32
      %730 = arith.index_cast %729 : i32 to index
      %c0_391 = arith.constant 0 : index
      %c0_392 = arith.constant 0 : index
      %731 = vector.load %arg2[%730, %c0_391, %c0_392] : memref<8x8x128xbf16, #tpu.memory_space<vmem>>, vector<1x8x128xbf16>
      %732 = vector.shape_cast %731 : vector<1x8x128xbf16> to vector<8x128xbf16>
      %c0_393 = arith.constant 0 : index
      %c0_394 = arith.constant 0 : index
      %733 = vector.load %arg12[%c0_393, %c0_394] : memref<8x256xbf16, #tpu.memory_space<vmem>>, vector<8x128xbf16>
      tpu.vector_store %arg12[%c0_393, %c0_394], %732 {strides = array<i32>} : memref<8x256xbf16, #tpu.memory_space<vmem>>, vector<8x128xbf16>,
    } else {
    }
    %c0_i32_387 = arith.constant 0 : i32
    %725 = arith.cmpi eq, %720, %c0_i32_387 : i32
    %726 = arith.andi %717, %725 : i1
    %727 = arith.extui %726 : i1 to i32
    %c0_i32_388 = arith.constant 0 : i32
    %728 = arith.cmpi ne, %727, %c0_i32_388 : i32
    scf.if %728 {
      %cst_390 = arith.constant dense<0xFF800000> : vector<8xf32>
      %729 = vector.multi_reduction <maximumf>, %711, %cst_390 [1] : vector<8x128xf32> to vector<8xf32>
      %730 = vector.shape_cast %729 : vector<8xf32> to vector<8x1xf32>
      %731 = tpu.iota {dimensions = array<i32: 1>} : vector<8x128xi32>
      %732 = vector.broadcast %730 : vector<8x1xf32> to vector<8x128xf32>
      %733 = arith.cmpf oeq, %711, %732 : vector<8x128xf32>
      %c128_i32 = arith.constant 128 : i32
      %734 = vector.broadcast %c128_i32 : i32 to vector<8x128xi32>
      %735 = arith.select %733, %731, %734 : vector<8x128xi1>, vector<8x128xi32>
      %cst_391 = arith.constant dense<2147483647> : vector<8xi32>
      %736 = vector.multi_reduction <minsi>, %735, %cst_391 [1] : vector<8x128xi32> to vector<8xi32>
      %737 = vector.shape_cast %736 : vector<8xi32> to vector<8x1xi32>
      %738 = vector.broadcast %737 : vector<8x1xi32> to vector<8x128xi32>
      %739 = arith.cmpi eq, %731, %738 : vector<8x128xi32>
      %740 = arith.extui %739 : vector<8x128xi1> to vector<8x128xi32>
      %741 = arith.sitofp %740 : vector<8x128xi32> to vector<8x128xf32>
      %742 = arith.truncf %741 : vector<8x128xf32> to vector<8x128xbf16>
      %c0_392 = arith.constant 0 : index
      %c0_393 = arith.constant 0 : index
      %743 = vector.load %arg3[%c0_392, %c0_393] : memref<128x128xbf16, #tpu.memory_space<vmem>>, vector<128x128xbf16>
      %cst_394 = arith.constant dense<0.000000e+00> : vector<8x128xf32>
      %744 = tpu.matmul %742, %743, %cst_394 {dimension_numbers = #tpu.dot_dimension_numbers<[1], [0], [0], [1], [0, 0, 1, 1], [], []>} : vector<8x128xbf16>, vector<128x128xbf16>, vector<8x128xf32> -> vector<8x128xf32>
      %745 = arith.truncf %744 : vector<8x128xf32> to vector<8x128xbf16>
      %c0_395 = arith.constant 0 : index
      %c0_396 = arith.constant 0 : index
      %746 = vector.load %arg12[%c0_395, %c0_396] : memref<8x256xbf16, #tpu.memory_space<vmem>>, vector<8x128xbf16>
      tpu.vector_store %arg12[%c0_395, %c0_396], %745 {strides = array<i32>} : memref<8x256xbf16, #tpu.memory_space<vmem>>, vector<8x128xbf16>,
    } else {
    }
    %c7_i32_389 = arith.constant 7 : i32
    return
  }
}

</mosaic_0001>

<llo_original>
// kernel: seq2seq_forward.1
$region0: #{seq2seq_forward.1}
  #allocation0 [shape = 'u32[]', space=smem, size = 0x4, offset = 0x4, fixed_abs, tag = 'smem constant byte address 0x4 - core index']
  #allocation1 [shape = 'u32[144,128]{1,0:T(1,128)}', space=vmem, size = 0x12000, scoped, tag = 'internal scratch']
  #allocation2 [shape = 'f32[8,128]{1,0:T(8,128)}', space=vmem, size = 0x1000, scoped, tag = 'scratch operand']
  #allocation3 [shape = 'bf16[8,256]{1,0:T(8,128)(2,1)}', space=vmem, size = 0x1000, scoped, tag = 'scratch operand']
  %s0 = inlined_call_operand.vmem [shape: s32[8], index: 0, kind: input, shape index: {}]
  %s1 = inlined_call_operand.vmem [shape: bf16[8,8,128], index: 1, kind: input, shape index: {}]
  %s2 = inlined_call_operand.vmem [shape: bf16[8,8,128], index: 2, kind: input, shape index: {}]
  %s3 = inlined_call_operand.vmem [shape: bf16[128,128], index: 3, kind: input, shape index: {}]
  %s4 = inlined_call_operand.vmem [shape: bf16[256,512], index: 4, kind: input, shape index: {}]
  %s5 = inlined_call_operand.vmem [shape: f32[1,512], index: 5, kind: input, shape index: {}]
  %s6 = inlined_call_operand.hbm [shape: bf16[256,512], index: 6, kind: input, shape index: {}]
  %s7 = inlined_call_operand.vmem [shape: f32[1,512], index: 7, kind: input, shape index: {}]
  %s8 = inlined_call_operand.vmem [shape: bf16[128,128], index: 8, kind: input, shape index: {}]
  %s9 = inlined_call_operand.vmem [shape: f32[1,128], index: 9, kind: input, shape index: {}]
  %s10 = inlined_call_operand.hbm [shape: f32[8,8,128], index: 10, kind: output, shape index: {}]
  %s11 = sld [smem:[#allocation0]]
  $region106: #{seq2seq_forward.1} parent=0
    _
  %s13 = ssub.s32 1, %s11
  %s14 = scalar_select 0, %s13, %s11
  $region1: #{seq2seq_forward.1} parent=0
    #allocation4 [shape = 'u8[512]{0}', space=smem, size = 0x200, scoped, tag = 'input window, operand 0, single buffered']
    #allocation5 [shape = 's32[1]{0}', space=sflag, size = 0x4, scoped, tag = 'scoped memory for seq2seq_forward.1']
    #allocation6 [shape = 's32[1]{0}', space=sflag, size = 0x4, scoped, tag = 'scoped memory for seq2seq_forward.1']
    #allocation7 [shape = 's32[1]{0}', space=sflag, size = 0x4, scoped, tag = 'scoped memory for seq2seq_forward.1']
    #allocation8 [shape = 'u8[262144]{0}', space=vmem, size = 0x40000, scoped, tag = 'input window, operand 6, single buffered']
    #allocation9 [shape = 'u8[32768]{0}', space=vmem, size = 0x8000, scoped, tag = 'output window, operand 0, single buffered']
    %15 = vsyncpa [#allocation7], 0
    %16 = vsyncpa [#allocation5], 0
    %17 = vsyncpa [#allocation6], 0
    // Predicated region
    $region2: #{seq2seq_forward.1} parent=1 // pred_check
      _
    $region3: #{seq2seq_forward.1} parent=1 // pred_check_branch
      %19 = sbr.rel (0) target = $region5
    $region4: #{seq2seq_forward.1} parent=1 // pred_region
      %s21 = ssub.s32 16, 16
      %22 = vsyncadd [#allocation7], %s21
      %s24 = sshll.u32 %s0, 4
      %s25 = int_to_ptr.vmem [resolvable:$true] %s24
      %27 = dma.vmem_to_smem %s25, 16, [#allocation4], [#allocation7]
    $region5: #{seq2seq_forward.1} parent=1 // pred_fallthru
      _
    // Predicated region
    $region6: #{seq2seq_forward.1} parent=1 // pred_check
      _
    $region7: #{seq2seq_forward.1} parent=1 // pred_check_branch
      %29 = sbr.rel (0) target = $region9
    $region8: #{seq2seq_forward.1} parent=1 // pred_region
      _
    $region9: #{seq2seq_forward.1} parent=1 // pred_fallthru
      _
    // Predicated region
    $region10: #{seq2seq_forward.1} parent=1 // pred_check
      _
    $region11: #{seq2seq_forward.1} parent=1 // pred_check_branch
      %31 = sbr.rel (0) target = $region13
    $region12: #{seq2seq_forward.1} parent=1 // pred_region
      _
    $region13: #{seq2seq_forward.1} parent=1 // pred_fallthru
      _
    // Predicated region
    $region14: #{seq2seq_forward.1} parent=1 // pred_check
      _
    $region15: #{seq2seq_forward.1} parent=1 // pred_check_branch
      %33 = sbr.rel (0) target = $region17
    $region16: #{seq2seq_forward.1} parent=1 // pred_region
      _
    $region17: #{seq2seq_forward.1} parent=1 // pred_fallthru
      _
    // Predicated region
    $region18: #{seq2seq_forward.1} parent=1 // pred_check
      _
    $region19: #{seq2seq_forward.1} parent=1 // pred_check_branch
      %35 = sbr.rel (0) target = $region21
    $region20: #{seq2seq_forward.1} parent=1 // pred_region
      _
    $region21: #{seq2seq_forward.1} parent=1 // pred_fallthru
      _
    // Predicated region
    $region22: #{seq2seq_forward.1} parent=1 // pred_check
      _
    $region23: #{seq2seq_forward.1} parent=1 // pred_check_branch
      %37 = sbr.rel (0) target = $region25
    $region24: #{seq2seq_forward.1} parent=1 // pred_region
      _
    $region25: #{seq2seq_forward.1} parent=1 // pred_fallthru
      _
    // Predicated region
    $region26: #{seq2seq_forward.1} parent=1 // pred_check
      _
    $region27: #{seq2seq_forward.1} parent=1 // pred_check_branch
      %39 = sbr.rel (0) target = $region29
    $region28: #{seq2seq_forward.1} parent=1 // pred_region
      %s41 = ssub.s32 8192, 8192
      %42 = vsyncadd [#allocation5], %s41
      %s43 = sshll.u32 [#allocation8], 4
      %s44 = int_to_ptr.vmem [resolvable:$true] %s43
      %49 = dma.hbm_to_vmem [thread:$0]  %s6, 8192, %s44, [#allocation5], 256, 256, 16
    $region29: #{seq2seq_forward.1} parent=1 // pred_fallthru
      _
    // Predicated region
    $region30: #{seq2seq_forward.1} parent=1 // pred_check
      _
    $region31: #{seq2seq_forward.1} parent=1 // pred_check_branch
      %51 = sbr.rel (0) target = $region33
    $region32: #{seq2seq_forward.1} parent=1 // pred_region
      _
    $region33: #{seq2seq_forward.1} parent=1 // pred_fallthru
      _
    // Predicated region
    $region34: #{seq2seq_forward.1} parent=1 // pred_check
      _
    $region35: #{seq2seq_forward.1} parent=1 // pred_check_branch
      %53 = sbr.rel (0) target = $region37
    $region36: #{seq2seq_forward.1} parent=1 // pred_region
      _
    $region37: #{seq2seq_forward.1} parent=1 // pred_fallthru
      _
    // Predicated region
    $region38: #{seq2seq_forward.1} parent=1 // pred_check
      _
    $region39: #{seq2seq_forward.1} parent=1 // pred_check_branch
      %55 = sbr.rel (0) target = $region41
    $region40: #{seq2seq_forward.1} parent=1 // pred_region
      _
    $region41: #{seq2seq_forward.1} parent=1 // pred_fallthru
      _
    // Predicated region
    $region42: #{seq2seq_forward.1} parent=1 // pred_check
      _
    $region43: #{seq2seq_forward.1} parent=1 // pred_check_branch
      %57 = sbr.rel (0) target = $region45
    $region44: #{seq2seq_forward.1} parent=1 // pred_region
      %58 = dma.done [#allocation7], 16
    $region45: #{seq2seq_forward.1} parent=1 // pred_fallthru
      _
    // Predicated region
    $region46: #{seq2seq_forward.1} parent=1 // pred_check
      _
    $region47: #{seq2seq_forward.1} parent=1 // pred_check_branch
      %60 = sbr.rel (0) target = $region49
    $region48: #{seq2seq_forward.1} parent=1 // pred_region
      %61 = dma.done [#allocation5], 8192
    $region49: #{seq2seq_forward.1} parent=1 // pred_fallthru
      _
    %62 = sfence
    %64 = vst [vmem:[#allocation2] sm:$0xff] 0.0
    %65 = vst [vmem:[#allocation3 + $0x4] sm:$0xf] 0
    %v66 = vld [vmem:[%s1] sm:$0xf]
    %67 = vst [vmem:[#allocation3] sm:$0xf] %v66
    %v68 = vld [vmem:[#allocation3] sm:$0xff]
    %v69 = vld [vmem:[#allocation2] sm:$0xff]
    %v70 = vld [vmem:[%s4] sm:$0xff]
    %v71 = vld [vmem:[%s4 + $0x8] sm:$0xff]
    %v72 = vld [vmem:[%s4 + $0x10] sm:$0xff]
    %v73 = vld [vmem:[%s4 + $0x18] sm:$0xff]
    %v74 = vld [vmem:[%s4 + $0x20] sm:$0xff]
    %v75 = vld [vmem:[%s4 + $0x28] sm:$0xff]
    %v76 = vld [vmem:[%s4 + $0x30] sm:$0xff]
    %v77 = vld [vmem:[%s4 + $0x38] sm:$0xff]
    %v78 = vld [vmem:[%s4 + $0x40] sm:$0xff]
    %v79 = vld [vmem:[%s4 + $0x48] sm:$0xff]
    %v80 = vld [vmem:[%s4 + $0x50] sm:$0xff]
    %v81 = vld [vmem:[%s4 + $0x58] sm:$0xff]
    %v82 = vld [vmem:[%s4 + $0x60] sm:$0xff]
    %v83 = vld [vmem:[%s4 + $0x68] sm:$0xff]
    %v84 = vld [vmem:[%s4 + $0x70] sm:$0xff]
    %v85 = vld [vmem:[%s4 + $0x78] sm:$0xff]
    %v86 = vld [vmem:[%s4 + $0x80] sm:$0xff]
    %v87 = vld [vmem:[%s4 + $0x88] sm:$0xff]
    %v88 = vld [vmem:[%s4 + $0x90] sm:$0xff]
    %v89 = vld [vmem:[%s4 + $0x98] sm:$0xff]
    %v90 = vld [vmem:[%s4 + $0xa0] sm:$0xff]
    %v91 = vld [vmem:[%s4 + $0xa8] sm:$0xff]
    %v92 = vld [vmem:[%s4 + $0xb0] sm:$0xff]
    %v93 = vld [vmem:[%s4 + $0xb8] sm:$0xff]
    %v94 = vld [vmem:[%s4 + $0xc0] sm:$0xff]
    %v95 = vld [vmem:[%s4 + $0xc8] sm:$0xff]
    %v96 = vld [vmem:[%s4 + $0xd0] sm:$0xff]
    %v97 = vld [vmem:[%s4 + $0xd8] sm:$0xff]
    %v98 = vld [vmem:[%s4 + $0xe0] sm:$0xff]
    %v99 = vld [vmem:[%s4 + $0xe8] sm:$0xff]
    %v100 = vld [vmem:[%s4 + $0xf0] sm:$0xff]
    %v101 = vld [vmem:[%s4 + $0xf8] sm:$0xff]
    %v102 = vld [vmem:[%s4 + $0x100] sm:$0xff]
    %v103 = vld [vmem:[%s4 + $0x108] sm:$0xff]
    %v104 = vld [vmem:[%s4 + $0x110] sm:$0xff]
    %v105 = vld [vmem:[%s4 + $0x118] sm:$0xff]
    %v106 = vld [vmem:[%s4 + $0x120] sm:$0xff]
    %v107 = vld [vmem:[%s4 + $0x128] sm:$0xff]
    %v108 = vld [vmem:[%s4 + $0x130] sm:$0xff]
    %v109 = vld [vmem:[%s4 + $0x138] sm:$0xff]
    %v110 = vld [vmem:[%s4 + $0x140] sm:$0xff]
    %v111 = vld [vmem:[%s4 + $0x148] sm:$0xff]
    %v112 = vld [vmem:[%s4 + $0x150] sm:$0xff]
    %v113 = vld [vmem:[%s4 + $0x158] sm:$0xff]
    %v114 = vld [vmem:[%s4 + $0x160] sm:$0xff]
    %v115 = vld [vmem:[%s4 + $0x168] sm:$0xff]
    %v116 = vld [vmem:[%s4 + $0x170] sm:$0xff]
    %v117 = vld [vmem:[%s4 + $0x178] sm:$0xff]
    %v118 = vld [vmem:[%s4 + $0x180] sm:$0xff]
    %v119 = vld [vmem:[%s4 + $0x188] sm:$0xff]
    %v120 = vld [vmem:[%s4 + $0x190] sm:$0xff]
    %v121 = vld [vmem:[%s4 + $0x198] sm:$0xff]
    %v122 = vld [vmem:[%s4 + $0x1a0] sm:$0xff]
    %v123 = vld [vmem:[%s4 + $0x1a8] sm:$0xff]
    %v124 = vld [vmem:[%s4 + $0x1b0] sm:$0xff]
    %v125 = vld [vmem:[%s4 + $0x1b8] sm:$0xff]
    %v126 = vld [vmem:[%s4 + $0x1c0] sm:$0xff]
    %v127 = vld [vmem:[%s4 + $0x1c8] sm:$0xff]
    %v128 = vld [vmem:[%s4 + $0x1d0] sm:$0xff]
    %v129 = vld [vmem:[%s4 + $0x1d8] sm:$0xff]
    %v130 = vld [vmem:[%s4 + $0x1e0] sm:$0xff]
    %v131 = vld [vmem:[%s4 + $0x1e8] sm:$0xff]
    %v132 = vld [vmem:[%s4 + $0x1f0] sm:$0xff]
    %v133 = vld [vmem:[%s4 + $0x1f8] sm:$0xff]
    %v134 = vld [vmem:[%s5] sm:$0xf]
    %v136 = vlaneseq
    %v137 = vshrl.u32 %v136, 7
    %v138 = vsub.s32 0, %v137
    %v139 = vrot.slane %v134, %v138
    %v140 = vlaneseq
    %v141 = vshrl.u32 %v140, 7
    %v142 = vsub.s32 1, %v141
    %v143 = vrot.slane %v134, %v142
    %v144 = vlaneseq
    %v145 = vshrl.u32 %v144, 7
    %v146 = vsub.s32 2, %v145
    %v147 = vrot.slane %v134, %v146
    %v148 = vlaneseq
    %v149 = vshrl.u32 %v148, 7
    %v150 = vsub.s32 3, %v149
    %v151 = vrot.slane %v134, %v150
    %v157 = vunpack.c.l.b16 %v68
    %v158 = vunpack.c.h.b16 %v68
    %v159 = vpack.c.b16 %v157, %v157
    %v160 = vpack.c.b16 %v158, %v158
    %v227 = vunpack.c.l.b16 %v70
    %v228 = vunpack.c.h.b16 %v70
    %v229 = vunpack.c.l.b16 %v71
    %v230 = vunpack.c.h.b16 %v71
    %v231 = vunpack.c.l.b16 %v72
    %v232 = vunpack.c.h.b16 %v72
    %v233 = vunpack.c.l.b16 %v73
    %v234 = vunpack.c.h.b16 %v73
    %v235 = vunpack.c.l.b16 %v74
    %v236 = vunpack.c.h.b16 %v74
    %v237 = vunpack.c.l.b16 %v75
    %v238 = vunpack.c.h.b16 %v75
    %v239 = vunpack.c.l.b16 %v76
    %v240 = vunpack.c.h.b16 %v76
    %v241 = vunpack.c.l.b16 %v77
    %v242 = vunpack.c.h.b16 %v77
    %v243 = vunpack.c.l.b16 %v78
    %v244 = vunpack.c.h.b16 %v78
    %v245 = vunpack.c.l.b16 %v79
    %v246 = vunpack.c.h.b16 %v79
    %v247 = vunpack.c.l.b16 %v80
    %v248 = vunpack.c.h.b16 %v80
    %v249 = vunpack.c.l.b16 %v81
    %v250 = vunpack.c.h.b16 %v81
    %v251 = vunpack.c.l.b16 %v82
    %v252 = vunpack.c.h.b16 %v82
    %v253 = vunpack.c.l.b16 %v83
    %v254 = vunpack.c.h.b16 %v83
    %v255 = vunpack.c.l.b16 %v84
    %v256 = vunpack.c.h.b16 %v84
    %v257 = vunpack.c.l.b16 %v85
    %v258 = vunpack.c.h.b16 %v85
    %v259 = vunpack.c.l.b16 %v86
    %v260 = vunpack.c.h.b16 %v86
    %v261 = vunpack.c.l.b16 %v87
    %v262 = vunpack.c.h.b16 %v87
    %v263 = vunpack.c.l.b16 %v88
    %v264 = vunpack.c.h.b16 %v88
    %v265 = vunpack.c.l.b16 %v89
    %v266 = vunpack.c.h.b16 %v89
    %v267 = vunpack.c.l.b16 %v90
    %v268 = vunpack.c.h.b16 %v90
    %v269 = vunpack.c.l.b16 %v91
    %v270 = vunpack.c.h.b16 %v91
    %v271 = vunpack.c.l.b16 %v92
    %v272 = vunpack.c.h.b16 %v92
    %v273 = vunpack.c.l.b16 %v93
    %v274 = vunpack.c.h.b16 %v93
    %v275 = vunpack.c.l.b16 %v94
    %v276 = vunpack.c.h.b16 %v94
    %v277 = vunpack.c.l.b16 %v95
    %v278 = vunpack.c.h.b16 %v95
    %v279 = vunpack.c.l.b16 %v96
    %v280 = vunpack.c.h.b16 %v96
    %v281 = vunpack.c.l.b16 %v97
    %v282 = vunpack.c.h.b16 %v97
    %v283 = vunpack.c.l.b16 %v98
    %v284 = vunpack.c.h.b16 %v98
    %v285 = vunpack.c.l.b16 %v99
    %v286 = vunpack.c.h.b16 %v99
    %v287 = vunpack.c.l.b16 %v100
    %v288 = vunpack.c.h.b16 %v100
    %v289 = vunpack.c.l.b16 %v101
    %v290 = vunpack.c.h.b16 %v101
    %v291 = vunpack.c.l.b16 %v102
    %v292 = vunpack.c.h.b16 %v102
    %v293 = vunpack.c.l.b16 %v103
    %v294 = vunpack.c.h.b16 %v103
    %v295 = vunpack.c.l.b16 %v104
    %v296 = vunpack.c.h.b16 %v104
    %v297 = vunpack.c.l.b16 %v105
    %v298 = vunpack.c.h.b16 %v105
    %v299 = vunpack.c.l.b16 %v106
    %v300 = vunpack.c.h.b16 %v106
    %v301 = vunpack.c.l.b16 %v107
    %v302 = vunpack.c.h.b16 %v107
    %v303 = vunpack.c.l.b16 %v108
    %v304 = vunpack.c.h.b16 %v108
    %v305 = vunpack.c.l.b16 %v109
    %v306 = vunpack.c.h.b16 %v109
    %v307 = vunpack.c.l.b16 %v110
    %v308 = vunpack.c.h.b16 %v110
    %v309 = vunpack.c.l.b16 %v111
    %v310 = vunpack.c.h.b16 %v111
    %v311 = vunpack.c.l.b16 %v112
    %v312 = vunpack.c.h.b16 %v112
    %v313 = vunpack.c.l.b16 %v113
    %v314 = vunpack.c.h.b16 %v113
    %v315 = vunpack.c.l.b16 %v114
    %v316 = vunpack.c.h.b16 %v114
    %v317 = vunpack.c.l.b16 %v115
    %v318 = vunpack.c.h.b16 %v115
    %v319 = vunpack.c.l.b16 %v116
    %v320 = vunpack.c.h.b16 %v116
    %v321 = vunpack.c.l.b16 %v117
    %v322 = vunpack.c.h.b16 %v117
    %v323 = vunpack.c.l.b16 %v118
    %v324 = vunpack.c.h.b16 %v118
    %v325 = vunpack.c.l.b16 %v119
    %v326 = vunpack.c.h.b16 %v119
    %v327 = vunpack.c.l.b16 %v120
    %v328 = vunpack.c.h.b16 %v120
    %v329 = vunpack.c.l.b16 %v121
    %v330 = vunpack.c.h.b16 %v121
    %v331 = vunpack.c.l.b16 %v122
    %v332 = vunpack.c.h.b16 %v122
    %v333 = vunpack.c.l.b16 %v123
    %v334 = vunpack.c.h.b16 %v123
    %v335 = vunpack.c.l.b16 %v124
    %v336 = vunpack.c.h.b16 %v124
    %v337 = vunpack.c.l.b16 %v125
    %v338 = vunpack.c.h.b16 %v125
    %v339 = vunpack.c.l.b16 %v126
    %v340 = vunpack.c.h.b16 %v126
    %v341 = vunpack.c.l.b16 %v127
    %v342 = vunpack.c.h.b16 %v127
    %v343 = vunpack.c.l.b16 %v128
    %v344 = vunpack.c.h.b16 %v128
    %v345 = vunpack.c.l.b16 %v129
    %v346 = vunpack.c.h.b16 %v129
    %v347 = vunpack.c.l.b16 %v130
    %v348 = vunpack.c.h.b16 %v130
    %v349 = vunpack.c.l.b16 %v131
    %v350 = vunpack.c.h.b16 %v131
    %v351 = vunpack.c.l.b16 %v132
    %v352 = vunpack.c.h.b16 %v132
    %v353 = vunpack.c.l.b16 %v133
    %v354 = vunpack.c.h.b16 %v133
    %v355 = vpack.c.b16 %v231, %v227
    %v356 = vpack.c.b16 %v232, %v228
    %v357 = vpack.c.b16 %v233, %v229
    %v358 = vpack.c.b16 %v234, %v230
    %v359 = vpack.c.b16 %v239, %v235
    %v360 = vpack.c.b16 %v240, %v236
    %v361 = vpack.c.b16 %v241, %v237
    %v362 = vpack.c.b16 %v242, %v238
    %v363 = vpack.c.b16 %v247, %v243
    %v364 = vpack.c.b16 %v248, %v244
    %v365 = vpack.c.b16 %v249, %v245
    %v366 = vpack.c.b16 %v250, %v246
    %v367 = vpack.c.b16 %v255, %v251
    %v368 = vpack.c.b16 %v256, %v252
    %v369 = vpack.c.b16 %v257, %v253
    %v370 = vpack.c.b16 %v258, %v254
    %v371 = vpack.c.b16 %v263, %v259
    %v372 = vpack.c.b16 %v264, %v260
    %v373 = vpack.c.b16 %v265, %v261
    %v374 = vpack.c.b16 %v266, %v262
    %v375 = vpack.c.b16 %v271, %v267
    %v376 = vpack.c.b16 %v272, %v268
    %v377 = vpack.c.b16 %v273, %v269
    %v378 = vpack.c.b16 %v274, %v270
    %v379 = vpack.c.b16 %v279, %v275
    %v380 = vpack.c.b16 %v280, %v276
    %v381 = vpack.c.b16 %v281, %v277
    %v382 = vpack.c.b16 %v282, %v278
    %v383 = vpack.c.b16 %v287, %v283
    %v384 = vpack.c.b16 %v288, %v284
    %v385 = vpack.c.b16 %v289, %v285
    %v386 = vpack.c.b16 %v290, %v286
    %v387 = vpack.c.b16 %v295, %v291
    %v388 = vpack.c.b16 %v296, %v292
    %v389 = vpack.c.b16 %v297, %v293
    %v390 = vpack.c.b16 %v298, %v294
    %v391 = vpack.c.b16 %v303, %v299
    %v392 = vpack.c.b16 %v304, %v300
    %v393 = vpack.c.b16 %v305, %v301
    %v394 = vpack.c.b16 %v306, %v302
    %v395 = vpack.c.b16 %v311, %v307
    %v396 = vpack.c.b16 %v312, %v308
    %v397 = vpack.c.b16 %v313, %v309
    %v398 = vpack.c.b16 %v314, %v310
    %v399 = vpack.c.b16 %v319, %v315
    %v400 = vpack.c.b16 %v320, %v316
    %v401 = vpack.c.b16 %v321, %v317
    %v402 = vpack.c.b16 %v322, %v318
    %v403 = vpack.c.b16 %v327, %v323
    %v404 = vpack.c.b16 %v328, %v324
    %v405 = vpack.c.b16 %v329, %v325
    %v406 = vpack.c.b16 %v330, %v326
    %v407 = vpack.c.b16 %v335, %v331
    %v408 = vpack.c.b16 %v336, %v332
    %v409 = vpack.c.b16 %v337, %v333
    %v410 = vpack.c.b16 %v338, %v334
    %v411 = vpack.c.b16 %v343, %v339
    %v412 = vpack.c.b16 %v344, %v340
    %v413 = vpack.c.b16 %v345, %v341
    %v414 = vpack.c.b16 %v346, %v342
    %v415 = vpack.c.b16 %v351, %v347
    %v416 = vpack.c.b16 %v352, %v348
    %v417 = vpack.c.b16 %v353, %v349
    %v418 = vpack.c.b16 %v354, %v350
    %483 = vmatprep.subr.bf16.mxu0 %v384
    %484 = vmatpush1.bf16.msra.mxu0 %v383
    %485 = vmatprep.subr.bf16.mxu0 %v380
    %486 = vmatpush1.bf16.msra.mxu0 %v379
    %487 = vmatprep.subr.bf16.mxu0 %v376
    %488 = vmatpush1.bf16.msra.mxu0 %v375
    %489 = vmatprep.subr.bf16.mxu0 %v372
    %490 = vmatpush1.bf16.msra.mxu0 %v371
    %491 = vmatprep.subr.bf16.mxu0 %v368
    %492 = vmatpush1.bf16.msra.mxu0 %v367
    %493 = vmatprep.subr.bf16.mxu0 %v364
    %494 = vmatpush1.bf16.msra.mxu0 %v363
    %495 = vmatprep.subr.bf16.mxu0 %v360
    %496 = vmatpush1.bf16.msra.mxu0 %v359
    %497 = vmatprep.subr.bf16.mxu0 %v356
    %498 = vmatpush1.bf16.msra.mxu0 %v355
    %499 = vmatprep.subr.bf16.mxu0 %v416
    %500 = vmatpush2.bf16.msra.mxu0 %v415
    %501 = vmatprep.subr.bf16.mxu0 %v412
    %502 = vmatpush2.bf16.msra.mxu0 %v411
    %503 = vmatprep.subr.bf16.mxu0 %v408
    %504 = vmatpush2.bf16.msra.mxu0 %v407
    %505 = vmatprep.subr.bf16.mxu0 %v404
    %506 = vmatpush2.bf16.msra.mxu0 %v403
    %507 = vmatprep.subr.bf16.mxu0 %v400
    %508 = vmatpush2.bf16.msra.mxu0 %v399
    %509 = vmatprep.subr.bf16.mxu0 %v396
    %510 = vmatpush2.bf16.msra.mxu0 %v395
    %511 = vmatprep.subr.bf16.mxu0 %v392
    %512 = vmatpush2.bf16.msra.mxu0 %v391
    %513 = vmatprep.subr.bf16.mxu0 %v388
    %514 = vmatpush2.bf16.msra.mxu0 %v387
    %515 = vmatprep.mubr.bf16.mxu0 %v160
    %516 = vmatmul.mubr.bf16.gmra.mxu0 %v159
    %v517 = vpop.f32.mrf.mxu0
    %v518 = vadd.f32 %v139, %v517
    %v519 = vpop.f32.mrf.mxu0
    %v520 = vadd.f32 %v143, %v519
    %v521 = vpop.f32.mrf.mxu0
    %v522 = vpop.f32.mrf.mxu0
    %523 = vdwg.mxu0
    %524 = vmatprep.subr.bf16.mxu0 %v386
    %525 = vmatpush1.bf16.msra.mxu0 %v385
    %526 = vmatprep.subr.bf16.mxu0 %v382
    %527 = vmatpush1.bf16.msra.mxu0 %v381
    %528 = vmatprep.subr.bf16.mxu0 %v378
    %529 = vmatpush1.bf16.msra.mxu0 %v377
    %530 = vmatprep.subr.bf16.mxu0 %v374
    %531 = vmatpush1.bf16.msra.mxu0 %v373
    %532 = vmatprep.subr.bf16.mxu0 %v370
    %533 = vmatpush1.bf16.msra.mxu0 %v369
    %534 = vmatprep.subr.bf16.mxu0 %v366
    %535 = vmatpush1.bf16.msra.mxu0 %v365
    %536 = vmatprep.subr.bf16.mxu0 %v362
    %537 = vmatpush1.bf16.msra.mxu0 %v361
    %538 = vmatprep.subr.bf16.mxu0 %v358
    %539 = vmatpush1.bf16.msra.mxu0 %v357
    %540 = vmatprep.subr.bf16.mxu0 %v418
    %541 = vmatpush2.bf16.msra.mxu0 %v417
    %542 = vmatprep.subr.bf16.mxu0 %v414
    %543 = vmatpush2.bf16.msra.mxu0 %v413
    %544 = vmatprep.subr.bf16.mxu0 %v410
    %545 = vmatpush2.bf16.msra.mxu0 %v409
    %546 = vmatprep.subr.bf16.mxu0 %v406
    %547 = vmatpush2.bf16.msra.mxu0 %v405
    %548 = vmatprep.subr.bf16.mxu0 %v402
    %549 = vmatpush2.bf16.msra.mxu0 %v401
    %550 = vmatprep.subr.bf16.mxu0 %v398
    %551 = vmatpush2.bf16.msra.mxu0 %v397
    %552 = vmatprep.subr.bf16.mxu0 %v394
    %553 = vmatpush2.bf16.msra.mxu0 %v393
    %554 = vmatprep.subr.bf16.mxu0 %v390
    %555 = vmatpush2.bf16.msra.mxu0 %v389
    %556 = vmatprep.mubr.bf16.mxu0 %v160
    %557 = vmatmul.mubr.bf16.gmra.mxu0 %v159
    %v558 = vpop.f32.mrf.mxu0
    %v559 = vadd.f32 %v147, %v558
    %v560 = vpop.f32.mrf.mxu0
    %v561 = vadd.f32 %v151, %v560
    %v562 = vpop.f32.mrf.mxu0
    %v563 = vpop.f32.mrf.mxu0
    %564 = vdwg.mxu0
    %v565 = vxor.u32 %v518, 2147483648
    %v566 = vmul.f32 %v565, 1.442695
    %v567 = vpow.pop %v566
    %v568 = vadd.f32 %v567, 1.0
    %v569 = vrcp.pop %v568
    %v570 = vmul.f32 1.0, %v569
    %v571 = vxor.u32 %v520, 2147483648
    %v572 = vmul.f32 %v571, 1.442695
    %v573 = vpow.pop %v572
    %v574 = vadd.f32 %v573, 1.0
    %v575 = vrcp.pop %v574
    %v576 = vmul.f32 1.0, %v575
    %v577 = vtanh.pop %v559
    %v578 = vxor.u32 %v561, 2147483648
    %v579 = vmul.f32 %v578, 1.442695
    %v580 = vpow.pop %v579
    %v581 = vadd.f32 %v580, 1.0
    %v582 = vrcp.pop %v581
    %v583 = vmul.f32 1.0, %v582
    %v584 = vmul.f32 %v576, %v69
    %v585 = vmul.f32 %v570, %v577
    %v586 = vadd.f32 %v584, %v585
    %v587 = vtanh.pop %v586
    %v588 = vmul.f32 %v583, %v587
    %589 = vst [vmem:[#allocation2] sm:$0xff] %v586
    %v590 = vpack.c.bf16 %v588, %v588
    %591 = vst [vmem:[#allocation3 + $0x4] sm:$0xf] %v590
    %s592 = scalar_lea.vmem %s1, 4
    %v593 = vld [vmem:[%s592] sm:$0xf]
    %594 = vst [vmem:[#allocation3] sm:$0xf] %v593
    %v595 = vld [vmem:[#allocation3] sm:$0xff]
    %v596 = vld [vmem:[#allocation2] sm:$0xff]
    %v597 = vld [vmem:[%s4] sm:$0xff]
    %v598 = vld [vmem:[%s4 + $0x8] sm:$0xff]
    %v599 = vld [vmem:[%s4 + $0x10] sm:$0xff]
    %v600 = vld [vmem:[%s4 + $0x18] sm:$0xff]
    %v601 = vld [vmem:[%s4 + $0x20] sm:$0xff]
    %v602 = vld [vmem:[%s4 + $0x28] sm:$0xff]
    %v603 = vld [vmem:[%s4 + $0x30] sm:$0xff]
    %v604 = vld [vmem:[%s4 + $0x38] sm:$0xff]
    %v605 = vld [vmem:[%s4 + $0x40] sm:$0xff]
    %v606 = vld [vmem:[%s4 + $0x48] sm:$0xff]
    %v607 = vld [vmem:[%s4 + $0x50] sm:$0xff]
    %v608 = vld [vmem:[%s4 + $0x58] sm:$0xff]
    %v609 = vld [vmem:[%s4 + $0x60] sm:$0xff]
    %v610 = vld [vmem:[%s4 + $0x68] sm:$0xff]
    %v611 = vld [vmem:[%s4 + $0x70] sm:$0xff]
    %v612 = vld [vmem:[%s4 + $0x78] sm:$0xff]
    %v613 = vld [vmem:[%s4 + $0x80] sm:$0xff]
    %v614 = vld [vmem:[%s4 + $0x88] sm:$0xff]
    %v615 = vld [vmem:[%s4 + $0x90] sm:$0xff]
    %v616 = vld [vmem:[%s4 + $0x98] sm:$0xff]
    %v617 = vld [vmem:[%s4 + $0xa0] sm:$0xff]
    %v618 = vld [vmem:[%s4 + $0xa8] sm:$0xff]
    %v619 = vld [vmem:[%s4 + $0xb0] sm:$0xff]
    %v620 = vld [vmem:[%s4 + $0xb8] sm:$0xff]
    %v621 = vld [vmem:[%s4 + $0xc0] sm:$0xff]
    %v622 = vld [vmem:[%s4 + $0xc8] sm:$0xff]
    %v623 = vld [vmem:[%s4 + $0xd0] sm:$0xff]
    %v624 = vld [vmem:[%s4 + $0xd8] sm:$0xff]
    %v625 = vld [vmem:[%s4 + $0xe0] sm:$0xff]
    %v626 = vld [vmem:[%s4 + $0xe8] sm:$0xff]
    %v627 = vld [vmem:[%s4 + $0xf0] sm:$0xff]
    %v628 = vld [vmem:[%s4 + $0xf8] sm:$0xff]
    %v629 = vld [vmem:[%s4 + $0x100] sm:$0xff]
    %v630 = vld [vmem:[%s4 + $0x108] sm:$0xff]
    %v631 = vld [vmem:[%s4 + $0x110] sm:$0xff]
    %v632 = vld [vmem:[%s4 + $0x118] sm:$0xff]
    %v633 = vld [vmem:[%s4 + $0x120] sm:$0xff]
    %v634 = vld [vmem:[%s4 + $0x128] sm:$0xff]
    %v635 = vld [vmem:[%s4 + $0x130] sm:$0xff]
    %v636 = vld [vmem:[%s4 + $0x138] sm:$0xff]
    %v637 = vld [vmem:[%s4 + $0x140] sm:$0xff]
    %v638 = vld [vmem:[%s4 + $0x148] sm:$0xff]
    %v639 = vld [vmem:[%s4 + $0x150] sm:$0xff]
    %v640 = vld [vmem:[%s4 + $0x158] sm:$0xff]
    %v641 = vld [vmem:[%s4 + $0x160] sm:$0xff]
    %v642 = vld [vmem:[%s4 + $0x168] sm:$0xff]
    %v643 = vld [vmem:[%s4 + $0x170] sm:$0xff]
    %v644 = vld [vmem:[%s4 + $0x178] sm:$0xff]
    %v645 = vld [vmem:[%s4 + $0x180] sm:$0xff]
    %v646 = vld [vmem:[%s4 + $0x188] sm:$0xff]
    %v647 = vld [vmem:[%s4 + $0x190] sm:$0xff]
    %v648 = vld [vmem:[%s4 + $0x198] sm:$0xff]
    %v649 = vld [vmem:[%s4 + $0x1a0] sm:$0xff]
    %v650 = vld [vmem:[%s4 + $0x1a8] sm:$0xff]
    %v651 = vld [vmem:[%s4 + $0x1b0] sm:$0xff]
    %v652 = vld [vmem:[%s4 + $0x1b8] sm:$0xff]
    %v653 = vld [vmem:[%s4 + $0x1c0] sm:$0xff]
    %v654 = vld [vmem:[%s4 + $0x1c8] sm:$0xff]
    %v655 = vld [vmem:[%s4 + $0x1d0] sm:$0xff]
    %v656 = vld [vmem:[%s4 + $0x1d8] sm:$0xff]
    %v657 = vld [vmem:[%s4 + $0x1e0] sm:$0xff]
    %v658 = vld [vmem:[%s4 + $0x1e8] sm:$0xff]
    %v659 = vld [vmem:[%s4 + $0x1f0] sm:$0xff]
    %v660 = vld [vmem:[%s4 + $0x1f8] sm:$0xff]
    %v661 = vld [vmem:[%s5] sm:$0xf]
    %v663 = vlaneseq
    %v664 = vshrl.u32 %v663, 7
    %v665 = vsub.s32 0, %v664
    %v666 = vrot.slane %v661, %v665
    %v667 = vlaneseq
    %v668 = vshrl.u32 %v667, 7
    %v669 = vsub.s32 1, %v668
    %v670 = vrot.slane %v661, %v669
    %v671 = vlaneseq
    %v672 = vshrl.u32 %v671, 7
    %v673 = vsub.s32 2, %v672
    %v674 = vrot.slane %v661, %v673
    %v675 = vlaneseq
    %v676 = vshrl.u32 %v675, 7
    %v677 = vsub.s32 3, %v676
    %v678 = vrot.slane %v661, %v677
    %v684 = vunpack.c.l.b16 %v595
    %v685 = vunpack.c.h.b16 %v595
    %v686 = vpack.c.b16 %v684, %v684
    %v687 = vpack.c.b16 %v685, %v685
    %v754 = vunpack.c.l.b16 %v597
    %v755 = vunpack.c.h.b16 %v597
    %v756 = vunpack.c.l.b16 %v598
    %v757 = vunpack.c.h.b16 %v598
    %v758 = vunpack.c.l.b16 %v599
    %v759 = vunpack.c.h.b16 %v599
    %v760 = vunpack.c.l.b16 %v600
    %v761 = vunpack.c.h.b16 %v600
    %v762 = vunpack.c.l.b16 %v601
    %v763 = vunpack.c.h.b16 %v601
    %v764 = vunpack.c.l.b16 %v602
    %v765 = vunpack.c.h.b16 %v602
    %v766 = vunpack.c.l.b16 %v603
    %v767 = vunpack.c.h.b16 %v603
    %v768 = vunpack.c.l.b16 %v604
    %v769 = vunpack.c.h.b16 %v604
    %v770 = vunpack.c.l.b16 %v605
    %v771 = vunpack.c.h.b16 %v605
    %v772 = vunpack.c.l.b16 %v606
    %v773 = vunpack.c.h.b16 %v606
    %v774 = vunpack.c.l.b16 %v607
    %v775 = vunpack.c.h.b16 %v607
    %v776 = vunpack.c.l.b16 %v608
    %v777 = vunpack.c.h.b16 %v608
    %v778 = vunpack.c.l.b16 %v609
    %v779 = vunpack.c.h.b16 %v609
    %v780 = vunpack.c.l.b16 %v610
    %v781 = vunpack.c.h.b16 %v610
    %v782 = vunpack.c.l.b16 %v611
    %v783 = vunpack.c.h.b16 %v611
    %v784 = vunpack.c.l.b16 %v612
    %v785 = vunpack.c.h.b16 %v612
    %v786 = vunpack.c.l.b16 %v613
    %v787 = vunpack.c.h.b16 %v613
    %v788 = vunpack.c.l.b16 %v614
    %v789 = vunpack.c.h.b16 %v614
    %v790 = vunpack.c.l.b16 %v615
    %v791 = vunpack.c.h.b16 %v615
    %v792 = vunpack.c.l.b16 %v616
    %v793 = vunpack.c.h.b16 %v616
    %v794 = vunpack.c.l.b16 %v617
    %v795 = vunpack.c.h.b16 %v617
    %v796 = vunpack.c.l.b16 %v618
    %v797 = vunpack.c.h.b16 %v618
    %v798 = vunpack.c.l.b16 %v619
    %v799 = vunpack.c.h.b16 %v619
    %v800 = vunpack.c.l.b16 %v620
    %v801 = vunpack.c.h.b16 %v620
    %v802 = vunpack.c.l.b16 %v621
    %v803 = vunpack.c.h.b16 %v621
    %v804 = vunpack.c.l.b16 %v622
    %v805 = vunpack.c.h.b16 %v622
    %v806 = vunpack.c.l.b16 %v623
    %v807 = vunpack.c.h.b16 %v623
    %v808 = vunpack.c.l.b16 %v624
    %v809 = vunpack.c.h.b16 %v624
    %v810 = vunpack.c.l.b16 %v625
    %v811 = vunpack.c.h.b16 %v625
    %v812 = vunpack.c.l.b16 %v626
    %v813 = vunpack.c.h.b16 %v626
    %v814 = vunpack.c.l.b16 %v627
    %v815 = vunpack.c.h.b16 %v627
    %v816 = vunpack.c.l.b16 %v628
    %v817 = vunpack.c.h.b16 %v628
    %v818 = vunpack.c.l.b16 %v629
    %v819 = vunpack.c.h.b16 %v629
    %v820 = vunpack.c.l.b16 %v630
    %v821 = vunpack.c.h.b16 %v630
    %v822 = vunpack.c.l.b16 %v631
    %v823 = vunpack.c.h.b16 %v631
    %v824 = vunpack.c.l.b16 %v632
    %v825 = vunpack.c.h.b16 %v632
    %v826 = vunpack.c.l.b16 %v633
    %v827 = vunpack.c.h.b16 %v633
    %v828 = vunpack.c.l.b16 %v634
    %v829 = vunpack.c.h.b16 %v634
    %v830 = vunpack.c.l.b16 %v635
    %v831 = vunpack.c.h.b16 %v635
    %v832 = vunpack.c.l.b16 %v636
    %v833 = vunpack.c.h.b16 %v636
    %v834 = vunpack.c.l.b16 %v637
    %v835 = vunpack.c.h.b16 %v637
    %v836 = vunpack.c.l.b16 %v638
    %v837 = vunpack.c.h.b16 %v638
    %v838 = vunpack.c.l.b16 %v639
    %v839 = vunpack.c.h.b16 %v639
    %v840 = vunpack.c.l.b16 %v640
    %v841 = vunpack.c.h.b16 %v640
    %v842 = vunpack.c.l.b16 %v641
    %v843 = vunpack.c.h.b16 %v641
    %v844 = vunpack.c.l.b16 %v642
    %v845 = vunpack.c.h.b16 %v642
    %v846 = vunpack.c.l.b16 %v643
    %v847 = vunpack.c.h.b16 %v643
    %v848 = vunpack.c.l.b16 %v644
    %v849 = vunpack.c.h.b16 %v644
    %v850 = vunpack.c.l.b16 %v645
    %v851 = vunpack.c.h.b16 %v645
    %v852 = vunpack.c.l.b16 %v646
    %v853 = vunpack.c.h.b16 %v646
    %v854 = vunpack.c.l.b16 %v647
    %v855 = vunpack.c.h.b16 %v647
    %v856 = vunpack.c.l.b16 %v648
    %v857 = vunpack.c.h.b16 %v648
    %v858 = vunpack.c.l.b16 %v649
    %v859 = vunpack.c.h.b16 %v649
    %v860 = vunpack.c.l.b16 %v650
    %v861 = vunpack.c.h.b16 %v650
    %v862 = vunpack.c.l.b16 %v651
    %v863 = vunpack.c.h.b16 %v651
    %v864 = vunpack.c.l.b16 %v652
    %v865 = vunpack.c.h.b16 %v652
    %v866 = vunpack.c.l.b16 %v653
    %v867 = vunpack.c.h.b16 %v653
    %v868 = vunpack.c.l.b16 %v654
    %v869 = vunpack.c.h.b16 %v654
    %v870 = vunpack.c.l.b16 %v655
    %v871 = vunpack.c.h.b16 %v655
    %v872 = vunpack.c.l.b16 %v656
    %v873 = vunpack.c.h.b16 %v656
    %v874 = vunpack.c.l.b16 %v657
    %v875 = vunpack.c.h.b16 %v657
    %v876 = vunpack.c.l.b16 %v658
    %v877 = vunpack.c.h.b16 %v658
    %v878 = vunpack.c.l.b16 %v659
    %v879 = vunpack.c.h.b16 %v659
    %v880 = vunpack.c.l.b16 %v660
    %v881 = vunpack.c.h.b16 %v660
    %v882 = vpack.c.b16 %v758, %v754
    %v883 = vpack.c.b16 %v759, %v755
    %v884 = vpack.c.b16 %v760, %v756
    %v885 = vpack.c.b16 %v761, %v757
    %v886 = vpack.c.b16 %v766, %v762
    %v887 = vpack.c.b16 %v767, %v763
    %v888 = vpack.c.b16 %v768, %v764
    %v889 = vpack.c.b16 %v769, %v765
    %v890 = vpack.c.b16 %v774, %v770
    %v891 = vpack.c.b16 %v775, %v771
    %v892 = vpack.c.b16 %v776, %v772
    %v893 = vpack.c.b16 %v777, %v773
    %v894 = vpack.c.b16 %v782, %v778
    %v895 = vpack.c.b16 %v783, %v779
    %v896 = vpack.c.b16 %v784, %v780
    %v897 = vpack.c.b16 %v785, %v781
    %v898 = vpack.c.b16 %v790, %v786
    %v899 = vpack.c.b16 %v791, %v787
    %v900 = vpack.c.b16 %v792, %v788
    %v901 = vpack.c.b16 %v793, %v789
    %v902 = vpack.c.b16 %v798, %v794
    %v903 = vpack.c.b16 %v799, %v795
    %v904 = vpack.c.b16 %v800, %v796
    %v905 = vpack.c.b16 %v801, %v797
    %v906 = vpack.c.b16 %v806, %v802
    %v907 = vpack.c.b16 %v807, %v803
    %v908 = vpack.c.b16 %v808, %v804
    %v909 = vpack.c.b16 %v809, %v805
    %v910 = vpack.c.b16 %v814, %v810
    %v911 = vpack.c.b16 %v815, %v811
    %v912 = vpack.c.b16 %v816, %v812
    %v913 = vpack.c.b16 %v817, %v813
    %v914 = vpack.c.b16 %v822, %v818
    %v915 = vpack.c.b16 %v823, %v819
    %v916 = vpack.c.b16 %v824, %v820
    %v917 = vpack.c.b16 %v825, %v821
    %v918 = vpack.c.b16 %v830, %v826
    %v919 = vpack.c.b16 %v831, %v827
    %v920 = vpack.c.b16 %v832, %v828
    %v921 = vpack.c.b16 %v833, %v829
    %v922 = vpack.c.b16 %v838, %v834
    %v923 = vpack.c.b16 %v839, %v835
    %v924 = vpack.c.b16 %v840, %v836
    %v925 = vpack.c.b16 %v841, %v837
    %v926 = vpack.c.b16 %v846, %v842
    %v927 = vpack.c.b16 %v847, %v843
    %v928 = vpack.c.b16 %v848, %v844
    %v929 = vpack.c.b16 %v849, %v845
    %v930 = vpack.c.b16 %v854, %v850
    %v931 = vpack.c.b16 %v855, %v851
    %v932 = vpack.c.b16 %v856, %v852
    %v933 = vpack.c.b16 %v857, %v853
    %v934 = vpack.c.b16 %v862, %v858
    %v935 = vpack.c.b16 %v863, %v859
    %v936 = vpack.c.b16 %v864, %v860
    %v937 = vpack.c.b16 %v865, %v861
    %v938 = vpack.c.b16 %v870, %v866
    %v939 = vpack.c.b16 %v871, %v867
    %v940 = vpack.c.b16 %v872, %v868
    %v941 = vpack.c.b16 %v873, %v869
    %v942 = vpack.c.b16 %v878, %v874
    %v943 = vpack.c.b16 %v879, %v875
    %v944 = vpack.c.b16 %v880, %v876
    %v945 = vpack.c.b16 %v881, %v877
    %1010 = vmatprep.subr.bf16.mxu0 %v911
    %1011 = vmatpush1.bf16.msra.mxu0 %v910
    %1012 = vmatprep.subr.bf16.mxu0 %v907
    %1013 = vmatpush1.bf16.msra.mxu0 %v906
    %1014 = vmatprep.subr.bf16.mxu0 %v903
    %1015 = vmatpush1.bf16.msra.mxu0 %v902
    %1016 = vmatprep.subr.bf16.mxu0 %v899
    %1017 = vmatpush1.bf16.msra.mxu0 %v898
    %1018 = vmatprep.subr.bf16.mxu0 %v895
    %1019 = vmatpush1.bf16.msra.mxu0 %v894
    %1020 = vmatprep.subr.bf16.mxu0 %v891
    %1021 = vmatpush1.bf16.msra.mxu0 %v890
    %1022 = vmatprep.subr.bf16.mxu0 %v887
    %1023 = vmatpush1.bf16.msra.mxu0 %v886
    %1024 = vmatprep.subr.bf16.mxu0 %v883
    %1025 = vmatpush1.bf16.msra.mxu0 %v882
    %1026 = vmatprep.subr.bf16.mxu0 %v943
    %1027 = vmatpush2.bf16.msra.mxu0 %v942
    %1028 = vmatprep.subr.bf16.mxu0 %v939
    %1029 = vmatpush2.bf16.msra.mxu0 %v938
    %1030 = vmatprep.subr.bf16.mxu0 %v935
    %1031 = vmatpush2.bf16.msra.mxu0 %v934
    %1032 = vmatprep.subr.bf16.mxu0 %v931
    %1033 = vmatpush2.bf16.msra.mxu0 %v930
    %1034 = vmatprep.subr.bf16.mxu0 %v927
    %1035 = vmatpush2.bf16.msra.mxu0 %v926
    %1036 = vmatprep.subr.bf16.mxu0 %v923
    %1037 = vmatpush2.bf16.msra.mxu0 %v922
    %1038 = vmatprep.subr.bf16.mxu0 %v919
    %1039 = vmatpush2.bf16.msra.mxu0 %v918
    %1040 = vmatprep.subr.bf16.mxu0 %v915
    %1041 = vmatpush2.bf16.msra.mxu0 %v914
    %1042 = vmatprep.mubr.bf16.mxu0 %v687
    %1043 = vmatmul.mubr.bf16.gmra.mxu0 %v686
    %v1044 = vpop.f32.mrf.mxu0
    %v1045 = vadd.f32 %v666, %v1044
    %v1046 = vpop.f32.mrf.mxu0
    %v1047 = vadd.f32 %v670, %v1046
    %v1048 = vpop.f32.mrf.mxu0
    %v1049 = vpop.f32.mrf.mxu0
    %1050 = vdwg.mxu0
    %1051 = vmatprep.subr.bf16.mxu0 %v913
    %1052 = vmatpush1.bf16.msra.mxu0 %v912
    %1053 = vmatprep.subr.bf16.mxu0 %v909
    %1054 = vmatpush1.bf16.msra.mxu0 %v908
    %1055 = vmatprep.subr.bf16.mxu0 %v905
    %1056 = vmatpush1.bf16.msra.mxu0 %v904
    %1057 = vmatprep.subr.bf16.mxu0 %v901
    %1058 = vmatpush1.bf16.msra.mxu0 %v900
    %1059 = vmatprep.subr.bf16.mxu0 %v897
    %1060 = vmatpush1.bf16.msra.mxu0 %v896
    %1061 = vmatprep.subr.bf16.mxu0 %v893
    %1062 = vmatpush1.bf16.msra.mxu0 %v892
    %1063 = vmatprep.subr.bf16.mxu0 %v889
    %1064 = vmatpush1.bf16.msra.mxu0 %v888
    %1065 = vmatprep.subr.bf16.mxu0 %v885
    %1066 = vmatpush1.bf16.msra.mxu0 %v884
    %1067 = vmatprep.subr.bf16.mxu0 %v945
    %1068 = vmatpush2.bf16.msra.mxu0 %v944
    %1069 = vmatprep.subr.bf16.mxu0 %v941
    %1070 = vmatpush2.bf16.msra.mxu0 %v940
    %1071 = vmatprep.subr.bf16.mxu0 %v937
    %1072 = vmatpush2.bf16.msra.mxu0 %v936
    %1073 = vmatprep.subr.bf16.mxu0 %v933
    %1074 = vmatpush2.bf16.msra.mxu0 %v932
    %1075 = vmatprep.subr.bf16.mxu0 %v929
    %1076 = vmatpush2.bf16.msra.mxu0 %v928
    %1077 = vmatprep.subr.bf16.mxu0 %v925
    %1078 = vmatpush2.bf16.msra.mxu0 %v924
    %1079 = vmatprep.subr.bf16.mxu0 %v921
    %1080 = vmatpush2.bf16.msra.mxu0 %v920
    %1081 = vmatprep.subr.bf16.mxu0 %v917
    %1082 = vmatpush2.bf16.msra.mxu0 %v916
    %1083 = vmatprep.mubr.bf16.mxu0 %v687
    %1084 = vmatmul.mubr.bf16.gmra.mxu0 %v686
    %v1085 = vpop.f32.mrf.mxu0
    %v1086 = vadd.f32 %v674, %v1085
    %v1087 = vpop.f32.mrf.mxu0
    %v1088 = vadd.f32 %v678, %v1087
    %v1089 = vpop.f32.mrf.mxu0
    %v1090 = vpop.f32.mrf.mxu0
    %1091 = vdwg.mxu0
    %v1092 = vxor.u32 %v1045, 2147483648
    %v1093 = vmul.f32 %v1092, 1.442695
    %v1094 = vpow.pop %v1093
    %v1095 = vadd.f32 %v1094, 1.0
    %v1096 = vrcp.pop %v1095
    %v1097 = vmul.f32 1.0, %v1096
    %v1098 = vxor.u32 %v1047, 2147483648
    %v1099 = vmul.f32 %v1098, 1.442695
    %v1100 = vpow.pop %v1099
    %v1101 = vadd.f32 %v1100, 1.0
    %v1102 = vrcp.pop %v1101
    %v1103 = vmul.f32 1.0, %v1102
    %v1104 = vtanh.pop %v1086
    %v1105 = vxor.u32 %v1088, 2147483648
    %v1106 = vmul.f32 %v1105, 1.442695
    %v1107 = vpow.pop %v1106
    %v1108 = vadd.f32 %v1107, 1.0
    %v1109 = vrcp.pop %v1108
    %v1110 = vmul.f32 1.0, %v1109
    %v1111 = vmul.f32 %v1103, %v596
    %v1112 = vmul.f32 %v1097, %v1104
    %v1113 = vadd.f32 %v1111, %v1112
    %v1114 = vtanh.pop %v1113
    %v1115 = vmul.f32 %v1110, %v1114
    %1116 = vst [vmem:[#allocation2] sm:$0xff] %v1113
    %v1117 = vpack.c.bf16 %v1115, %v1115
    %1118 = vst [vmem:[#allocation3 + $0x4] sm:$0xf] %v1117
    %s1119 = scalar_lea.vmem %s1, 8
    %v1120 = vld [vmem:[%s1119] sm:$0xf]
    %1121 = vst [vmem:[#allocation3] sm:$0xf] %v1120
    %v1122 = vld [vmem:[#allocation3] sm:$0xff]
    %v1123 = vld [vmem:[#allocation2] sm:$0xff]
    %v1124 = vld [vmem:[%s4] sm:$0xff]
    %v1125 = vld [vmem:[%s4 + $0x8] sm:$0xff]
    %v1126 = vld [vmem:[%s4 + $0x10] sm:$0xff]
    %v1127 = vld [vmem:[%s4 + $0x18] sm:$0xff]
    %v1128 = vld [vmem:[%s4 + $0x20] sm:$0xff]
    %v1129 = vld [vmem:[%s4 + $0x28] sm:$0xff]
    %v1130 = vld [vmem:[%s4 + $0x30] sm:$0xff]
    %v1131 = vld [vmem:[%s4 + $0x38] sm:$0xff]
    %v1132 = vld [vmem:[%s4 + $0x40] sm:$0xff]
    %v1133 = vld [vmem:[%s4 + $0x48] sm:$0xff]
    %v1134 = vld [vmem:[%s4 + $0x50] sm:$0xff]
    %v1135 = vld [vmem:[%s4 + $0x58] sm:$0xff]
    %v1136 = vld [vmem:[%s4 + $0x60] sm:$0xff]
    %v1137 = vld [vmem:[%s4 + $0x68] sm:$0xff]
    %v1138 = vld [vmem:[%s4 + $0x70] sm:$0xff]
    %v1139 = vld [vmem:[%s4 + $0x78] sm:$0xff]
    %v1140 = vld [vmem:[%s4 + $0x80] sm:$0xff]
    %v1141 = vld [vmem:[%s4 + $0x88] sm:$0xff]
    %v1142 = vld [vmem:[%s4 + $0x90] sm:$0xff]
    %v1143 = vld [vmem:[%s4 + $0x98] sm:$0xff]
    %v1144 = vld [vmem:[%s4 + $0xa0] sm:$0xff]
    %v1145 = vld [vmem:[%s4 + $0xa8] sm:$0xff]
    %v1146 = vld [vmem:[%s4 + $0xb0] sm:$0xff]
    %v1147 = vld [vmem:[%s4 + $0xb8] sm:$0xff]
    %v1148 = vld [vmem:[%s4 + $0xc0] sm:$0xff]
    %v1149 = vld [vmem:[%s4 + $0xc8] sm:$0xff]
    %v1150 = vld [vmem:[%s4 + $0xd0] sm:$0xff]
    %v1151 = vld [vmem:[%s4 + $0xd8] sm:$0xff]
    %v1152 = vld [vmem:[%s4 + $0xe0] sm:$0xff]
    %v1153 = vld [vmem:[%s4 + $0xe8] sm:$0xff]
    %v1154 = vld [vmem:[%s4 + $0xf0] sm:$0xff]
    %v1155 = vld [vmem:[%s4 + $0xf8] sm:$0xff]
    %v1156 = vld [vmem:[%s4 + $0x100] sm:$0xff]
    %v1157 = vld [vmem:[%s4 + $0x108] sm:$0xff]
    %v1158 = vld [vmem:[%s4 + $0x110] sm:$0xff]
    %v1159 = vld [vmem:[%s4 + $0x118] sm:$0xff]
    %v1160 = vld [vmem:[%s4 + $0x120] sm:$0xff]
    %v1161 = vld [vmem:[%s4 + $0x128] sm:$0xff]
    %v1162 = vld [vmem:[%s4 + $0x130] sm:$0xff]
    %v1163 = vld [vmem:[%s4 + $0x138] sm:$0xff]
    %v1164 = vld [vmem:[%s4 + $0x140] sm:$0xff]
    %v1165 = vld [vmem:[%s4 + $0x148] sm:$0xff]
    %v1166 = vld [vmem:[%s4 + $0x150] sm:$0xff]
    %v1167 = vld [vmem:[%s4 + $0x158] sm:$0xff]
    %v1168 = vld [vmem:[%s4 + $0x160] sm:$0xff]
    %v1169 = vld [vmem:[%s4 + $0x168] sm:$0xff]
    %v1170 = vld [vmem:[%s4 + $0x170] sm:$0xff]
    %v1171 = vld [vmem:[%s4 + $0x178] sm:$0xff]
    %v1172 = vld [vmem:[%s4 + $0x180] sm:$0xff]
    %v1173 = vld [vmem:[%s4 + $0x188] sm:$0xff]
    %v1174 = vld [vmem:[%s4 + $0x190] sm:$0xff]
    %v1175 = vld [vmem:[%s4 + $0x198] sm:$0xff]
    %v1176 = vld [vmem:[%s4 + $0x1a0] sm:$0xff]
    %v1177 = vld [vmem:[%s4 + $0x1a8] sm:$0xff]
    %v1178 = vld [vmem:[%s4 + $0x1b0] sm:$0xff]
    %v1179 = vld [vmem:[%s4 + $0x1b8] sm:$0xff]
    %v1180 = vld [vmem:[%s4 + $0x1c0] sm:$0xff]
    %v1181 = vld [vmem:[%s4 + $0x1c8] sm:$0xff]
    %v1182 = vld [vmem:[%s4 + $0x1d0] sm:$0xff]
    %v1183 = vld [vmem:[%s4 + $0x1d8] sm:$0xff]
    %v1184 = vld [vmem:[%s4 + $0x1e0] sm:$0xff]
    %v1185 = vld [vmem:[%s4 + $0x1e8] sm:$0xff]
    %v1186 = vld [vmem:[%s4 + $0x1f0] sm:$0xff]
    %v1187 = vld [vmem:[%s4 + $0x1f8] sm:$0xff]
    %v1188 = vld [vmem:[%s5] sm:$0xf]
    %v1190 = vlaneseq
    %v1191 = vshrl.u32 %v1190, 7
    %v1192 = vsub.s32 0, %v1191
    %v1193 = vrot.slane %v1188, %v1192
    %v1194 = vlaneseq
    %v1195 = vshrl.u32 %v1194, 7
    %v1196 = vsub.s32 1, %v1195
    %v1197 = vrot.slane %v1188, %v1196
    %v1198 = vlaneseq
    %v1199 = vshrl.u32 %v1198, 7
    %v1200 = vsub.s32 2, %v1199
    %v1201 = vrot.slane %v1188, %v1200
    %v1202 = vlaneseq
    %v1203 = vshrl.u32 %v1202, 7
    %v1204 = vsub.s32 3, %v1203
    %v1205 = vrot.slane %v1188, %v1204
    %v1211 = vunpack.c.l.b16 %v1122
    %v1212 = vunpack.c.h.b16 %v1122
    %v1213 = vpack.c.b16 %v1211, %v1211
    %v1214 = vpack.c.b16 %v1212, %v1212
    %v1281 = vunpack.c.l.b16 %v1124
    %v1282 = vunpack.c.h.b16 %v1124
    %v1283 = vunpack.c.l.b16 %v1125
    %v1284 = vunpack.c.h.b16 %v1125
    %v1285 = vunpack.c.l.b16 %v1126
    %v1286 = vunpack.c.h.b16 %v1126
    %v1287 = vunpack.c.l.b16 %v1127
    %v1288 = vunpack.c.h.b16 %v1127
    %v1289 = vunpack.c.l.b16 %v1128
    %v1290 = vunpack.c.h.b16 %v1128
    %v1291 = vunpack.c.l.b16 %v1129
    %v1292 = vunpack.c.h.b16 %v1129
    %v1293 = vunpack.c.l.b16 %v1130
    %v1294 = vunpack.c.h.b16 %v1130
    %v1295 = vunpack.c.l.b16 %v1131
    %v1296 = vunpack.c.h.b16 %v1131
    %v1297 = vunpack.c.l.b16 %v1132
    %v1298 = vunpack.c.h.b16 %v1132
    %v1299 = vunpack.c.l.b16 %v1133
    %v1300 = vunpack.c.h.b16 %v1133
    %v1301 = vunpack.c.l.b16 %v1134
    %v1302 = vunpack.c.h.b16 %v1134
    %v1303 = vunpack.c.l.b16 %v1135
    %v1304 = vunpack.c.h.b16 %v1135
    %v1305 = vunpack.c.l.b16 %v1136
    %v1306 = vunpack.c.h.b16 %v1136
    %v1307 = vunpack.c.l.b16 %v1137
    %v1308 = vunpack.c.h.b16 %v1137
    %v1309 = vunpack.c.l.b16 %v1138
    %v1310 = vunpack.c.h.b16 %v1138
    %v1311 = vunpack.c.l.b16 %v1139
    %v1312 = vunpack.c.h.b16 %v1139
    %v1313 = vunpack.c.l.b16 %v1140
    %v1314 = vunpack.c.h.b16 %v1140
    %v1315 = vunpack.c.l.b16 %v1141
    %v1316 = vunpack.c.h.b16 %v1141
    %v1317 = vunpack.c.l.b16 %v1142
    %v1318 = vunpack.c.h.b16 %v1142
    %v1319 = vunpack.c.l.b16 %v1143
    %v1320 = vunpack.c.h.b16 %v1143
    %v1321 = vunpack.c.l.b16 %v1144
    %v1322 = vunpack.c.h.b16 %v1144
    %v1323 = vunpack.c.l.b16 %v1145
    %v1324 = vunpack.c.h.b16 %v1145
    %v1325 = vunpack.c.l.b16 %v1146
    %v1326 = vunpack.c.h.b16 %v1146
    %v1327 = vunpack.c.l.b16 %v1147
    %v1328 = vunpack.c.h.b16 %v1147
    %v1329 = vunpack.c.l.b16 %v1148
    %v1330 = vunpack.c.h.b16 %v1148
    %v1331 = vunpack.c.l.b16 %v1149
    %v1332 = vunpack.c.h.b16 %v1149
    %v1333 = vunpack.c.l.b16 %v1150
    %v1334 = vunpack.c.h.b16 %v1150
    %v1335 = vunpack.c.l.b16 %v1151
    %v1336 = vunpack.c.h.b16 %v1151
    %v1337 = vunpack.c.l.b16 %v1152
    %v1338 = vunpack.c.h.b16 %v1152
    %v1339 = vunpack.c.l.b16 %v1153
    %v1340 = vunpack.c.h.b16 %v1153
    %v1341 = vunpack.c.l.b16 %v1154
    %v1342 = vunpack.c.h.b16 %v1154
    %v1343 = vunpack.c.l.b16 %v1155
    %v1344 = vunpack.c.h.b16 %v1155
    %v1345 = vunpack.c.l.b16 %v1156
    %v1346 = vunpack.c.h.b16 %v1156
    %v1347 = vunpack.c.l.b16 %v1157
    %v1348 = vunpack.c.h.b16 %v1157
    %v1349 = vunpack.c.l.b16 %v1158
    %v1350 = vunpack.c.h.b16 %v1158
    %v1351 = vunpack.c.l.b16 %v1159
    %v1352 = vunpack.c.h.b16 %v1159
    %v1353 = vunpack.c.l.b16 %v1160
    %v1354 = vunpack.c.h.b16 %v1160
    %v1355 = vunpack.c.l.b16 %v1161
    %v1356 = vunpack.c.h.b16 %v1161
    %v1357 = vunpack.c.l.b16 %v1162
    %v1358 = vunpack.c.h.b16 %v1162
    %v1359 = vunpack.c.l.b16 %v1163
    %v1360 = vunpack.c.h.b16 %v1163
    %v1361 = vunpack.c.l.b16 %v1164
    %v1362 = vunpack.c.h.b16 %v1164
    %v1363 = vunpack.c.l.b16 %v1165
    %v1364 = vunpack.c.h.b16 %v1165
    %v1365 = vunpack.c.l.b16 %v1166
    %v1366 = vunpack.c.h.b16 %v1166
    %v1367 = vunpack.c.l.b16 %v1167
    %v1368 = vunpack.c.h.b16 %v1167
    %v1369 = vunpack.c.l.b16 %v1168
    %v1370 = vunpack.c.h.b16 %v1168
    %v1371 = vunpack.c.l.b16 %v1169
    %v1372 = vunpack.c.h.b16 %v1169
    %v1373 = vunpack.c.l.b16 %v1170
    %v1374 = vunpack.c.h.b16 %v1170
    %v1375 = vunpack.c.l.b16 %v1171
    %v1376 = vunpack.c.h.b16 %v1171
    %v1377 = vunpack.c.l.b16 %v1172
    %v1378 = vunpack.c.h.b16 %v1172
    %v1379 = vunpack.c.l.b16 %v1173
    %v1380 = vunpack.c.h.b16 %v1173
    %v1381 = vunpack.c.l.b16 %v1174
    %v1382 = vunpack.c.h.b16 %v1174
    %v1383 = vunpack.c.l.b16 %v1175
    %v1384 = vunpack.c.h.b16 %v1175
    %v1385 = vunpack.c.l.b16 %v1176
    %v1386 = vunpack.c.h.b16 %v1176
    %v1387 = vunpack.c.l.b16 %v1177
    %v1388 = vunpack.c.h.b16 %v1177
    %v1389 = vunpack.c.l.b16 %v1178
    %v1390 = vunpack.c.h.b16 %v1178
    %v1391 = vunpack.c.l.b16 %v1179
    %v1392 = vunpack.c.h.b16 %v1179
    %v1393 = vunpack.c.l.b16 %v1180
    %v1394 = vunpack.c.h.b16 %v1180
    %v1395 = vunpack.c.l.b16 %v1181
    %v1396 = vunpack.c.h.b16 %v1181
    %v1397 = vunpack.c.l.b16 %v1182
    %v1398 = vunpack.c.h.b16 %v1182
    %v1399 = vunpack.c.l.b16 %v1183
    %v1400 = vunpack.c.h.b16 %v1183
    %v1401 = vunpack.c.l.b16 %v1184
    %v1402 = vunpack.c.h.b16 %v1184
    %v1403 = vunpack.c.l.b16 %v1185
    %v1404 = vunpack.c.h.b16 %v1185
    %v1405 = vunpack.c.l.b16 %v1186
    %v1406 = vunpack.c.h.b16 %v1186
    %v1407 = vunpack.c.l.b16 %v1187
    %v1408 = vunpack.c.h.b16 %v1187
    %v1409 = vpack.c.b16 %v1285, %v1281
    %v1410 = vpack.c.b16 %v1286, %v1282
    %v1411 = vpack.c.b16 %v1287, %v1283
    %v1412 = vpack.c.b16 %v1288, %v1284
    %v1413 = vpack.c.b16 %v1293, %v1289
    %v1414 = vpack.c.b16 %v1294, %v1290
    %v1415 = vpack.c.b16 %v1295, %v1291
    %v1416 = vpack.c.b16 %v1296, %v1292
    %v1417 = vpack.c.b16 %v1301, %v1297
    %v1418 = vpack.c.b16 %v1302, %v1298
    %v1419 = vpack.c.b16 %v1303, %v1299
    %v1420 = vpack.c.b16 %v1304, %v1300
    %v1421 = vpack.c.b16 %v1309, %v1305
    %v1422 = vpack.c.b16 %v1310, %v1306
    %v1423 = vpack.c.b16 %v1311, %v1307
    %v1424 = vpack.c.b16 %v1312, %v1308
    %v1425 = vpack.c.b16 %v1317, %v1313
    %v1426 = vpack.c.b16 %v1318, %v1314
    %v1427 = vpack.c.b16 %v1319, %v1315
    %v1428 = vpack.c.b16 %v1320, %v1316
    %v1429 = vpack.c.b16 %v1325, %v1321
    %v1430 = vpack.c.b16 %v1326, %v1322
    %v1431 = vpack.c.b16 %v1327, %v1323
    %v1432 = vpack.c.b16 %v1328, %v1324
    %v1433 = vpack.c.b16 %v1333, %v1329
    %v1434 = vpack.c.b16 %v1334, %v1330
    %v1435 = vpack.c.b16 %v1335, %v1331
    %v1436 = vpack.c.b16 %v1336, %v1332
    %v1437 = vpack.c.b16 %v1341, %v1337
    %v1438 = vpack.c.b16 %v1342, %v1338
    %v1439 = vpack.c.b16 %v1343, %v1339
    %v1440 = vpack.c.b16 %v1344, %v1340
    %v1441 = vpack.c.b16 %v1349, %v1345
    %v1442 = vpack.c.b16 %v1350, %v1346
    %v1443 = vpack.c.b16 %v1351, %v1347
    %v1444 = vpack.c.b16 %v1352, %v1348
    %v1445 = vpack.c.b16 %v1357, %v1353
    %v1446 = vpack.c.b16 %v1358, %v1354
    %v1447 = vpack.c.b16 %v1359, %v1355
    %v1448 = vpack.c.b16 %v1360, %v1356
    %v1449 = vpack.c.b16 %v1365, %v1361
    %v1450 = vpack.c.b16 %v1366, %v1362
    %v1451 = vpack.c.b16 %v1367, %v1363
    %v1452 = vpack.c.b16 %v1368, %v1364
    %v1453 = vpack.c.b16 %v1373, %v1369
    %v1454 = vpack.c.b16 %v1374, %v1370
    %v1455 = vpack.c.b16 %v1375, %v1371
    %v1456 = vpack.c.b16 %v1376, %v1372
    %v1457 = vpack.c.b16 %v1381, %v1377
    %v1458 = vpack.c.b16 %v1382, %v1378
    %v1459 = vpack.c.b16 %v1383, %v1379
    %v1460 = vpack.c.b16 %v1384, %v1380
    %v1461 = vpack.c.b16 %v1389, %v1385
    %v1462 = vpack.c.b16 %v1390, %v1386
    %v1463 = vpack.c.b16 %v1391, %v1387
    %v1464 = vpack.c.b16 %v1392, %v1388
    %v1465 = vpack.c.b16 %v1397, %v1393
    %v1466 = vpack.c.b16 %v1398, %v1394
    %v1467 = vpack.c.b16 %v1399, %v1395
    %v1468 = vpack.c.b16 %v1400, %v1396
    %v1469 = vpack.c.b16 %v1405, %v1401
    %v1470 = vpack.c.b16 %v1406, %v1402
    %v1471 = vpack.c.b16 %v1407, %v1403
    %v1472 = vpack.c.b16 %v1408, %v1404
    %1537 = vmatprep.subr.bf16.mxu0 %v1438
    %1538 = vmatpush1.bf16.msra.mxu0 %v1437
    %1539 = vmatprep.subr.bf16.mxu0 %v1434
    %1540 = vmatpush1.bf16.msra.mxu0 %v1433
    %1541 = vmatprep.subr.bf16.mxu0 %v1430
    %1542 = vmatpush1.bf16.msra.mxu0 %v1429
    %1543 = vmatprep.subr.bf16.mxu0 %v1426
    %1544 = vmatpush1.bf16.msra.mxu0 %v1425
    %1545 = vmatprep.subr.bf16.mxu0 %v1422
    %1546 = vmatpush1.bf16.msra.mxu0 %v1421
    %1547 = vmatprep.subr.bf16.mxu0 %v1418
    %1548 = vmatpush1.bf16.msra.mxu0 %v1417
    %1549 = vmatprep.subr.bf16.mxu0 %v1414
    %1550 = vmatpush1.bf16.msra.mxu0 %v1413
    %1551 = vmatprep.subr.bf16.mxu0 %v1410
    %1552 = vmatpush1.bf16.msra.mxu0 %v1409
    %1553 = vmatprep.subr.bf16.mxu0 %v1470
    %1554 = vmatpush2.bf16.msra.mxu0 %v1469
    %1555 = vmatprep.subr.bf16.mxu0 %v1466
    %1556 = vmatpush2.bf16.msra.mxu0 %v1465
    %1557 = vmatprep.subr.bf16.mxu0 %v1462
    %1558 = vmatpush2.bf16.msra.mxu0 %v1461
    %1559 = vmatprep.subr.bf16.mxu0 %v1458
    %1560 = vmatpush2.bf16.msra.mxu0 %v1457
    %1561 = vmatprep.subr.bf16.mxu0 %v1454
    %1562 = vmatpush2.bf16.msra.mxu0 %v1453
    %1563 = vmatprep.subr.bf16.mxu0 %v1450
    %1564 = vmatpush2.bf16.msra.mxu0 %v1449
    %1565 = vmatprep.subr.bf16.mxu0 %v1446
    %1566 = vmatpush2.bf16.msra.mxu0 %v1445
    %1567 = vmatprep.subr.bf16.mxu0 %v1442
    %1568 = vmatpush2.bf16.msra.mxu0 %v1441
    %1569 = vmatprep.mubr.bf16.mxu0 %v1214
    %1570 = vmatmul.mubr.bf16.gmra.mxu0 %v1213
    %v1571 = vpop.f32.mrf.mxu0
    %v1572 = vadd.f32 %v1193, %v1571
    %v1573 = vpop.f32.mrf.mxu0
    %v1574 = vadd.f32 %v1197, %v1573
    %v1575 = vpop.f32.mrf.mxu0
    %v1576 = vpop.f32.mrf.mxu0
    %1577 = vdwg.mxu0
    %1578 = vmatprep.subr.bf16.mxu0 %v1440
    %1579 = vmatpush1.bf16.msra.mxu0 %v1439
    %1580 = vmatprep.subr.bf16.mxu0 %v1436
    %1581 = vmatpush1.bf16.msra.mxu0 %v1435
    %1582 = vmatprep.subr.bf16.mxu0 %v1432
    %1583 = vmatpush1.bf16.msra.mxu0 %v1431
    %1584 = vmatprep.subr.bf16.mxu0 %v1428
    %1585 = vmatpush1.bf16.msra.mxu0 %v1427
    %1586 = vmatprep.subr.bf16.mxu0 %v1424
    %1587 = vmatpush1.bf16.msra.mxu0 %v1423
    %1588 = vmatprep.subr.bf16.mxu0 %v1420
    %1589 = vmatpush1.bf16.msra.mxu0 %v1419
    %1590 = vmatprep.subr.bf16.mxu0 %v1416
    %1591 = vmatpush1.bf16.msra.mxu0 %v1415
    %1592 = vmatprep.subr.bf16.mxu0 %v1412
    %1593 = vmatpush1.bf16.msra.mxu0 %v1411
    %1594 = vmatprep.subr.bf16.mxu0 %v1472
    %1595 = vmatpush2.bf16.msra.mxu0 %v1471
    %1596 = vmatprep.subr.bf16.mxu0 %v1468
    %1597 = vmatpush2.bf16.msra.mxu0 %v1467
    %1598 = vmatprep.subr.bf16.mxu0 %v1464
    %1599 = vmatpush2.bf16.msra.mxu0 %v1463
    %1600 = vmatprep.subr.bf16.mxu0 %v1460
    %1601 = vmatpush2.bf16.msra.mxu0 %v1459
    %1602 = vmatprep.subr.bf16.mxu0 %v1456
    %1603 = vmatpush2.bf16.msra.mxu0 %v1455
    %1604 = vmatprep.subr.bf16.mxu0 %v1452
    %1605 = vmatpush2.bf16.msra.mxu0 %v1451
    %1606 = vmatprep.subr.bf16.mxu0 %v1448
    %1607 = vmatpush2.bf16.msra.mxu0 %v1447
    %1608 = vmatprep.subr.bf16.mxu0 %v1444
    %1609 = vmatpush2.bf16.msra.mxu0 %v1443
    %1610 = vmatprep.mubr.bf16.mxu0 %v1214
    %1611 = vmatmul.mubr.bf16.gmra.mxu0 %v1213
    %v1612 = vpop.f32.mrf.mxu0
    %v1613 = vadd.f32 %v1201, %v1612
    %v1614 = vpop.f32.mrf.mxu0
    %v1615 = vadd.f32 %v1205, %v1614
    %v1616 = vpop.f32.mrf.mxu0
    %v1617 = vpop.f32.mrf.mxu0
    %1618 = vdwg.mxu0
    %v1619 = vxor.u32 %v1572, 2147483648
    %v1620 = vmul.f32 %v1619, 1.442695
    %v1621 = vpow.pop %v1620
    %v1622 = vadd.f32 %v1621, 1.0
    %v1623 = vrcp.pop %v1622
    %v1624 = vmul.f32 1.0, %v1623
    %v1625 = vxor.u32 %v1574, 2147483648
    %v1626 = vmul.f32 %v1625, 1.442695
    %v1627 = vpow.pop %v1626
    %v1628 = vadd.f32 %v1627, 1.0
    %v1629 = vrcp.pop %v1628
    %v1630 = vmul.f32 1.0, %v1629
    %v1631 = vtanh.pop %v1613
    %v1632 = vxor.u32 %v1615, 2147483648
    %v1633 = vmul.f32 %v1632, 1.442695
    %v1634 = vpow.pop %v1633
    %v1635 = vadd.f32 %v1634, 1.0
    %v1636 = vrcp.pop %v1635
    %v1637 = vmul.f32 1.0, %v1636
    %v1638 = vmul.f32 %v1630, %v1123
    %v1639 = vmul.f32 %v1624, %v1631
    %v1640 = vadd.f32 %v1638, %v1639
    %v1641 = vtanh.pop %v1640
    %v1642 = vmul.f32 %v1637, %v1641
    %1643 = vst [vmem:[#allocation2] sm:$0xff] %v1640
    %v1644 = vpack.c.bf16 %v1642, %v1642
    %1645 = vst [vmem:[#allocation3 + $0x4] sm:$0xf] %v1644
    %s1646 = scalar_lea.vmem %s1, 12
    %v1647 = vld [vmem:[%s1646] sm:$0xf]
    %1648 = vst [vmem:[#allocation3] sm:$0xf] %v1647
    %v1649 = vld [vmem:[#allocation3] sm:$0xff]
    %v1650 = vld [vmem:[#allocation2] sm:$0xff]
    %v1651 = vld [vmem:[%s4] sm:$0xff]
    %v1652 = vld [vmem:[%s4 + $0x8] sm:$0xff]
    %v1653 = vld [vmem:[%s4 + $0x10] sm:$0xff]
    %v1654 = vld [vmem:[%s4 + $0x18] sm:$0xff]
    %v1655 = vld [vmem:[%s4 + $0x20] sm:$0xff]
    %v1656 = vld [vmem:[%s4 + $0x28] sm:$0xff]
    %v1657 = vld [vmem:[%s4 + $0x30] sm:$0xff]
    %v1658 = vld [vmem:[%s4 + $0x38] sm:$0xff]
    %v1659 = vld [vmem:[%s4 + $0x40] sm:$0xff]
    %v1660 = vld [vmem:[%s4 + $0x48] sm:$0xff]
    %v1661 = vld [vmem:[%s4 + $0x50] sm:$0xff]
    %v1662 = vld [vmem:[%s4 + $0x58] sm:$0xff]
    %v1663 = vld [vmem:[%s4 + $0x60] sm:$0xff]
    %v1664 = vld [vmem:[%s4 + $0x68] sm:$0xff]
    %v1665 = vld [vmem:[%s4 + $0x70] sm:$0xff]
    %v1666 = vld [vmem:[%s4 + $0x78] sm:$0xff]
    %v1667 = vld [vmem:[%s4 + $0x80] sm:$0xff]
    %v1668 = vld [vmem:[%s4 + $0x88] sm:$0xff]
    %v1669 = vld [vmem:[%s4 + $0x90] sm:$0xff]
    %v1670 = vld [vmem:[%s4 + $0x98] sm:$0xff]
    %v1671 = vld [vmem:[%s4 + $0xa0] sm:$0xff]
    %v1672 = vld [vmem:[%s4 + $0xa8] sm:$0xff]
    %v1673 = vld [vmem:[%s4 + $0xb0] sm:$0xff]
    %v1674 = vld [vmem:[%s4 + $0xb8] sm:$0xff]
    %v1675 = vld [vmem:[%s4 + $0xc0] sm:$0xff]
    %v1676 = vld [vmem:[%s4 + $0xc8] sm:$0xff]
    %v1677 = vld [vmem:[%s4 + $0xd0] sm:$0xff]
    %v1678 = vld [vmem:[%s4 + $0xd8] sm:$0xff]
    %v1679 = vld [vmem:[%s4 + $0xe0] sm:$0xff]
    %v1680 = vld [vmem:[%s4 + $0xe8] sm:$0xff]
    %v1681 = vld [vmem:[%s4 + $0xf0] sm:$0xff]
    %v1682 = vld [vmem:[%s4 + $0xf8] sm:$0xff]
    %v1683 = vld [vmem:[%s4 + $0x100] sm:$0xff]
    %v1684 = vld [vmem:[%s4 + $0x108] sm:$0xff]
    %v1685 = vld [vmem:[%s4 + $0x110] sm:$0xff]
    %v1686 = vld [vmem:[%s4 + $0x118] sm:$0xff]
    %v1687 = vld [vmem:[%s4 + $0x120] sm:$0xff]
    %v1688 = vld [vmem:[%s4 + $0x128] sm:$0xff]
    %v1689 = vld [vmem:[%s4 + $0x130] sm:$0xff]
    %v1690 = vld [vmem:[%s4 + $0x138] sm:$0xff]
    %v1691 = vld [vmem:[%s4 + $0x140] sm:$0xff]
    %v1692 = vld [vmem:[%s4 + $0x148] sm:$0xff]
    %v1693 = vld [vmem:[%s4 + $0x150] sm:$0xff]
    %v1694 = vld [vmem:[%s4 + $0x158] sm:$0xff]
    %v1695 = vld [vmem:[%s4 + $0x160] sm:$0xff]
    %v1696 = vld [vmem:[%s4 + $0x168] sm:$0xff]
    %v1697 = vld [vmem:[%s4 + $0x170] sm:$0xff]
    %v1698 = vld [vmem:[%s4 + $0x178] sm:$0xff]
    %v1699 = vld [vmem:[%s4 + $0x180] sm:$0xff]
    %v1700 = vld [vmem:[%s4 + $0x188] sm:$0xff]
    %v1701 = vld [vmem:[%s4 + $0x190] sm:$0xff]
    %v1702 = vld [vmem:[%s4 + $0x198] sm:$0xff]
    %v1703 = vld [vmem:[%s4 + $0x1a0] sm:$0xff]
    %v1704 = vld [vmem:[%s4 + $0x1a8] sm:$0xff]
    %v1705 = vld [vmem:[%s4 + $0x1b0] sm:$0xff]
    %v1706 = vld [vmem:[%s4 + $0x1b8] sm:$0xff]
    %v1707 = vld [vmem:[%s4 + $0x1c0] sm:$0xff]
    %v1708 = vld [vmem:[%s4 + $0x1c8] sm:$0xff]
    %v1709 = vld [vmem:[%s4 + $0x1d0] sm:$0xff]
    %v1710 = vld [vmem:[%s4 + $0x1d8] sm:$0xff]
    %v1711 = vld [vmem:[%s4 + $0x1e0] sm:$0xff]
    %v1712 = vld [vmem:[%s4 + $0x1e8] sm:$0xff]
    %v1713 = vld [vmem:[%s4 + $0x1f0] sm:$0xff]
    %v1714 = vld [vmem:[%s4 + $0x1f8] sm:$0xff]
    %v1715 = vld [vmem:[%s5] sm:$0xf]
    %v1717 = vlaneseq
    %v1718 = vshrl.u32 %v1717, 7
    %v1719 = vsub.s32 0, %v1718
    %v1720 = vrot.slane %v1715, %v1719
    %v1721 = vlaneseq
    %v1722 = vshrl.u32 %v1721, 7
    %v1723 = vsub.s32 1, %v1722
    %v1724 = vrot.slane %v1715, %v1723
    %v1725 = vlaneseq
    %v1726 = vshrl.u32 %v1725, 7
    %v1727 = vsub.s32 2, %v1726
    %v1728 = vrot.slane %v1715, %v1727
    %v1729 = vlaneseq
    %v1730 = vshrl.u32 %v1729, 7
    %v1731 = vsub.s32 3, %v1730
    %v1732 = vrot.slane %v1715, %v1731
    %v1738 = vunpack.c.l.b16 %v1649
    %v1739 = vunpack.c.h.b16 %v1649
    %v1740 = vpack.c.b16 %v1738, %v1738
    %v1741 = vpack.c.b16 %v1739, %v1739
    %v1808 = vunpack.c.l.b16 %v1651
    %v1809 = vunpack.c.h.b16 %v1651
    %v1810 = vunpack.c.l.b16 %v1652
    %v1811 = vunpack.c.h.b16 %v1652
    %v1812 = vunpack.c.l.b16 %v1653
    %v1813 = vunpack.c.h.b16 %v1653
    %v1814 = vunpack.c.l.b16 %v1654
    %v1815 = vunpack.c.h.b16 %v1654
    %v1816 = vunpack.c.l.b16 %v1655
    %v1817 = vunpack.c.h.b16 %v1655
    %v1818 = vunpack.c.l.b16 %v1656
    %v1819 = vunpack.c.h.b16 %v1656
    %v1820 = vunpack.c.l.b16 %v1657
    %v1821 = vunpack.c.h.b16 %v1657
    %v1822 = vunpack.c.l.b16 %v1658
    %v1823 = vunpack.c.h.b16 %v1658
    %v1824 = vunpack.c.l.b16 %v1659
    %v1825 = vunpack.c.h.b16 %v1659
    %v1826 = vunpack.c.l.b16 %v1660
    %v1827 = vunpack.c.h.b16 %v1660
    %v1828 = vunpack.c.l.b16 %v1661
    %v1829 = vunpack.c.h.b16 %v1661
    %v1830 = vunpack.c.l.b16 %v1662
    %v1831 = vunpack.c.h.b16 %v1662
    %v1832 = vunpack.c.l.b16 %v1663
    %v1833 = vunpack.c.h.b16 %v1663
    %v1834 = vunpack.c.l.b16 %v1664
    %v1835 = vunpack.c.h.b16 %v1664
    %v1836 = vunpack.c.l.b16 %v1665
    %v1837 = vunpack.c.h.b16 %v1665
    %v1838 = vunpack.c.l.b16 %v1666
    %v1839 = vunpack.c.h.b16 %v1666
    %v1840 = vunpack.c.l.b16 %v1667
    %v1841 = vunpack.c.h.b16 %v1667
    %v1842 = vunpack.c.l.b16 %v1668
    %v1843 = vunpack.c.h.b16 %v1668
    %v1844 = vunpack.c.l.b16 %v1669
    %v1845 = vunpack.c.h.b16 %v1669
    %v1846 = vunpack.c.l.b16 %v1670
    %v1847 = vunpack.c.h.b16 %v1670
    %v1848 = vunpack.c.l.b16 %v1671
    %v1849 = vunpack.c.h.b16 %v1671
    %v1850 = vunpack.c.l.b16 %v1672
    %v1851 = vunpack.c.h.b16 %v1672
    %v1852 = vunpack.c.l.b16 %v1673
    %v1853 = vunpack.c.h.b16 %v1673
    %v1854 = vunpack.c.l.b16 %v1674
    %v1855 = vunpack.c.h.b16 %v1674
    %v1856 = vunpack.c.l.b16 %v1675
    %v1857 = vunpack.c.h.b16 %v1675
    %v1858 = vunpack.c.l.b16 %v1676
    %v1859 = vunpack.c.h.b16 %v1676
    %v1860 = vunpack.c.l.b16 %v1677
    %v1861 = vunpack.c.h.b16 %v1677
    %v1862 = vunpack.c.l.b16 %v1678
    %v1863 = vunpack.c.h.b16 %v1678
    %v1864 = vunpack.c.l.b16 %v1679
    %v1865 = vunpack.c.h.b16 %v1679
    %v1866 = vunpack.c.l.b16 %v1680
    %v1867 = vunpack.c.h.b16 %v1680
    %v1868 = vunpack.c.l.b16 %v1681
    %v1869 = vunpack.c.h.b16 %v1681
    %v1870 = vunpack.c.l.b16 %v1682
    %v1871 = vunpack.c.h.b16 %v1682
    %v1872 = vunpack.c.l.b16 %v1683
    %v1873 = vunpack.c.h.b16 %v1683
    %v1874 = vunpack.c.l.b16 %v1684
    %v1875 = vunpack.c.h.b16 %v1684
    %v1876 = vunpack.c.l.b16 %v1685
    %v1877 = vunpack.c.h.b16 %v1685
    %v1878 = vunpack.c.l.b16 %v1686
    %v1879 = vunpack.c.h.b16 %v1686
    %v1880 = vunpack.c.l.b16 %v1687
    %v1881 = vunpack.c.h.b16 %v1687
    %v1882 = vunpack.c.l.b16 %v1688
    %v1883 = vunpack.c.h.b16 %v1688
    %v1884 = vunpack.c.l.b16 %v1689
    %v1885 = vunpack.c.h.b16 %v1689
    %v1886 = vunpack.c.l.b16 %v1690
    %v1887 = vunpack.c.h.b16 %v1690
    %v1888 = vunpack.c.l.b16 %v1691
    %v1889 = vunpack.c.h.b16 %v1691
    %v1890 = vunpack.c.l.b16 %v1692
    %v1891 = vunpack.c.h.b16 %v1692
    %v1892 = vunpack.c.l.b16 %v1693
    %v1893 = vunpack.c.h.b16 %v1693
    %v1894 = vunpack.c.l.b16 %v1694
    %v1895 = vunpack.c.h.b16 %v1694
    %v1896 = vunpack.c.l.b16 %v1695
    %v1897 = vunpack.c.h.b16 %v1695
    %v1898 = vunpack.c.l.b16 %v1696
    %v1899 = vunpack.c.h.b16 %v1696
    %v1900 = vunpack.c.l.b16 %v1697
    %v1901 = vunpack.c.h.b16 %v1697
    %v1902 = vunpack.c.l.b16 %v1698
    %v1903 = vunpack.c.h.b16 %v1698
    %v1904 = vunpack.c.l.b16 %v1699
    %v1905 = vunpack.c.h.b16 %v1699
    %v1906 = vunpack.c.l.b16 %v1700
    %v1907 = vunpack.c.h.b16 %v1700
    %v1908 = vunpack.c.l.b16 %v1701
    %v1909 = vunpack.c.h.b16 %v1701
    %v1910 = vunpack.c.l.b16 %v1702
    %v1911 = vunpack.c.h.b16 %v1702
    %v1912 = vunpack.c.l.b16 %v1703
    %v1913 = vunpack.c.h.b16 %v1703
    %v1914 = vunpack.c.l.b16 %v1704
    %v1915 = vunpack.c.h.b16 %v1704
    %v1916 = vunpack.c.l.b16 %v1705
    %v1917 = vunpack.c.h.b16 %v1705
    %v1918 = vunpack.c.l.b16 %v1706
    %v1919 = vunpack.c.h.b16 %v1706
    %v1920 = vunpack.c.l.b16 %v1707
    %v1921 = vunpack.c.h.b16 %v1707
    %v1922 = vunpack.c.l.b16 %v1708
    %v1923 = vunpack.c.h.b16 %v1708
    %v1924 = vunpack.c.l.b16 %v1709
    %v1925 = vunpack.c.h.b16 %v1709
    %v1926 = vunpack.c.l.b16 %v1710
    %v1927 = vunpack.c.h.b16 %v1710
    %v1928 = vunpack.c.l.b16 %v1711
    %v1929 = vunpack.c.h.b16 %v1711
    %v1930 = vunpack.c.l.b16 %v1712
    %v1931 = vunpack.c.h.b16 %v1712
    %v1932 = vunpack.c.l.b16 %v1713
    %v1933 = vunpack.c.h.b16 %v1713
    %v1934 = vunpack.c.l.b16 %v1714
    %v1935 = vunpack.c.h.b16 %v1714
    %v1936 = vpack.c.b16 %v1812, %v1808
    %v1937 = vpack.c.b16 %v1813, %v1809
    %v1938 = vpack.c.b16 %v1814, %v1810
    %v1939 = vpack.c.b16 %v1815, %v1811
    %v1940 = vpack.c.b16 %v1820, %v1816
    %v1941 = vpack.c.b16 %v1821, %v1817
    %v1942 = vpack.c.b16 %v1822, %v1818
    %v1943 = vpack.c.b16 %v1823, %v1819
    %v1944 = vpack.c.b16 %v1828, %v1824
    %v1945 = vpack.c.b16 %v1829, %v1825
    %v1946 = vpack.c.b16 %v1830, %v1826
    %v1947 = vpack.c.b16 %v1831, %v1827
    %v1948 = vpack.c.b16 %v1836, %v1832
    %v1949 = vpack.c.b16 %v1837, %v1833
    %v1950 = vpack.c.b16 %v1838, %v1834
    %v1951 = vpack.c.b16 %v1839, %v1835
    %v1952 = vpack.c.b16 %v1844, %v1840
    %v1953 = vpack.c.b16 %v1845, %v1841
    %v1954 = vpack.c.b16 %v1846, %v1842
    %v1955 = vpack.c.b16 %v1847, %v1843
    %v1956 = vpack.c.b16 %v1852, %v1848
    %v1957 = vpack.c.b16 %v1853, %v1849
    %v1958 = vpack.c.b16 %v1854, %v1850
    %v1959 = vpack.c.b16 %v1855, %v1851
    %v1960 = vpack.c.b16 %v1860, %v1856
    %v1961 = vpack.c.b16 %v1861, %v1857
    %v1962 = vpack.c.b16 %v1862, %v1858
    %v1963 = vpack.c.b16 %v1863, %v1859
    %v1964 = vpack.c.b16 %v1868, %v1864
    %v1965 = vpack.c.b16 %v1869, %v1865
    %v1966 = vpack.c.b16 %v1870, %v1866
    %v1967 = vpack.c.b16 %v1871, %v1867
    %v1968 = vpack.c.b16 %v1876, %v1872
    %v1969 = vpack.c.b16 %v1877, %v1873
    %v1970 = vpack.c.b16 %v1878, %v1874
    %v1971 = vpack.c.b16 %v1879, %v1875
    %v1972 = vpack.c.b16 %v1884, %v1880
    %v1973 = vpack.c.b16 %v1885, %v1881
    %v1974 = vpack.c.b16 %v1886, %v1882
    %v1975 = vpack.c.b16 %v1887, %v1883
    %v1976 = vpack.c.b16 %v1892, %v1888
    %v1977 = vpack.c.b16 %v1893, %v1889
    %v1978 = vpack.c.b16 %v1894, %v1890
    %v1979 = vpack.c.b16 %v1895, %v1891
    %v1980 = vpack.c.b16 %v1900, %v1896
    %v1981 = vpack.c.b16 %v1901, %v1897
    %v1982 = vpack.c.b16 %v1902, %v1898
    %v1983 = vpack.c.b16 %v1903, %v1899
    %v1984 = vpack.c.b16 %v1908, %v1904
    %v1985 = vpack.c.b16 %v1909, %v1905
    %v1986 = vpack.c.b16 %v1910, %v1906
    %v1987 = vpack.c.b16 %v1911, %v1907
    %v1988 = vpack.c.b16 %v1916, %v1912
    %v1989 = vpack.c.b16 %v1917, %v1913
    %v1990 = vpack.c.b16 %v1918, %v1914
    %v1991 = vpack.c.b16 %v1919, %v1915
    %v1992 = vpack.c.b16 %v1924, %v1920
    %v1993 = vpack.c.b16 %v1925, %v1921
    %v1994 = vpack.c.b16 %v1926, %v1922
    %v1995 = vpack.c.b16 %v1927, %v1923
    %v1996 = vpack.c.b16 %v1932, %v1928
    %v1997 = vpack.c.b16 %v1933, %v1929
    %v1998 = vpack.c.b16 %v1934, %v1930
    %v1999 = vpack.c.b16 %v1935, %v1931
    %2064 = vmatprep.subr.bf16.mxu0 %v1965
    %2065 = vmatpush1.bf16.msra.mxu0 %v1964
    %2066 = vmatprep.subr.bf16.mxu0 %v1961
    %2067 = vmatpush1.bf16.msra.mxu0 %v1960
    %2068 = vmatprep.subr.bf16.mxu0 %v1957
    %2069 = vmatpush1.bf16.msra.mxu0 %v1956
    %2070 = vmatprep.subr.bf16.mxu0 %v1953
    %2071 = vmatpush1.bf16.msra.mxu0 %v1952
    %2072 = vmatprep.subr.bf16.mxu0 %v1949
    %2073 = vmatpush1.bf16.msra.mxu0 %v1948
    %2074 = vmatprep.subr.bf16.mxu0 %v1945
    %2075 = vmatpush1.bf16.msra.mxu0 %v1944
    %2076 = vmatprep.subr.bf16.mxu0 %v1941
    %2077 = vmatpush1.bf16.msra.mxu0 %v1940
    %2078 = vmatprep.subr.bf16.mxu0 %v1937
    %2079 = vmatpush1.bf16.msra.mxu0 %v1936
    %2080 = vmatprep.subr.bf16.mxu0 %v1997
    %2081 = vmatpush2.bf16.msra.mxu0 %v1996
    %2082 = vmatprep.subr.bf16.mxu0 %v1993
    %2083 = vmatpush2.bf16.msra.mxu0 %v1992
    %2084 = vmatprep.subr.bf16.mxu0 %v1989
    %2085 = vmatpush2.bf16.msra.mxu0 %v1988
    %2086 = vmatprep.subr.bf16.mxu0 %v1985
    %2087 = vmatpush2.bf16.msra.mxu0 %v1984
    %2088 = vmatprep.subr.bf16.mxu0 %v1981
    %2089 = vmatpush2.bf16.msra.mxu0 %v1980
    %2090 = vmatprep.subr.bf16.mxu0 %v1977
    %2091 = vmatpush2.bf16.msra.mxu0 %v1976
    %2092 = vmatprep.subr.bf16.mxu0 %v1973
    %2093 = vmatpush2.bf16.msra.mxu0 %v1972
    %2094 = vmatprep.subr.bf16.mxu0 %v1969
    %2095 = vmatpush2.bf16.msra.mxu0 %v1968
    %2096 = vmatprep.mubr.bf16.mxu0 %v1741
    %2097 = vmatmul.mubr.bf16.gmra.mxu0 %v1740
    %v2098 = vpop.f32.mrf.mxu0
    %v2099 = vadd.f32 %v1720, %v2098
    %v2100 = vpop.f32.mrf.mxu0
    %v2101 = vadd.f32 %v1724, %v2100
    %v2102 = vpop.f32.mrf.mxu0
    %v2103 = vpop.f32.mrf.mxu0
    %2104 = vdwg.mxu0
    %2105 = vmatprep.subr.bf16.mxu0 %v1967
    %2106 = vmatpush1.bf16.msra.mxu0 %v1966
    %2107 = vmatprep.subr.bf16.mxu0 %v1963
    %2108 = vmatpush1.bf16.msra.mxu0 %v1962
    %2109 = vmatprep.subr.bf16.mxu0 %v1959
    %2110 = vmatpush1.bf16.msra.mxu0 %v1958
    %2111 = vmatprep.subr.bf16.mxu0 %v1955
    %2112 = vmatpush1.bf16.msra.mxu0 %v1954
    %2113 = vmatprep.subr.bf16.mxu0 %v1951
    %2114 = vmatpush1.bf16.msra.mxu0 %v1950
    %2115 = vmatprep.subr.bf16.mxu0 %v1947
    %2116 = vmatpush1.bf16.msra.mxu0 %v1946
    %2117 = vmatprep.subr.bf16.mxu0 %v1943
    %2118 = vmatpush1.bf16.msra.mxu0 %v1942
    %2119 = vmatprep.subr.bf16.mxu0 %v1939
    %2120 = vmatpush1.bf16.msra.mxu0 %v1938
    %2121 = vmatprep.subr.bf16.mxu0 %v1999
    %2122 = vmatpush2.bf16.msra.mxu0 %v1998
    %2123 = vmatprep.subr.bf16.mxu0 %v1995
    %2124 = vmatpush2.bf16.msra.mxu0 %v1994
    %2125 = vmatprep.subr.bf16.mxu0 %v1991
    %2126 = vmatpush2.bf16.msra.mxu0 %v1990
    %2127 = vmatprep.subr.bf16.mxu0 %v1987
    %2128 = vmatpush2.bf16.msra.mxu0 %v1986
    %2129 = vmatprep.subr.bf16.mxu0 %v1983
    %2130 = vmatpush2.bf16.msra.mxu0 %v1982
    %2131 = vmatprep.subr.bf16.mxu0 %v1979
    %2132 = vmatpush2.bf16.msra.mxu0 %v1978
    %2133 = vmatprep.subr.bf16.mxu0 %v1975
    %2134 = vmatpush2.bf16.msra.mxu0 %v1974
    %2135 = vmatprep.subr.bf16.mxu0 %v1971
    %2136 = vmatpush2.bf16.msra.mxu0 %v1970
    %2137 = vmatprep.mubr.bf16.mxu0 %v1741
    %2138 = vmatmul.mubr.bf16.gmra.mxu0 %v1740
    %v2139 = vpop.f32.mrf.mxu0
    %v2140 = vadd.f32 %v1728, %v2139
    %v2141 = vpop.f32.mrf.mxu0
    %v2142 = vadd.f32 %v1732, %v2141
    %v2143 = vpop.f32.mrf.mxu0
    %v2144 = vpop.f32.mrf.mxu0
    %2145 = vdwg.mxu0
    %v2146 = vxor.u32 %v2099, 2147483648
    %v2147 = vmul.f32 %v2146, 1.442695
    %v2148 = vpow.pop %v2147
    %v2149 = vadd.f32 %v2148, 1.0
    %v2150 = vrcp.pop %v2149
    %v2151 = vmul.f32 1.0, %v2150
    %v2152 = vxor.u32 %v2101, 2147483648
    %v2153 = vmul.f32 %v2152, 1.442695
    %v2154 = vpow.pop %v2153
    %v2155 = vadd.f32 %v2154, 1.0
    %v2156 = vrcp.pop %v2155
    %v2157 = vmul.f32 1.0, %v2156
    %v2158 = vtanh.pop %v2140
    %v2159 = vxor.u32 %v2142, 2147483648
    %v2160 = vmul.f32 %v2159, 1.442695
    %v2161 = vpow.pop %v2160
    %v2162 = vadd.f32 %v2161, 1.0
    %v2163 = vrcp.pop %v2162
    %v2164 = vmul.f32 1.0, %v2163
    %v2165 = vmul.f32 %v2157, %v1650
    %v2166 = vmul.f32 %v2151, %v2158
    %v2167 = vadd.f32 %v2165, %v2166
    %v2168 = vtanh.pop %v2167
    %v2169 = vmul.f32 %v2164, %v2168
    %2170 = vst [vmem:[#allocation2] sm:$0xff] %v2167
    %v2171 = vpack.c.bf16 %v2169, %v2169
    %2172 = vst [vmem:[#allocation3 + $0x4] sm:$0xf] %v2171
    %s2173 = scalar_lea.vmem %s1, 16
    %v2174 = vld [vmem:[%s2173] sm:$0xf]
    %2175 = vst [vmem:[#allocation3] sm:$0xf] %v2174
    %v2176 = vld [vmem:[#allocation3] sm:$0xff]
    %v2177 = vld [vmem:[#allocation2] sm:$0xff]
    %v2178 = vld [vmem:[%s4] sm:$0xff]
    %v2179 = vld [vmem:[%s4 + $0x8] sm:$0xff]
    %v2180 = vld [vmem:[%s4 + $0x10] sm:$0xff]
    %v2181 = vld [vmem:[%s4 + $0x18] sm:$0xff]
    %v2182 = vld [vmem:[%s4 + $0x20] sm:$0xff]
    %v2183 = vld [vmem:[%s4 + $0x28] sm:$0xff]
    %v2184 = vld [vmem:[%s4 + $0x30] sm:$0xff]
    %v2185 = vld [vmem:[%s4 + $0x38] sm:$0xff]
    %v2186 = vld [vmem:[%s4 + $0x40] sm:$0xff]
    %v2187 = vld [vmem:[%s4 + $0x48] sm:$0xff]
    %v2188 = vld [vmem:[%s4 + $0x50] sm:$0xff]
    %v2189 = vld [vmem:[%s4 + $0x58] sm:$0xff]
    %v2190 = vld [vmem:[%s4 + $0x60] sm:$0xff]
    %v2191 = vld [vmem:[%s4 + $0x68] sm:$0xff]
    %v2192 = vld [vmem:[%s4 + $0x70] sm:$0xff]
    %v2193 = vld [vmem:[%s4 + $0x78] sm:$0xff]
    %v2194 = vld [vmem:[%s4 + $0x80] sm:$0xff]
    %v2195 = vld [vmem:[%s4 + $0x88] sm:$0xff]
    %v2196 = vld [vmem:[%s4 + $0x90] sm:$0xff]
    %v2197 = vld [vmem:[%s4 + $0x98] sm:$0xff]
    %v2198 = vld [vmem:[%s4 + $0xa0] sm:$0xff]
    %v2199 = vld [vmem:[%s4 + $0xa8] sm:$0xff]
    %v2200 = vld [vmem:[%s4 + $0xb0] sm:$0xff]
    %v2201 = vld [vmem:[%s4 + $0xb8] sm:$0xff]
    %v2202 = vld [vmem:[%s4 + $0xc0] sm:$0xff]
    %v2203 = vld [vmem:[%s4 + $0xc8] sm:$0xff]
    %v2204 = vld [vmem:[%s4 + $0xd0] sm:$0xff]
    %v2205 = vld [vmem:[%s4 + $0xd8] sm:$0xff]
    %v2206 = vld [vmem:[%s4 + $0xe0] sm:$0xff]
    %v2207 = vld [vmem:[%s4 + $0xe8] sm:$0xff]
    %v2208 = vld [vmem:[%s4 + $0xf0] sm:$0xff]
    %v2209 = vld [vmem:[%s4 + $0xf8] sm:$0xff]
    %v2210 = vld [vmem:[%s4 + $0x100] sm:$0xff]
    %v2211 = vld [vmem:[%s4 + $0x108] sm:$0xff]
    %v2212 = vld [vmem:[%s4 + $0x110] sm:$0xff]
    %v2213 = vld [vmem:[%s4 + $0x118] sm:$0xff]
    %v2214 = vld [vmem:[%s4 + $0x120] sm:$0xff]
    %v2215 = vld [vmem:[%s4 + $0x128] sm:$0xff]
    %v2216 = vld [vmem:[%s4 + $0x130] sm:$0xff]
    %v2217 = vld [vmem:[%s4 + $0x138] sm:$0xff]
    %v2218 = vld [vmem:[%s4 + $0x140] sm:$0xff]
    %v2219 = vld [vmem:[%s4 + $0x148] sm:$0xff]
    %v2220 = vld [vmem:[%s4 + $0x150] sm:$0xff]
    %v2221 = vld [vmem:[%s4 + $0x158] sm:$0xff]
    %v2222 = vld [vmem:[%s4 + $0x160] sm:$0xff]
    %v2223 = vld [vmem:[%s4 + $0x168] sm:$0xff]
    %v2224 = vld [vmem:[%s4 + $0x170] sm:$0xff]
    %v2225 = vld [vmem:[%s4 + $0x178] sm:$0xff]
    %v2226 = vld [vmem:[%s4 + $0x180] sm:$0xff]
    %v2227 = vld [vmem:[%s4 + $0x188] sm:$0xff]
    %v2228 = vld [vmem:[%s4 + $0x190] sm:$0xff]
    %v2229 = vld [vmem:[%s4 + $0x198] sm:$0xff]
    %v2230 = vld [vmem:[%s4 + $0x1a0] sm:$0xff]
    %v2231 = vld [vmem:[%s4 + $0x1a8] sm:$0xff]
    %v2232 = vld [vmem:[%s4 + $0x1b0] sm:$0xff]
    %v2233 = vld [vmem:[%s4 + $0x1b8] sm:$0xff]
    %v2234 = vld [vmem:[%s4 + $0x1c0] sm:$0xff]
    %v2235 = vld [vmem:[%s4 + $0x1c8] sm:$0xff]
    %v2236 = vld [vmem:[%s4 + $0x1d0] sm:$0xff]
    %v2237 = vld [vmem:[%s4 + $0x1d8] sm:$0xff]
    %v2238 = vld [vmem:[%s4 + $0x1e0] sm:$0xff]
    %v2239 = vld [vmem:[%s4 + $0x1e8] sm:$0xff]
    %v2240 = vld [vmem:[%s4 + $0x1f0] sm:$0xff]
    %v2241 = vld [vmem:[%s4 + $0x1f8] sm:$0xff]
    %v2242 = vld [vmem:[%s5] sm:$0xf]
    %v2244 = vlaneseq
    %v2245 = vshrl.u32 %v2244, 7
    %v2246 = vsub.s32 0, %v2245
    %v2247 = vrot.slane %v2242, %v2246
    %v2248 = vlaneseq
    %v2249 = vshrl.u32 %v2248, 7
    %v2250 = vsub.s32 1, %v2249
    %v2251 = vrot.slane %v2242, %v2250
    %v2252 = vlaneseq
    %v2253 = vshrl.u32 %v2252, 7
    %v2254 = vsub.s32 2, %v2253
    %v2255 = vrot.slane %v2242, %v2254
    %v2256 = vlaneseq
    %v2257 = vshrl.u32 %v2256, 7
    %v2258 = vsub.s32 3, %v2257
    %v2259 = vrot.slane %v2242, %v2258
    %v2265 = vunpack.c.l.b16 %v2176
    %v2266 = vunpack.c.h.b16 %v2176
    %v2267 = vpack.c.b16 %v2265, %v2265
    %v2268 = vpack.c.b16 %v2266, %v2266
    %v2335 = vunpack.c.l.b16 %v2178
    %v2336 = vunpack.c.h.b16 %v2178
    %v2337 = vunpack.c.l.b16 %v2179
    %v2338 = vunpack.c.h.b16 %v2179
    %v2339 = vunpack.c.l.b16 %v2180
    %v2340 = vunpack.c.h.b16 %v2180
    %v2341 = vunpack.c.l.b16 %v2181
    %v2342 = vunpack.c.h.b16 %v2181
    %v2343 = vunpack.c.l.b16 %v2182
    %v2344 = vunpack.c.h.b16 %v2182
    %v2345 = vunpack.c.l.b16 %v2183
    %v2346 = vunpack.c.h.b16 %v2183
    %v2347 = vunpack.c.l.b16 %v2184
    %v2348 = vunpack.c.h.b16 %v2184
    %v2349 = vunpack.c.l.b16 %v2185
    %v2350 = vunpack.c.h.b16 %v2185
    %v2351 = vunpack.c.l.b16 %v2186
    %v2352 = vunpack.c.h.b16 %v2186
    %v2353 = vunpack.c.l.b16 %v2187
    %v2354 = vunpack.c.h.b16 %v2187
    %v2355 = vunpack.c.l.b16 %v2188
    %v2356 = vunpack.c.h.b16 %v2188
    %v2357 = vunpack.c.l.b16 %v2189
    %v2358 = vunpack.c.h.b16 %v2189
    %v2359 = vunpack.c.l.b16 %v2190
    %v2360 = vunpack.c.h.b16 %v2190
    %v2361 = vunpack.c.l.b16 %v2191
    %v2362 = vunpack.c.h.b16 %v2191
    %v2363 = vunpack.c.l.b16 %v2192
    %v2364 = vunpack.c.h.b16 %v2192
    %v2365 = vunpack.c.l.b16 %v2193
    %v2366 = vunpack.c.h.b16 %v2193
    %v2367 = vunpack.c.l.b16 %v2194
    %v2368 = vunpack.c.h.b16 %v2194
    %v2369 = vunpack.c.l.b16 %v2195
    %v2370 = vunpack.c.h.b16 %v2195
    %v2371 = vunpack.c.l.b16 %v2196
    %v2372 = vunpack.c.h.b16 %v2196
    %v2373 = vunpack.c.l.b16 %v2197
    %v2374 = vunpack.c.h.b16 %v2197
    %v2375 = vunpack.c.l.b16 %v2198
    %v2376 = vunpack.c.h.b16 %v2198
    %v2377 = vunpack.c.l.b16 %v2199
    %v2378 = vunpack.c.h.b16 %v2199
    %v2379 = vunpack.c.l.b16 %v2200
    %v2380 = vunpack.c.h.b16 %v2200
    %v2381 = vunpack.c.l.b16 %v2201
    %v2382 = vunpack.c.h.b16 %v2201
    %v2383 = vunpack.c.l.b16 %v2202
    %v2384 = vunpack.c.h.b16 %v2202
    %v2385 = vunpack.c.l.b16 %v2203
    %v2386 = vunpack.c.h.b16 %v2203
    %v2387 = vunpack.c.l.b16 %v2204
    %v2388 = vunpack.c.h.b16 %v2204
    %v2389 = vunpack.c.l.b16 %v2205
    %v2390 = vunpack.c.h.b16 %v2205
    %v2391 = vunpack.c.l.b16 %v2206
    %v2392 = vunpack.c.h.b16 %v2206
    %v2393 = vunpack.c.l.b16 %v2207
    %v2394 = vunpack.c.h.b16 %v2207
    %v2395 = vunpack.c.l.b16 %v2208
    %v2396 = vunpack.c.h.b16 %v2208
    %v2397 = vunpack.c.l.b16 %v2209
    %v2398 = vunpack.c.h.b16 %v2209
    %v2399 = vunpack.c.l.b16 %v2210
    %v2400 = vunpack.c.h.b16 %v2210
    %v2401 = vunpack.c.l.b16 %v2211
    %v2402 = vunpack.c.h.b16 %v2211
    %v2403 = vunpack.c.l.b16 %v2212
    %v2404 = vunpack.c.h.b16 %v2212
    %v2405 = vunpack.c.l.b16 %v2213
    %v2406 = vunpack.c.h.b16 %v2213
    %v2407 = vunpack.c.l.b16 %v2214
    %v2408 = vunpack.c.h.b16 %v2214
    %v2409 = vunpack.c.l.b16 %v2215
    %v2410 = vunpack.c.h.b16 %v2215
    %v2411 = vunpack.c.l.b16 %v2216
    %v2412 = vunpack.c.h.b16 %v2216
    %v2413 = vunpack.c.l.b16 %v2217
    %v2414 = vunpack.c.h.b16 %v2217
    %v2415 = vunpack.c.l.b16 %v2218
    %v2416 = vunpack.c.h.b16 %v2218
    %v2417 = vunpack.c.l.b16 %v2219
    %v2418 = vunpack.c.h.b16 %v2219
    %v2419 = vunpack.c.l.b16 %v2220
    %v2420 = vunpack.c.h.b16 %v2220
    %v2421 = vunpack.c.l.b16 %v2221
    %v2422 = vunpack.c.h.b16 %v2221
    %v2423 = vunpack.c.l.b16 %v2222
    %v2424 = vunpack.c.h.b16 %v2222
    %v2425 = vunpack.c.l.b16 %v2223
    %v2426 = vunpack.c.h.b16 %v2223
    %v2427 = vunpack.c.l.b16 %v2224
    %v2428 = vunpack.c.h.b16 %v2224
    %v2429 = vunpack.c.l.b16 %v2225
    %v2430 = vunpack.c.h.b16 %v2225
    %v2431 = vunpack.c.l.b16 %v2226
    %v2432 = vunpack.c.h.b16 %v2226
    %v2433 = vunpack.c.l.b16 %v2227
    %v2434 = vunpack.c.h.b16 %v2227
    %v2435 = vunpack.c.l.b16 %v2228
    %v2436 = vunpack.c.h.b16 %v2228
    %v2437 = vunpack.c.l.b16 %v2229
    %v2438 = vunpack.c.h.b16 %v2229
    %v2439 = vunpack.c.l.b16 %v2230
    %v2440 = vunpack.c.h.b16 %v2230
    %v2441 = vunpack.c.l.b16 %v2231
    %v2442 = vunpack.c.h.b16 %v2231
    %v2443 = vunpack.c.l.b16 %v2232
    %v2444 = vunpack.c.h.b16 %v2232
    %v2445 = vunpack.c.l.b16 %v2233
    %v2446 = vunpack.c.h.b16 %v2233
    %v2447 = vunpack.c.l.b16 %v2234
    %v2448 = vunpack.c.h.b16 %v2234
    %v2449 = vunpack.c.l.b16 %v2235
    %v2450 = vunpack.c.h.b16 %v2235
    %v2451 = vunpack.c.l.b16 %v2236
    %v2452 = vunpack.c.h.b16 %v2236
    %v2453 = vunpack.c.l.b16 %v2237
    %v2454 = vunpack.c.h.b16 %v2237
    %v2455 = vunpack.c.l.b16 %v2238
    %v2456 = vunpack.c.h.b16 %v2238
    %v2457 = vunpack.c.l.b16 %v2239
    %v2458 = vunpack.c.h.b16 %v2239
    %v2459 = vunpack.c.l.b16 %v2240
    %v2460 = vunpack.c.h.b16 %v2240
    %v2461 = vunpack.c.l.b16 %v2241
    %v2462 = vunpack.c.h.b16 %v2241
    %v2463 = vpack.c.b16 %v2339, %v2335
    %v2464 = vpack.c.b16 %v2340, %v2336
    %v2465 = vpack.c.b16 %v2341, %v2337
    %v2466 = vpack.c.b16 %v2342, %v2338
    %v2467 = vpack.c.b16 %v2347, %v2343
    %v2468 = vpack.c.b16 %v2348, %v2344
    %v2469 = vpack.c.b16 %v2349, %v2345
    %v2470 = vpack.c.b16 %v2350, %v2346
    %v2471 = vpack.c.b16 %v2355, %v2351
    %v2472 = vpack.c.b16 %v2356, %v2352
    %v2473 = vpack.c.b16 %v2357, %v2353
    %v2474 = vpack.c.b16 %v2358, %v2354
    %v2475 = vpack.c.b16 %v2363, %v2359
    %v2476 = vpack.c.b16 %v2364, %v2360
    %v2477 = vpack.c.b16 %v2365, %v2361
    %v2478 = vpack.c.b16 %v2366, %v2362
    %v2479 = vpack.c.b16 %v2371, %v2367
    %v2480 = vpack.c.b16 %v2372, %v2368
    %v2481 = vpack.c.b16 %v2373, %v2369
    %v2482 = vpack.c.b16 %v2374, %v2370
    %v2483 = vpack.c.b16 %v2379, %v2375
    %v2484 = vpack.c.b16 %v2380, %v2376
    %v2485 = vpack.c.b16 %v2381, %v2377
    %v2486 = vpack.c.b16 %v2382, %v2378
    %v2487 = vpack.c.b16 %v2387, %v2383
    %v2488 = vpack.c.b16 %v2388, %v2384
    %v2489 = vpack.c.b16 %v2389, %v2385
    %v2490 = vpack.c.b16 %v2390, %v2386
    %v2491 = vpack.c.b16 %v2395, %v2391
    %v2492 = vpack.c.b16 %v2396, %v2392
    %v2493 = vpack.c.b16 %v2397, %v2393
    %v2494 = vpack.c.b16 %v2398, %v2394
    %v2495 = vpack.c.b16 %v2403, %v2399
    %v2496 = vpack.c.b16 %v2404, %v2400
    %v2497 = vpack.c.b16 %v2405, %v2401
    %v2498 = vpack.c.b16 %v2406, %v2402
    %v2499 = vpack.c.b16 %v2411, %v2407
    %v2500 = vpack.c.b16 %v2412, %v2408
    %v2501 = vpack.c.b16 %v2413, %v2409
    %v2502 = vpack.c.b16 %v2414, %v2410
    %v2503 = vpack.c.b16 %v2419, %v2415
    %v2504 = vpack.c.b16 %v2420, %v2416
    %v2505 = vpack.c.b16 %v2421, %v2417
    %v2506 = vpack.c.b16 %v2422, %v2418
    %v2507 = vpack.c.b16 %v2427, %v2423
    %v2508 = vpack.c.b16 %v2428, %v2424
    %v2509 = vpack.c.b16 %v2429, %v2425
    %v2510 = vpack.c.b16 %v2430, %v2426
    %v2511 = vpack.c.b16 %v2435, %v2431
    %v2512 = vpack.c.b16 %v2436, %v2432
    %v2513 = vpack.c.b16 %v2437, %v2433
    %v2514 = vpack.c.b16 %v2438, %v2434
    %v2515 = vpack.c.b16 %v2443, %v2439
    %v2516 = vpack.c.b16 %v2444, %v2440
    %v2517 = vpack.c.b16 %v2445, %v2441
    %v2518 = vpack.c.b16 %v2446, %v2442
    %v2519 = vpack.c.b16 %v2451, %v2447
    %v2520 = vpack.c.b16 %v2452, %v2448
    %v2521 = vpack.c.b16 %v2453, %v2449
    %v2522 = vpack.c.b16 %v2454, %v2450
    %v2523 = vpack.c.b16 %v2459, %v2455
    %v2524 = vpack.c.b16 %v2460, %v2456
    %v2525 = vpack.c.b16 %v2461, %v2457
    %v2526 = vpack.c.b16 %v2462, %v2458
    %2591 = vmatprep.subr.bf16.mxu0 %v2492
    %2592 = vmatpush1.bf16.msra.mxu0 %v2491
    %2593 = vmatprep.subr.bf16.mxu0 %v2488
    %2594 = vmatpush1.bf16.msra.mxu0 %v2487
    %2595 = vmatprep.subr.bf16.mxu0 %v2484
    %2596 = vmatpush1.bf16.msra.mxu0 %v2483
    %2597 = vmatprep.subr.bf16.mxu0 %v2480
    %2598 = vmatpush1.bf16.msra.mxu0 %v2479
    %2599 = vmatprep.subr.bf16.mxu0 %v2476
    %2600 = vmatpush1.bf16.msra.mxu0 %v2475
    %2601 = vmatprep.subr.bf16.mxu0 %v2472
    %2602 = vmatpush1.bf16.msra.mxu0 %v2471
    %2603 = vmatprep.subr.bf16.mxu0 %v2468
    %2604 = vmatpush1.bf16.msra.mxu0 %v2467
    %2605 = vmatprep.subr.bf16.mxu0 %v2464
    %2606 = vmatpush1.bf16.msra.mxu0 %v2463
    %2607 = vmatprep.subr.bf16.mxu0 %v2524
    %2608 = vmatpush2.bf16.msra.mxu0 %v2523
    %2609 = vmatprep.subr.bf16.mxu0 %v2520
    %2610 = vmatpush2.bf16.msra.mxu0 %v2519
    %2611 = vmatprep.subr.bf16.mxu0 %v2516
    %2612 = vmatpush2.bf16.msra.mxu0 %v2515
    %2613 = vmatprep.subr.bf16.mxu0 %v2512
    %2614 = vmatpush2.bf16.msra.mxu0 %v2511
    %2615 = vmatprep.subr.bf16.mxu0 %v2508
    %2616 = vmatpush2.bf16.msra.mxu0 %v2507
    %2617 = vmatprep.subr.bf16.mxu0 %v2504
    %2618 = vmatpush2.bf16.msra.mxu0 %v2503
    %2619 = vmatprep.subr.bf16.mxu0 %v2500
    %2620 = vmatpush2.bf16.msra.mxu0 %v2499
    %2621 = vmatprep.subr.bf16.mxu0 %v2496
    %2622 = vmatpush2.bf16.msra.mxu0 %v2495
    %2623 = vmatprep.mubr.bf16.mxu0 %v2268
    %2624 = vmatmul.mubr.bf16.gmra.mxu0 %v2267
    %v2625 = vpop.f32.mrf.mxu0
    %v2626 = vadd.f32 %v2247, %v2625
    %v2627 = vpop.f32.mrf.mxu0
    %v2628 = vadd.f32 %v2251, %v2627
    %v2629 = vpop.f32.mrf.mxu0
    %v2630 = vpop.f32.mrf.mxu0
    %2631 = vdwg.mxu0
    %2632 = vmatprep.subr.bf16.mxu0 %v2494
    %2633 = vmatpush1.bf16.msra.mxu0 %v2493
    %2634 = vmatprep.subr.bf16.mxu0 %v2490
    %2635 = vmatpush1.bf16.msra.mxu0 %v2489
    %2636 = vmatprep.subr.bf16.mxu0 %v2486
    %2637 = vmatpush1.bf16.msra.mxu0 %v2485
    %2638 = vmatprep.subr.bf16.mxu0 %v2482
    %2639 = vmatpush1.bf16.msra.mxu0 %v2481
    %2640 = vmatprep.subr.bf16.mxu0 %v2478
    %2641 = vmatpush1.bf16.msra.mxu0 %v2477
    %2642 = vmatprep.subr.bf16.mxu0 %v2474
    %2643 = vmatpush1.bf16.msra.mxu0 %v2473
    %2644 = vmatprep.subr.bf16.mxu0 %v2470
    %2645 = vmatpush1.bf16.msra.mxu0 %v2469
    %2646 = vmatprep.subr.bf16.mxu0 %v2466
    %2647 = vmatpush1.bf16.msra.mxu0 %v2465
    %2648 = vmatprep.subr.bf16.mxu0 %v2526
    %2649 = vmatpush2.bf16.msra.mxu0 %v2525
    %2650 = vmatprep.subr.bf16.mxu0 %v2522
    %2651 = vmatpush2.bf16.msra.mxu0 %v2521
    %2652 = vmatprep.subr.bf16.mxu0 %v2518
    %2653 = vmatpush2.bf16.msra.mxu0 %v2517
    %2654 = vmatprep.subr.bf16.mxu0 %v2514
    %2655 = vmatpush2.bf16.msra.mxu0 %v2513
    %2656 = vmatprep.subr.bf16.mxu0 %v2510
    %2657 = vmatpush2.bf16.msra.mxu0 %v2509
    %2658 = vmatprep.subr.bf16.mxu0 %v2506
    %2659 = vmatpush2.bf16.msra.mxu0 %v2505
    %2660 = vmatprep.subr.bf16.mxu0 %v2502
    %2661 = vmatpush2.bf16.msra.mxu0 %v2501
    %2662 = vmatprep.subr.bf16.mxu0 %v2498
    %2663 = vmatpush2.bf16.msra.mxu0 %v2497
    %2664 = vmatprep.mubr.bf16.mxu0 %v2268
    %2665 = vmatmul.mubr.bf16.gmra.mxu0 %v2267
    %v2666 = vpop.f32.mrf.mxu0
    %v2667 = vadd.f32 %v2255, %v2666
    %v2668 = vpop.f32.mrf.mxu0
    %v2669 = vadd.f32 %v2259, %v2668
    %v2670 = vpop.f32.mrf.mxu0
    %v2671 = vpop.f32.mrf.mxu0
    %2672 = vdwg.mxu0
    %v2673 = vxor.u32 %v2626, 2147483648
    %v2674 = vmul.f32 %v2673, 1.442695
    %v2675 = vpow.pop %v2674
    %v2676 = vadd.f32 %v2675, 1.0
    %v2677 = vrcp.pop %v2676
    %v2678 = vmul.f32 1.0, %v2677
    %v2679 = vxor.u32 %v2628, 2147483648
    %v2680 = vmul.f32 %v2679, 1.442695
    %v2681 = vpow.pop %v2680
    %v2682 = vadd.f32 %v2681, 1.0
    %v2683 = vrcp.pop %v2682
    %v2684 = vmul.f32 1.0, %v2683
    %v2685 = vtanh.pop %v2667
    %v2686 = vxor.u32 %v2669, 2147483648
    %v2687 = vmul.f32 %v2686, 1.442695
    %v2688 = vpow.pop %v2687
    %v2689 = vadd.f32 %v2688, 1.0
    %v2690 = vrcp.pop %v2689
    %v2691 = vmul.f32 1.0, %v2690
    %v2692 = vmul.f32 %v2684, %v2177
    %v2693 = vmul.f32 %v2678, %v2685
    %v2694 = vadd.f32 %v2692, %v2693
    %v2695 = vtanh.pop %v2694
    %v2696 = vmul.f32 %v2691, %v2695
    %2697 = vst [vmem:[#allocation2] sm:$0xff] %v2694
    %v2698 = vpack.c.bf16 %v2696, %v2696
    %2699 = vst [vmem:[#allocation3 + $0x4] sm:$0xf] %v2698
    %s2700 = scalar_lea.vmem %s1, 20
    %v2701 = vld [vmem:[%s2700] sm:$0xf]
    %2702 = vst [vmem:[#allocation3] sm:$0xf] %v2701
    %v2703 = vld [vmem:[#allocation3] sm:$0xff]
    %v2704 = vld [vmem:[#allocation2] sm:$0xff]
    %v2705 = vld [vmem:[%s4] sm:$0xff]
    %v2706 = vld [vmem:[%s4 + $0x8] sm:$0xff]
    %v2707 = vld [vmem:[%s4 + $0x10] sm:$0xff]
    %v2708 = vld [vmem:[%s4 + $0x18] sm:$0xff]
    %v2709 = vld [vmem:[%s4 + $0x20] sm:$0xff]
    %v2710 = vld [vmem:[%s4 + $0x28] sm:$0xff]
    %v2711 = vld [vmem:[%s4 + $0x30] sm:$0xff]
    %v2712 = vld [vmem:[%s4 + $0x38] sm:$0xff]
    %v2713 = vld [vmem:[%s4 + $0x40] sm:$0xff]
    %v2714 = vld [vmem:[%s4 + $0x48] sm:$0xff]
    %v2715 = vld [vmem:[%s4 + $0x50] sm:$0xff]
    %v2716 = vld [vmem:[%s4 + $0x58] sm:$0xff]
    %v2717 = vld [vmem:[%s4 + $0x60] sm:$0xff]
    %v2718 = vld [vmem:[%s4 + $0x68] sm:$0xff]
    %v2719 = vld [vmem:[%s4 + $0x70] sm:$0xff]
    %v2720 = vld [vmem:[%s4 + $0x78] sm:$0xff]
    %v2721 = vld [vmem:[%s4 + $0x80] sm:$0xff]
    %v2722 = vld [vmem:[%s4 + $0x88] sm:$0xff]
    %v2723 = vld [vmem:[%s4 + $0x90] sm:$0xff]
    %v2724 = vld [vmem:[%s4 + $0x98] sm:$0xff]
    %v2725 = vld [vmem:[%s4 + $0xa0] sm:$0xff]
    %v2726 = vld [vmem:[%s4 + $0xa8] sm:$0xff]
    %v2727 = vld [vmem:[%s4 + $0xb0] sm:$0xff]
    %v2728 = vld [vmem:[%s4 + $0xb8] sm:$0xff]
    %v2729 = vld [vmem:[%s4 + $0xc0] sm:$0xff]
    %v2730 = vld [vmem:[%s4 + $0xc8] sm:$0xff]
    %v2731 = vld [vmem:[%s4 + $0xd0] sm:$0xff]
    %v2732 = vld [vmem:[%s4 + $0xd8] sm:$0xff]
    %v2733 = vld [vmem:[%s4 + $0xe0] sm:$0xff]
    %v2734 = vld [vmem:[%s4 + $0xe8] sm:$0xff]
    %v2735 = vld [vmem:[%s4 + $0xf0] sm:$0xff]
    %v2736 = vld [vmem:[%s4 + $0xf8] sm:$0xff]
    %v2737 = vld [vmem:[%s4 + $0x100] sm:$0xff]
    %v2738 = vld [vmem:[%s4 + $0x108] sm:$0xff]
    %v2739 = vld [vmem:[%s4 + $0x110] sm:$0xff]
    %v2740 = vld [vmem:[%s4 + $0x118] sm:$0xff]
    %v2741 = vld [vmem:[%s4 + $0x120] sm:$0xff]
    %v2742 = vld [vmem:[%s4 + $0x128] sm:$0xff]
    %v2743 = vld [vmem:[%s4 + $0x130] sm:$0xff]
    %v2744 = vld [vmem:[%s4 + $0x138] sm:$0xff]
    %v2745 = vld [vmem:[%s4 + $0x140] sm:$0xff]
    %v2746 = vld [vmem:[%s4 + $0x148] sm:$0xff]
    %v2747 = vld [vmem:[%s4 + $0x150] sm:$0xff]
    %v2748 = vld [vmem:[%s4 + $0x158] sm:$0xff]
    %v2749 = vld [vmem:[%s4 + $0x160] sm:$0xff]
    %v2750 = vld [vmem:[%s4 + $0x168] sm:$0xff]
    %v2751 = vld [vmem:[%s4 + $0x170] sm:$0xff]
    %v2752 = vld [vmem:[%s4 + $0x178] sm:$0xff]
    %v2753 = vld [vmem:[%s4 + $0x180] sm:$0xff]
    %v2754 = vld [vmem:[%s4 + $0x188] sm:$0xff]
    %v2755 = vld [vmem:[%s4 + $0x190] sm:$0xff]
    %v2756 = vld [vmem:[%s4 + $0x198] sm:$0xff]
    %v2757 = vld [vmem:[%s4 + $0x1a0] sm:$0xff]
    %v2758 = vld [vmem:[%s4 + $0x1a8] sm:$0xff]
    %v2759 = vld [vmem:[%s4 + $0x1b0] sm:$0xff]
    %v2760 = vld [vmem:[%s4 + $0x1b8] sm:$0xff]
    %v2761 = vld [vmem:[%s4 + $0x1c0] sm:$0xff]
    %v2762 = vld [vmem:[%s4 + $0x1c8] sm:$0xff]
    %v2763 = vld [vmem:[%s4 + $0x1d0] sm:$0xff]
    %v2764 = vld [vmem:[%s4 + $0x1d8] sm:$0xff]
    %v2765 = vld [vmem:[%s4 + $0x1e0] sm:$0xff]
    %v2766 = vld [vmem:[%s4 + $0x1e8] sm:$0xff]
    %v2767 = vld [vmem:[%s4 + $0x1f0] sm:$0xff]
    %v2768 = vld [vmem:[%s4 + $0x1f8] sm:$0xff]
    %v2769 = vld [vmem:[%s5] sm:$0xf]
    %v2771 = vlaneseq
    %v2772 = vshrl.u32 %v2771, 7
    %v2773 = vsub.s32 0, %v2772
    %v2774 = vrot.slane %v2769, %v2773
    %v2775 = vlaneseq
    %v2776 = vshrl.u32 %v2775, 7
    %v2777 = vsub.s32 1, %v2776
    %v2778 = vrot.slane %v2769, %v2777
    %v2779 = vlaneseq
    %v2780 = vshrl.u32 %v2779, 7
    %v2781 = vsub.s32 2, %v2780
    %v2782 = vrot.slane %v2769, %v2781
    %v2783 = vlaneseq
    %v2784 = vshrl.u32 %v2783, 7
    %v2785 = vsub.s32 3, %v2784
    %v2786 = vrot.slane %v2769, %v2785
    %v2792 = vunpack.c.l.b16 %v2703
    %v2793 = vunpack.c.h.b16 %v2703
    %v2794 = vpack.c.b16 %v2792, %v2792
    %v2795 = vpack.c.b16 %v2793, %v2793
    %v2862 = vunpack.c.l.b16 %v2705
    %v2863 = vunpack.c.h.b16 %v2705
    %v2864 = vunpack.c.l.b16 %v2706
    %v2865 = vunpack.c.h.b16 %v2706
    %v2866 = vunpack.c.l.b16 %v2707
    %v2867 = vunpack.c.h.b16 %v2707
    %v2868 = vunpack.c.l.b16 %v2708
    %v2869 = vunpack.c.h.b16 %v2708
    %v2870 = vunpack.c.l.b16 %v2709
    %v2871 = vunpack.c.h.b16 %v2709
    %v2872 = vunpack.c.l.b16 %v2710
    %v2873 = vunpack.c.h.b16 %v2710
    %v2874 = vunpack.c.l.b16 %v2711
    %v2875 = vunpack.c.h.b16 %v2711
    %v2876 = vunpack.c.l.b16 %v2712
    %v2877 = vunpack.c.h.b16 %v2712
    %v2878 = vunpack.c.l.b16 %v2713
    %v2879 = vunpack.c.h.b16 %v2713
    %v2880 = vunpack.c.l.b16 %v2714
    %v2881 = vunpack.c.h.b16 %v2714
    %v2882 = vunpack.c.l.b16 %v2715
    %v2883 = vunpack.c.h.b16 %v2715
    %v2884 = vunpack.c.l.b16 %v2716
    %v2885 = vunpack.c.h.b16 %v2716
    %v2886 = vunpack.c.l.b16 %v2717
    %v2887 = vunpack.c.h.b16 %v2717
    %v2888 = vunpack.c.l.b16 %v2718
    %v2889 = vunpack.c.h.b16 %v2718
    %v2890 = vunpack.c.l.b16 %v2719
    %v2891 = vunpack.c.h.b16 %v2719
    %v2892 = vunpack.c.l.b16 %v2720
    %v2893 = vunpack.c.h.b16 %v2720
    %v2894 = vunpack.c.l.b16 %v2721
    %v2895 = vunpack.c.h.b16 %v2721
    %v2896 = vunpack.c.l.b16 %v2722
    %v2897 = vunpack.c.h.b16 %v2722
    %v2898 = vunpack.c.l.b16 %v2723
    %v2899 = vunpack.c.h.b16 %v2723
    %v2900 = vunpack.c.l.b16 %v2724
    %v2901 = vunpack.c.h.b16 %v2724
    %v2902 = vunpack.c.l.b16 %v2725
    %v2903 = vunpack.c.h.b16 %v2725
    %v2904 = vunpack.c.l.b16 %v2726
    %v2905 = vunpack.c.h.b16 %v2726
    %v2906 = vunpack.c.l.b16 %v2727
    %v2907 = vunpack.c.h.b16 %v2727
    %v2908 = vunpack.c.l.b16 %v2728
    %v2909 = vunpack.c.h.b16 %v2728
    %v2910 = vunpack.c.l.b16 %v2729
    %v2911 = vunpack.c.h.b16 %v2729
    %v2912 = vunpack.c.l.b16 %v2730
    %v2913 = vunpack.c.h.b16 %v2730
    %v2914 = vunpack.c.l.b16 %v2731
    %v2915 = vunpack.c.h.b16 %v2731
    %v2916 = vunpack.c.l.b16 %v2732
    %v2917 = vunpack.c.h.b16 %v2732
    %v2918 = vunpack.c.l.b16 %v2733
    %v2919 = vunpack.c.h.b16 %v2733
    %v2920 = vunpack.c.l.b16 %v2734
    %v2921 = vunpack.c.h.b16 %v2734
    %v2922 = vunpack.c.l.b16 %v2735
    %v2923 = vunpack.c.h.b16 %v2735
    %v2924 = vunpack.c.l.b16 %v2736
    %v2925 = vunpack.c.h.b16 %v2736
    %v2926 = vunpack.c.l.b16 %v2737
    %v2927 = vunpack.c.h.b16 %v2737
    %v2928 = vunpack.c.l.b16 %v2738
    %v2929 = vunpack.c.h.b16 %v2738
    %v2930 = vunpack.c.l.b16 %v2739
    %v2931 = vunpack.c.h.b16 %v2739
    %v2932 = vunpack.c.l.b16 %v2740
    %v2933 = vunpack.c.h.b16 %v2740
    %v2934 = vunpack.c.l.b16 %v2741
    %v2935 = vunpack.c.h.b16 %v2741
    %v2936 = vunpack.c.l.b16 %v2742
    %v2937 = vunpack.c.h.b16 %v2742
    %v2938 = vunpack.c.l.b16 %v2743
    %v2939 = vunpack.c.h.b16 %v2743
    %v2940 = vunpack.c.l.b16 %v2744
    %v2941 = vunpack.c.h.b16 %v2744
    %v2942 = vunpack.c.l.b16 %v2745
    %v2943 = vunpack.c.h.b16 %v2745
    %v2944 = vunpack.c.l.b16 %v2746
    %v2945 = vunpack.c.h.b16 %v2746
    %v2946 = vunpack.c.l.b16 %v2747
    %v2947 = vunpack.c.h.b16 %v2747
    %v2948 = vunpack.c.l.b16 %v2748
    %v2949 = vunpack.c.h.b16 %v2748
    %v2950 = vunpack.c.l.b16 %v2749
    %v2951 = vunpack.c.h.b16 %v2749
    %v2952 = vunpack.c.l.b16 %v2750
    %v2953 = vunpack.c.h.b16 %v2750
    %v2954 = vunpack.c.l.b16 %v2751
    %v2955 = vunpack.c.h.b16 %v2751
    %v2956 = vunpack.c.l.b16 %v2752
    %v2957 = vunpack.c.h.b16 %v2752
    %v2958 = vunpack.c.l.b16 %v2753
    %v2959 = vunpack.c.h.b16 %v2753
    %v2960 = vunpack.c.l.b16 %v2754
    %v2961 = vunpack.c.h.b16 %v2754
    %v2962 = vunpack.c.l.b16 %v2755
    %v2963 = vunpack.c.h.b16 %v2755
    %v2964 = vunpack.c.l.b16 %v2756
    %v2965 = vunpack.c.h.b16 %v2756
    %v2966 = vunpack.c.l.b16 %v2757
    %v2967 = vunpack.c.h.b16 %v2757
    %v2968 = vunpack.c.l.b16 %v2758
    %v2969 = vunpack.c.h.b16 %v2758
    %v2970 = vunpack.c.l.b16 %v2759
    %v2971 = vunpack.c.h.b16 %v2759
    %v2972 = vunpack.c.l.b16 %v2760
    %v2973 = vunpack.c.h.b16 %v2760
    %v2974 = vunpack.c.l.b16 %v2761
    %v2975 = vunpack.c.h.b16 %v2761
    %v2976 = vunpack.c.l.b16 %v2762
    %v2977 = vunpack.c.h.b16 %v2762
    %v2978 = vunpack.c.l.b16 %v2763
    %v2979 = vunpack.c.h.b16 %v2763
    %v2980 = vunpack.c.l.b16 %v2764
    %v2981 = vunpack.c.h.b16 %v2764
    %v2982 = vunpack.c.l.b16 %v2765
    %v2983 = vunpack.c.h.b16 %v2765
    %v2984 = vunpack.c.l.b16 %v2766
    %v2985 = vunpack.c.h.b16 %v2766
    %v2986 = vunpack.c.l.b16 %v2767
    %v2987 = vunpack.c.h.b16 %v2767
    %v2988 = vunpack.c.l.b16 %v2768
    %v2989 = vunpack.c.h.b16 %v2768
    %v2990 = vpack.c.b16 %v2866, %v2862
    %v2991 = vpack.c.b16 %v2867, %v2863
    %v2992 = vpack.c.b16 %v2868, %v2864
    %v2993 = vpack.c.b16 %v2869, %v2865
    %v2994 = vpack.c.b16 %v2874, %v2870
    %v2995 = vpack.c.b16 %v2875, %v2871
    %v2996 = vpack.c.b16 %v2876, %v2872
    %v2997 = vpack.c.b16 %v2877, %v2873
    %v2998 = vpack.c.b16 %v2882, %v2878
    %v2999 = vpack.c.b16 %v2883, %v2879
    %v3000 = vpack.c.b16 %v2884, %v2880
    %v3001 = vpack.c.b16 %v2885, %v2881
    %v3002 = vpack.c.b16 %v2890, %v2886
    %v3003 = vpack.c.b16 %v2891, %v2887
    %v3004 = vpack.c.b16 %v2892, %v2888
    %v3005 = vpack.c.b16 %v2893, %v2889
    %v3006 = vpack.c.b16 %v2898, %v2894
    %v3007 = vpack.c.b16 %v2899, %v2895
    %v3008 = vpack.c.b16 %v2900, %v2896
    %v3009 = vpack.c.b16 %v2901, %v2897
    %v3010 = vpack.c.b16 %v2906, %v2902
    %v3011 = vpack.c.b16 %v2907, %v2903
    %v3012 = vpack.c.b16 %v2908, %v2904
    %v3013 = vpack.c.b16 %v2909, %v2905
    %v3014 = vpack.c.b16 %v2914, %v2910
    %v3015 = vpack.c.b16 %v2915, %v2911
    %v3016 = vpack.c.b16 %v2916, %v2912
    %v3017 = vpack.c.b16 %v2917, %v2913
    %v3018 = vpack.c.b16 %v2922, %v2918
    %v3019 = vpack.c.b16 %v2923, %v2919
    %v3020 = vpack.c.b16 %v2924, %v2920
    %v3021 = vpack.c.b16 %v2925, %v2921
    %v3022 = vpack.c.b16 %v2930, %v2926
    %v3023 = vpack.c.b16 %v2931, %v2927
    %v3024 = vpack.c.b16 %v2932, %v2928
    %v3025 = vpack.c.b16 %v2933, %v2929
    %v3026 = vpack.c.b16 %v2938, %v2934
    %v3027 = vpack.c.b16 %v2939, %v2935
    %v3028 = vpack.c.b16 %v2940, %v2936
    %v3029 = vpack.c.b16 %v2941, %v2937
    %v3030 = vpack.c.b16 %v2946, %v2942
    %v3031 = vpack.c.b16 %v2947, %v2943
    %v3032 = vpack.c.b16 %v2948, %v2944
    %v3033 = vpack.c.b16 %v2949, %v2945
    %v3034 = vpack.c.b16 %v2954, %v2950
    %v3035 = vpack.c.b16 %v2955, %v2951
    %v3036 = vpack.c.b16 %v2956, %v2952
    %v3037 = vpack.c.b16 %v2957, %v2953
    %v3038 = vpack.c.b16 %v2962, %v2958
    %v3039 = vpack.c.b16 %v2963, %v2959
    %v3040 = vpack.c.b16 %v2964, %v2960
    %v3041 = vpack.c.b16 %v2965, %v2961
    %v3042 = vpack.c.b16 %v2970, %v2966
    %v3043 = vpack.c.b16 %v2971, %v2967
    %v3044 = vpack.c.b16 %v2972, %v2968
    %v3045 = vpack.c.b16 %v2973, %v2969
    %v3046 = vpack.c.b16 %v2978, %v2974
    %v3047 = vpack.c.b16 %v2979, %v2975
    %v3048 = vpack.c.b16 %v2980, %v2976
    %v3049 = vpack.c.b16 %v2981, %v2977
    %v3050 = vpack.c.b16 %v2986, %v2982
    %v3051 = vpack.c.b16 %v2987, %v2983
    %v3052 = vpack.c.b16 %v2988, %v2984
    %v3053 = vpack.c.b16 %v2989, %v2985
    %3118 = vmatprep.subr.bf16.mxu0 %v3019
    %3119 = vmatpush1.bf16.msra.mxu0 %v3018
    %3120 = vmatprep.subr.bf16.mxu0 %v3015
    %3121 = vmatpush1.bf16.msra.mxu0 %v3014
    %3122 = vmatprep.subr.bf16.mxu0 %v3011
    %3123 = vmatpush1.bf16.msra.mxu0 %v3010
    %3124 = vmatprep.subr.bf16.mxu0 %v3007
    %3125 = vmatpush1.bf16.msra.mxu0 %v3006
    %3126 = vmatprep.subr.bf16.mxu0 %v3003
    %3127 = vmatpush1.bf16.msra.mxu0 %v3002
    %3128 = vmatprep.subr.bf16.mxu0 %v2999
    %3129 = vmatpush1.bf16.msra.mxu0 %v2998
    %3130 = vmatprep.subr.bf16.mxu0 %v2995
    %3131 = vmatpush1.bf16.msra.mxu0 %v2994
    %3132 = vmatprep.subr.bf16.mxu0 %v2991
    %3133 = vmatpush1.bf16.msra.mxu0 %v2990
    %3134 = vmatprep.subr.bf16.mxu0 %v3051
    %3135 = vmatpush2.bf16.msra.mxu0 %v3050
    %3136 = vmatprep.subr.bf16.mxu0 %v3047
    %3137 = vmatpush2.bf16.msra.mxu0 %v3046
    %3138 = vmatprep.subr.bf16.mxu0 %v3043
    %3139 = vmatpush2.bf16.msra.mxu0 %v3042
    %3140 = vmatprep.subr.bf16.mxu0 %v3039
    %3141 = vmatpush2.bf16.msra.mxu0 %v3038
    %3142 = vmatprep.subr.bf16.mxu0 %v3035
    %3143 = vmatpush2.bf16.msra.mxu0 %v3034
    %3144 = vmatprep.subr.bf16.mxu0 %v3031
    %3145 = vmatpush2.bf16.msra.mxu0 %v3030
    %3146 = vmatprep.subr.bf16.mxu0 %v3027
    %3147 = vmatpush2.bf16.msra.mxu0 %v3026
    %3148 = vmatprep.subr.bf16.mxu0 %v3023
    %3149 = vmatpush2.bf16.msra.mxu0 %v3022
    %3150 = vmatprep.mubr.bf16.mxu0 %v2795
    %3151 = vmatmul.mubr.bf16.gmra.mxu0 %v2794
    %v3152 = vpop.f32.mrf.mxu0
    %v3153 = vadd.f32 %v2774, %v3152
    %v3154 = vpop.f32.mrf.mxu0
    %v3155 = vadd.f32 %v2778, %v3154
    %v3156 = vpop.f32.mrf.mxu0
    %v3157 = vpop.f32.mrf.mxu0
    %3158 = vdwg.mxu0
    %3159 = vmatprep.subr.bf16.mxu0 %v3021
    %3160 = vmatpush1.bf16.msra.mxu0 %v3020
    %3161 = vmatprep.subr.bf16.mxu0 %v3017
    %3162 = vmatpush1.bf16.msra.mxu0 %v3016
    %3163 = vmatprep.subr.bf16.mxu0 %v3013
    %3164 = vmatpush1.bf16.msra.mxu0 %v3012
    %3165 = vmatprep.subr.bf16.mxu0 %v3009
    %3166 = vmatpush1.bf16.msra.mxu0 %v3008
    %3167 = vmatprep.subr.bf16.mxu0 %v3005
    %3168 = vmatpush1.bf16.msra.mxu0 %v3004
    %3169 = vmatprep.subr.bf16.mxu0 %v3001
    %3170 = vmatpush1.bf16.msra.mxu0 %v3000
    %3171 = vmatprep.subr.bf16.mxu0 %v2997
    %3172 = vmatpush1.bf16.msra.mxu0 %v2996
    %3173 = vmatprep.subr.bf16.mxu0 %v2993
    %3174 = vmatpush1.bf16.msra.mxu0 %v2992
    %3175 = vmatprep.subr.bf16.mxu0 %v3053
    %3176 = vmatpush2.bf16.msra.mxu0 %v3052
    %3177 = vmatprep.subr.bf16.mxu0 %v3049
    %3178 = vmatpush2.bf16.msra.mxu0 %v3048
    %3179 = vmatprep.subr.bf16.mxu0 %v3045
    %3180 = vmatpush2.bf16.msra.mxu0 %v3044
    %3181 = vmatprep.subr.bf16.mxu0 %v3041
    %3182 = vmatpush2.bf16.msra.mxu0 %v3040
    %3183 = vmatprep.subr.bf16.mxu0 %v3037
    %3184 = vmatpush2.bf16.msra.mxu0 %v3036
    %3185 = vmatprep.subr.bf16.mxu0 %v3033
    %3186 = vmatpush2.bf16.msra.mxu0 %v3032
    %3187 = vmatprep.subr.bf16.mxu0 %v3029
    %3188 = vmatpush2.bf16.msra.mxu0 %v3028
    %3189 = vmatprep.subr.bf16.mxu0 %v3025
    %3190 = vmatpush2.bf16.msra.mxu0 %v3024
    %3191 = vmatprep.mubr.bf16.mxu0 %v2795
    %3192 = vmatmul.mubr.bf16.gmra.mxu0 %v2794
    %v3193 = vpop.f32.mrf.mxu0
    %v3194 = vadd.f32 %v2782, %v3193
    %v3195 = vpop.f32.mrf.mxu0
    %v3196 = vadd.f32 %v2786, %v3195
    %v3197 = vpop.f32.mrf.mxu0
    %v3198 = vpop.f32.mrf.mxu0
    %3199 = vdwg.mxu0
    %v3200 = vxor.u32 %v3153, 2147483648
    %v3201 = vmul.f32 %v3200, 1.442695
    %v3202 = vpow.pop %v3201
    %v3203 = vadd.f32 %v3202, 1.0
    %v3204 = vrcp.pop %v3203
    %v3205 = vmul.f32 1.0, %v3204
    %v3206 = vxor.u32 %v3155, 2147483648
    %v3207 = vmul.f32 %v3206, 1.442695
    %v3208 = vpow.pop %v3207
    %v3209 = vadd.f32 %v3208, 1.0
    %v3210 = vrcp.pop %v3209
    %v3211 = vmul.f32 1.0, %v3210
    %v3212 = vtanh.pop %v3194
    %v3213 = vxor.u32 %v3196, 2147483648
    %v3214 = vmul.f32 %v3213, 1.442695
    %v3215 = vpow.pop %v3214
    %v3216 = vadd.f32 %v3215, 1.0
    %v3217 = vrcp.pop %v3216
    %v3218 = vmul.f32 1.0, %v3217
    %v3219 = vmul.f32 %v3211, %v2704
    %v3220 = vmul.f32 %v3205, %v3212
    %v3221 = vadd.f32 %v3219, %v3220
    %v3222 = vtanh.pop %v3221
    %v3223 = vmul.f32 %v3218, %v3222
    %3224 = vst [vmem:[#allocation2] sm:$0xff] %v3221
    %v3225 = vpack.c.bf16 %v3223, %v3223
    %3226 = vst [vmem:[#allocation3 + $0x4] sm:$0xf] %v3225
    %s3227 = scalar_lea.vmem %s1, 24
    %v3228 = vld [vmem:[%s3227] sm:$0xf]
    %3229 = vst [vmem:[#allocation3] sm:$0xf] %v3228
    %v3230 = vld [vmem:[#allocation3] sm:$0xff]
    %v3231 = vld [vmem:[#allocation2] sm:$0xff]
    %v3232 = vld [vmem:[%s4] sm:$0xff]
    %v3233 = vld [vmem:[%s4 + $0x8] sm:$0xff]
    %v3234 = vld [vmem:[%s4 + $0x10] sm:$0xff]
    %v3235 = vld [vmem:[%s4 + $0x18] sm:$0xff]
    %v3236 = vld [vmem:[%s4 + $0x20] sm:$0xff]
    %v3237 = vld [vmem:[%s4 + $0x28] sm:$0xff]
    %v3238 = vld [vmem:[%s4 + $0x30] sm:$0xff]
    %v3239 = vld [vmem:[%s4 + $0x38] sm:$0xff]
    %v3240 = vld [vmem:[%s4 + $0x40] sm:$0xff]
    %v3241 = vld [vmem:[%s4 + $0x48] sm:$0xff]
    %v3242 = vld [vmem:[%s4 + $0x50] sm:$0xff]
    %v3243 = vld [vmem:[%s4 + $0x58] sm:$0xff]
    %v3244 = vld [vmem:[%s4 + $0x60] sm:$0xff]
    %v3245 = vld [vmem:[%s4 + $0x68] sm:$0xff]
    %v3246 = vld [vmem:[%s4 + $0x70] sm:$0xff]
    %v3247 = vld [vmem:[%s4 + $0x78] sm:$0xff]
    %v3248 = vld [vmem:[%s4 + $0x80] sm:$0xff]
    %v3249 = vld [vmem:[%s4 + $0x88] sm:$0xff]
    %v3250 = vld [vmem:[%s4 + $0x90] sm:$0xff]
    %v3251 = vld [vmem:[%s4 + $0x98] sm:$0xff]
    %v3252 = vld [vmem:[%s4 + $0xa0] sm:$0xff]
    %v3253 = vld [vmem:[%s4 + $0xa8] sm:$0xff]
    %v3254 = vld [vmem:[%s4 + $0xb0] sm:$0xff]
    %v3255 = vld [vmem:[%s4 + $0xb8] sm:$0xff]
    %v3256 = vld [vmem:[%s4 + $0xc0] sm:$0xff]
    %v3257 = vld [vmem:[%s4 + $0xc8] sm:$0xff]
    %v3258 = vld [vmem:[%s4 + $0xd0] sm:$0xff]
    %v3259 = vld [vmem:[%s4 + $0xd8] sm:$0xff]
    %v3260 = vld [vmem:[%s4 + $0xe0] sm:$0xff]
    %v3261 = vld [vmem:[%s4 + $0xe8] sm:$0xff]
    %v3262 = vld [vmem:[%s4 + $0xf0] sm:$0xff]
    %v3263 = vld [vmem:[%s4 + $0xf8] sm:$0xff]
    %v3264 = vld [vmem:[%s4 + $0x100] sm:$0xff]
    %v3265 = vld [vmem:[%s4 + $0x108] sm:$0xff]
    %v3266 = vld [vmem:[%s4 + $0x110] sm:$0xff]
    %v3267 = vld [vmem:[%s4 + $0x118] sm:$0xff]
    %v3268 = vld [vmem:[%s4 + $0x120] sm:$0xff]
    %v3269 = vld [vmem:[%s4 + $0x128] sm:$0xff]
    %v3270 = vld [vmem:[%s4 + $0x130] sm:$0xff]
    %v3271 = vld [vmem:[%s4 + $0x138] sm:$0xff]
    %v3272 = vld [vmem:[%s4 + $0x140] sm:$0xff]
    %v3273 = vld [vmem:[%s4 + $0x148] sm:$0xff]
    %v3274 = vld [vmem:[%s4 + $0x150] sm:$0xff]
    %v3275 = vld [vmem:[%s4 + $0x158] sm:$0xff]
    %v3276 = vld [vmem:[%s4 + $0x160] sm:$0xff]
    %v3277 = vld [vmem:[%s4 + $0x168] sm:$0xff]
    %v3278 = vld [vmem:[%s4 + $0x170] sm:$0xff]
    %v3279 = vld [vmem:[%s4 + $0x178] sm:$0xff]
    %v3280 = vld [vmem:[%s4 + $0x180] sm:$0xff]
    %v3281 = vld [vmem:[%s4 + $0x188] sm:$0xff]
    %v3282 = vld [vmem:[%s4 + $0x190] sm:$0xff]
    %v3283 = vld [vmem:[%s4 + $0x198] sm:$0xff]
    %v3284 = vld [vmem:[%s4 + $0x1a0] sm:$0xff]
    %v3285 = vld [vmem:[%s4 + $0x1a8] sm:$0xff]
    %v3286 = vld [vmem:[%s4 + $0x1b0] sm:$0xff]
    %v3287 = vld [vmem:[%s4 + $0x1b8] sm:$0xff]
    %v3288 = vld [vmem:[%s4 + $0x1c0] sm:$0xff]
    %v3289 = vld [vmem:[%s4 + $0x1c8] sm:$0xff]
    %v3290 = vld [vmem:[%s4 + $0x1d0] sm:$0xff]
    %v3291 = vld [vmem:[%s4 + $0x1d8] sm:$0xff]
    %v3292 = vld [vmem:[%s4 + $0x1e0] sm:$0xff]
    %v3293 = vld [vmem:[%s4 + $0x1e8] sm:$0xff]
    %v3294 = vld [vmem:[%s4 + $0x1f0] sm:$0xff]
    %v3295 = vld [vmem:[%s4 + $0x1f8] sm:$0xff]
    %v3296 = vld [vmem:[%s5] sm:$0xf]
    %v3298 = vlaneseq
    %v3299 = vshrl.u32 %v3298, 7
    %v3300 = vsub.s32 0, %v3299
    %v3301 = vrot.slane %v3296, %v3300
    %v3302 = vlaneseq
    %v3303 = vshrl.u32 %v3302, 7
    %v3304 = vsub.s32 1, %v3303
    %v3305 = vrot.slane %v3296, %v3304
    %v3306 = vlaneseq
    %v3307 = vshrl.u32 %v3306, 7
    %v3308 = vsub.s32 2, %v3307
    %v3309 = vrot.slane %v3296, %v3308
    %v3310 = vlaneseq
    %v3311 = vshrl.u32 %v3310, 7
    %v3312 = vsub.s32 3, %v3311
    %v3313 = vrot.slane %v3296, %v3312
    %v3319 = vunpack.c.l.b16 %v3230
    %v3320 = vunpack.c.h.b16 %v3230
    %v3321 = vpack.c.b16 %v3319, %v3319
    %v3322 = vpack.c.b16 %v3320, %v3320
    %v3389 = vunpack.c.l.b16 %v3232
    %v3390 = vunpack.c.h.b16 %v3232
    %v3391 = vunpack.c.l.b16 %v3233
    %v3392 = vunpack.c.h.b16 %v3233
    %v3393 = vunpack.c.l.b16 %v3234
    %v3394 = vunpack.c.h.b16 %v3234
    %v3395 = vunpack.c.l.b16 %v3235
    %v3396 = vunpack.c.h.b16 %v3235
    %v3397 = vunpack.c.l.b16 %v3236
    %v3398 = vunpack.c.h.b16 %v3236
    %v3399 = vunpack.c.l.b16 %v3237
    %v3400 = vunpack.c.h.b16 %v3237
    %v3401 = vunpack.c.l.b16 %v3238
    %v3402 = vunpack.c.h.b16 %v3238
    %v3403 = vunpack.c.l.b16 %v3239
    %v3404 = vunpack.c.h.b16 %v3239
    %v3405 = vunpack.c.l.b16 %v3240
    %v3406 = vunpack.c.h.b16 %v3240
    %v3407 = vunpack.c.l.b16 %v3241
    %v3408 = vunpack.c.h.b16 %v3241
    %v3409 = vunpack.c.l.b16 %v3242
    %v3410 = vunpack.c.h.b16 %v3242
    %v3411 = vunpack.c.l.b16 %v3243
    %v3412 = vunpack.c.h.b16 %v3243
    %v3413 = vunpack.c.l.b16 %v3244
    %v3414 = vunpack.c.h.b16 %v3244
    %v3415 = vunpack.c.l.b16 %v3245
    %v3416 = vunpack.c.h.b16 %v3245
    %v3417 = vunpack.c.l.b16 %v3246
    %v3418 = vunpack.c.h.b16 %v3246
    %v3419 = vunpack.c.l.b16 %v3247
    %v3420 = vunpack.c.h.b16 %v3247
    %v3421 = vunpack.c.l.b16 %v3248
    %v3422 = vunpack.c.h.b16 %v3248
    %v3423 = vunpack.c.l.b16 %v3249
    %v3424 = vunpack.c.h.b16 %v3249
    %v3425 = vunpack.c.l.b16 %v3250
    %v3426 = vunpack.c.h.b16 %v3250
    %v3427 = vunpack.c.l.b16 %v3251
    %v3428 = vunpack.c.h.b16 %v3251
    %v3429 = vunpack.c.l.b16 %v3252
    %v3430 = vunpack.c.h.b16 %v3252
    %v3431 = vunpack.c.l.b16 %v3253
    %v3432 = vunpack.c.h.b16 %v3253
    %v3433 = vunpack.c.l.b16 %v3254
    %v3434 = vunpack.c.h.b16 %v3254
    %v3435 = vunpack.c.l.b16 %v3255
    %v3436 = vunpack.c.h.b16 %v3255
    %v3437 = vunpack.c.l.b16 %v3256
    %v3438 = vunpack.c.h.b16 %v3256
    %v3439 = vunpack.c.l.b16 %v3257
    %v3440 = vunpack.c.h.b16 %v3257
    %v3441 = vunpack.c.l.b16 %v3258
    %v3442 = vunpack.c.h.b16 %v3258
    %v3443 = vunpack.c.l.b16 %v3259
    %v3444 = vunpack.c.h.b16 %v3259
    %v3445 = vunpack.c.l.b16 %v3260
    %v3446 = vunpack.c.h.b16 %v3260
    %v3447 = vunpack.c.l.b16 %v3261
    %v3448 = vunpack.c.h.b16 %v3261
    %v3449 = vunpack.c.l.b16 %v3262
    %v3450 = vunpack.c.h.b16 %v3262
    %v3451 = vunpack.c.l.b16 %v3263
    %v3452 = vunpack.c.h.b16 %v3263
    %v3453 = vunpack.c.l.b16 %v3264
    %v3454 = vunpack.c.h.b16 %v3264
    %v3455 = vunpack.c.l.b16 %v3265
    %v3456 = vunpack.c.h.b16 %v3265
    %v3457 = vunpack.c.l.b16 %v3266
    %v3458 = vunpack.c.h.b16 %v3266
    %v3459 = vunpack.c.l.b16 %v3267
    %v3460 = vunpack.c.h.b16 %v3267
    %v3461 = vunpack.c.l.b16 %v3268
    %v3462 = vunpack.c.h.b16 %v3268
    %v3463 = vunpack.c.l.b16 %v3269
    %v3464 = vunpack.c.h.b16 %v3269
    %v3465 = vunpack.c.l.b16 %v3270
    %v3466 = vunpack.c.h.b16 %v3270
    %v3467 = vunpack.c.l.b16 %v3271
    %v3468 = vunpack.c.h.b16 %v3271
    %v3469 = vunpack.c.l.b16 %v3272
    %v3470 = vunpack.c.h.b16 %v3272
    %v3471 = vunpack.c.l.b16 %v3273
    %v3472 = vunpack.c.h.b16 %v3273
    %v3473 = vunpack.c.l.b16 %v3274
    %v3474 = vunpack.c.h.b16 %v3274
    %v3475 = vunpack.c.l.b16 %v3275
    %v3476 = vunpack.c.h.b16 %v3275
    %v3477 = vunpack.c.l.b16 %v3276
    %v3478 = vunpack.c.h.b16 %v3276
    %v3479 = vunpack.c.l.b16 %v3277
    %v3480 = vunpack.c.h.b16 %v3277
    %v3481 = vunpack.c.l.b16 %v3278
    %v3482 = vunpack.c.h.b16 %v3278
    %v3483 = vunpack.c.l.b16 %v3279
    %v3484 = vunpack.c.h.b16 %v3279
    %v3485 = vunpack.c.l.b16 %v3280
    %v3486 = vunpack.c.h.b16 %v3280
    %v3487 = vunpack.c.l.b16 %v3281
    %v3488 = vunpack.c.h.b16 %v3281
    %v3489 = vunpack.c.l.b16 %v3282
    %v3490 = vunpack.c.h.b16 %v3282
    %v3491 = vunpack.c.l.b16 %v3283
    %v3492 = vunpack.c.h.b16 %v3283
    %v3493 = vunpack.c.l.b16 %v3284
    %v3494 = vunpack.c.h.b16 %v3284
    %v3495 = vunpack.c.l.b16 %v3285
    %v3496 = vunpack.c.h.b16 %v3285
    %v3497 = vunpack.c.l.b16 %v3286
    %v3498 = vunpack.c.h.b16 %v3286
    %v3499 = vunpack.c.l.b16 %v3287
    %v3500 = vunpack.c.h.b16 %v3287
    %v3501 = vunpack.c.l.b16 %v3288
    %v3502 = vunpack.c.h.b16 %v3288
    %v3503 = vunpack.c.l.b16 %v3289
    %v3504 = vunpack.c.h.b16 %v3289
    %v3505 = vunpack.c.l.b16 %v3290
    %v3506 = vunpack.c.h.b16 %v3290
    %v3507 = vunpack.c.l.b16 %v3291
    %v3508 = vunpack.c.h.b16 %v3291
    %v3509 = vunpack.c.l.b16 %v3292
    %v3510 = vunpack.c.h.b16 %v3292
    %v3511 = vunpack.c.l.b16 %v3293
    %v3512 = vunpack.c.h.b16 %v3293
    %v3513 = vunpack.c.l.b16 %v3294
    %v3514 = vunpack.c.h.b16 %v3294
    %v3515 = vunpack.c.l.b16 %v3295
    %v3516 = vunpack.c.h.b16 %v3295
    %v3517 = vpack.c.b16 %v3393, %v3389
    %v3518 = vpack.c.b16 %v3394, %v3390
    %v3519 = vpack.c.b16 %v3395, %v3391
    %v3520 = vpack.c.b16 %v3396, %v3392
    %v3521 = vpack.c.b16 %v3401, %v3397
    %v3522 = vpack.c.b16 %v3402, %v3398
    %v3523 = vpack.c.b16 %v3403, %v3399
    %v3524 = vpack.c.b16 %v3404, %v3400
    %v3525 = vpack.c.b16 %v3409, %v3405
    %v3526 = vpack.c.b16 %v3410, %v3406
    %v3527 = vpack.c.b16 %v3411, %v3407
    %v3528 = vpack.c.b16 %v3412, %v3408
    %v3529 = vpack.c.b16 %v3417, %v3413
    %v3530 = vpack.c.b16 %v3418, %v3414
    %v3531 = vpack.c.b16 %v3419, %v3415
    %v3532 = vpack.c.b16 %v3420, %v3416
    %v3533 = vpack.c.b16 %v3425, %v3421
    %v3534 = vpack.c.b16 %v3426, %v3422
    %v3535 = vpack.c.b16 %v3427, %v3423
    %v3536 = vpack.c.b16 %v3428, %v3424
    %v3537 = vpack.c.b16 %v3433, %v3429
    %v3538 = vpack.c.b16 %v3434, %v3430
    %v3539 = vpack.c.b16 %v3435, %v3431
    %v3540 = vpack.c.b16 %v3436, %v3432
    %v3541 = vpack.c.b16 %v3441, %v3437
    %v3542 = vpack.c.b16 %v3442, %v3438
    %v3543 = vpack.c.b16 %v3443, %v3439
    %v3544 = vpack.c.b16 %v3444, %v3440
    %v3545 = vpack.c.b16 %v3449, %v3445
    %v3546 = vpack.c.b16 %v3450, %v3446
    %v3547 = vpack.c.b16 %v3451, %v3447
    %v3548 = vpack.c.b16 %v3452, %v3448
    %v3549 = vpack.c.b16 %v3457, %v3453
    %v3550 = vpack.c.b16 %v3458, %v3454
    %v3551 = vpack.c.b16 %v3459, %v3455
    %v3552 = vpack.c.b16 %v3460, %v3456
    %v3553 = vpack.c.b16 %v3465, %v3461
    %v3554 = vpack.c.b16 %v3466, %v3462
    %v3555 = vpack.c.b16 %v3467, %v3463
    %v3556 = vpack.c.b16 %v3468, %v3464
    %v3557 = vpack.c.b16 %v3473, %v3469
    %v3558 = vpack.c.b16 %v3474, %v3470
    %v3559 = vpack.c.b16 %v3475, %v3471
    %v3560 = vpack.c.b16 %v3476, %v3472
    %v3561 = vpack.c.b16 %v3481, %v3477
    %v3562 = vpack.c.b16 %v3482, %v3478
    %v3563 = vpack.c.b16 %v3483, %v3479
    %v3564 = vpack.c.b16 %v3484, %v3480
    %v3565 = vpack.c.b16 %v3489, %v3485
    %v3566 = vpack.c.b16 %v3490, %v3486
    %v3567 = vpack.c.b16 %v3491, %v3487
    %v3568 = vpack.c.b16 %v3492, %v3488
    %v3569 = vpack.c.b16 %v3497, %v3493
    %v3570 = vpack.c.b16 %v3498, %v3494
    %v3571 = vpack.c.b16 %v3499, %v3495
    %v3572 = vpack.c.b16 %v3500, %v3496
    %v3573 = vpack.c.b16 %v3505, %v3501
    %v3574 = vpack.c.b16 %v3506, %v3502
    %v3575 = vpack.c.b16 %v3507, %v3503
    %v3576 = vpack.c.b16 %v3508, %v3504
    %v3577 = vpack.c.b16 %v3513, %v3509
    %v3578 = vpack.c.b16 %v3514, %v3510
    %v3579 = vpack.c.b16 %v3515, %v3511
    %v3580 = vpack.c.b16 %v3516, %v3512
    %3645 = vmatprep.subr.bf16.mxu0 %v3546
    %3646 = vmatpush1.bf16.msra.mxu0 %v3545
    %3647 = vmatprep.subr.bf16.mxu0 %v3542
    %3648 = vmatpush1.bf16.msra.mxu0 %v3541
    %3649 = vmatprep.subr.bf16.mxu0 %v3538
    %3650 = vmatpush1.bf16.msra.mxu0 %v3537
    %3651 = vmatprep.subr.bf16.mxu0 %v3534
    %3652 = vmatpush1.bf16.msra.mxu0 %v3533
    %3653 = vmatprep.subr.bf16.mxu0 %v3530
    %3654 = vmatpush1.bf16.msra.mxu0 %v3529
    %3655 = vmatprep.subr.bf16.mxu0 %v3526
    %3656 = vmatpush1.bf16.msra.mxu0 %v3525
    %3657 = vmatprep.subr.bf16.mxu0 %v3522
    %3658 = vmatpush1.bf16.msra.mxu0 %v3521
    %3659 = vmatprep.subr.bf16.mxu0 %v3518
    %3660 = vmatpush1.bf16.msra.mxu0 %v3517
    %3661 = vmatprep.subr.bf16.mxu0 %v3578
    %3662 = vmatpush2.bf16.msra.mxu0 %v3577
    %3663 = vmatprep.subr.bf16.mxu0 %v3574
    %3664 = vmatpush2.bf16.msra.mxu0 %v3573
    %3665 = vmatprep.subr.bf16.mxu0 %v3570
    %3666 = vmatpush2.bf16.msra.mxu0 %v3569
    %3667 = vmatprep.subr.bf16.mxu0 %v3566
    %3668 = vmatpush2.bf16.msra.mxu0 %v3565
    %3669 = vmatprep.subr.bf16.mxu0 %v3562
    %3670 = vmatpush2.bf16.msra.mxu0 %v3561
    %3671 = vmatprep.subr.bf16.mxu0 %v3558
    %3672 = vmatpush2.bf16.msra.mxu0 %v3557
    %3673 = vmatprep.subr.bf16.mxu0 %v3554
    %3674 = vmatpush2.bf16.msra.mxu0 %v3553
    %3675 = vmatprep.subr.bf16.mxu0 %v3550
    %3676 = vmatpush2.bf16.msra.mxu0 %v3549
    %3677 = vmatprep.mubr.bf16.mxu0 %v3322
    %3678 = vmatmul.mubr.bf16.gmra.mxu0 %v3321
    %v3679 = vpop.f32.mrf.mxu0
    %v3680 = vadd.f32 %v3301, %v3679
    %v3681 = vpop.f32.mrf.mxu0
    %v3682 = vadd.f32 %v3305, %v3681
    %v3683 = vpop.f32.mrf.mxu0
    %v3684 = vpop.f32.mrf.mxu0
    %3685 = vdwg.mxu0
    %3686 = vmatprep.subr.bf16.mxu0 %v3548
    %3687 = vmatpush1.bf16.msra.mxu0 %v3547
    %3688 = vmatprep.subr.bf16.mxu0 %v3544
    %3689 = vmatpush1.bf16.msra.mxu0 %v3543
    %3690 = vmatprep.subr.bf16.mxu0 %v3540
    %3691 = vmatpush1.bf16.msra.mxu0 %v3539
    %3692 = vmatprep.subr.bf16.mxu0 %v3536
    %3693 = vmatpush1.bf16.msra.mxu0 %v3535
    %3694 = vmatprep.subr.bf16.mxu0 %v3532
    %3695 = vmatpush1.bf16.msra.mxu0 %v3531
    %3696 = vmatprep.subr.bf16.mxu0 %v3528
    %3697 = vmatpush1.bf16.msra.mxu0 %v3527
    %3698 = vmatprep.subr.bf16.mxu0 %v3524
    %3699 = vmatpush1.bf16.msra.mxu0 %v3523
    %3700 = vmatprep.subr.bf16.mxu0 %v3520
    %3701 = vmatpush1.bf16.msra.mxu0 %v3519
    %3702 = vmatprep.subr.bf16.mxu0 %v3580
    %3703 = vmatpush2.bf16.msra.mxu0 %v3579
    %3704 = vmatprep.subr.bf16.mxu0 %v3576
    %3705 = vmatpush2.bf16.msra.mxu0 %v3575
    %3706 = vmatprep.subr.bf16.mxu0 %v3572
    %3707 = vmatpush2.bf16.msra.mxu0 %v3571
    %3708 = vmatprep.subr.bf16.mxu0 %v3568
    %3709 = vmatpush2.bf16.msra.mxu0 %v3567
    %3710 = vmatprep.subr.bf16.mxu0 %v3564
    %3711 = vmatpush2.bf16.msra.mxu0 %v3563
    %3712 = vmatprep.subr.bf16.mxu0 %v3560
    %3713 = vmatpush2.bf16.msra.mxu0 %v3559
    %3714 = vmatprep.subr.bf16.mxu0 %v3556
    %3715 = vmatpush2.bf16.msra.mxu0 %v3555
    %3716 = vmatprep.subr.bf16.mxu0 %v3552
    %3717 = vmatpush2.bf16.msra.mxu0 %v3551
    %3718 = vmatprep.mubr.bf16.mxu0 %v3322
    %3719 = vmatmul.mubr.bf16.gmra.mxu0 %v3321
    %v3720 = vpop.f32.mrf.mxu0
    %v3721 = vadd.f32 %v3309, %v3720
    %v3722 = vpop.f32.mrf.mxu0
    %v3723 = vadd.f32 %v3313, %v3722
    %v3724 = vpop.f32.mrf.mxu0
    %v3725 = vpop.f32.mrf.mxu0
    %3726 = vdwg.mxu0
    %v3727 = vxor.u32 %v3680, 2147483648
    %v3728 = vmul.f32 %v3727, 1.442695
    %v3729 = vpow.pop %v3728
    %v3730 = vadd.f32 %v3729, 1.0
    %v3731 = vrcp.pop %v3730
    %v3732 = vmul.f32 1.0, %v3731
    %v3733 = vxor.u32 %v3682, 2147483648
    %v3734 = vmul.f32 %v3733, 1.442695
    %v3735 = vpow.pop %v3734
    %v3736 = vadd.f32 %v3735, 1.0
    %v3737 = vrcp.pop %v3736
    %v3738 = vmul.f32 1.0, %v3737
    %v3739 = vtanh.pop %v3721
    %v3740 = vxor.u32 %v3723, 2147483648
    %v3741 = vmul.f32 %v3740, 1.442695
    %v3742 = vpow.pop %v3741
    %v3743 = vadd.f32 %v3742, 1.0
    %v3744 = vrcp.pop %v3743
    %v3745 = vmul.f32 1.0, %v3744
    %v3746 = vmul.f32 %v3738, %v3231
    %v3747 = vmul.f32 %v3732, %v3739
    %v3748 = vadd.f32 %v3746, %v3747
    %v3749 = vtanh.pop %v3748
    %v3750 = vmul.f32 %v3745, %v3749
    %3751 = vst [vmem:[#allocation2] sm:$0xff] %v3748
    %v3752 = vpack.c.bf16 %v3750, %v3750
    %3753 = vst [vmem:[#allocation3 + $0x4] sm:$0xf] %v3752
    %s3754 = scalar_lea.vmem %s1, 28
    %v3755 = vld [vmem:[%s3754] sm:$0xf]
    %3756 = vst [vmem:[#allocation3] sm:$0xf] %v3755
    %v3757 = vld [vmem:[#allocation3] sm:$0xff]
    %v3758 = vld [vmem:[#allocation2] sm:$0xff]
    %v3759 = vld [vmem:[%s4] sm:$0xff]
    %v3760 = vld [vmem:[%s4 + $0x8] sm:$0xff]
    %v3761 = vld [vmem:[%s4 + $0x10] sm:$0xff]
    %v3762 = vld [vmem:[%s4 + $0x18] sm:$0xff]
    %v3763 = vld [vmem:[%s4 + $0x20] sm:$0xff]
    %v3764 = vld [vmem:[%s4 + $0x28] sm:$0xff]
    %v3765 = vld [vmem:[%s4 + $0x30] sm:$0xff]
    %v3766 = vld [vmem:[%s4 + $0x38] sm:$0xff]
    %v3767 = vld [vmem:[%s4 + $0x40] sm:$0xff]
    %v3768 = vld [vmem:[%s4 + $0x48] sm:$0xff]
    %v3769 = vld [vmem:[%s4 + $0x50] sm:$0xff]
    %v3770 = vld [vmem:[%s4 + $0x58] sm:$0xff]
    %v3771 = vld [vmem:[%s4 + $0x60] sm:$0xff]
    %v3772 = vld [vmem:[%s4 + $0x68] sm:$0xff]
    %v3773 = vld [vmem:[%s4 + $0x70] sm:$0xff]
    %v3774 = vld [vmem:[%s4 + $0x78] sm:$0xff]
    %v3775 = vld [vmem:[%s4 + $0x80] sm:$0xff]
    %v3776 = vld [vmem:[%s4 + $0x88] sm:$0xff]
    %v3777 = vld [vmem:[%s4 + $0x90] sm:$0xff]
    %v3778 = vld [vmem:[%s4 + $0x98] sm:$0xff]
    %v3779 = vld [vmem:[%s4 + $0xa0] sm:$0xff]
    %v3780 = vld [vmem:[%s4 + $0xa8] sm:$0xff]
    %v3781 = vld [vmem:[%s4 + $0xb0] sm:$0xff]
    %v3782 = vld [vmem:[%s4 + $0xb8] sm:$0xff]
    %v3783 = vld [vmem:[%s4 + $0xc0] sm:$0xff]
    %v3784 = vld [vmem:[%s4 + $0xc8] sm:$0xff]
    %v3785 = vld [vmem:[%s4 + $0xd0] sm:$0xff]
    %v3786 = vld [vmem:[%s4 + $0xd8] sm:$0xff]
    %v3787 = vld [vmem:[%s4 + $0xe0] sm:$0xff]
    %v3788 = vld [vmem:[%s4 + $0xe8] sm:$0xff]
    %v3789 = vld [vmem:[%s4 + $0xf0] sm:$0xff]
    %v3790 = vld [vmem:[%s4 + $0xf8] sm:$0xff]
    %v3791 = vld [vmem:[%s4 + $0x100] sm:$0xff]
    %v3792 = vld [vmem:[%s4 + $0x108] sm:$0xff]
    %v3793 = vld [vmem:[%s4 + $0x110] sm:$0xff]
    %v3794 = vld [vmem:[%s4 + $0x118] sm:$0xff]
    %v3795 = vld [vmem:[%s4 + $0x120] sm:$0xff]
    %v3796 = vld [vmem:[%s4 + $0x128] sm:$0xff]
    %v3797 = vld [vmem:[%s4 + $0x130] sm:$0xff]
    %v3798 = vld [vmem:[%s4 + $0x138] sm:$0xff]
    %v3799 = vld [vmem:[%s4 + $0x140] sm:$0xff]
    %v3800 = vld [vmem:[%s4 + $0x148] sm:$0xff]
    %v3801 = vld [vmem:[%s4 + $0x150] sm:$0xff]
    %v3802 = vld [vmem:[%s4 + $0x158] sm:$0xff]
    %v3803 = vld [vmem:[%s4 + $0x160] sm:$0xff]
    %v3804 = vld [vmem:[%s4 + $0x168] sm:$0xff]
    %v3805 = vld [vmem:[%s4 + $0x170] sm:$0xff]
    %v3806 = vld [vmem:[%s4 + $0x178] sm:$0xff]
    %v3807 = vld [vmem:[%s4 + $0x180] sm:$0xff]
    %v3808 = vld [vmem:[%s4 + $0x188] sm:$0xff]
    %v3809 = vld [vmem:[%s4 + $0x190] sm:$0xff]
    %v3810 = vld [vmem:[%s4 + $0x198] sm:$0xff]
    %v3811 = vld [vmem:[%s4 + $0x1a0] sm:$0xff]
    %v3812 = vld [vmem:[%s4 + $0x1a8] sm:$0xff]
    %v3813 = vld [vmem:[%s4 + $0x1b0] sm:$0xff]
    %v3814 = vld [vmem:[%s4 + $0x1b8] sm:$0xff]
    %v3815 = vld [vmem:[%s4 + $0x1c0] sm:$0xff]
    %v3816 = vld [vmem:[%s4 + $0x1c8] sm:$0xff]
    %v3817 = vld [vmem:[%s4 + $0x1d0] sm:$0xff]
    %v3818 = vld [vmem:[%s4 + $0x1d8] sm:$0xff]
    %v3819 = vld [vmem:[%s4 + $0x1e0] sm:$0xff]
    %v3820 = vld [vmem:[%s4 + $0x1e8] sm:$0xff]
    %v3821 = vld [vmem:[%s4 + $0x1f0] sm:$0xff]
    %v3822 = vld [vmem:[%s4 + $0x1f8] sm:$0xff]
    %v3823 = vld [vmem:[%s5] sm:$0xf]
    %v3825 = vlaneseq
    %v3826 = vshrl.u32 %v3825, 7
    %v3827 = vsub.s32 0, %v3826
    %v3828 = vrot.slane %v3823, %v3827
    %v3829 = vlaneseq
    %v3830 = vshrl.u32 %v3829, 7
    %v3831 = vsub.s32 1, %v3830
    %v3832 = vrot.slane %v3823, %v3831
    %v3833 = vlaneseq
    %v3834 = vshrl.u32 %v3833, 7
    %v3835 = vsub.s32 2, %v3834
    %v3836 = vrot.slane %v3823, %v3835
    %v3837 = vlaneseq
    %v3838 = vshrl.u32 %v3837, 7
    %v3839 = vsub.s32 3, %v3838
    %v3840 = vrot.slane %v3823, %v3839
    %v3846 = vunpack.c.l.b16 %v3757
    %v3847 = vunpack.c.h.b16 %v3757
    %v3848 = vpack.c.b16 %v3846, %v3846
    %v3849 = vpack.c.b16 %v3847, %v3847
    %v3916 = vunpack.c.l.b16 %v3759
    %v3917 = vunpack.c.h.b16 %v3759
    %v3918 = vunpack.c.l.b16 %v3760
    %v3919 = vunpack.c.h.b16 %v3760
    %v3920 = vunpack.c.l.b16 %v3761
    %v3921 = vunpack.c.h.b16 %v3761
    %v3922 = vunpack.c.l.b16 %v3762
    %v3923 = vunpack.c.h.b16 %v3762
    %v3924 = vunpack.c.l.b16 %v3763
    %v3925 = vunpack.c.h.b16 %v3763
    %v3926 = vunpack.c.l.b16 %v3764
    %v3927 = vunpack.c.h.b16 %v3764
    %v3928 = vunpack.c.l.b16 %v3765
    %v3929 = vunpack.c.h.b16 %v3765
    %v3930 = vunpack.c.l.b16 %v3766
    %v3931 = vunpack.c.h.b16 %v3766
    %v3932 = vunpack.c.l.b16 %v3767
    %v3933 = vunpack.c.h.b16 %v3767
    %v3934 = vunpack.c.l.b16 %v3768
    %v3935 = vunpack.c.h.b16 %v3768
    %v3936 = vunpack.c.l.b16 %v3769
    %v3937 = vunpack.c.h.b16 %v3769
    %v3938 = vunpack.c.l.b16 %v3770
    %v3939 = vunpack.c.h.b16 %v3770
    %v3940 = vunpack.c.l.b16 %v3771
    %v3941 = vunpack.c.h.b16 %v3771
    %v3942 = vunpack.c.l.b16 %v3772
    %v3943 = vunpack.c.h.b16 %v3772
    %v3944 = vunpack.c.l.b16 %v3773
    %v3945 = vunpack.c.h.b16 %v3773
    %v3946 = vunpack.c.l.b16 %v3774
    %v3947 = vunpack.c.h.b16 %v3774
    %v3948 = vunpack.c.l.b16 %v3775
    %v3949 = vunpack.c.h.b16 %v3775
    %v3950 = vunpack.c.l.b16 %v3776
    %v3951 = vunpack.c.h.b16 %v3776
    %v3952 = vunpack.c.l.b16 %v3777
    %v3953 = vunpack.c.h.b16 %v3777
    %v3954 = vunpack.c.l.b16 %v3778
    %v3955 = vunpack.c.h.b16 %v3778
    %v3956 = vunpack.c.l.b16 %v3779
    %v3957 = vunpack.c.h.b16 %v3779
    %v3958 = vunpack.c.l.b16 %v3780
    %v3959 = vunpack.c.h.b16 %v3780
    %v3960 = vunpack.c.l.b16 %v3781
    %v3961 = vunpack.c.h.b16 %v3781
    %v3962 = vunpack.c.l.b16 %v3782
    %v3963 = vunpack.c.h.b16 %v3782
    %v3964 = vunpack.c.l.b16 %v3783
    %v3965 = vunpack.c.h.b16 %v3783
    %v3966 = vunpack.c.l.b16 %v3784
    %v3967 = vunpack.c.h.b16 %v3784
    %v3968 = vunpack.c.l.b16 %v3785
    %v3969 = vunpack.c.h.b16 %v3785
    %v3970 = vunpack.c.l.b16 %v3786
    %v3971 = vunpack.c.h.b16 %v3786
    %v3972 = vunpack.c.l.b16 %v3787
    %v3973 = vunpack.c.h.b16 %v3787
    %v3974 = vunpack.c.l.b16 %v3788
    %v3975 = vunpack.c.h.b16 %v3788
    %v3976 = vunpack.c.l.b16 %v3789
    %v3977 = vunpack.c.h.b16 %v3789
    %v3978 = vunpack.c.l.b16 %v3790
    %v3979 = vunpack.c.h.b16 %v3790
    %v3980 = vunpack.c.l.b16 %v3791
    %v3981 = vunpack.c.h.b16 %v3791
    %v3982 = vunpack.c.l.b16 %v3792
    %v3983 = vunpack.c.h.b16 %v3792
    %v3984 = vunpack.c.l.b16 %v3793
    %v3985 = vunpack.c.h.b16 %v3793
    %v3986 = vunpack.c.l.b16 %v3794
    %v3987 = vunpack.c.h.b16 %v3794
    %v3988 = vunpack.c.l.b16 %v3795
    %v3989 = vunpack.c.h.b16 %v3795
    %v3990 = vunpack.c.l.b16 %v3796
    %v3991 = vunpack.c.h.b16 %v3796
    %v3992 = vunpack.c.l.b16 %v3797
    %v3993 = vunpack.c.h.b16 %v3797
    %v3994 = vunpack.c.l.b16 %v3798
    %v3995 = vunpack.c.h.b16 %v3798
    %v3996 = vunpack.c.l.b16 %v3799
    %v3997 = vunpack.c.h.b16 %v3799
    %v3998 = vunpack.c.l.b16 %v3800
    %v3999 = vunpack.c.h.b16 %v3800
    %v4000 = vunpack.c.l.b16 %v3801
    %v4001 = vunpack.c.h.b16 %v3801
    %v4002 = vunpack.c.l.b16 %v3802
    %v4003 = vunpack.c.h.b16 %v3802
    %v4004 = vunpack.c.l.b16 %v3803
    %v4005 = vunpack.c.h.b16 %v3803
    %v4006 = vunpack.c.l.b16 %v3804
    %v4007 = vunpack.c.h.b16 %v3804
    %v4008 = vunpack.c.l.b16 %v3805
    %v4009 = vunpack.c.h.b16 %v3805
    %v4010 = vunpack.c.l.b16 %v3806
    %v4011 = vunpack.c.h.b16 %v3806
    %v4012 = vunpack.c.l.b16 %v3807
    %v4013 = vunpack.c.h.b16 %v3807
    %v4014 = vunpack.c.l.b16 %v3808
    %v4015 = vunpack.c.h.b16 %v3808
    %v4016 = vunpack.c.l.b16 %v3809
    %v4017 = vunpack.c.h.b16 %v3809
    %v4018 = vunpack.c.l.b16 %v3810
    %v4019 = vunpack.c.h.b16 %v3810
    %v4020 = vunpack.c.l.b16 %v3811
    %v4021 = vunpack.c.h.b16 %v3811
    %v4022 = vunpack.c.l.b16 %v3812
    %v4023 = vunpack.c.h.b16 %v3812
    %v4024 = vunpack.c.l.b16 %v3813
    %v4025 = vunpack.c.h.b16 %v3813
    %v4026 = vunpack.c.l.b16 %v3814
    %v4027 = vunpack.c.h.b16 %v3814
    %v4028 = vunpack.c.l.b16 %v3815
    %v4029 = vunpack.c.h.b16 %v3815
    %v4030 = vunpack.c.l.b16 %v3816
    %v4031 = vunpack.c.h.b16 %v3816
    %v4032 = vunpack.c.l.b16 %v3817
    %v4033 = vunpack.c.h.b16 %v3817
    %v4034 = vunpack.c.l.b16 %v3818
    %v4035 = vunpack.c.h.b16 %v3818
    %v4036 = vunpack.c.l.b16 %v3819
    %v4037 = vunpack.c.h.b16 %v3819
    %v4038 = vunpack.c.l.b16 %v3820
    %v4039 = vunpack.c.h.b16 %v3820
    %v4040 = vunpack.c.l.b16 %v3821
    %v4041 = vunpack.c.h.b16 %v3821
    %v4042 = vunpack.c.l.b16 %v3822
    %v4043 = vunpack.c.h.b16 %v3822
    %v4044 = vpack.c.b16 %v3920, %v3916
    %v4045 = vpack.c.b16 %v3921, %v3917
    %v4046 = vpack.c.b16 %v3922, %v3918
    %v4047 = vpack.c.b16 %v3923, %v3919
    %v4048 = vpack.c.b16 %v3928, %v3924
    %v4049 = vpack.c.b16 %v3929, %v3925
    %v4050 = vpack.c.b16 %v3930, %v3926
    %v4051 = vpack.c.b16 %v3931, %v3927
    %v4052 = vpack.c.b16 %v3936, %v3932
    %v4053 = vpack.c.b16 %v3937, %v3933
    %v4054 = vpack.c.b16 %v3938, %v3934
    %v4055 = vpack.c.b16 %v3939, %v3935
    %v4056 = vpack.c.b16 %v3944, %v3940
    %v4057 = vpack.c.b16 %v3945, %v3941
    %v4058 = vpack.c.b16 %v3946, %v3942
    %v4059 = vpack.c.b16 %v3947, %v3943
    %v4060 = vpack.c.b16 %v3952, %v3948
    %v4061 = vpack.c.b16 %v3953, %v3949
    %v4062 = vpack.c.b16 %v3954, %v3950
    %v4063 = vpack.c.b16 %v3955, %v3951
    %v4064 = vpack.c.b16 %v3960, %v3956
    %v4065 = vpack.c.b16 %v3961, %v3957
    %v4066 = vpack.c.b16 %v3962, %v3958
    %v4067 = vpack.c.b16 %v3963, %v3959
    %v4068 = vpack.c.b16 %v3968, %v3964
    %v4069 = vpack.c.b16 %v3969, %v3965
    %v4070 = vpack.c.b16 %v3970, %v3966
    %v4071 = vpack.c.b16 %v3971, %v3967
    %v4072 = vpack.c.b16 %v3976, %v3972
    %v4073 = vpack.c.b16 %v3977, %v3973
    %v4074 = vpack.c.b16 %v3978, %v3974
    %v4075 = vpack.c.b16 %v3979, %v3975
    %v4076 = vpack.c.b16 %v3984, %v3980
    %v4077 = vpack.c.b16 %v3985, %v3981
    %v4078 = vpack.c.b16 %v3986, %v3982
    %v4079 = vpack.c.b16 %v3987, %v3983
    %v4080 = vpack.c.b16 %v3992, %v3988
    %v4081 = vpack.c.b16 %v3993, %v3989
    %v4082 = vpack.c.b16 %v3994, %v3990
    %v4083 = vpack.c.b16 %v3995, %v3991
    %v4084 = vpack.c.b16 %v4000, %v3996
    %v4085 = vpack.c.b16 %v4001, %v3997
    %v4086 = vpack.c.b16 %v4002, %v3998
    %v4087 = vpack.c.b16 %v4003, %v3999
    %v4088 = vpack.c.b16 %v4008, %v4004
    %v4089 = vpack.c.b16 %v4009, %v4005
    %v4090 = vpack.c.b16 %v4010, %v4006
    %v4091 = vpack.c.b16 %v4011, %v4007
    %v4092 = vpack.c.b16 %v4016, %v4012
    %v4093 = vpack.c.b16 %v4017, %v4013
    %v4094 = vpack.c.b16 %v4018, %v4014
    %v4095 = vpack.c.b16 %v4019, %v4015
    %v4096 = vpack.c.b16 %v4024, %v4020
    %v4097 = vpack.c.b16 %v4025, %v4021
    %v4098 = vpack.c.b16 %v4026, %v4022
    %v4099 = vpack.c.b16 %v4027, %v4023
    %v4100 = vpack.c.b16 %v4032, %v4028
    %v4101 = vpack.c.b16 %v4033, %v4029
    %v4102 = vpack.c.b16 %v4034, %v4030
    %v4103 = vpack.c.b16 %v4035, %v4031
    %v4104 = vpack.c.b16 %v4040, %v4036
    %v4105 = vpack.c.b16 %v4041, %v4037
    %v4106 = vpack.c.b16 %v4042, %v4038
    %v4107 = vpack.c.b16 %v4043, %v4039
    %4172 = vmatprep.subr.bf16.mxu0 %v4073
    %4173 = vmatpush1.bf16.msra.mxu0 %v4072
    %4174 = vmatprep.subr.bf16.mxu0 %v4069
    %4175 = vmatpush1.bf16.msra.mxu0 %v4068
    %4176 = vmatprep.subr.bf16.mxu0 %v4065
    %4177 = vmatpush1.bf16.msra.mxu0 %v4064
    %4178 = vmatprep.subr.bf16.mxu0 %v4061
    %4179 = vmatpush1.bf16.msra.mxu0 %v4060
    %4180 = vmatprep.subr.bf16.mxu0 %v4057
    %4181 = vmatpush1.bf16.msra.mxu0 %v4056
    %4182 = vmatprep.subr.bf16.mxu0 %v4053
    %4183 = vmatpush1.bf16.msra.mxu0 %v4052
    %4184 = vmatprep.subr.bf16.mxu0 %v4049
    %4185 = vmatpush1.bf16.msra.mxu0 %v4048
    %4186 = vmatprep.subr.bf16.mxu0 %v4045
    %4187 = vmatpush1.bf16.msra.mxu0 %v4044
    %4188 = vmatprep.subr.bf16.mxu0 %v4105
    %4189 = vmatpush2.bf16.msra.mxu0 %v4104
    %4190 = vmatprep.subr.bf16.mxu0 %v4101
    %4191 = vmatpush2.bf16.msra.mxu0 %v4100
    %4192 = vmatprep.subr.bf16.mxu0 %v4097
    %4193 = vmatpush2.bf16.msra.mxu0 %v4096
    %4194 = vmatprep.subr.bf16.mxu0 %v4093
    %4195 = vmatpush2.bf16.msra.mxu0 %v4092
    %4196 = vmatprep.subr.bf16.mxu0 %v4089
    %4197 = vmatpush2.bf16.msra.mxu0 %v4088
    %4198 = vmatprep.subr.bf16.mxu0 %v4085
    %4199 = vmatpush2.bf16.msra.mxu0 %v4084
    %4200 = vmatprep.subr.bf16.mxu0 %v4081
    %4201 = vmatpush2.bf16.msra.mxu0 %v4080
    %4202 = vmatprep.subr.bf16.mxu0 %v4077
    %4203 = vmatpush2.bf16.msra.mxu0 %v4076
    %4204 = vmatprep.mubr.bf16.mxu0 %v3849
    %4205 = vmatmul.mubr.bf16.gmra.mxu0 %v3848
    %v4206 = vpop.f32.mrf.mxu0
    %v4207 = vadd.f32 %v3828, %v4206
    %v4208 = vpop.f32.mrf.mxu0
    %v4209 = vadd.f32 %v3832, %v4208
    %v4210 = vpop.f32.mrf.mxu0
    %v4211 = vpop.f32.mrf.mxu0
    %4212 = vdwg.mxu0
    %4213 = vmatprep.subr.bf16.mxu0 %v4075
    %4214 = vmatpush1.bf16.msra.mxu0 %v4074
    %4215 = vmatprep.subr.bf16.mxu0 %v4071
    %4216 = vmatpush1.bf16.msra.mxu0 %v4070
    %4217 = vmatprep.subr.bf16.mxu0 %v4067
    %4218 = vmatpush1.bf16.msra.mxu0 %v4066
    %4219 = vmatprep.subr.bf16.mxu0 %v4063
    %4220 = vmatpush1.bf16.msra.mxu0 %v4062
    %4221 = vmatprep.subr.bf16.mxu0 %v4059
    %4222 = vmatpush1.bf16.msra.mxu0 %v4058
    %4223 = vmatprep.subr.bf16.mxu0 %v4055
    %4224 = vmatpush1.bf16.msra.mxu0 %v4054
    %4225 = vmatprep.subr.bf16.mxu0 %v4051
    %4226 = vmatpush1.bf16.msra.mxu0 %v4050
    %4227 = vmatprep.subr.bf16.mxu0 %v4047
    %4228 = vmatpush1.bf16.msra.mxu0 %v4046
    %4229 = vmatprep.subr.bf16.mxu0 %v4107
    %4230 = vmatpush2.bf16.msra.mxu0 %v4106
    %4231 = vmatprep.subr.bf16.mxu0 %v4103
    %4232 = vmatpush2.bf16.msra.mxu0 %v4102
    %4233 = vmatprep.subr.bf16.mxu0 %v4099
    %4234 = vmatpush2.bf16.msra.mxu0 %v4098
    %4235 = vmatprep.subr.bf16.mxu0 %v4095
    %4236 = vmatpush2.bf16.msra.mxu0 %v4094
    %4237 = vmatprep.subr.bf16.mxu0 %v4091
    %4238 = vmatpush2.bf16.msra.mxu0 %v4090
    %4239 = vmatprep.subr.bf16.mxu0 %v4087
    %4240 = vmatpush2.bf16.msra.mxu0 %v4086
    %4241 = vmatprep.subr.bf16.mxu0 %v4083
    %4242 = vmatpush2.bf16.msra.mxu0 %v4082
    %4243 = vmatprep.subr.bf16.mxu0 %v4079
    %4244 = vmatpush2.bf16.msra.mxu0 %v4078
    %4245 = vmatprep.mubr.bf16.mxu0 %v3849
    %4246 = vmatmul.mubr.bf16.gmra.mxu0 %v3848
    %v4247 = vpop.f32.mrf.mxu0
    %v4248 = vadd.f32 %v3836, %v4247
    %v4249 = vpop.f32.mrf.mxu0
    %v4250 = vadd.f32 %v3840, %v4249
    %v4251 = vpop.f32.mrf.mxu0
    %v4252 = vpop.f32.mrf.mxu0
    %4253 = vdwg.mxu0
    %v4254 = vxor.u32 %v4207, 2147483648
    %v4255 = vmul.f32 %v4254, 1.442695
    %v4256 = vpow.pop %v4255
    %v4257 = vadd.f32 %v4256, 1.0
    %v4258 = vrcp.pop %v4257
    %v4259 = vmul.f32 1.0, %v4258
    %v4260 = vxor.u32 %v4209, 2147483648
    %v4261 = vmul.f32 %v4260, 1.442695
    %v4262 = vpow.pop %v4261
    %v4263 = vadd.f32 %v4262, 1.0
    %v4264 = vrcp.pop %v4263
    %v4265 = vmul.f32 1.0, %v4264
    %v4266 = vtanh.pop %v4248
    %v4267 = vxor.u32 %v4250, 2147483648
    %v4268 = vmul.f32 %v4267, 1.442695
    %v4269 = vpow.pop %v4268
    %v4270 = vadd.f32 %v4269, 1.0
    %v4271 = vrcp.pop %v4270
    %v4272 = vmul.f32 1.0, %v4271
    %v4273 = vmul.f32 %v4265, %v3758
    %v4274 = vmul.f32 %v4259, %v4266
    %v4275 = vadd.f32 %v4273, %v4274
    %v4276 = vtanh.pop %v4275
    %v4277 = vmul.f32 %v4272, %v4276
    %4278 = vst [vmem:[#allocation2] sm:$0xff] %v4275
    %v4279 = vpack.c.bf16 %v4277, %v4277
    %4280 = vst [vmem:[#allocation3 + $0x4] sm:$0xf] %v4279
    %4281 = vst [vmem:[#allocation9] sm:$0xff] 0.0
    %v4282 = vld [vmem:[%s2] sm:$0xf]
    %4283 = vst [vmem:[#allocation3] sm:$0xf] %v4282
    %v4284 = vld [vmem:[#allocation3] sm:$0xff]
    %v4285 = vld [vmem:[#allocation2] sm:$0xff]
    %v4286 = vld [vmem:[#allocation8] sm:$0xff]
    %v4287 = vld [vmem:[#allocation8 + $0x8] sm:$0xff]
    %v4288 = vld [vmem:[#allocation8 + $0x10] sm:$0xff]
    %v4289 = vld [vmem:[#allocation8 + $0x18] sm:$0xff]
    %v4290 = vld [vmem:[#allocation8 + $0x20] sm:$0xff]
    %v4291 = vld [vmem:[#allocation8 + $0x28] sm:$0xff]
    %v4292 = vld [vmem:[#allocation8 + $0x30] sm:$0xff]
    %v4293 = vld [vmem:[#allocation8 + $0x38] sm:$0xff]
    %v4294 = vld [vmem:[#allocation8 + $0x40] sm:$0xff]
    %v4295 = vld [vmem:[#allocation8 + $0x48] sm:$0xff]
    %v4296 = vld [vmem:[#allocation8 + $0x50] sm:$0xff]
    %v4297 = vld [vmem:[#allocation8 + $0x58] sm:$0xff]
    %v4298 = vld [vmem:[#allocation8 + $0x60] sm:$0xff]
    %v4299 = vld [vmem:[#allocation8 + $0x68] sm:$0xff]
    %v4300 = vld [vmem:[#allocation8 + $0x70] sm:$0xff]
    %v4301 = vld [vmem:[#allocation8 + $0x78] sm:$0xff]
    %v4302 = vld [vmem:[#allocation8 + $0x80] sm:$0xff]
    %v4303 = vld [vmem:[#allocation8 + $0x88] sm:$0xff]
    %v4304 = vld [vmem:[#allocation8 + $0x90] sm:$0xff]
    %v4305 = vld [vmem:[#allocation8 + $0x98] sm:$0xff]
    %v4306 = vld [vmem:[#allocation8 + $0xa0] sm:$0xff]
    %v4307 = vld [vmem:[#allocation8 + $0xa8] sm:$0xff]
    %v4308 = vld [vmem:[#allocation8 + $0xb0] sm:$0xff]
    %v4309 = vld [vmem:[#allocation8 + $0xb8] sm:$0xff]
    %v4310 = vld [vmem:[#allocation8 + $0xc0] sm:$0xff]
    %v4311 = vld [vmem:[#allocation8 + $0xc8] sm:$0xff]
    %v4312 = vld [vmem:[#allocation8 + $0xd0] sm:$0xff]
    %v4313 = vld [vmem:[#allocation8 + $0xd8] sm:$0xff]
    %v4314 = vld [vmem:[#allocation8 + $0xe0] sm:$0xff]
    %v4315 = vld [vmem:[#allocation8 + $0xe8] sm:$0xff]
    %v4316 = vld [vmem:[#allocation8 + $0xf0] sm:$0xff]
    %v4317 = vld [vmem:[#allocation8 + $0xf8] sm:$0xff]
    %v4318 = vld [vmem:[#allocation8 + $0x100] sm:$0xff]
    %v4319 = vld [vmem:[#allocation8 + $0x108] sm:$0xff]
    %v4320 = vld [vmem:[#allocation8 + $0x110] sm:$0xff]
    %v4321 = vld [vmem:[#allocation8 + $0x118] sm:$0xff]
    %v4322 = vld [vmem:[#allocation8 + $0x120] sm:$0xff]
    %v4323 = vld [vmem:[#allocation8 + $0x128] sm:$0xff]
    %v4324 = vld [vmem:[#allocation8 + $0x130] sm:$0xff]
    %v4325 = vld [vmem:[#allocation8 + $0x138] sm:$0xff]
    %v4326 = vld [vmem:[#allocation8 + $0x140] sm:$0xff]
    %v4327 = vld [vmem:[#allocation8 + $0x148] sm:$0xff]
    %v4328 = vld [vmem:[#allocation8 + $0x150] sm:$0xff]
    %v4329 = vld [vmem:[#allocation8 + $0x158] sm:$0xff]
    %v4330 = vld [vmem:[#allocation8 + $0x160] sm:$0xff]
    %v4331 = vld [vmem:[#allocation8 + $0x168] sm:$0xff]
    %v4332 = vld [vmem:[#allocation8 + $0x170] sm:$0xff]
    %v4333 = vld [vmem:[#allocation8 + $0x178] sm:$0xff]
    %v4334 = vld [vmem:[#allocation8 + $0x180] sm:$0xff]
    %v4335 = vld [vmem:[#allocation8 + $0x188] sm:$0xff]
    %v4336 = vld [vmem:[#allocation8 + $0x190] sm:$0xff]
    %v4337 = vld [vmem:[#allocation8 + $0x198] sm:$0xff]
    %v4338 = vld [vmem:[#allocation8 + $0x1a0] sm:$0xff]
    %v4339 = vld [vmem:[#allocation8 + $0x1a8] sm:$0xff]
    %v4340 = vld [vmem:[#allocation8 + $0x1b0] sm:$0xff]
    %v4341 = vld [vmem:[#allocation8 + $0x1b8] sm:$0xff]
    %v4342 = vld [vmem:[#allocation8 + $0x1c0] sm:$0xff]
    %v4343 = vld [vmem:[#allocation8 + $0x1c8] sm:$0xff]
    %v4344 = vld [vmem:[#allocation8 + $0x1d0] sm:$0xff]
    %v4345 = vld [vmem:[#allocation8 + $0x1d8] sm:$0xff]
    %v4346 = vld [vmem:[#allocation8 + $0x1e0] sm:$0xff]
    %v4347 = vld [vmem:[#allocation8 + $0x1e8] sm:$0xff]
    %v4348 = vld [vmem:[#allocation8 + $0x1f0] sm:$0xff]
    %v4349 = vld [vmem:[#allocation8 + $0x1f8] sm:$0xff]
    %v4350 = vld [vmem:[%s7] sm:$0xf]
    %v4352 = vlaneseq
    %v4353 = vshrl.u32 %v4352, 7
    %v4354 = vsub.s32 0, %v4353
    %v4355 = vrot.slane %v4350, %v4354
    %v4356 = vlaneseq
    %v4357 = vshrl.u32 %v4356, 7
    %v4358 = vsub.s32 1, %v4357
    %v4359 = vrot.slane %v4350, %v4358
    %v4360 = vlaneseq
    %v4361 = vshrl.u32 %v4360, 7
    %v4362 = vsub.s32 2, %v4361
    %v4363 = vrot.slane %v4350, %v4362
    %v4364 = vlaneseq
    %v4365 = vshrl.u32 %v4364, 7
    %v4366 = vsub.s32 3, %v4365
    %v4367 = vrot.slane %v4350, %v4366
    %v4373 = vunpack.c.l.b16 %v4284
    %v4374 = vunpack.c.h.b16 %v4284
    %v4375 = vpack.c.b16 %v4373, %v4373
    %v4376 = vpack.c.b16 %v4374, %v4374
    %v4443 = vunpack.c.l.b16 %v4286
    %v4444 = vunpack.c.h.b16 %v4286
    %v4445 = vunpack.c.l.b16 %v4287
    %v4446 = vunpack.c.h.b16 %v4287
    %v4447 = vunpack.c.l.b16 %v4288
    %v4448 = vunpack.c.h.b16 %v4288
    %v4449 = vunpack.c.l.b16 %v4289
    %v4450 = vunpack.c.h.b16 %v4289
    %v4451 = vunpack.c.l.b16 %v4290
    %v4452 = vunpack.c.h.b16 %v4290
    %v4453 = vunpack.c.l.b16 %v4291
    %v4454 = vunpack.c.h.b16 %v4291
    %v4455 = vunpack.c.l.b16 %v4292
    %v4456 = vunpack.c.h.b16 %v4292
    %v4457 = vunpack.c.l.b16 %v4293
    %v4458 = vunpack.c.h.b16 %v4293
    %v4459 = vunpack.c.l.b16 %v4294
    %v4460 = vunpack.c.h.b16 %v4294
    %v4461 = vunpack.c.l.b16 %v4295
    %v4462 = vunpack.c.h.b16 %v4295
    %v4463 = vunpack.c.l.b16 %v4296
    %v4464 = vunpack.c.h.b16 %v4296
    %v4465 = vunpack.c.l.b16 %v4297
    %v4466 = vunpack.c.h.b16 %v4297
    %v4467 = vunpack.c.l.b16 %v4298
    %v4468 = vunpack.c.h.b16 %v4298
    %v4469 = vunpack.c.l.b16 %v4299
    %v4470 = vunpack.c.h.b16 %v4299
    %v4471 = vunpack.c.l.b16 %v4300
    %v4472 = vunpack.c.h.b16 %v4300
    %v4473 = vunpack.c.l.b16 %v4301
    %v4474 = vunpack.c.h.b16 %v4301
    %v4475 = vunpack.c.l.b16 %v4302
    %v4476 = vunpack.c.h.b16 %v4302
    %v4477 = vunpack.c.l.b16 %v4303
    %v4478 = vunpack.c.h.b16 %v4303
    %v4479 = vunpack.c.l.b16 %v4304
    %v4480 = vunpack.c.h.b16 %v4304
    %v4481 = vunpack.c.l.b16 %v4305
    %v4482 = vunpack.c.h.b16 %v4305
    %v4483 = vunpack.c.l.b16 %v4306
    %v4484 = vunpack.c.h.b16 %v4306
    %v4485 = vunpack.c.l.b16 %v4307
    %v4486 = vunpack.c.h.b16 %v4307
    %v4487 = vunpack.c.l.b16 %v4308
    %v4488 = vunpack.c.h.b16 %v4308
    %v4489 = vunpack.c.l.b16 %v4309
    %v4490 = vunpack.c.h.b16 %v4309
    %v4491 = vunpack.c.l.b16 %v4310
    %v4492 = vunpack.c.h.b16 %v4310
    %v4493 = vunpack.c.l.b16 %v4311
    %v4494 = vunpack.c.h.b16 %v4311
    %v4495 = vunpack.c.l.b16 %v4312
    %v4496 = vunpack.c.h.b16 %v4312
    %v4497 = vunpack.c.l.b16 %v4313
    %v4498 = vunpack.c.h.b16 %v4313
    %v4499 = vunpack.c.l.b16 %v4314
    %v4500 = vunpack.c.h.b16 %v4314
    %v4501 = vunpack.c.l.b16 %v4315
    %v4502 = vunpack.c.h.b16 %v4315
    %v4503 = vunpack.c.l.b16 %v4316
    %v4504 = vunpack.c.h.b16 %v4316
    %v4505 = vunpack.c.l.b16 %v4317
    %v4506 = vunpack.c.h.b16 %v4317
    %v4507 = vunpack.c.l.b16 %v4318
    %v4508 = vunpack.c.h.b16 %v4318
    %v4509 = vunpack.c.l.b16 %v4319
    %v4510 = vunpack.c.h.b16 %v4319
    %v4511 = vunpack.c.l.b16 %v4320
    %v4512 = vunpack.c.h.b16 %v4320
    %v4513 = vunpack.c.l.b16 %v4321
    %v4514 = vunpack.c.h.b16 %v4321
    %v4515 = vunpack.c.l.b16 %v4322
    %v4516 = vunpack.c.h.b16 %v4322
    %v4517 = vunpack.c.l.b16 %v4323
    %v4518 = vunpack.c.h.b16 %v4323
    %v4519 = vunpack.c.l.b16 %v4324
    %v4520 = vunpack.c.h.b16 %v4324
    %v4521 = vunpack.c.l.b16 %v4325
    %v4522 = vunpack.c.h.b16 %v4325
    %v4523 = vunpack.c.l.b16 %v4326
    %v4524 = vunpack.c.h.b16 %v4326
    %v4525 = vunpack.c.l.b16 %v4327
    %v4526 = vunpack.c.h.b16 %v4327
    %v4527 = vunpack.c.l.b16 %v4328
    %v4528 = vunpack.c.h.b16 %v4328
    %v4529 = vunpack.c.l.b16 %v4329
    %v4530 = vunpack.c.h.b16 %v4329
    %v4531 = vunpack.c.l.b16 %v4330
    %v4532 = vunpack.c.h.b16 %v4330
    %v4533 = vunpack.c.l.b16 %v4331
    %v4534 = vunpack.c.h.b16 %v4331
    %v4535 = vunpack.c.l.b16 %v4332
    %v4536 = vunpack.c.h.b16 %v4332
    %v4537 = vunpack.c.l.b16 %v4333
    %v4538 = vunpack.c.h.b16 %v4333
    %v4539 = vunpack.c.l.b16 %v4334
    %v4540 = vunpack.c.h.b16 %v4334
    %v4541 = vunpack.c.l.b16 %v4335
    %v4542 = vunpack.c.h.b16 %v4335
    %v4543 = vunpack.c.l.b16 %v4336
    %v4544 = vunpack.c.h.b16 %v4336
    %v4545 = vunpack.c.l.b16 %v4337
    %v4546 = vunpack.c.h.b16 %v4337
    %v4547 = vunpack.c.l.b16 %v4338
    %v4548 = vunpack.c.h.b16 %v4338
    %v4549 = vunpack.c.l.b16 %v4339
    %v4550 = vunpack.c.h.b16 %v4339
    %v4551 = vunpack.c.l.b16 %v4340
    %v4552 = vunpack.c.h.b16 %v4340
    %v4553 = vunpack.c.l.b16 %v4341
    %v4554 = vunpack.c.h.b16 %v4341
    %v4555 = vunpack.c.l.b16 %v4342
    %v4556 = vunpack.c.h.b16 %v4342
    %v4557 = vunpack.c.l.b16 %v4343
    %v4558 = vunpack.c.h.b16 %v4343
    %v4559 = vunpack.c.l.b16 %v4344
    %v4560 = vunpack.c.h.b16 %v4344
    %v4561 = vunpack.c.l.b16 %v4345
    %v4562 = vunpack.c.h.b16 %v4345
    %v4563 = vunpack.c.l.b16 %v4346
    %v4564 = vunpack.c.h.b16 %v4346
    %v4565 = vunpack.c.l.b16 %v4347
    %v4566 = vunpack.c.h.b16 %v4347
    %v4567 = vunpack.c.l.b16 %v4348
    %v4568 = vunpack.c.h.b16 %v4348
    %v4569 = vunpack.c.l.b16 %v4349
    %v4570 = vunpack.c.h.b16 %v4349
    %v4571 = vpack.c.b16 %v4447, %v4443
    %v4572 = vpack.c.b16 %v4448, %v4444
    %v4573 = vpack.c.b16 %v4449, %v4445
    %v4574 = vpack.c.b16 %v4450, %v4446
    %v4575 = vpack.c.b16 %v4455, %v4451
    %v4576 = vpack.c.b16 %v4456, %v4452
    %v4577 = vpack.c.b16 %v4457, %v4453
    %v4578 = vpack.c.b16 %v4458, %v4454
    %v4579 = vpack.c.b16 %v4463, %v4459
    %v4580 = vpack.c.b16 %v4464, %v4460
    %v4581 = vpack.c.b16 %v4465, %v4461
    %v4582 = vpack.c.b16 %v4466, %v4462
    %v4583 = vpack.c.b16 %v4471, %v4467
    %v4584 = vpack.c.b16 %v4472, %v4468
    %v4585 = vpack.c.b16 %v4473, %v4469
    %v4586 = vpack.c.b16 %v4474, %v4470
    %v4587 = vpack.c.b16 %v4479, %v4475
    %v4588 = vpack.c.b16 %v4480, %v4476
    %v4589 = vpack.c.b16 %v4481, %v4477
    %v4590 = vpack.c.b16 %v4482, %v4478
    %v4591 = vpack.c.b16 %v4487, %v4483
    %v4592 = vpack.c.b16 %v4488, %v4484
    %v4593 = vpack.c.b16 %v4489, %v4485
    %v4594 = vpack.c.b16 %v4490, %v4486
    %v4595 = vpack.c.b16 %v4495, %v4491
    %v4596 = vpack.c.b16 %v4496, %v4492
    %v4597 = vpack.c.b16 %v4497, %v4493
    %v4598 = vpack.c.b16 %v4498, %v4494
    %v4599 = vpack.c.b16 %v4503, %v4499
    %v4600 = vpack.c.b16 %v4504, %v4500
    %v4601 = vpack.c.b16 %v4505, %v4501
    %v4602 = vpack.c.b16 %v4506, %v4502
    %v4603 = vpack.c.b16 %v4511, %v4507
    %v4604 = vpack.c.b16 %v4512, %v4508
    %v4605 = vpack.c.b16 %v4513, %v4509
    %v4606 = vpack.c.b16 %v4514, %v4510
    %v4607 = vpack.c.b16 %v4519, %v4515
    %v4608 = vpack.c.b16 %v4520, %v4516
    %v4609 = vpack.c.b16 %v4521, %v4517
    %v4610 = vpack.c.b16 %v4522, %v4518
    %v4611 = vpack.c.b16 %v4527, %v4523
    %v4612 = vpack.c.b16 %v4528, %v4524
    %v4613 = vpack.c.b16 %v4529, %v4525
    %v4614 = vpack.c.b16 %v4530, %v4526
    %v4615 = vpack.c.b16 %v4535, %v4531
    %v4616 = vpack.c.b16 %v4536, %v4532
    %v4617 = vpack.c.b16 %v4537, %v4533
    %v4618 = vpack.c.b16 %v4538, %v4534
    %v4619 = vpack.c.b16 %v4543, %v4539
    %v4620 = vpack.c.b16 %v4544, %v4540
    %v4621 = vpack.c.b16 %v4545, %v4541
    %v4622 = vpack.c.b16 %v4546, %v4542
    %v4623 = vpack.c.b16 %v4551, %v4547
    %v4624 = vpack.c.b16 %v4552, %v4548
    %v4625 = vpack.c.b16 %v4553, %v4549
    %v4626 = vpack.c.b16 %v4554, %v4550
    %v4627 = vpack.c.b16 %v4559, %v4555
    %v4628 = vpack.c.b16 %v4560, %v4556
    %v4629 = vpack.c.b16 %v4561, %v4557
    %v4630 = vpack.c.b16 %v4562, %v4558
    %v4631 = vpack.c.b16 %v4567, %v4563
    %v4632 = vpack.c.b16 %v4568, %v4564
    %v4633 = vpack.c.b16 %v4569, %v4565
    %v4634 = vpack.c.b16 %v4570, %v4566
    %4699 = vmatprep.subr.bf16.mxu0 %v4600
    %4700 = vmatpush1.bf16.msra.mxu0 %v4599
    %4701 = vmatprep.subr.bf16.mxu0 %v4596
    %4702 = vmatpush1.bf16.msra.mxu0 %v4595
    %4703 = vmatprep.subr.bf16.mxu0 %v4592
    %4704 = vmatpush1.bf16.msra.mxu0 %v4591
    %4705 = vmatprep.subr.bf16.mxu0 %v4588
    %4706 = vmatpush1.bf16.msra.mxu0 %v4587
    %4707 = vmatprep.subr.bf16.mxu0 %v4584
    %4708 = vmatpush1.bf16.msra.mxu0 %v4583
    %4709 = vmatprep.subr.bf16.mxu0 %v4580
    %4710 = vmatpush1.bf16.msra.mxu0 %v4579
    %4711 = vmatprep.subr.bf16.mxu0 %v4576
    %4712 = vmatpush1.bf16.msra.mxu0 %v4575
    %4713 = vmatprep.subr.bf16.mxu0 %v4572
    %4714 = vmatpush1.bf16.msra.mxu0 %v4571
    %4715 = vmatprep.subr.bf16.mxu0 %v4632
    %4716 = vmatpush2.bf16.msra.mxu0 %v4631
    %4717 = vmatprep.subr.bf16.mxu0 %v4628
    %4718 = vmatpush2.bf16.msra.mxu0 %v4627
    %4719 = vmatprep.subr.bf16.mxu0 %v4624
    %4720 = vmatpush2.bf16.msra.mxu0 %v4623
    %4721 = vmatprep.subr.bf16.mxu0 %v4620
    %4722 = vmatpush2.bf16.msra.mxu0 %v4619
    %4723 = vmatprep.subr.bf16.mxu0 %v4616
    %4724 = vmatpush2.bf16.msra.mxu0 %v4615
    %4725 = vmatprep.subr.bf16.mxu0 %v4612
    %4726 = vmatpush2.bf16.msra.mxu0 %v4611
    %4727 = vmatprep.subr.bf16.mxu0 %v4608
    %4728 = vmatpush2.bf16.msra.mxu0 %v4607
    %4729 = vmatprep.subr.bf16.mxu0 %v4604
    %4730 = vmatpush2.bf16.msra.mxu0 %v4603
    %4731 = vmatprep.mubr.bf16.mxu0 %v4376
    %4732 = vmatmul.mubr.bf16.gmra.mxu0 %v4375
    %v4733 = vpop.f32.mrf.mxu0
    %v4734 = vadd.f32 %v4355, %v4733
    %v4735 = vpop.f32.mrf.mxu0
    %v4736 = vadd.f32 %v4359, %v4735
    %v4737 = vpop.f32.mrf.mxu0
    %v4738 = vpop.f32.mrf.mxu0
    %4739 = vdwg.mxu0
    %4740 = vmatprep.subr.bf16.mxu0 %v4602
    %4741 = vmatpush1.bf16.msra.mxu0 %v4601
    %4742 = vmatprep.subr.bf16.mxu0 %v4598
    %4743 = vmatpush1.bf16.msra.mxu0 %v4597
    %4744 = vmatprep.subr.bf16.mxu0 %v4594
    %4745 = vmatpush1.bf16.msra.mxu0 %v4593
    %4746 = vmatprep.subr.bf16.mxu0 %v4590
    %4747 = vmatpush1.bf16.msra.mxu0 %v4589
    %4748 = vmatprep.subr.bf16.mxu0 %v4586
    %4749 = vmatpush1.bf16.msra.mxu0 %v4585
    %4750 = vmatprep.subr.bf16.mxu0 %v4582
    %4751 = vmatpush1.bf16.msra.mxu0 %v4581
    %4752 = vmatprep.subr.bf16.mxu0 %v4578
    %4753 = vmatpush1.bf16.msra.mxu0 %v4577
    %4754 = vmatprep.subr.bf16.mxu0 %v4574
    %4755 = vmatpush1.bf16.msra.mxu0 %v4573
    %4756 = vmatprep.subr.bf16.mxu0 %v4634
    %4757 = vmatpush2.bf16.msra.mxu0 %v4633
    %4758 = vmatprep.subr.bf16.mxu0 %v4630
    %4759 = vmatpush2.bf16.msra.mxu0 %v4629
    %4760 = vmatprep.subr.bf16.mxu0 %v4626
    %4761 = vmatpush2.bf16.msra.mxu0 %v4625
    %4762 = vmatprep.subr.bf16.mxu0 %v4622
    %4763 = vmatpush2.bf16.msra.mxu0 %v4621
    %4764 = vmatprep.subr.bf16.mxu0 %v4618
    %4765 = vmatpush2.bf16.msra.mxu0 %v4617
    %4766 = vmatprep.subr.bf16.mxu0 %v4614
    %4767 = vmatpush2.bf16.msra.mxu0 %v4613
    %4768 = vmatprep.subr.bf16.mxu0 %v4610
    %4769 = vmatpush2.bf16.msra.mxu0 %v4609
    %4770 = vmatprep.subr.bf16.mxu0 %v4606
    %4771 = vmatpush2.bf16.msra.mxu0 %v4605
    %4772 = vmatprep.mubr.bf16.mxu0 %v4376
    %4773 = vmatmul.mubr.bf16.gmra.mxu0 %v4375
    %v4774 = vpop.f32.mrf.mxu0
    %v4775 = vadd.f32 %v4363, %v4774
    %v4776 = vpop.f32.mrf.mxu0
    %v4777 = vadd.f32 %v4367, %v4776
    %v4778 = vpop.f32.mrf.mxu0
    %v4779 = vpop.f32.mrf.mxu0
    %4780 = vdwg.mxu0
    %v4781 = vxor.u32 %v4734, 2147483648
    %v4782 = vmul.f32 %v4781, 1.442695
    %v4783 = vpow.pop %v4782
    %v4784 = vadd.f32 %v4783, 1.0
    %v4785 = vrcp.pop %v4784
    %v4786 = vmul.f32 1.0, %v4785
    %v4787 = vxor.u32 %v4736, 2147483648
    %v4788 = vmul.f32 %v4787, 1.442695
    %v4789 = vpow.pop %v4788
    %v4790 = vadd.f32 %v4789, 1.0
    %v4791 = vrcp.pop %v4790
    %v4792 = vmul.f32 1.0, %v4791
    %v4793 = vtanh.pop %v4775
    %v4794 = vxor.u32 %v4777, 2147483648
    %v4795 = vmul.f32 %v4794, 1.442695
    %v4796 = vpow.pop %v4795
    %v4797 = vadd.f32 %v4796, 1.0
    %v4798 = vrcp.pop %v4797
    %v4799 = vmul.f32 1.0, %v4798
    %v4800 = vmul.f32 %v4792, %v4285
    %v4801 = vmul.f32 %v4786, %v4793
    %v4802 = vadd.f32 %v4800, %v4801
    %v4803 = vtanh.pop %v4802
    %v4804 = vmul.f32 %v4799, %v4803
    %4805 = vst [vmem:[#allocation2] sm:$0xff] %v4802
    %v4806 = vpack.c.bf16 %v4804, %v4804
    %4807 = vst [vmem:[#allocation3 + $0x4] sm:$0xf] %v4806
    %v4808 = vld [vmem:[%s8] sm:$0xf]
    %v4809 = vld [vmem:[%s8 + $0x4] sm:$0xf]
    %v4810 = vld [vmem:[%s8 + $0x8] sm:$0xf]
    %v4811 = vld [vmem:[%s8 + $0xc] sm:$0xf]
    %v4812 = vld [vmem:[%s8 + $0x10] sm:$0xf]
    %v4813 = vld [vmem:[%s8 + $0x14] sm:$0xf]
    %v4814 = vld [vmem:[%s8 + $0x18] sm:$0xf]
    %v4815 = vld [vmem:[%s8 + $0x1c] sm:$0xf]
    %v4816 = vld [vmem:[%s8 + $0x20] sm:$0xf]
    %v4817 = vld [vmem:[%s8 + $0x24] sm:$0xf]
    %v4818 = vld [vmem:[%s8 + $0x28] sm:$0xf]
    %v4819 = vld [vmem:[%s8 + $0x2c] sm:$0xf]
    %v4820 = vld [vmem:[%s8 + $0x30] sm:$0xf]
    %v4821 = vld [vmem:[%s8 + $0x34] sm:$0xf]
    %v4822 = vld [vmem:[%s8 + $0x38] sm:$0xf]
    %v4823 = vld [vmem:[%s8 + $0x3c] sm:$0xf]
    %v4824 = vld [vmem:[%s9] sm:$0x1]
    %v4826 = vlaneseq
    %v4827 = vshrl.u32 %v4826, 7
    %v4828 = vsub.s32 0, %v4827
    %v4829 = vrot.slane %v4824, %v4828
    %v4847 = vunpack.c.l.b16 %v4808
    %v4848 = vunpack.c.l.b16 %v4809
    %v4849 = vunpack.c.l.b16 %v4810
    %v4850 = vunpack.c.l.b16 %v4811
    %v4851 = vunpack.c.l.b16 %v4812
    %v4852 = vunpack.c.l.b16 %v4813
    %v4853 = vunpack.c.l.b16 %v4814
    %v4854 = vunpack.c.l.b16 %v4815
    %v4855 = vunpack.c.l.b16 %v4816
    %v4856 = vunpack.c.l.b16 %v4817
    %v4857 = vunpack.c.l.b16 %v4818
    %v4858 = vunpack.c.l.b16 %v4819
    %v4859 = vunpack.c.l.b16 %v4820
    %v4860 = vunpack.c.l.b16 %v4821
    %v4861 = vunpack.c.l.b16 %v4822
    %v4862 = vunpack.c.l.b16 %v4823
    %v4863 = vpack.c.b16 %v4848, %v4847
    %v4864 = vpack.c.b16 %v4850, %v4849
    %v4865 = vpack.c.b16 %v4852, %v4851
    %v4866 = vpack.c.b16 %v4854, %v4853
    %v4867 = vpack.c.b16 %v4856, %v4855
    %v4868 = vpack.c.b16 %v4858, %v4857
    %v4869 = vpack.c.b16 %v4860, %v4859
    %v4870 = vpack.c.b16 %v4862, %v4861
    %4879 = vmatprep.subr.bf16.mxu0 0
    %4880 = vmatpush1.bf16.msra.mxu0 %v4870
    %4881 = vmatprep.subr.bf16.mxu0 0
    %4882 = vmatpush1.bf16.msra.mxu0 %v4869
    %4883 = vmatprep.subr.bf16.mxu0 0
    %4884 = vmatpush1.bf16.msra.mxu0 %v4868
    %4885 = vmatprep.subr.bf16.mxu0 0
    %4886 = vmatpush1.bf16.msra.mxu0 %v4867
    %4887 = vmatprep.subr.bf16.mxu0 0
    %4888 = vmatpush1.bf16.msra.mxu0 %v4866
    %4889 = vmatprep.subr.bf16.mxu0 0
    %4890 = vmatpush1.bf16.msra.mxu0 %v4865
    %4891 = vmatprep.subr.bf16.mxu0 0
    %4892 = vmatpush1.bf16.msra.mxu0 %v4864
    %4893 = vmatprep.subr.bf16.mxu0 0
    %4894 = vmatpush1.bf16.msra.mxu0 %v4863
    %4895 = vmatprep.subr.bf16.mxu0 0
    %4896 = vmatpush2.bf16.msra.mxu0 0
    %4897 = vmatprep.subr.bf16.mxu0 0
    %4898 = vmatpush2.bf16.msra.mxu0 0
    %4899 = vmatprep.subr.bf16.mxu0 0
    %4900 = vmatpush2.bf16.msra.mxu0 0
    %4901 = vmatprep.subr.bf16.mxu0 0
    %4902 = vmatpush2.bf16.msra.mxu0 0
    %4903 = vmatprep.subr.bf16.mxu0 0
    %4904 = vmatpush2.bf16.msra.mxu0 0
    %4905 = vmatprep.subr.bf16.mxu0 0
    %4906 = vmatpush2.bf16.msra.mxu0 0
    %4907 = vmatprep.subr.bf16.mxu0 0
    %4908 = vmatpush2.bf16.msra.mxu0 0
    %4909 = vmatprep.subr.bf16.mxu0 0
    %4910 = vmatpush2.bf16.msra.mxu0 0
    %4911 = vmatprep.mubr.bf16.mxu0 0
    %4912 = vmatmul.mubr.bf16.gmra.mxu0 %v4806
    %v4913 = vpop.f32.mrf.mxu0
    %v4914 = vadd.f32 %v4829, %v4913
    %v4915 = vpop.f32.mrf.mxu0
    %v4916 = vpop.f32.mrf.mxu0
    %v4917 = vpop.f32.mrf.mxu0
    %4918 = vdwg.mxu0
    %s4919 = scalar_lea.vmem [#allocation9], 8
    %4920 = vst [vmem:[%s4919] sm:$0xff] %v4914
    %s4921 = sld [smem:[#allocation4 + $0x1]]
    %p4922 = scmp.ne.s32.totalorder %s4921, 0
    // Predicated region
    $region50: #{seq2seq_forward.1} parent=1 // pred_check
      %p4923 = pneg %p4922
    $region51: #{seq2seq_forward.1} parent=1 // pred_check_branch
      %4925 = sbr.rel (%p4923) target = $region53
    $region52: #{seq2seq_forward.1} parent=1 // pred_region
      %s4926 = scalar_lea.vmem %s2, 4
      %v4927 = vld [vmem:[%s4926] sm:$0xf]
      %4928 = vst [vmem:[#allocation3] sm:$0xf] %v4927
    $region53: #{seq2seq_forward.1} parent=1 // pred_fallthru
      _
    %p4929 = scmp.eq.s32.totalorder %s4921, 0
    // Predicated region
    $region54: #{seq2seq_forward.1} parent=1 // pred_check
      %p4930 = pneg %p4929
    $region55: #{seq2seq_forward.1} parent=1 // pred_check_branch
      %4932 = sbr.rel (%p4930) target = $region57
    $region56: #{seq2seq_forward.1} parent=1 // pred_region
      %4933 = vmax.xlane.f32.xlu0 %v4914
      %v4934 = vpop.xlane.xlu0 %4933
      %v4935 = vlaneseq
      %v4936 = vand.u32 %v4935, 127
      %vm4937 = vcmp.eq.f32.partialorder %v4914, %v4934
      %v4938 = vsel %vm4937, %v4936, 128
      %v4939 = vand.u32 %v4938, 65535
      %v4940 = vshra.s32 %v4938, 16
      %v4941 = vcvt.s32.f32 %v4939
      %v4942 = vcvt.s32.f32 %v4940
      %4943 = vmin.xlane.f32.xlu0 %v4942
      %v4944 = vpop.xlane.xlu0 %4943
      %vm4945 = vcmp.eq.f32.partialorder %v4942, %v4944
      %v4946 = vsel %vm4945, %v4941, inf
      %4947 = vmin.xlane.f32.xlu0 %v4946
      %v4948 = vpop.xlane.xlu0 %4947
      %v4949 = vcvt.f32.s32 %v4948
      %v4950 = vcvt.f32.s32 %v4944
      %v4951 = vshll.u32 %v4950, 16
      %v4952 = vadd.s32 %v4951, %v4949
      %vm4953 = vcmp.eq.s32.totalorder %v4936, %v4952
      %v4954 = vsel %vm4953, 1, 0
      %v4955 = vcvt.s32.f32 %v4954
      %v4956 = vpack.c.bf16 %v4955, %v4955
      %v4957 = vld [vmem:[%s3] sm:$0xf]
      %v4958 = vld [vmem:[%s3 + $0x4] sm:$0xf]
      %v4959 = vld [vmem:[%s3 + $0x8] sm:$0xf]
      %v4960 = vld [vmem:[%s3 + $0xc] sm:$0xf]
      %v4961 = vld [vmem:[%s3 + $0x10] sm:$0xf]
      %v4962 = vld [vmem:[%s3 + $0x14] sm:$0xf]
      %v4963 = vld [vmem:[%s3 + $0x18] sm:$0xf]
      %v4964 = vld [vmem:[%s3 + $0x1c] sm:$0xf]
      %v4965 = vld [vmem:[%s3 + $0x20] sm:$0xf]
      %v4966 = vld [vmem:[%s3 + $0x24] sm:$0xf]
      %v4967 = vld [vmem:[%s3 + $0x28] sm:$0xf]
      %v4968 = vld [vmem:[%s3 + $0x2c] sm:$0xf]
      %v4969 = vld [vmem:[%s3 + $0x30] sm:$0xf]
      %v4970 = vld [vmem:[%s3 + $0x34] sm:$0xf]
      %v4971 = vld [vmem:[%s3 + $0x38] sm:$0xf]
      %v4972 = vld [vmem:[%s3 + $0x3c] sm:$0xf]
      %v4989 = vunpack.c.l.b16 %v4957
      %v4990 = vunpack.c.l.b16 %v4958
      %v4991 = vunpack.c.l.b16 %v4959
      %v4992 = vunpack.c.l.b16 %v4960
      %v4993 = vunpack.c.l.b16 %v4961
      %v4994 = vunpack.c.l.b16 %v4962
      %v4995 = vunpack.c.l.b16 %v4963
      %v4996 = vunpack.c.l.b16 %v4964
      %v4997 = vunpack.c.l.b16 %v4965
      %v4998 = vunpack.c.l.b16 %v4966
      %v4999 = vunpack.c.l.b16 %v4967
      %v5000 = vunpack.c.l.b16 %v4968
      %v5001 = vunpack.c.l.b16 %v4969
      %v5002 = vunpack.c.l.b16 %v4970
      %v5003 = vunpack.c.l.b16 %v4971
      %v5004 = vunpack.c.l.b16 %v4972
      %v5005 = vpack.c.b16 %v4990, %v4989
      %v5006 = vpack.c.b16 %v4992, %v4991
      %v5007 = vpack.c.b16 %v4994, %v4993
      %v5008 = vpack.c.b16 %v4996, %v4995
      %v5009 = vpack.c.b16 %v4998, %v4997
      %v5010 = vpack.c.b16 %v5000, %v4999
      %v5011 = vpack.c.b16 %v5002, %v5001
      %v5012 = vpack.c.b16 %v5004, %v5003
      %5021 = vmatprep.subr.bf16.mxu0 0
      %5022 = vmatpush1.bf16.msra.mxu0 %v5012
      %5023 = vmatprep.subr.bf16.mxu0 0
      %5024 = vmatpush1.bf16.msra.mxu0 %v5011
      %5025 = vmatprep.subr.bf16.mxu0 0
      %5026 = vmatpush1.bf16.msra.mxu0 %v5010
      %5027 = vmatprep.subr.bf16.mxu0 0
      %5028 = vmatpush1.bf16.msra.mxu0 %v5009
      %5029 = vmatprep.subr.bf16.mxu0 0
      %5030 = vmatpush1.bf16.msra.mxu0 %v5008
      %5031 = vmatprep.subr.bf16.mxu0 0
      %5032 = vmatpush1.bf16.msra.mxu0 %v5007
      %5033 = vmatprep.subr.bf16.mxu0 0
      %5034 = vmatpush1.bf16.msra.mxu0 %v5006
      %5035 = vmatprep.subr.bf16.mxu0 0
      %5036 = vmatpush1.bf16.msra.mxu0 %v5005
      %5037 = vmatprep.subr.bf16.mxu0 0
      %5038 = vmatpush2.bf16.msra.mxu0 0
      %5039 = vmatprep.subr.bf16.mxu0 0
      %5040 = vmatpush2.bf16.msra.mxu0 0
      %5041 = vmatprep.subr.bf16.mxu0 0
      %5042 = vmatpush2.bf16.msra.mxu0 0
      %5043 = vmatprep.subr.bf16.mxu0 0
      %5044 = vmatpush2.bf16.msra.mxu0 0
      %5045 = vmatprep.subr.bf16.mxu0 0
      %5046 = vmatpush2.bf16.msra.mxu0 0
      %5047 = vmatprep.subr.bf16.mxu0 0
      %5048 = vmatpush2.bf16.msra.mxu0 0
      %5049 = vmatprep.subr.bf16.mxu0 0
      %5050 = vmatpush2.bf16.msra.mxu0 0
      %5051 = vmatprep.subr.bf16.mxu0 0
      %5052 = vmatpush2.bf16.msra.mxu0 0
      %5053 = vmatprep.mubr.bf16.mxu0 0
      %5054 = vmatmul.mubr.bf16.gmra.mxu0 %v4956
      %v5055 = vpop.f32.mrf.mxu0
      %v5056 = vadd.f32 0.0, %v5055
      %v5057 = vpop.f32.mrf.mxu0
      %v5058 = vpop.f32.mrf.mxu0
      %v5059 = vpop.f32.mrf.mxu0
      %5060 = vdwg.mxu0
      %v5061 = vpack.c.bf16 %v5056, %v5056
      %5062 = vst [vmem:[#allocation3] sm:$0xf] %v5061
    $region57: #{seq2seq_forward.1} parent=1 // pred_fallthru
      _
    %v5063 = vld [vmem:[#allocation3] sm:$0xff]
    %v5064 = vld [vmem:[#allocation2] sm:$0xff]
    %v5065 = vld [vmem:[#allocation8] sm:$0xff]
    %v5066 = vld [vmem:[#allocation8 + $0x8] sm:$0xff]
    %v5067 = vld [vmem:[#allocation8 + $0x10] sm:$0xff]
    %v5068 = vld [vmem:[#allocation8 + $0x18] sm:$0xff]
    %v5069 = vld [vmem:[#allocation8 + $0x20] sm:$0xff]
    %v5070 = vld [vmem:[#allocation8 + $0x28] sm:$0xff]
    %v5071 = vld [vmem:[#allocation8 + $0x30] sm:$0xff]
    %v5072 = vld [vmem:[#allocation8 + $0x38] sm:$0xff]
    %v5073 = vld [vmem:[#allocation8 + $0x40] sm:$0xff]
    %v5074 = vld [vmem:[#allocation8 + $0x48] sm:$0xff]
    %v5075 = vld [vmem:[#allocation8 + $0x50] sm:$0xff]
    %v5076 = vld [vmem:[#allocation8 + $0x58] sm:$0xff]
    %v5077 = vld [vmem:[#allocation8 + $0x60] sm:$0xff]
    %v5078 = vld [vmem:[#allocation8 + $0x68] sm:$0xff]
    %v5079 = vld [vmem:[#allocation8 + $0x70] sm:$0xff]
    %v5080 = vld [vmem:[#allocation8 + $0x78] sm:$0xff]
    %v5081 = vld [vmem:[#allocation8 + $0x80] sm:$0xff]
    %v5082 = vld [vmem:[#allocation8 + $0x88] sm:$0xff]
    %v5083 = vld [vmem:[#allocation8 + $0x90] sm:$0xff]
    %v5084 = vld [vmem:[#allocation8 + $0x98] sm:$0xff]
    %v5085 = vld [vmem:[#allocation8 + $0xa0] sm:$0xff]
    %v5086 = vld [vmem:[#allocation8 + $0xa8] sm:$0xff]
    %v5087 = vld [vmem:[#allocation8 + $0xb0] sm:$0xff]
    %v5088 = vld [vmem:[#allocation8 + $0xb8] sm:$0xff]
    %v5089 = vld [vmem:[#allocation8 + $0xc0] sm:$0xff]
    %v5090 = vld [vmem:[#allocation8 + $0xc8] sm:$0xff]
    %v5091 = vld [vmem:[#allocation8 + $0xd0] sm:$0xff]
    %v5092 = vld [vmem:[#allocation8 + $0xd8] sm:$0xff]
    %v5093 = vld [vmem:[#allocation8 + $0xe0] sm:$0xff]
    %v5094 = vld [vmem:[#allocation8 + $0xe8] sm:$0xff]
    %v5095 = vld [vmem:[#allocation8 + $0xf0] sm:$0xff]
    %v5096 = vld [vmem:[#allocation8 + $0xf8] sm:$0xff]
    %v5097 = vld [vmem:[#allocation8 + $0x100] sm:$0xff]
    %v5098 = vld [vmem:[#allocation8 + $0x108] sm:$0xff]
    %v5099 = vld [vmem:[#allocation8 + $0x110] sm:$0xff]
    %v5100 = vld [vmem:[#allocation8 + $0x118] sm:$0xff]
    %v5101 = vld [vmem:[#allocation8 + $0x120] sm:$0xff]
    %v5102 = vld [vmem:[#allocation8 + $0x128] sm:$0xff]
    %v5103 = vld [vmem:[#allocation8 + $0x130] sm:$0xff]
    %v5104 = vld [vmem:[#allocation8 + $0x138] sm:$0xff]
    %v5105 = vld [vmem:[#allocation8 + $0x140] sm:$0xff]
    %v5106 = vld [vmem:[#allocation8 + $0x148] sm:$0xff]
    %v5107 = vld [vmem:[#allocation8 + $0x150] sm:$0xff]
    %v5108 = vld [vmem:[#allocation8 + $0x158] sm:$0xff]
    %v5109 = vld [vmem:[#allocation8 + $0x160] sm:$0xff]
    %v5110 = vld [vmem:[#allocation8 + $0x168] sm:$0xff]
    %v5111 = vld [vmem:[#allocation8 + $0x170] sm:$0xff]
    %v5112 = vld [vmem:[#allocation8 + $0x178] sm:$0xff]
    %v5113 = vld [vmem:[#allocation8 + $0x180] sm:$0xff]
    %v5114 = vld [vmem:[#allocation8 + $0x188] sm:$0xff]
    %v5115 = vld [vmem:[#allocation8 + $0x190] sm:$0xff]
    %v5116 = vld [vmem:[#allocation8 + $0x198] sm:$0xff]
    %v5117 = vld [vmem:[#allocation8 + $0x1a0] sm:$0xff]
    %v5118 = vld [vmem:[#allocation8 + $0x1a8] sm:$0xff]
    %v5119 = vld [vmem:[#allocation8 + $0x1b0] sm:$0xff]
    %v5120 = vld [vmem:[#allocation8 + $0x1b8] sm:$0xff]
    %v5121 = vld [vmem:[#allocation8 + $0x1c0] sm:$0xff]
    %v5122 = vld [vmem:[#allocation8 + $0x1c8] sm:$0xff]
    %v5123 = vld [vmem:[#allocation8 + $0x1d0] sm:$0xff]
    %v5124 = vld [vmem:[#allocation8 + $0x1d8] sm:$0xff]
    %v5125 = vld [vmem:[#allocation8 + $0x1e0] sm:$0xff]
    %v5126 = vld [vmem:[#allocation8 + $0x1e8] sm:$0xff]
    %v5127 = vld [vmem:[#allocation8 + $0x1f0] sm:$0xff]
    %v5128 = vld [vmem:[#allocation8 + $0x1f8] sm:$0xff]
    %v5129 = vld [vmem:[%s7] sm:$0xf]
    %v5131 = vlaneseq
    %v5132 = vshrl.u32 %v5131, 7
    %v5133 = vsub.s32 0, %v5132
    %v5134 = vrot.slane %v5129, %v5133
    %v5135 = vlaneseq
    %v5136 = vshrl.u32 %v5135, 7
    %v5137 = vsub.s32 1, %v5136
    %v5138 = vrot.slane %v5129, %v5137
    %v5139 = vlaneseq
    %v5140 = vshrl.u32 %v5139, 7
    %v5141 = vsub.s32 2, %v5140
    %v5142 = vrot.slane %v5129, %v5141
    %v5143 = vlaneseq
    %v5144 = vshrl.u32 %v5143, 7
    %v5145 = vsub.s32 3, %v5144
    %v5146 = vrot.slane %v5129, %v5145
    %v5152 = vunpack.c.l.b16 %v5063
    %v5153 = vunpack.c.h.b16 %v5063
    %v5154 = vpack.c.b16 %v5152, %v5152
    %v5155 = vpack.c.b16 %v5153, %v5153
    %v5222 = vunpack.c.l.b16 %v5065
    %v5223 = vunpack.c.h.b16 %v5065
    %v5224 = vunpack.c.l.b16 %v5066
    %v5225 = vunpack.c.h.b16 %v5066
    %v5226 = vunpack.c.l.b16 %v5067
    %v5227 = vunpack.c.h.b16 %v5067
    %v5228 = vunpack.c.l.b16 %v5068
    %v5229 = vunpack.c.h.b16 %v5068
    %v5230 = vunpack.c.l.b16 %v5069
    %v5231 = vunpack.c.h.b16 %v5069
    %v5232 = vunpack.c.l.b16 %v5070
    %v5233 = vunpack.c.h.b16 %v5070
    %v5234 = vunpack.c.l.b16 %v5071
    %v5235 = vunpack.c.h.b16 %v5071
    %v5236 = vunpack.c.l.b16 %v5072
    %v5237 = vunpack.c.h.b16 %v5072
    %v5238 = vunpack.c.l.b16 %v5073
    %v5239 = vunpack.c.h.b16 %v5073
    %v5240 = vunpack.c.l.b16 %v5074
    %v5241 = vunpack.c.h.b16 %v5074
    %v5242 = vunpack.c.l.b16 %v5075
    %v5243 = vunpack.c.h.b16 %v5075
    %v5244 = vunpack.c.l.b16 %v5076
    %v5245 = vunpack.c.h.b16 %v5076
    %v5246 = vunpack.c.l.b16 %v5077
    %v5247 = vunpack.c.h.b16 %v5077
    %v5248 = vunpack.c.l.b16 %v5078
    %v5249 = vunpack.c.h.b16 %v5078
    %v5250 = vunpack.c.l.b16 %v5079
    %v5251 = vunpack.c.h.b16 %v5079
    %v5252 = vunpack.c.l.b16 %v5080
    %v5253 = vunpack.c.h.b16 %v5080
    %v5254 = vunpack.c.l.b16 %v5081
    %v5255 = vunpack.c.h.b16 %v5081
    %v5256 = vunpack.c.l.b16 %v5082
    %v5257 = vunpack.c.h.b16 %v5082
    %v5258 = vunpack.c.l.b16 %v5083
    %v5259 = vunpack.c.h.b16 %v5083
    %v5260 = vunpack.c.l.b16 %v5084
    %v5261 = vunpack.c.h.b16 %v5084
    %v5262 = vunpack.c.l.b16 %v5085
    %v5263 = vunpack.c.h.b16 %v5085
    %v5264 = vunpack.c.l.b16 %v5086
    %v5265 = vunpack.c.h.b16 %v5086
    %v5266 = vunpack.c.l.b16 %v5087
    %v5267 = vunpack.c.h.b16 %v5087
    %v5268 = vunpack.c.l.b16 %v5088
    %v5269 = vunpack.c.h.b16 %v5088
    %v5270 = vunpack.c.l.b16 %v5089
    %v5271 = vunpack.c.h.b16 %v5089
    %v5272 = vunpack.c.l.b16 %v5090
    %v5273 = vunpack.c.h.b16 %v5090
    %v5274 = vunpack.c.l.b16 %v5091
    %v5275 = vunpack.c.h.b16 %v5091
    %v5276 = vunpack.c.l.b16 %v5092
    %v5277 = vunpack.c.h.b16 %v5092
    %v5278 = vunpack.c.l.b16 %v5093
    %v5279 = vunpack.c.h.b16 %v5093
    %v5280 = vunpack.c.l.b16 %v5094
    %v5281 = vunpack.c.h.b16 %v5094
    %v5282 = vunpack.c.l.b16 %v5095
    %v5283 = vunpack.c.h.b16 %v5095
    %v5284 = vunpack.c.l.b16 %v5096
    %v5285 = vunpack.c.h.b16 %v5096
    %v5286 = vunpack.c.l.b16 %v5097
    %v5287 = vunpack.c.h.b16 %v5097
    %v5288 = vunpack.c.l.b16 %v5098
    %v5289 = vunpack.c.h.b16 %v5098
    %v5290 = vunpack.c.l.b16 %v5099
    %v5291 = vunpack.c.h.b16 %v5099
    %v5292 = vunpack.c.l.b16 %v5100
    %v5293 = vunpack.c.h.b16 %v5100
    %v5294 = vunpack.c.l.b16 %v5101
    %v5295 = vunpack.c.h.b16 %v5101
    %v5296 = vunpack.c.l.b16 %v5102
    %v5297 = vunpack.c.h.b16 %v5102
    %v5298 = vunpack.c.l.b16 %v5103
    %v5299 = vunpack.c.h.b16 %v5103
    %v5300 = vunpack.c.l.b16 %v5104
    %v5301 = vunpack.c.h.b16 %v5104
    %v5302 = vunpack.c.l.b16 %v5105
    %v5303 = vunpack.c.h.b16 %v5105
    %v5304 = vunpack.c.l.b16 %v5106
    %v5305 = vunpack.c.h.b16 %v5106
    %v5306 = vunpack.c.l.b16 %v5107
    %v5307 = vunpack.c.h.b16 %v5107
    %v5308 = vunpack.c.l.b16 %v5108
    %v5309 = vunpack.c.h.b16 %v5108
    %v5310 = vunpack.c.l.b16 %v5109
    %v5311 = vunpack.c.h.b16 %v5109
    %v5312 = vunpack.c.l.b16 %v5110
    %v5313 = vunpack.c.h.b16 %v5110
    %v5314 = vunpack.c.l.b16 %v5111
    %v5315 = vunpack.c.h.b16 %v5111
    %v5316 = vunpack.c.l.b16 %v5112
    %v5317 = vunpack.c.h.b16 %v5112
    %v5318 = vunpack.c.l.b16 %v5113
    %v5319 = vunpack.c.h.b16 %v5113
    %v5320 = vunpack.c.l.b16 %v5114
    %v5321 = vunpack.c.h.b16 %v5114
    %v5322 = vunpack.c.l.b16 %v5115
    %v5323 = vunpack.c.h.b16 %v5115
    %v5324 = vunpack.c.l.b16 %v5116
    %v5325 = vunpack.c.h.b16 %v5116
    %v5326 = vunpack.c.l.b16 %v5117
    %v5327 = vunpack.c.h.b16 %v5117
    %v5328 = vunpack.c.l.b16 %v5118
    %v5329 = vunpack.c.h.b16 %v5118
    %v5330 = vunpack.c.l.b16 %v5119
    %v5331 = vunpack.c.h.b16 %v5119
    %v5332 = vunpack.c.l.b16 %v5120
    %v5333 = vunpack.c.h.b16 %v5120
    %v5334 = vunpack.c.l.b16 %v5121
    %v5335 = vunpack.c.h.b16 %v5121
    %v5336 = vunpack.c.l.b16 %v5122
    %v5337 = vunpack.c.h.b16 %v5122
    %v5338 = vunpack.c.l.b16 %v5123
    %v5339 = vunpack.c.h.b16 %v5123
    %v5340 = vunpack.c.l.b16 %v5124
    %v5341 = vunpack.c.h.b16 %v5124
    %v5342 = vunpack.c.l.b16 %v5125
    %v5343 = vunpack.c.h.b16 %v5125
    %v5344 = vunpack.c.l.b16 %v5126
    %v5345 = vunpack.c.h.b16 %v5126
    %v5346 = vunpack.c.l.b16 %v5127
    %v5347 = vunpack.c.h.b16 %v5127
    %v5348 = vunpack.c.l.b16 %v5128
    %v5349 = vunpack.c.h.b16 %v5128
    %v5350 = vpack.c.b16 %v5226, %v5222
    %v5351 = vpack.c.b16 %v5227, %v5223
    %v5352 = vpack.c.b16 %v5228, %v5224
    %v5353 = vpack.c.b16 %v5229, %v5225
    %v5354 = vpack.c.b16 %v5234, %v5230
    %v5355 = vpack.c.b16 %v5235, %v5231
    %v5356 = vpack.c.b16 %v5236, %v5232
    %v5357 = vpack.c.b16 %v5237, %v5233
    %v5358 = vpack.c.b16 %v5242, %v5238
    %v5359 = vpack.c.b16 %v5243, %v5239
    %v5360 = vpack.c.b16 %v5244, %v5240
    %v5361 = vpack.c.b16 %v5245, %v5241
    %v5362 = vpack.c.b16 %v5250, %v5246
    %v5363 = vpack.c.b16 %v5251, %v5247
    %v5364 = vpack.c.b16 %v5252, %v5248
    %v5365 = vpack.c.b16 %v5253, %v5249
    %v5366 = vpack.c.b16 %v5258, %v5254
    %v5367 = vpack.c.b16 %v5259, %v5255
    %v5368 = vpack.c.b16 %v5260, %v5256
    %v5369 = vpack.c.b16 %v5261, %v5257
    %v5370 = vpack.c.b16 %v5266, %v5262
    %v5371 = vpack.c.b16 %v5267, %v5263
    %v5372 = vpack.c.b16 %v5268, %v5264
    %v5373 = vpack.c.b16 %v5269, %v5265
    %v5374 = vpack.c.b16 %v5274, %v5270
    %v5375 = vpack.c.b16 %v5275, %v5271
    %v5376 = vpack.c.b16 %v5276, %v5272
    %v5377 = vpack.c.b16 %v5277, %v5273
    %v5378 = vpack.c.b16 %v5282, %v5278
    %v5379 = vpack.c.b16 %v5283, %v5279
    %v5380 = vpack.c.b16 %v5284, %v5280
    %v5381 = vpack.c.b16 %v5285, %v5281
    %v5382 = vpack.c.b16 %v5290, %v5286
    %v5383 = vpack.c.b16 %v5291, %v5287
    %v5384 = vpack.c.b16 %v5292, %v5288
    %v5385 = vpack.c.b16 %v5293, %v5289
    %v5386 = vpack.c.b16 %v5298, %v5294
    %v5387 = vpack.c.b16 %v5299, %v5295
    %v5388 = vpack.c.b16 %v5300, %v5296
    %v5389 = vpack.c.b16 %v5301, %v5297
    %v5390 = vpack.c.b16 %v5306, %v5302
    %v5391 = vpack.c.b16 %v5307, %v5303
    %v5392 = vpack.c.b16 %v5308, %v5304
    %v5393 = vpack.c.b16 %v5309, %v5305
    %v5394 = vpack.c.b16 %v5314, %v5310
    %v5395 = vpack.c.b16 %v5315, %v5311
    %v5396 = vpack.c.b16 %v5316, %v5312
    %v5397 = vpack.c.b16 %v5317, %v5313
    %v5398 = vpack.c.b16 %v5322, %v5318
    %v5399 = vpack.c.b16 %v5323, %v5319
    %v5400 = vpack.c.b16 %v5324, %v5320
    %v5401 = vpack.c.b16 %v5325, %v5321
    %v5402 = vpack.c.b16 %v5330, %v5326
    %v5403 = vpack.c.b16 %v5331, %v5327
    %v5404 = vpack.c.b16 %v5332, %v5328
    %v5405 = vpack.c.b16 %v5333, %v5329
    %v5406 = vpack.c.b16 %v5338, %v5334
    %v5407 = vpack.c.b16 %v5339, %v5335
    %v5408 = vpack.c.b16 %v5340, %v5336
    %v5409 = vpack.c.b16 %v5341, %v5337
    %v5410 = vpack.c.b16 %v5346, %v5342
    %v5411 = vpack.c.b16 %v5347, %v5343
    %v5412 = vpack.c.b16 %v5348, %v5344
    %v5413 = vpack.c.b16 %v5349, %v5345
    %5478 = vmatprep.subr.bf16.mxu0 %v5379
    %5479 = vmatpush1.bf16.msra.mxu0 %v5378
    %5480 = vmatprep.subr.bf16.mxu0 %v5375
    %5481 = vmatpush1.bf16.msra.mxu0 %v5374
    %5482 = vmatprep.subr.bf16.mxu0 %v5371
    %5483 = vmatpush1.bf16.msra.mxu0 %v5370
    %5484 = vmatprep.subr.bf16.mxu0 %v5367
    %5485 = vmatpush1.bf16.msra.mxu0 %v5366
    %5486 = vmatprep.subr.bf16.mxu0 %v5363
    %5487 = vmatpush1.bf16.msra.mxu0 %v5362
    %5488 = vmatprep.subr.bf16.mxu0 %v5359
    %5489 = vmatpush1.bf16.msra.mxu0 %v5358
    %5490 = vmatprep.subr.bf16.mxu0 %v5355
    %5491 = vmatpush1.bf16.msra.mxu0 %v5354
    %5492 = vmatprep.subr.bf16.mxu0 %v5351
    %5493 = vmatpush1.bf16.msra.mxu0 %v5350
    %5494 = vmatprep.subr.bf16.mxu0 %v5411
    %5495 = vmatpush2.bf16.msra.mxu0 %v5410
    %5496 = vmatprep.subr.bf16.mxu0 %v5407
    %5497 = vmatpush2.bf16.msra.mxu0 %v5406
    %5498 = vmatprep.subr.bf16.mxu0 %v5403
    %5499 = vmatpush2.bf16.msra.mxu0 %v5402
    %5500 = vmatprep.subr.bf16.mxu0 %v5399
    %5501 = vmatpush2.bf16.msra.mxu0 %v5398
    %5502 = vmatprep.subr.bf16.mxu0 %v5395
    %5503 = vmatpush2.bf16.msra.mxu0 %v5394
    %5504 = vmatprep.subr.bf16.mxu0 %v5391
    %5505 = vmatpush2.bf16.msra.mxu0 %v5390
    %5506 = vmatprep.subr.bf16.mxu0 %v5387
    %5507 = vmatpush2.bf16.msra.mxu0 %v5386
    %5508 = vmatprep.subr.bf16.mxu0 %v5383
    %5509 = vmatpush2.bf16.msra.mxu0 %v5382
    %5510 = vmatprep.mubr.bf16.mxu0 %v5155
    %5511 = vmatmul.mubr.bf16.gmra.mxu0 %v5154
    %v5512 = vpop.f32.mrf.mxu0
    %v5513 = vadd.f32 %v5134, %v5512
    %v5514 = vpop.f32.mrf.mxu0
    %v5515 = vadd.f32 %v5138, %v5514
    %v5516 = vpop.f32.mrf.mxu0
    %v5517 = vpop.f32.mrf.mxu0
    %5518 = vdwg.mxu0
    %5519 = vmatprep.subr.bf16.mxu0 %v5381
    %5520 = vmatpush1.bf16.msra.mxu0 %v5380
    %5521 = vmatprep.subr.bf16.mxu0 %v5377
    %5522 = vmatpush1.bf16.msra.mxu0 %v5376
    %5523 = vmatprep.subr.bf16.mxu0 %v5373
    %5524 = vmatpush1.bf16.msra.mxu0 %v5372
    %5525 = vmatprep.subr.bf16.mxu0 %v5369
    %5526 = vmatpush1.bf16.msra.mxu0 %v5368
    %5527 = vmatprep.subr.bf16.mxu0 %v5365
    %5528 = vmatpush1.bf16.msra.mxu0 %v5364
    %5529 = vmatprep.subr.bf16.mxu0 %v5361
    %5530 = vmatpush1.bf16.msra.mxu0 %v5360
    %5531 = vmatprep.subr.bf16.mxu0 %v5357
    %5532 = vmatpush1.bf16.msra.mxu0 %v5356
    %5533 = vmatprep.subr.bf16.mxu0 %v5353
    %5534 = vmatpush1.bf16.msra.mxu0 %v5352
    %5535 = vmatprep.subr.bf16.mxu0 %v5413
    %5536 = vmatpush2.bf16.msra.mxu0 %v5412
    %5537 = vmatprep.subr.bf16.mxu0 %v5409
    %5538 = vmatpush2.bf16.msra.mxu0 %v5408
    %5539 = vmatprep.subr.bf16.mxu0 %v5405
    %5540 = vmatpush2.bf16.msra.mxu0 %v5404
    %5541 = vmatprep.subr.bf16.mxu0 %v5401
    %5542 = vmatpush2.bf16.msra.mxu0 %v5400
    %5543 = vmatprep.subr.bf16.mxu0 %v5397
    %5544 = vmatpush2.bf16.msra.mxu0 %v5396
    %5545 = vmatprep.subr.bf16.mxu0 %v5393
    %5546 = vmatpush2.bf16.msra.mxu0 %v5392
    %5547 = vmatprep.subr.bf16.mxu0 %v5389
    %5548 = vmatpush2.bf16.msra.mxu0 %v5388
    %5549 = vmatprep.subr.bf16.mxu0 %v5385
    %5550 = vmatpush2.bf16.msra.mxu0 %v5384
    %5551 = vmatprep.mubr.bf16.mxu0 %v5155
    %5552 = vmatmul.mubr.bf16.gmra.mxu0 %v5154
    %v5553 = vpop.f32.mrf.mxu0
    %v5554 = vadd.f32 %v5142, %v5553
    %v5555 = vpop.f32.mrf.mxu0
    %v5556 = vadd.f32 %v5146, %v5555
    %v5557 = vpop.f32.mrf.mxu0
    %v5558 = vpop.f32.mrf.mxu0
    %5559 = vdwg.mxu0
    %v5560 = vxor.u32 %v5513, 2147483648
    %v5561 = vmul.f32 %v5560, 1.442695
    %v5562 = vpow.pop %v5561
    %v5563 = vadd.f32 %v5562, 1.0
    %v5564 = vrcp.pop %v5563
    %v5565 = vmul.f32 1.0, %v5564
    %v5566 = vxor.u32 %v5515, 2147483648
    %v5567 = vmul.f32 %v5566, 1.442695
    %v5568 = vpow.pop %v5567
    %v5569 = vadd.f32 %v5568, 1.0
    %v5570 = vrcp.pop %v5569
    %v5571 = vmul.f32 1.0, %v5570
    %v5572 = vtanh.pop %v5554
    %v5573 = vxor.u32 %v5556, 2147483648
    %v5574 = vmul.f32 %v5573, 1.442695
    %v5575 = vpow.pop %v5574
    %v5576 = vadd.f32 %v5575, 1.0
    %v5577 = vrcp.pop %v5576
    %v5578 = vmul.f32 1.0, %v5577
    %v5579 = vmul.f32 %v5571, %v5064
    %v5580 = vmul.f32 %v5565, %v5572
    %v5581 = vadd.f32 %v5579, %v5580
    %v5582 = vtanh.pop %v5581
    %v5583 = vmul.f32 %v5578, %v5582
    %5584 = vst [vmem:[#allocation2] sm:$0xff] %v5581
    %v5585 = vpack.c.bf16 %v5583, %v5583
    %5586 = vst [vmem:[#allocation3 + $0x4] sm:$0xf] %v5585
    %v5587 = vld [vmem:[%s8] sm:$0xf]
    %v5588 = vld [vmem:[%s8 + $0x4] sm:$0xf]
    %v5589 = vld [vmem:[%s8 + $0x8] sm:$0xf]
    %v5590 = vld [vmem:[%s8 + $0xc] sm:$0xf]
    %v5591 = vld [vmem:[%s8 + $0x10] sm:$0xf]
    %v5592 = vld [vmem:[%s8 + $0x14] sm:$0xf]
    %v5593 = vld [vmem:[%s8 + $0x18] sm:$0xf]
    %v5594 = vld [vmem:[%s8 + $0x1c] sm:$0xf]
    %v5595 = vld [vmem:[%s8 + $0x20] sm:$0xf]
    %v5596 = vld [vmem:[%s8 + $0x24] sm:$0xf]
    %v5597 = vld [vmem:[%s8 + $0x28] sm:$0xf]
    %v5598 = vld [vmem:[%s8 + $0x2c] sm:$0xf]
    %v5599 = vld [vmem:[%s8 + $0x30] sm:$0xf]
    %v5600 = vld [vmem:[%s8 + $0x34] sm:$0xf]
    %v5601 = vld [vmem:[%s8 + $0x38] sm:$0xf]
    %v5602 = vld [vmem:[%s8 + $0x3c] sm:$0xf]
    %v5603 = vld [vmem:[%s9] sm:$0x1]
    %v5605 = vlaneseq
    %v5606 = vshrl.u32 %v5605, 7
    %v5607 = vsub.s32 0, %v5606
    %v5608 = vrot.slane %v5603, %v5607
    %v5626 = vunpack.c.l.b16 %v5587
    %v5627 = vunpack.c.l.b16 %v5588
    %v5628 = vunpack.c.l.b16 %v5589
    %v5629 = vunpack.c.l.b16 %v5590
    %v5630 = vunpack.c.l.b16 %v5591
    %v5631 = vunpack.c.l.b16 %v5592
    %v5632 = vunpack.c.l.b16 %v5593
    %v5633 = vunpack.c.l.b16 %v5594
    %v5634 = vunpack.c.l.b16 %v5595
    %v5635 = vunpack.c.l.b16 %v5596
    %v5636 = vunpack.c.l.b16 %v5597
    %v5637 = vunpack.c.l.b16 %v5598
    %v5638 = vunpack.c.l.b16 %v5599
    %v5639 = vunpack.c.l.b16 %v5600
    %v5640 = vunpack.c.l.b16 %v5601
    %v5641 = vunpack.c.l.b16 %v5602
    %v5642 = vpack.c.b16 %v5627, %v5626
    %v5643 = vpack.c.b16 %v5629, %v5628
    %v5644 = vpack.c.b16 %v5631, %v5630
    %v5645 = vpack.c.b16 %v5633, %v5632
    %v5646 = vpack.c.b16 %v5635, %v5634
    %v5647 = vpack.c.b16 %v5637, %v5636
    %v5648 = vpack.c.b16 %v5639, %v5638
    %v5649 = vpack.c.b16 %v5641, %v5640
    %5658 = vmatprep.subr.bf16.mxu0 0
    %5659 = vmatpush1.bf16.msra.mxu0 %v5649
    %5660 = vmatprep.subr.bf16.mxu0 0
    %5661 = vmatpush1.bf16.msra.mxu0 %v5648
    %5662 = vmatprep.subr.bf16.mxu0 0
    %5663 = vmatpush1.bf16.msra.mxu0 %v5647
    %5664 = vmatprep.subr.bf16.mxu0 0
    %5665 = vmatpush1.bf16.msra.mxu0 %v5646
    %5666 = vmatprep.subr.bf16.mxu0 0
    %5667 = vmatpush1.bf16.msra.mxu0 %v5645
    %5668 = vmatprep.subr.bf16.mxu0 0
    %5669 = vmatpush1.bf16.msra.mxu0 %v5644
    %5670 = vmatprep.subr.bf16.mxu0 0
    %5671 = vmatpush1.bf16.msra.mxu0 %v5643
    %5672 = vmatprep.subr.bf16.mxu0 0
    %5673 = vmatpush1.bf16.msra.mxu0 %v5642
    %5674 = vmatprep.subr.bf16.mxu0 0
    %5675 = vmatpush2.bf16.msra.mxu0 0
    %5676 = vmatprep.subr.bf16.mxu0 0
    %5677 = vmatpush2.bf16.msra.mxu0 0
    %5678 = vmatprep.subr.bf16.mxu0 0
    %5679 = vmatpush2.bf16.msra.mxu0 0
    %5680 = vmatprep.subr.bf16.mxu0 0
    %5681 = vmatpush2.bf16.msra.mxu0 0
    %5682 = vmatprep.subr.bf16.mxu0 0
    %5683 = vmatpush2.bf16.msra.mxu0 0
    %5684 = vmatprep.subr.bf16.mxu0 0
    %5685 = vmatpush2.bf16.msra.mxu0 0
    %5686 = vmatprep.subr.bf16.mxu0 0
    %5687 = vmatpush2.bf16.msra.mxu0 0
    %5688 = vmatprep.subr.bf16.mxu0 0
    %5689 = vmatpush2.bf16.msra.mxu0 0
    %5690 = vmatprep.mubr.bf16.mxu0 0
    %5691 = vmatmul.mubr.bf16.gmra.mxu0 %v5585
    %v5692 = vpop.f32.mrf.mxu0
    %v5693 = vadd.f32 %v5608, %v5692
    %v5694 = vpop.f32.mrf.mxu0
    %v5695 = vpop.f32.mrf.mxu0
    %v5696 = vpop.f32.mrf.mxu0
    %5697 = vdwg.mxu0
    %s5698 = scalar_lea.vmem [#allocation9], 16
    %5699 = vst [vmem:[%s5698] sm:$0xff] %v5693
    %s5700 = sld [smem:[#allocation4 + $0x2]]
    %p5701 = scmp.ne.s32.totalorder %s5700, 0
    // Predicated region
    $region58: #{seq2seq_forward.1} parent=1 // pred_check
      %p5702 = pneg %p5701
    $region59: #{seq2seq_forward.1} parent=1 // pred_check_branch
      %5704 = sbr.rel (%p5702) target = $region61
    $region60: #{seq2seq_forward.1} parent=1 // pred_region
      %s5705 = scalar_lea.vmem %s2, 8
      %v5706 = vld [vmem:[%s5705] sm:$0xf]
      %5707 = vst [vmem:[#allocation3] sm:$0xf] %v5706
    $region61: #{seq2seq_forward.1} parent=1 // pred_fallthru
      _
    %p5708 = scmp.eq.s32.totalorder %s5700, 0
    // Predicated region
    $region62: #{seq2seq_forward.1} parent=1 // pred_check
      %p5709 = pneg %p5708
    $region63: #{seq2seq_forward.1} parent=1 // pred_check_branch
      %5711 = sbr.rel (%p5709) target = $region65
    $region64: #{seq2seq_forward.1} parent=1 // pred_region
      %5712 = vmax.xlane.f32.xlu0 %v5693
      %v5713 = vpop.xlane.xlu0 %5712
      %v5714 = vlaneseq
      %v5715 = vand.u32 %v5714, 127
      %vm5716 = vcmp.eq.f32.partialorder %v5693, %v5713
      %v5717 = vsel %vm5716, %v5715, 128
      %v5718 = vand.u32 %v5717, 65535
      %v5719 = vshra.s32 %v5717, 16
      %v5720 = vcvt.s32.f32 %v5718
      %v5721 = vcvt.s32.f32 %v5719
      %5722 = vmin.xlane.f32.xlu0 %v5721
      %v5723 = vpop.xlane.xlu0 %5722
      %vm5724 = vcmp.eq.f32.partialorder %v5721, %v5723
      %v5725 = vsel %vm5724, %v5720, inf
      %5726 = vmin.xlane.f32.xlu0 %v5725
      %v5727 = vpop.xlane.xlu0 %5726
      %v5728 = vcvt.f32.s32 %v5727
      %v5729 = vcvt.f32.s32 %v5723
      %v5730 = vshll.u32 %v5729, 16
      %v5731 = vadd.s32 %v5730, %v5728
      %vm5732 = vcmp.eq.s32.totalorder %v5715, %v5731
      %v5733 = vsel %vm5732, 1, 0
      %v5734 = vcvt.s32.f32 %v5733
      %v5735 = vpack.c.bf16 %v5734, %v5734
      %v5736 = vld [vmem:[%s3] sm:$0xf]
      %v5737 = vld [vmem:[%s3 + $0x4] sm:$0xf]
      %v5738 = vld [vmem:[%s3 + $0x8] sm:$0xf]
      %v5739 = vld [vmem:[%s3 + $0xc] sm:$0xf]
      %v5740 = vld [vmem:[%s3 + $0x10] sm:$0xf]
      %v5741 = vld [vmem:[%s3 + $0x14] sm:$0xf]
      %v5742 = vld [vmem:[%s3 + $0x18] sm:$0xf]
      %v5743 = vld [vmem:[%s3 + $0x1c] sm:$0xf]
      %v5744 = vld [vmem:[%s3 + $0x20] sm:$0xf]
      %v5745 = vld [vmem:[%s3 + $0x24] sm:$0xf]
      %v5746 = vld [vmem:[%s3 + $0x28] sm:$0xf]
      %v5747 = vld [vmem:[%s3 + $0x2c] sm:$0xf]
      %v5748 = vld [vmem:[%s3 + $0x30] sm:$0xf]
      %v5749 = vld [vmem:[%s3 + $0x34] sm:$0xf]
      %v5750 = vld [vmem:[%s3 + $0x38] sm:$0xf]
      %v5751 = vld [vmem:[%s3 + $0x3c] sm:$0xf]
      %v5768 = vunpack.c.l.b16 %v5736
      %v5769 = vunpack.c.l.b16 %v5737
      %v5770 = vunpack.c.l.b16 %v5738
      %v5771 = vunpack.c.l.b16 %v5739
      %v5772 = vunpack.c.l.b16 %v5740
      %v5773 = vunpack.c.l.b16 %v5741
      %v5774 = vunpack.c.l.b16 %v5742
      %v5775 = vunpack.c.l.b16 %v5743
      %v5776 = vunpack.c.l.b16 %v5744
      %v5777 = vunpack.c.l.b16 %v5745
      %v5778 = vunpack.c.l.b16 %v5746
      %v5779 = vunpack.c.l.b16 %v5747
      %v5780 = vunpack.c.l.b16 %v5748
      %v5781 = vunpack.c.l.b16 %v5749
      %v5782 = vunpack.c.l.b16 %v5750
      %v5783 = vunpack.c.l.b16 %v5751
      %v5784 = vpack.c.b16 %v5769, %v5768
      %v5785 = vpack.c.b16 %v5771, %v5770
      %v5786 = vpack.c.b16 %v5773, %v5772
      %v5787 = vpack.c.b16 %v5775, %v5774
      %v5788 = vpack.c.b16 %v5777, %v5776
      %v5789 = vpack.c.b16 %v5779, %v5778
      %v5790 = vpack.c.b16 %v5781, %v5780
      %v5791 = vpack.c.b16 %v5783, %v5782
      %5800 = vmatprep.subr.bf16.mxu0 0
      %5801 = vmatpush1.bf16.msra.mxu0 %v5791
      %5802 = vmatprep.subr.bf16.mxu0 0
      %5803 = vmatpush1.bf16.msra.mxu0 %v5790
      %5804 = vmatprep.subr.bf16.mxu0 0
      %5805 = vmatpush1.bf16.msra.mxu0 %v5789
      %5806 = vmatprep.subr.bf16.mxu0 0
      %5807 = vmatpush1.bf16.msra.mxu0 %v5788
      %5808 = vmatprep.subr.bf16.mxu0 0
      %5809 = vmatpush1.bf16.msra.mxu0 %v5787
      %5810 = vmatprep.subr.bf16.mxu0 0
      %5811 = vmatpush1.bf16.msra.mxu0 %v5786
      %5812 = vmatprep.subr.bf16.mxu0 0
      %5813 = vmatpush1.bf16.msra.mxu0 %v5785
      %5814 = vmatprep.subr.bf16.mxu0 0
      %5815 = vmatpush1.bf16.msra.mxu0 %v5784
      %5816 = vmatprep.subr.bf16.mxu0 0
      %5817 = vmatpush2.bf16.msra.mxu0 0
      %5818 = vmatprep.subr.bf16.mxu0 0
      %5819 = vmatpush2.bf16.msra.mxu0 0
      %5820 = vmatprep.subr.bf16.mxu0 0
      %5821 = vmatpush2.bf16.msra.mxu0 0
      %5822 = vmatprep.subr.bf16.mxu0 0
      %5823 = vmatpush2.bf16.msra.mxu0 0
      %5824 = vmatprep.subr.bf16.mxu0 0
      %5825 = vmatpush2.bf16.msra.mxu0 0
      %5826 = vmatprep.subr.bf16.mxu0 0
      %5827 = vmatpush2.bf16.msra.mxu0 0
      %5828 = vmatprep.subr.bf16.mxu0 0
      %5829 = vmatpush2.bf16.msra.mxu0 0
      %5830 = vmatprep.subr.bf16.mxu0 0
      %5831 = vmatpush2.bf16.msra.mxu0 0
      %5832 = vmatprep.mubr.bf16.mxu0 0
      %5833 = vmatmul.mubr.bf16.gmra.mxu0 %v5735
      %v5834 = vpop.f32.mrf.mxu0
      %v5835 = vadd.f32 0.0, %v5834
      %v5836 = vpop.f32.mrf.mxu0
      %v5837 = vpop.f32.mrf.mxu0
      %v5838 = vpop.f32.mrf.mxu0
      %5839 = vdwg.mxu0
      %v5840 = vpack.c.bf16 %v5835, %v5835
      %5841 = vst [vmem:[#allocation3] sm:$0xf] %v5840
    $region65: #{seq2seq_forward.1} parent=1 // pred_fallthru
      _
    %v5842 = vld [vmem:[#allocation3] sm:$0xff]
    %v5843 = vld [vmem:[#allocation2] sm:$0xff]
    %v5844 = vld [vmem:[#allocation8] sm:$0xff]
    %v5845 = vld [vmem:[#allocation8 + $0x8] sm:$0xff]
    %v5846 = vld [vmem:[#allocation8 + $0x10] sm:$0xff]
    %v5847 = vld [vmem:[#allocation8 + $0x18] sm:$0xff]
    %v5848 = vld [vmem:[#allocation8 + $0x20] sm:$0xff]
    %v5849 = vld [vmem:[#allocation8 + $0x28] sm:$0xff]
    %v5850 = vld [vmem:[#allocation8 + $0x30] sm:$0xff]
    %v5851 = vld [vmem:[#allocation8 + $0x38] sm:$0xff]
    %v5852 = vld [vmem:[#allocation8 + $0x40] sm:$0xff]
    %v5853 = vld [vmem:[#allocation8 + $0x48] sm:$0xff]
    %v5854 = vld [vmem:[#allocation8 + $0x50] sm:$0xff]
    %v5855 = vld [vmem:[#allocation8 + $0x58] sm:$0xff]
    %v5856 = vld [vmem:[#allocation8 + $0x60] sm:$0xff]
    %v5857 = vld [vmem:[#allocation8 + $0x68] sm:$0xff]
    %v5858 = vld [vmem:[#allocation8 + $0x70] sm:$0xff]
    %v5859 = vld [vmem:[#allocation8 + $0x78] sm:$0xff]
    %v5860 = vld [vmem:[#allocation8 + $0x80] sm:$0xff]
    %v5861 = vld [vmem:[#allocation8 + $0x88] sm:$0xff]
    %v5862 = vld [vmem:[#allocation8 + $0x90] sm:$0xff]
    %v5863 = vld [vmem:[#allocation8 + $0x98] sm:$0xff]
    %v5864 = vld [vmem:[#allocation8 + $0xa0] sm:$0xff]
    %v5865 = vld [vmem:[#allocation8 + $0xa8] sm:$0xff]
    %v5866 = vld [vmem:[#allocation8 + $0xb0] sm:$0xff]
    %v5867 = vld [vmem:[#allocation8 + $0xb8] sm:$0xff]
    %v5868 = vld [vmem:[#allocation8 + $0xc0] sm:$0xff]
    %v5869 = vld [vmem:[#allocation8 + $0xc8] sm:$0xff]
    %v5870 = vld [vmem:[#allocation8 + $0xd0] sm:$0xff]
    %v5871 = vld [vmem:[#allocation8 + $0xd8] sm:$0xff]
    %v5872 = vld [vmem:[#allocation8 + $0xe0] sm:$0xff]
    %v5873 = vld [vmem:[#allocation8 + $0xe8] sm:$0xff]
    %v5874 = vld [vmem:[#allocation8 + $0xf0] sm:$0xff]
    %v5875 = vld [vmem:[#allocation8 + $0xf8] sm:$0xff]
    %v5876 = vld [vmem:[#allocation8 + $0x100] sm:$0xff]
    %v5877 = vld [vmem:[#allocation8 + $0x108] sm:$0xff]
    %v5878 = vld [vmem:[#allocation8 + $0x110] sm:$0xff]
    %v5879 = vld [vmem:[#allocation8 + $0x118] sm:$0xff]
    %v5880 = vld [vmem:[#allocation8 + $0x120] sm:$0xff]
    %v5881 = vld [vmem:[#allocation8 + $0x128] sm:$0xff]
    %v5882 = vld [vmem:[#allocation8 + $0x130] sm:$0xff]
    %v5883 = vld [vmem:[#allocation8 + $0x138] sm:$0xff]
    %v5884 = vld [vmem:[#allocation8 + $0x140] sm:$0xff]
    %v5885 = vld [vmem:[#allocation8 + $0x148] sm:$0xff]
    %v5886 = vld [vmem:[#allocation8 + $0x150] sm:$0xff]
    %v5887 = vld [vmem:[#allocation8 + $0x158] sm:$0xff]
    %v5888 = vld [vmem:[#allocation8 + $0x160] sm:$0xff]
    %v5889 = vld [vmem:[#allocation8 + $0x168] sm:$0xff]
    %v5890 = vld [vmem:[#allocation8 + $0x170] sm:$0xff]
    %v5891 = vld [vmem:[#allocation8 + $0x178] sm:$0xff]
    %v5892 = vld [vmem:[#allocation8 + $0x180] sm:$0xff]
    %v5893 = vld [vmem:[#allocation8 + $0x188] sm:$0xff]
    %v5894 = vld [vmem:[#allocation8 + $0x190] sm:$0xff]
    %v5895 = vld [vmem:[#allocation8 + $0x198] sm:$0xff]
    %v5896 = vld [vmem:[#allocation8 + $0x1a0] sm:$0xff]
    %v5897 = vld [vmem:[#allocation8 + $0x1a8] sm:$0xff]
    %v5898 = vld [vmem:[#allocation8 + $0x1b0] sm:$0xff]
    %v5899 = vld [vmem:[#allocation8 + $0x1b8] sm:$0xff]
    %v5900 = vld [vmem:[#allocation8 + $0x1c0] sm:$0xff]
    %v5901 = vld [vmem:[#allocation8 + $0x1c8] sm:$0xff]
    %v5902 = vld [vmem:[#allocation8 + $0x1d0] sm:$0xff]
    %v5903 = vld [vmem:[#allocation8 + $0x1d8] sm:$0xff]
    %v5904 = vld [vmem:[#allocation8 + $0x1e0] sm:$0xff]
    %v5905 = vld [vmem:[#allocation8 + $0x1e8] sm:$0xff]
    %v5906 = vld [vmem:[#allocation8 + $0x1f0] sm:$0xff]
    %v5907 = vld [vmem:[#allocation8 + $0x1f8] sm:$0xff]
    %v5908 = vld [vmem:[%s7] sm:$0xf]
    %v5910 = vlaneseq
    %v5911 = vshrl.u32 %v5910, 7
    %v5912 = vsub.s32 0, %v5911
    %v5913 = vrot.slane %v5908, %v5912
    %v5914 = vlaneseq
    %v5915 = vshrl.u32 %v5914, 7
    %v5916 = vsub.s32 1, %v5915
    %v5917 = vrot.slane %v5908, %v5916
    %v5918 = vlaneseq
    %v5919 = vshrl.u32 %v5918, 7
    %v5920 = vsub.s32 2, %v5919
    %v5921 = vrot.slane %v5908, %v5920
    %v5922 = vlaneseq
    %v5923 = vshrl.u32 %v5922, 7
    %v5924 = vsub.s32 3, %v5923
    %v5925 = vrot.slane %v5908, %v5924
    %v5931 = vunpack.c.l.b16 %v5842
    %v5932 = vunpack.c.h.b16 %v5842
    %v5933 = vpack.c.b16 %v5931, %v5931
    %v5934 = vpack.c.b16 %v5932, %v5932
    %v6001 = vunpack.c.l.b16 %v5844
    %v6002 = vunpack.c.h.b16 %v5844
    %v6003 = vunpack.c.l.b16 %v5845
    %v6004 = vunpack.c.h.b16 %v5845
    %v6005 = vunpack.c.l.b16 %v5846
    %v6006 = vunpack.c.h.b16 %v5846
    %v6007 = vunpack.c.l.b16 %v5847
    %v6008 = vunpack.c.h.b16 %v5847
    %v6009 = vunpack.c.l.b16 %v5848
    %v6010 = vunpack.c.h.b16 %v5848
    %v6011 = vunpack.c.l.b16 %v5849
    %v6012 = vunpack.c.h.b16 %v5849
    %v6013 = vunpack.c.l.b16 %v5850
    %v6014 = vunpack.c.h.b16 %v5850
    %v6015 = vunpack.c.l.b16 %v5851
    %v6016 = vunpack.c.h.b16 %v5851
    %v6017 = vunpack.c.l.b16 %v5852
    %v6018 = vunpack.c.h.b16 %v5852
    %v6019 = vunpack.c.l.b16 %v5853
    %v6020 = vunpack.c.h.b16 %v5853
    %v6021 = vunpack.c.l.b16 %v5854
    %v6022 = vunpack.c.h.b16 %v5854
    %v6023 = vunpack.c.l.b16 %v5855
    %v6024 = vunpack.c.h.b16 %v5855
    %v6025 = vunpack.c.l.b16 %v5856
    %v6026 = vunpack.c.h.b16 %v5856
    %v6027 = vunpack.c.l.b16 %v5857
    %v6028 = vunpack.c.h.b16 %v5857
    %v6029 = vunpack.c.l.b16 %v5858
    %v6030 = vunpack.c.h.b16 %v5858
    %v6031 = vunpack.c.l.b16 %v5859
    %v6032 = vunpack.c.h.b16 %v5859
    %v6033 = vunpack.c.l.b16 %v5860
    %v6034 = vunpack.c.h.b16 %v5860
    %v6035 = vunpack.c.l.b16 %v5861
    %v6036 = vunpack.c.h.b16 %v5861
    %v6037 = vunpack.c.l.b16 %v5862
    %v6038 = vunpack.c.h.b16 %v5862
    %v6039 = vunpack.c.l.b16 %v5863
    %v6040 = vunpack.c.h.b16 %v5863
    %v6041 = vunpack.c.l.b16 %v5864
    %v6042 = vunpack.c.h.b16 %v5864
    %v6043 = vunpack.c.l.b16 %v5865
    %v6044 = vunpack.c.h.b16 %v5865
    %v6045 = vunpack.c.l.b16 %v5866
    %v6046 = vunpack.c.h.b16 %v5866
    %v6047 = vunpack.c.l.b16 %v5867
    %v6048 = vunpack.c.h.b16 %v5867
    %v6049 = vunpack.c.l.b16 %v5868
    %v6050 = vunpack.c.h.b16 %v5868
    %v6051 = vunpack.c.l.b16 %v5869
    %v6052 = vunpack.c.h.b16 %v5869
    %v6053 = vunpack.c.l.b16 %v5870
    %v6054 = vunpack.c.h.b16 %v5870
    %v6055 = vunpack.c.l.b16 %v5871
    %v6056 = vunpack.c.h.b16 %v5871
    %v6057 = vunpack.c.l.b16 %v5872
    %v6058 = vunpack.c.h.b16 %v5872
    %v6059 = vunpack.c.l.b16 %v5873
    %v6060 = vunpack.c.h.b16 %v5873
    %v6061 = vunpack.c.l.b16 %v5874
    %v6062 = vunpack.c.h.b16 %v5874
    %v6063 = vunpack.c.l.b16 %v5875
    %v6064 = vunpack.c.h.b16 %v5875
    %v6065 = vunpack.c.l.b16 %v5876
    %v6066 = vunpack.c.h.b16 %v5876
    %v6067 = vunpack.c.l.b16 %v5877
    %v6068 = vunpack.c.h.b16 %v5877
    %v6069 = vunpack.c.l.b16 %v5878
    %v6070 = vunpack.c.h.b16 %v5878
    %v6071 = vunpack.c.l.b16 %v5879
    %v6072 = vunpack.c.h.b16 %v5879
    %v6073 = vunpack.c.l.b16 %v5880
    %v6074 = vunpack.c.h.b16 %v5880
    %v6075 = vunpack.c.l.b16 %v5881
    %v6076 = vunpack.c.h.b16 %v5881
    %v6077 = vunpack.c.l.b16 %v5882
    %v6078 = vunpack.c.h.b16 %v5882
    %v6079 = vunpack.c.l.b16 %v5883
    %v6080 = vunpack.c.h.b16 %v5883
    %v6081 = vunpack.c.l.b16 %v5884
    %v6082 = vunpack.c.h.b16 %v5884
    %v6083 = vunpack.c.l.b16 %v5885
    %v6084 = vunpack.c.h.b16 %v5885
    %v6085 = vunpack.c.l.b16 %v5886
    %v6086 = vunpack.c.h.b16 %v5886
    %v6087 = vunpack.c.l.b16 %v5887
    %v6088 = vunpack.c.h.b16 %v5887
    %v6089 = vunpack.c.l.b16 %v5888
    %v6090 = vunpack.c.h.b16 %v5888
    %v6091 = vunpack.c.l.b16 %v5889
    %v6092 = vunpack.c.h.b16 %v5889
    %v6093 = vunpack.c.l.b16 %v5890
    %v6094 = vunpack.c.h.b16 %v5890
    %v6095 = vunpack.c.l.b16 %v5891
    %v6096 = vunpack.c.h.b16 %v5891
    %v6097 = vunpack.c.l.b16 %v5892
    %v6098 = vunpack.c.h.b16 %v5892
    %v6099 = vunpack.c.l.b16 %v5893
    %v6100 = vunpack.c.h.b16 %v5893
    %v6101 = vunpack.c.l.b16 %v5894
    %v6102 = vunpack.c.h.b16 %v5894
    %v6103 = vunpack.c.l.b16 %v5895
    %v6104 = vunpack.c.h.b16 %v5895
    %v6105 = vunpack.c.l.b16 %v5896
    %v6106 = vunpack.c.h.b16 %v5896
    %v6107 = vunpack.c.l.b16 %v5897
    %v6108 = vunpack.c.h.b16 %v5897
    %v6109 = vunpack.c.l.b16 %v5898
    %v6110 = vunpack.c.h.b16 %v5898
    %v6111 = vunpack.c.l.b16 %v5899
    %v6112 = vunpack.c.h.b16 %v5899
    %v6113 = vunpack.c.l.b16 %v5900
    %v6114 = vunpack.c.h.b16 %v5900
    %v6115 = vunpack.c.l.b16 %v5901
    %v6116 = vunpack.c.h.b16 %v5901
    %v6117 = vunpack.c.l.b16 %v5902
    %v6118 = vunpack.c.h.b16 %v5902
    %v6119 = vunpack.c.l.b16 %v5903
    %v6120 = vunpack.c.h.b16 %v5903
    %v6121 = vunpack.c.l.b16 %v5904
    %v6122 = vunpack.c.h.b16 %v5904
    %v6123 = vunpack.c.l.b16 %v5905
    %v6124 = vunpack.c.h.b16 %v5905
    %v6125 = vunpack.c.l.b16 %v5906
    %v6126 = vunpack.c.h.b16 %v5906
    %v6127 = vunpack.c.l.b16 %v5907
    %v6128 = vunpack.c.h.b16 %v5907
    %v6129 = vpack.c.b16 %v6005, %v6001
    %v6130 = vpack.c.b16 %v6006, %v6002
    %v6131 = vpack.c.b16 %v6007, %v6003
    %v6132 = vpack.c.b16 %v6008, %v6004
    %v6133 = vpack.c.b16 %v6013, %v6009
    %v6134 = vpack.c.b16 %v6014, %v6010
    %v6135 = vpack.c.b16 %v6015, %v6011
    %v6136 = vpack.c.b16 %v6016, %v6012
    %v6137 = vpack.c.b16 %v6021, %v6017
    %v6138 = vpack.c.b16 %v6022, %v6018
    %v6139 = vpack.c.b16 %v6023, %v6019
    %v6140 = vpack.c.b16 %v6024, %v6020
    %v6141 = vpack.c.b16 %v6029, %v6025
    %v6142 = vpack.c.b16 %v6030, %v6026
    %v6143 = vpack.c.b16 %v6031, %v6027
    %v6144 = vpack.c.b16 %v6032, %v6028
    %v6145 = vpack.c.b16 %v6037, %v6033
    %v6146 = vpack.c.b16 %v6038, %v6034
    %v6147 = vpack.c.b16 %v6039, %v6035
    %v6148 = vpack.c.b16 %v6040, %v6036
    %v6149 = vpack.c.b16 %v6045, %v6041
    %v6150 = vpack.c.b16 %v6046, %v6042
    %v6151 = vpack.c.b16 %v6047, %v6043
    %v6152 = vpack.c.b16 %v6048, %v6044
    %v6153 = vpack.c.b16 %v6053, %v6049
    %v6154 = vpack.c.b16 %v6054, %v6050
    %v6155 = vpack.c.b16 %v6055, %v6051
    %v6156 = vpack.c.b16 %v6056, %v6052
    %v6157 = vpack.c.b16 %v6061, %v6057
    %v6158 = vpack.c.b16 %v6062, %v6058
    %v6159 = vpack.c.b16 %v6063, %v6059
    %v6160 = vpack.c.b16 %v6064, %v6060
    %v6161 = vpack.c.b16 %v6069, %v6065
    %v6162 = vpack.c.b16 %v6070, %v6066
    %v6163 = vpack.c.b16 %v6071, %v6067
    %v6164 = vpack.c.b16 %v6072, %v6068
    %v6165 = vpack.c.b16 %v6077, %v6073
    %v6166 = vpack.c.b16 %v6078, %v6074
    %v6167 = vpack.c.b16 %v6079, %v6075
    %v6168 = vpack.c.b16 %v6080, %v6076
    %v6169 = vpack.c.b16 %v6085, %v6081
    %v6170 = vpack.c.b16 %v6086, %v6082
    %v6171 = vpack.c.b16 %v6087, %v6083
    %v6172 = vpack.c.b16 %v6088, %v6084
    %v6173 = vpack.c.b16 %v6093, %v6089
    %v6174 = vpack.c.b16 %v6094, %v6090
    %v6175 = vpack.c.b16 %v6095, %v6091
    %v6176 = vpack.c.b16 %v6096, %v6092
    %v6177 = vpack.c.b16 %v6101, %v6097
    %v6178 = vpack.c.b16 %v6102, %v6098
    %v6179 = vpack.c.b16 %v6103, %v6099
    %v6180 = vpack.c.b16 %v6104, %v6100
    %v6181 = vpack.c.b16 %v6109, %v6105
    %v6182 = vpack.c.b16 %v6110, %v6106
    %v6183 = vpack.c.b16 %v6111, %v6107
    %v6184 = vpack.c.b16 %v6112, %v6108
    %v6185 = vpack.c.b16 %v6117, %v6113
    %v6186 = vpack.c.b16 %v6118, %v6114
    %v6187 = vpack.c.b16 %v6119, %v6115
    %v6188 = vpack.c.b16 %v6120, %v6116
    %v6189 = vpack.c.b16 %v6125, %v6121
    %v6190 = vpack.c.b16 %v6126, %v6122
    %v6191 = vpack.c.b16 %v6127, %v6123
    %v6192 = vpack.c.b16 %v6128, %v6124
    %6257 = vmatprep.subr.bf16.mxu0 %v6158
    %6258 = vmatpush1.bf16.msra.mxu0 %v6157
    %6259 = vmatprep.subr.bf16.mxu0 %v6154
    %6260 = vmatpush1.bf16.msra.mxu0 %v6153
    %6261 = vmatprep.subr.bf16.mxu0 %v6150
    %6262 = vmatpush1.bf16.msra.mxu0 %v6149
    %6263 = vmatprep.subr.bf16.mxu0 %v6146
    %6264 = vmatpush1.bf16.msra.mxu0 %v6145
    %6265 = vmatprep.subr.bf16.mxu0 %v6142
    %6266 = vmatpush1.bf16.msra.mxu0 %v6141
    %6267 = vmatprep.subr.bf16.mxu0 %v6138
    %6268 = vmatpush1.bf16.msra.mxu0 %v6137
    %6269 = vmatprep.subr.bf16.mxu0 %v6134
    %6270 = vmatpush1.bf16.msra.mxu0 %v6133
    %6271 = vmatprep.subr.bf16.mxu0 %v6130
    %6272 = vmatpush1.bf16.msra.mxu0 %v6129
    %6273 = vmatprep.subr.bf16.mxu0 %v6190
    %6274 = vmatpush2.bf16.msra.mxu0 %v6189
    %6275 = vmatprep.subr.bf16.mxu0 %v6186
    %6276 = vmatpush2.bf16.msra.mxu0 %v6185
    %6277 = vmatprep.subr.bf16.mxu0 %v6182
    %6278 = vmatpush2.bf16.msra.mxu0 %v6181
    %6279 = vmatprep.subr.bf16.mxu0 %v6178
    %6280 = vmatpush2.bf16.msra.mxu0 %v6177
    %6281 = vmatprep.subr.bf16.mxu0 %v6174
    %6282 = vmatpush2.bf16.msra.mxu0 %v6173
    %6283 = vmatprep.subr.bf16.mxu0 %v6170
    %6284 = vmatpush2.bf16.msra.mxu0 %v6169
    %6285 = vmatprep.subr.bf16.mxu0 %v6166
    %6286 = vmatpush2.bf16.msra.mxu0 %v6165
    %6287 = vmatprep.subr.bf16.mxu0 %v6162
    %6288 = vmatpush2.bf16.msra.mxu0 %v6161
    %6289 = vmatprep.mubr.bf16.mxu0 %v5934
    %6290 = vmatmul.mubr.bf16.gmra.mxu0 %v5933
    %v6291 = vpop.f32.mrf.mxu0
    %v6292 = vadd.f32 %v5913, %v6291
    %v6293 = vpop.f32.mrf.mxu0
    %v6294 = vadd.f32 %v5917, %v6293
    %v6295 = vpop.f32.mrf.mxu0
    %v6296 = vpop.f32.mrf.mxu0
    %6297 = vdwg.mxu0
    %6298 = vmatprep.subr.bf16.mxu0 %v6160
    %6299 = vmatpush1.bf16.msra.mxu0 %v6159
    %6300 = vmatprep.subr.bf16.mxu0 %v6156
    %6301 = vmatpush1.bf16.msra.mxu0 %v6155
    %6302 = vmatprep.subr.bf16.mxu0 %v6152
    %6303 = vmatpush1.bf16.msra.mxu0 %v6151
    %6304 = vmatprep.subr.bf16.mxu0 %v6148
    %6305 = vmatpush1.bf16.msra.mxu0 %v6147
    %6306 = vmatprep.subr.bf16.mxu0 %v6144
    %6307 = vmatpush1.bf16.msra.mxu0 %v6143
    %6308 = vmatprep.subr.bf16.mxu0 %v6140
    %6309 = vmatpush1.bf16.msra.mxu0 %v6139
    %6310 = vmatprep.subr.bf16.mxu0 %v6136
    %6311 = vmatpush1.bf16.msra.mxu0 %v6135
    %6312 = vmatprep.subr.bf16.mxu0 %v6132
    %6313 = vmatpush1.bf16.msra.mxu0 %v6131
    %6314 = vmatprep.subr.bf16.mxu0 %v6192
    %6315 = vmatpush2.bf16.msra.mxu0 %v6191
    %6316 = vmatprep.subr.bf16.mxu0 %v6188
    %6317 = vmatpush2.bf16.msra.mxu0 %v6187
    %6318 = vmatprep.subr.bf16.mxu0 %v6184
    %6319 = vmatpush2.bf16.msra.mxu0 %v6183
    %6320 = vmatprep.subr.bf16.mxu0 %v6180
    %6321 = vmatpush2.bf16.msra.mxu0 %v6179
    %6322 = vmatprep.subr.bf16.mxu0 %v6176
    %6323 = vmatpush2.bf16.msra.mxu0 %v6175
    %6324 = vmatprep.subr.bf16.mxu0 %v6172
    %6325 = vmatpush2.bf16.msra.mxu0 %v6171
    %6326 = vmatprep.subr.bf16.mxu0 %v6168
    %6327 = vmatpush2.bf16.msra.mxu0 %v6167
    %6328 = vmatprep.subr.bf16.mxu0 %v6164
    %6329 = vmatpush2.bf16.msra.mxu0 %v6163
    %6330 = vmatprep.mubr.bf16.mxu0 %v5934
    %6331 = vmatmul.mubr.bf16.gmra.mxu0 %v5933
    %v6332 = vpop.f32.mrf.mxu0
    %v6333 = vadd.f32 %v5921, %v6332
    %v6334 = vpop.f32.mrf.mxu0
    %v6335 = vadd.f32 %v5925, %v6334
    %v6336 = vpop.f32.mrf.mxu0
    %v6337 = vpop.f32.mrf.mxu0
    %6338 = vdwg.mxu0
    %v6339 = vxor.u32 %v6292, 2147483648
    %v6340 = vmul.f32 %v6339, 1.442695
    %v6341 = vpow.pop %v6340
    %v6342 = vadd.f32 %v6341, 1.0
    %v6343 = vrcp.pop %v6342
    %v6344 = vmul.f32 1.0, %v6343
    %v6345 = vxor.u32 %v6294, 2147483648
    %v6346 = vmul.f32 %v6345, 1.442695
    %v6347 = vpow.pop %v6346
    %v6348 = vadd.f32 %v6347, 1.0
    %v6349 = vrcp.pop %v6348
    %v6350 = vmul.f32 1.0, %v6349
    %v6351 = vtanh.pop %v6333
    %v6352 = vxor.u32 %v6335, 2147483648
    %v6353 = vmul.f32 %v6352, 1.442695
    %v6354 = vpow.pop %v6353
    %v6355 = vadd.f32 %v6354, 1.0
    %v6356 = vrcp.pop %v6355
    %v6357 = vmul.f32 1.0, %v6356
    %v6358 = vmul.f32 %v6350, %v5843
    %v6359 = vmul.f32 %v6344, %v6351
    %v6360 = vadd.f32 %v6358, %v6359
    %v6361 = vtanh.pop %v6360
    %v6362 = vmul.f32 %v6357, %v6361
    %6363 = vst [vmem:[#allocation2] sm:$0xff] %v6360
    %v6364 = vpack.c.bf16 %v6362, %v6362
    %6365 = vst [vmem:[#allocation3 + $0x4] sm:$0xf] %v6364
    %v6366 = vld [vmem:[%s8] sm:$0xf]
    %v6367 = vld [vmem:[%s8 + $0x4] sm:$0xf]
    %v6368 = vld [vmem:[%s8 + $0x8] sm:$0xf]
    %v6369 = vld [vmem:[%s8 + $0xc] sm:$0xf]
    %v6370 = vld [vmem:[%s8 + $0x10] sm:$0xf]
    %v6371 = vld [vmem:[%s8 + $0x14] sm:$0xf]
    %v6372 = vld [vmem:[%s8 + $0x18] sm:$0xf]
    %v6373 = vld [vmem:[%s8 + $0x1c] sm:$0xf]
    %v6374 = vld [vmem:[%s8 + $0x20] sm:$0xf]
    %v6375 = vld [vmem:[%s8 + $0x24] sm:$0xf]
    %v6376 = vld [vmem:[%s8 + $0x28] sm:$0xf]
    %v6377 = vld [vmem:[%s8 + $0x2c] sm:$0xf]
    %v6378 = vld [vmem:[%s8 + $0x30] sm:$0xf]
    %v6379 = vld [vmem:[%s8 + $0x34] sm:$0xf]
    %v6380 = vld [vmem:[%s8 + $0x38] sm:$0xf]
    %v6381 = vld [vmem:[%s8 + $0x3c] sm:$0xf]
    %v6382 = vld [vmem:[%s9] sm:$0x1]
    %v6384 = vlaneseq
    %v6385 = vshrl.u32 %v6384, 7
    %v6386 = vsub.s32 0, %v6385
    %v6387 = vrot.slane %v6382, %v6386
    %v6405 = vunpack.c.l.b16 %v6366
    %v6406 = vunpack.c.l.b16 %v6367
    %v6407 = vunpack.c.l.b16 %v6368
    %v6408 = vunpack.c.l.b16 %v6369
    %v6409 = vunpack.c.l.b16 %v6370
    %v6410 = vunpack.c.l.b16 %v6371
    %v6411 = vunpack.c.l.b16 %v6372
    %v6412 = vunpack.c.l.b16 %v6373
    %v6413 = vunpack.c.l.b16 %v6374
    %v6414 = vunpack.c.l.b16 %v6375
    %v6415 = vunpack.c.l.b16 %v6376
    %v6416 = vunpack.c.l.b16 %v6377
    %v6417 = vunpack.c.l.b16 %v6378
    %v6418 = vunpack.c.l.b16 %v6379
    %v6419 = vunpack.c.l.b16 %v6380
    %v6420 = vunpack.c.l.b16 %v6381
    %v6421 = vpack.c.b16 %v6406, %v6405
    %v6422 = vpack.c.b16 %v6408, %v6407
    %v6423 = vpack.c.b16 %v6410, %v6409
    %v6424 = vpack.c.b16 %v6412, %v6411
    %v6425 = vpack.c.b16 %v6414, %v6413
    %v6426 = vpack.c.b16 %v6416, %v6415
    %v6427 = vpack.c.b16 %v6418, %v6417
    %v6428 = vpack.c.b16 %v6420, %v6419
    %6437 = vmatprep.subr.bf16.mxu0 0
    %6438 = vmatpush1.bf16.msra.mxu0 %v6428
    %6439 = vmatprep.subr.bf16.mxu0 0
    %6440 = vmatpush1.bf16.msra.mxu0 %v6427
    %6441 = vmatprep.subr.bf16.mxu0 0
    %6442 = vmatpush1.bf16.msra.mxu0 %v6426
    %6443 = vmatprep.subr.bf16.mxu0 0
    %6444 = vmatpush1.bf16.msra.mxu0 %v6425
    %6445 = vmatprep.subr.bf16.mxu0 0
    %6446 = vmatpush1.bf16.msra.mxu0 %v6424
    %6447 = vmatprep.subr.bf16.mxu0 0
    %6448 = vmatpush1.bf16.msra.mxu0 %v6423
    %6449 = vmatprep.subr.bf16.mxu0 0
    %6450 = vmatpush1.bf16.msra.mxu0 %v6422
    %6451 = vmatprep.subr.bf16.mxu0 0
    %6452 = vmatpush1.bf16.msra.mxu0 %v6421
    %6453 = vmatprep.subr.bf16.mxu0 0
    %6454 = vmatpush2.bf16.msra.mxu0 0
    %6455 = vmatprep.subr.bf16.mxu0 0
    %6456 = vmatpush2.bf16.msra.mxu0 0
    %6457 = vmatprep.subr.bf16.mxu0 0
    %6458 = vmatpush2.bf16.msra.mxu0 0
    %6459 = vmatprep.subr.bf16.mxu0 0
    %6460 = vmatpush2.bf16.msra.mxu0 0
    %6461 = vmatprep.subr.bf16.mxu0 0
    %6462 = vmatpush2.bf16.msra.mxu0 0
    %6463 = vmatprep.subr.bf16.mxu0 0
    %6464 = vmatpush2.bf16.msra.mxu0 0
    %6465 = vmatprep.subr.bf16.mxu0 0
    %6466 = vmatpush2.bf16.msra.mxu0 0
    %6467 = vmatprep.subr.bf16.mxu0 0
    %6468 = vmatpush2.bf16.msra.mxu0 0
    %6469 = vmatprep.mubr.bf16.mxu0 0
    %6470 = vmatmul.mubr.bf16.gmra.mxu0 %v6364
    %v6471 = vpop.f32.mrf.mxu0
    %v6472 = vadd.f32 %v6387, %v6471
    %v6473 = vpop.f32.mrf.mxu0
    %v6474 = vpop.f32.mrf.mxu0
    %v6475 = vpop.f32.mrf.mxu0
    %6476 = vdwg.mxu0
    %s6477 = scalar_lea.vmem [#allocation9], 24
    %6478 = vst [vmem:[%s6477] sm:$0xff] %v6472
    %s6479 = sld [smem:[#allocation4 + $0x3]]
    %p6480 = scmp.ne.s32.totalorder %s6479, 0
    // Predicated region
    $region66: #{seq2seq_forward.1} parent=1 // pred_check
      %p6481 = pneg %p6480
    $region67: #{seq2seq_forward.1} parent=1 // pred_check_branch
      %6483 = sbr.rel (%p6481) target = $region69
    $region68: #{seq2seq_forward.1} parent=1 // pred_region
      %s6484 = scalar_lea.vmem %s2, 12
      %v6485 = vld [vmem:[%s6484] sm:$0xf]
      %6486 = vst [vmem:[#allocation3] sm:$0xf] %v6485
    $region69: #{seq2seq_forward.1} parent=1 // pred_fallthru
      _
    %p6487 = scmp.eq.s32.totalorder %s6479, 0
    // Predicated region
    $region70: #{seq2seq_forward.1} parent=1 // pred_check
      %p6488 = pneg %p6487
    $region71: #{seq2seq_forward.1} parent=1 // pred_check_branch
      %6490 = sbr.rel (%p6488) target = $region73
    $region72: #{seq2seq_forward.1} parent=1 // pred_region
      %6491 = vmax.xlane.f32.xlu0 %v6472
      %v6492 = vpop.xlane.xlu0 %6491
      %v6493 = vlaneseq
      %v6494 = vand.u32 %v6493, 127
      %vm6495 = vcmp.eq.f32.partialorder %v6472, %v6492
      %v6496 = vsel %vm6495, %v6494, 128
      %v6497 = vand.u32 %v6496, 65535
      %v6498 = vshra.s32 %v6496, 16
      %v6499 = vcvt.s32.f32 %v6497
      %v6500 = vcvt.s32.f32 %v6498
      %6501 = vmin.xlane.f32.xlu0 %v6500
      %v6502 = vpop.xlane.xlu0 %6501
      %vm6503 = vcmp.eq.f32.partialorder %v6500, %v6502
      %v6504 = vsel %vm6503, %v6499, inf
      %6505 = vmin.xlane.f32.xlu0 %v6504
      %v6506 = vpop.xlane.xlu0 %6505
      %v6507 = vcvt.f32.s32 %v6506
      %v6508 = vcvt.f32.s32 %v6502
      %v6509 = vshll.u32 %v6508, 16
      %v6510 = vadd.s32 %v6509, %v6507
      %vm6511 = vcmp.eq.s32.totalorder %v6494, %v6510
      %v6512 = vsel %vm6511, 1, 0
      %v6513 = vcvt.s32.f32 %v6512
      %v6514 = vpack.c.bf16 %v6513, %v6513
      %v6515 = vld [vmem:[%s3] sm:$0xf]
      %v6516 = vld [vmem:[%s3 + $0x4] sm:$0xf]
      %v6517 = vld [vmem:[%s3 + $0x8] sm:$0xf]
      %v6518 = vld [vmem:[%s3 + $0xc] sm:$0xf]
      %v6519 = vld [vmem:[%s3 + $0x10] sm:$0xf]
      %v6520 = vld [vmem:[%s3 + $0x14] sm:$0xf]
      %v6521 = vld [vmem:[%s3 + $0x18] sm:$0xf]
      %v6522 = vld [vmem:[%s3 + $0x1c] sm:$0xf]
      %v6523 = vld [vmem:[%s3 + $0x20] sm:$0xf]
      %v6524 = vld [vmem:[%s3 + $0x24] sm:$0xf]
      %v6525 = vld [vmem:[%s3 + $0x28] sm:$0xf]
      %v6526 = vld [vmem:[%s3 + $0x2c] sm:$0xf]
      %v6527 = vld [vmem:[%s3 + $0x30] sm:$0xf]
      %v6528 = vld [vmem:[%s3 + $0x34] sm:$0xf]
      %v6529 = vld [vmem:[%s3 + $0x38] sm:$0xf]
      %v6530 = vld [vmem:[%s3 + $0x3c] sm:$0xf]
      %v6547 = vunpack.c.l.b16 %v6515
      %v6548 = vunpack.c.l.b16 %v6516
      %v6549 = vunpack.c.l.b16 %v6517
      %v6550 = vunpack.c.l.b16 %v6518
      %v6551 = vunpack.c.l.b16 %v6519
      %v6552 = vunpack.c.l.b16 %v6520
      %v6553 = vunpack.c.l.b16 %v6521
      %v6554 = vunpack.c.l.b16 %v6522
      %v6555 = vunpack.c.l.b16 %v6523
      %v6556 = vunpack.c.l.b16 %v6524
      %v6557 = vunpack.c.l.b16 %v6525
      %v6558 = vunpack.c.l.b16 %v6526
      %v6559 = vunpack.c.l.b16 %v6527
      %v6560 = vunpack.c.l.b16 %v6528
      %v6561 = vunpack.c.l.b16 %v6529
      %v6562 = vunpack.c.l.b16 %v6530
      %v6563 = vpack.c.b16 %v6548, %v6547
      %v6564 = vpack.c.b16 %v6550, %v6549
      %v6565 = vpack.c.b16 %v6552, %v6551
      %v6566 = vpack.c.b16 %v6554, %v6553
      %v6567 = vpack.c.b16 %v6556, %v6555
      %v6568 = vpack.c.b16 %v6558, %v6557
      %v6569 = vpack.c.b16 %v6560, %v6559
      %v6570 = vpack.c.b16 %v6562, %v6561
      %6579 = vmatprep.subr.bf16.mxu0 0
      %6580 = vmatpush1.bf16.msra.mxu0 %v6570
      %6581 = vmatprep.subr.bf16.mxu0 0
      %6582 = vmatpush1.bf16.msra.mxu0 %v6569
      %6583 = vmatprep.subr.bf16.mxu0 0
      %6584 = vmatpush1.bf16.msra.mxu0 %v6568
      %6585 = vmatprep.subr.bf16.mxu0 0
      %6586 = vmatpush1.bf16.msra.mxu0 %v6567
      %6587 = vmatprep.subr.bf16.mxu0 0
      %6588 = vmatpush1.bf16.msra.mxu0 %v6566
      %6589 = vmatprep.subr.bf16.mxu0 0
      %6590 = vmatpush1.bf16.msra.mxu0 %v6565
      %6591 = vmatprep.subr.bf16.mxu0 0
      %6592 = vmatpush1.bf16.msra.mxu0 %v6564
      %6593 = vmatprep.subr.bf16.mxu0 0
      %6594 = vmatpush1.bf16.msra.mxu0 %v6563
      %6595 = vmatprep.subr.bf16.mxu0 0
      %6596 = vmatpush2.bf16.msra.mxu0 0
      %6597 = vmatprep.subr.bf16.mxu0 0
      %6598 = vmatpush2.bf16.msra.mxu0 0
      %6599 = vmatprep.subr.bf16.mxu0 0
      %6600 = vmatpush2.bf16.msra.mxu0 0
      %6601 = vmatprep.subr.bf16.mxu0 0
      %6602 = vmatpush2.bf16.msra.mxu0 0
      %6603 = vmatprep.subr.bf16.mxu0 0
      %6604 = vmatpush2.bf16.msra.mxu0 0
      %6605 = vmatprep.subr.bf16.mxu0 0
      %6606 = vmatpush2.bf16.msra.mxu0 0
      %6607 = vmatprep.subr.bf16.mxu0 0
      %6608 = vmatpush2.bf16.msra.mxu0 0
      %6609 = vmatprep.subr.bf16.mxu0 0
      %6610 = vmatpush2.bf16.msra.mxu0 0
      %6611 = vmatprep.mubr.bf16.mxu0 0
      %6612 = vmatmul.mubr.bf16.gmra.mxu0 %v6514
      %v6613 = vpop.f32.mrf.mxu0
      %v6614 = vadd.f32 0.0, %v6613
      %v6615 = vpop.f32.mrf.mxu0
      %v6616 = vpop.f32.mrf.mxu0
      %v6617 = vpop.f32.mrf.mxu0
      %6618 = vdwg.mxu0
      %v6619 = vpack.c.bf16 %v6614, %v6614
      %6620 = vst [vmem:[#allocation3] sm:$0xf] %v6619
    $region73: #{seq2seq_forward.1} parent=1 // pred_fallthru
      _
    %v6621 = vld [vmem:[#allocation3] sm:$0xff]
    %v6622 = vld [vmem:[#allocation2] sm:$0xff]
    %v6623 = vld [vmem:[#allocation8] sm:$0xff]
    %v6624 = vld [vmem:[#allocation8 + $0x8] sm:$0xff]
    %v6625 = vld [vmem:[#allocation8 + $0x10] sm:$0xff]
    %v6626 = vld [vmem:[#allocation8 + $0x18] sm:$0xff]
    %v6627 = vld [vmem:[#allocation8 + $0x20] sm:$0xff]
    %v6628 = vld [vmem:[#allocation8 + $0x28] sm:$0xff]
    %v6629 = vld [vmem:[#allocation8 + $0x30] sm:$0xff]
    %v6630 = vld [vmem:[#allocation8 + $0x38] sm:$0xff]
    %v6631 = vld [vmem:[#allocation8 + $0x40] sm:$0xff]
    %v6632 = vld [vmem:[#allocation8 + $0x48] sm:$0xff]
    %v6633 = vld [vmem:[#allocation8 + $0x50] sm:$0xff]
    %v6634 = vld [vmem:[#allocation8 + $0x58] sm:$0xff]
    %v6635 = vld [vmem:[#allocation8 + $0x60] sm:$0xff]
    %v6636 = vld [vmem:[#allocation8 + $0x68] sm:$0xff]
    %v6637 = vld [vmem:[#allocation8 + $0x70] sm:$0xff]
    %v6638 = vld [vmem:[#allocation8 + $0x78] sm:$0xff]
    %v6639 = vld [vmem:[#allocation8 + $0x80] sm:$0xff]
    %v6640 = vld [vmem:[#allocation8 + $0x88] sm:$0xff]
    %v6641 = vld [vmem:[#allocation8 + $0x90] sm:$0xff]
    %v6642 = vld [vmem:[#allocation8 + $0x98] sm:$0xff]
    %v6643 = vld [vmem:[#allocation8 + $0xa0] sm:$0xff]
    %v6644 = vld [vmem:[#allocation8 + $0xa8] sm:$0xff]
    %v6645 = vld [vmem:[#allocation8 + $0xb0] sm:$0xff]
    %v6646 = vld [vmem:[#allocation8 + $0xb8] sm:$0xff]
    %v6647 = vld [vmem:[#allocation8 + $0xc0] sm:$0xff]
    %v6648 = vld [vmem:[#allocation8 + $0xc8] sm:$0xff]
    %v6649 = vld [vmem:[#allocation8 + $0xd0] sm:$0xff]
    %v6650 = vld [vmem:[#allocation8 + $0xd8] sm:$0xff]
    %v6651 = vld [vmem:[#allocation8 + $0xe0] sm:$0xff]
    %v6652 = vld [vmem:[#allocation8 + $0xe8] sm:$0xff]
    %v6653 = vld [vmem:[#allocation8 + $0xf0] sm:$0xff]
    %v6654 = vld [vmem:[#allocation8 + $0xf8] sm:$0xff]
    %v6655 = vld [vmem:[#allocation8 + $0x100] sm:$0xff]
    %v6656 = vld [vmem:[#allocation8 + $0x108] sm:$0xff]
    %v6657 = vld [vmem:[#allocation8 + $0x110] sm:$0xff]
    %v6658 = vld [vmem:[#allocation8 + $0x118] sm:$0xff]
    %v6659 = vld [vmem:[#allocation8 + $0x120] sm:$0xff]
    %v6660 = vld [vmem:[#allocation8 + $0x128] sm:$0xff]
    %v6661 = vld [vmem:[#allocation8 + $0x130] sm:$0xff]
    %v6662 = vld [vmem:[#allocation8 + $0x138] sm:$0xff]
    %v6663 = vld [vmem:[#allocation8 + $0x140] sm:$0xff]
    %v6664 = vld [vmem:[#allocation8 + $0x148] sm:$0xff]
    %v6665 = vld [vmem:[#allocation8 + $0x150] sm:$0xff]
    %v6666 = vld [vmem:[#allocation8 + $0x158] sm:$0xff]
    %v6667 = vld [vmem:[#allocation8 + $0x160] sm:$0xff]
    %v6668 = vld [vmem:[#allocation8 + $0x168] sm:$0xff]
    %v6669 = vld [vmem:[#allocation8 + $0x170] sm:$0xff]
    %v6670 = vld [vmem:[#allocation8 + $0x178] sm:$0xff]
    %v6671 = vld [vmem:[#allocation8 + $0x180] sm:$0xff]
    %v6672 = vld [vmem:[#allocation8 + $0x188] sm:$0xff]
    %v6673 = vld [vmem:[#allocation8 + $0x190] sm:$0xff]
    %v6674 = vld [vmem:[#allocation8 + $0x198] sm:$0xff]
    %v6675 = vld [vmem:[#allocation8 + $0x1a0] sm:$0xff]
    %v6676 = vld [vmem:[#allocation8 + $0x1a8] sm:$0xff]
    %v6677 = vld [vmem:[#allocation8 + $0x1b0] sm:$0xff]
    %v6678 = vld [vmem:[#allocation8 + $0x1b8] sm:$0xff]
    %v6679 = vld [vmem:[#allocation8 + $0x1c0] sm:$0xff]
    %v6680 = vld [vmem:[#allocation8 + $0x1c8] sm:$0xff]
    %v6681 = vld [vmem:[#allocation8 + $0x1d0] sm:$0xff]
    %v6682 = vld [vmem:[#allocation8 + $0x1d8] sm:$0xff]
    %v6683 = vld [vmem:[#allocation8 + $0x1e0] sm:$0xff]
    %v6684 = vld [vmem:[#allocation8 + $0x1e8] sm:$0xff]
    %v6685 = vld [vmem:[#allocation8 + $0x1f0] sm:$0xff]
    %v6686 = vld [vmem:[#allocation8 + $0x1f8] sm:$0xff]
    %v6687 = vld [vmem:[%s7] sm:$0xf]
    %v6689 = vlaneseq
    %v6690 = vshrl.u32 %v6689, 7
    %v6691 = vsub.s32 0, %v6690
    %v6692 = vrot.slane %v6687, %v6691
    %v6693 = vlaneseq
    %v6694 = vshrl.u32 %v6693, 7
    %v6695 = vsub.s32 1, %v6694
    %v6696 = vrot.slane %v6687, %v6695
    %v6697 = vlaneseq
    %v6698 = vshrl.u32 %v6697, 7
    %v6699 = vsub.s32 2, %v6698
    %v6700 = vrot.slane %v6687, %v6699
    %v6701 = vlaneseq
    %v6702 = vshrl.u32 %v6701, 7
    %v6703 = vsub.s32 3, %v6702
    %v6704 = vrot.slane %v6687, %v6703
    %v6710 = vunpack.c.l.b16 %v6621
    %v6711 = vunpack.c.h.b16 %v6621
    %v6712 = vpack.c.b16 %v6710, %v6710
    %v6713 = vpack.c.b16 %v6711, %v6711
    %v6780 = vunpack.c.l.b16 %v6623
    %v6781 = vunpack.c.h.b16 %v6623
    %v6782 = vunpack.c.l.b16 %v6624
    %v6783 = vunpack.c.h.b16 %v6624
    %v6784 = vunpack.c.l.b16 %v6625
    %v6785 = vunpack.c.h.b16 %v6625
    %v6786 = vunpack.c.l.b16 %v6626
    %v6787 = vunpack.c.h.b16 %v6626
    %v6788 = vunpack.c.l.b16 %v6627
    %v6789 = vunpack.c.h.b16 %v6627
    %v6790 = vunpack.c.l.b16 %v6628
    %v6791 = vunpack.c.h.b16 %v6628
    %v6792 = vunpack.c.l.b16 %v6629
    %v6793 = vunpack.c.h.b16 %v6629
    %v6794 = vunpack.c.l.b16 %v6630
    %v6795 = vunpack.c.h.b16 %v6630
    %v6796 = vunpack.c.l.b16 %v6631
    %v6797 = vunpack.c.h.b16 %v6631
    %v6798 = vunpack.c.l.b16 %v6632
    %v6799 = vunpack.c.h.b16 %v6632
    %v6800 = vunpack.c.l.b16 %v6633
    %v6801 = vunpack.c.h.b16 %v6633
    %v6802 = vunpack.c.l.b16 %v6634
    %v6803 = vunpack.c.h.b16 %v6634
    %v6804 = vunpack.c.l.b16 %v6635
    %v6805 = vunpack.c.h.b16 %v6635
    %v6806 = vunpack.c.l.b16 %v6636
    %v6807 = vunpack.c.h.b16 %v6636
    %v6808 = vunpack.c.l.b16 %v6637
    %v6809 = vunpack.c.h.b16 %v6637
    %v6810 = vunpack.c.l.b16 %v6638
    %v6811 = vunpack.c.h.b16 %v6638
    %v6812 = vunpack.c.l.b16 %v6639
    %v6813 = vunpack.c.h.b16 %v6639
    %v6814 = vunpack.c.l.b16 %v6640
    %v6815 = vunpack.c.h.b16 %v6640
    %v6816 = vunpack.c.l.b16 %v6641
    %v6817 = vunpack.c.h.b16 %v6641
    %v6818 = vunpack.c.l.b16 %v6642
    %v6819 = vunpack.c.h.b16 %v6642
    %v6820 = vunpack.c.l.b16 %v6643
    %v6821 = vunpack.c.h.b16 %v6643
    %v6822 = vunpack.c.l.b16 %v6644
    %v6823 = vunpack.c.h.b16 %v6644
    %v6824 = vunpack.c.l.b16 %v6645
    %v6825 = vunpack.c.h.b16 %v6645
    %v6826 = vunpack.c.l.b16 %v6646
    %v6827 = vunpack.c.h.b16 %v6646
    %v6828 = vunpack.c.l.b16 %v6647
    %v6829 = vunpack.c.h.b16 %v6647
    %v6830 = vunpack.c.l.b16 %v6648
    %v6831 = vunpack.c.h.b16 %v6648
    %v6832 = vunpack.c.l.b16 %v6649
    %v6833 = vunpack.c.h.b16 %v6649
    %v6834 = vunpack.c.l.b16 %v6650
    %v6835 = vunpack.c.h.b16 %v6650
    %v6836 = vunpack.c.l.b16 %v6651
    %v6837 = vunpack.c.h.b16 %v6651
    %v6838 = vunpack.c.l.b16 %v6652
    %v6839 = vunpack.c.h.b16 %v6652
    %v6840 = vunpack.c.l.b16 %v6653
    %v6841 = vunpack.c.h.b16 %v6653
    %v6842 = vunpack.c.l.b16 %v6654
    %v6843 = vunpack.c.h.b16 %v6654
    %v6844 = vunpack.c.l.b16 %v6655
    %v6845 = vunpack.c.h.b16 %v6655
    %v6846 = vunpack.c.l.b16 %v6656
    %v6847 = vunpack.c.h.b16 %v6656
    %v6848 = vunpack.c.l.b16 %v6657
    %v6849 = vunpack.c.h.b16 %v6657
    %v6850 = vunpack.c.l.b16 %v6658
    %v6851 = vunpack.c.h.b16 %v6658
    %v6852 = vunpack.c.l.b16 %v6659
    %v6853 = vunpack.c.h.b16 %v6659
    %v6854 = vunpack.c.l.b16 %v6660
    %v6855 = vunpack.c.h.b16 %v6660
    %v6856 = vunpack.c.l.b16 %v6661
    %v6857 = vunpack.c.h.b16 %v6661
    %v6858 = vunpack.c.l.b16 %v6662
    %v6859 = vunpack.c.h.b16 %v6662
    %v6860 = vunpack.c.l.b16 %v6663
    %v6861 = vunpack.c.h.b16 %v6663
    %v6862 = vunpack.c.l.b16 %v6664
    %v6863 = vunpack.c.h.b16 %v6664
    %v6864 = vunpack.c.l.b16 %v6665
    %v6865 = vunpack.c.h.b16 %v6665
    %v6866 = vunpack.c.l.b16 %v6666
    %v6867 = vunpack.c.h.b16 %v6666
    %v6868 = vunpack.c.l.b16 %v6667
    %v6869 = vunpack.c.h.b16 %v6667
    %v6870 = vunpack.c.l.b16 %v6668
    %v6871 = vunpack.c.h.b16 %v6668
    %v6872 = vunpack.c.l.b16 %v6669
    %v6873 = vunpack.c.h.b16 %v6669
    %v6874 = vunpack.c.l.b16 %v6670
    %v6875 = vunpack.c.h.b16 %v6670
    %v6876 = vunpack.c.l.b16 %v6671
    %v6877 = vunpack.c.h.b16 %v6671
    %v6878 = vunpack.c.l.b16 %v6672
    %v6879 = vunpack.c.h.b16 %v6672
    %v6880 = vunpack.c.l.b16 %v6673
    %v6881 = vunpack.c.h.b16 %v6673
    %v6882 = vunpack.c.l.b16 %v6674
    %v6883 = vunpack.c.h.b16 %v6674
    %v6884 = vunpack.c.l.b16 %v6675
    %v6885 = vunpack.c.h.b16 %v6675
    %v6886 = vunpack.c.l.b16 %v6676
    %v6887 = vunpack.c.h.b16 %v6676
    %v6888 = vunpack.c.l.b16 %v6677
    %v6889 = vunpack.c.h.b16 %v6677
    %v6890 = vunpack.c.l.b16 %v6678
    %v6891 = vunpack.c.h.b16 %v6678
    %v6892 = vunpack.c.l.b16 %v6679
    %v6893 = vunpack.c.h.b16 %v6679
    %v6894 = vunpack.c.l.b16 %v6680
    %v6895 = vunpack.c.h.b16 %v6680
    %v6896 = vunpack.c.l.b16 %v6681
    %v6897 = vunpack.c.h.b16 %v6681
    %v6898 = vunpack.c.l.b16 %v6682
    %v6899 = vunpack.c.h.b16 %v6682
    %v6900 = vunpack.c.l.b16 %v6683
    %v6901 = vunpack.c.h.b16 %v6683
    %v6902 = vunpack.c.l.b16 %v6684
    %v6903 = vunpack.c.h.b16 %v6684
    %v6904 = vunpack.c.l.b16 %v6685
    %v6905 = vunpack.c.h.b16 %v6685
    %v6906 = vunpack.c.l.b16 %v6686
    %v6907 = vunpack.c.h.b16 %v6686
    %v6908 = vpack.c.b16 %v6784, %v6780
    %v6909 = vpack.c.b16 %v6785, %v6781
    %v6910 = vpack.c.b16 %v6786, %v6782
    %v6911 = vpack.c.b16 %v6787, %v6783
    %v6912 = vpack.c.b16 %v6792, %v6788
    %v6913 = vpack.c.b16 %v6793, %v6789
    %v6914 = vpack.c.b16 %v6794, %v6790
    %v6915 = vpack.c.b16 %v6795, %v6791
    %v6916 = vpack.c.b16 %v6800, %v6796
    %v6917 = vpack.c.b16 %v6801, %v6797
    %v6918 = vpack.c.b16 %v6802, %v6798
    %v6919 = vpack.c.b16 %v6803, %v6799
    %v6920 = vpack.c.b16 %v6808, %v6804
    %v6921 = vpack.c.b16 %v6809, %v6805
    %v6922 = vpack.c.b16 %v6810, %v6806
    %v6923 = vpack.c.b16 %v6811, %v6807
    %v6924 = vpack.c.b16 %v6816, %v6812
    %v6925 = vpack.c.b16 %v6817, %v6813
    %v6926 = vpack.c.b16 %v6818, %v6814
    %v6927 = vpack.c.b16 %v6819, %v6815
    %v6928 = vpack.c.b16 %v6824, %v6820
    %v6929 = vpack.c.b16 %v6825, %v6821
    %v6930 = vpack.c.b16 %v6826, %v6822
    %v6931 = vpack.c.b16 %v6827, %v6823
    %v6932 = vpack.c.b16 %v6832, %v6828
    %v6933 = vpack.c.b16 %v6833, %v6829
    %v6934 = vpack.c.b16 %v6834, %v6830
    %v6935 = vpack.c.b16 %v6835, %v6831
    %v6936 = vpack.c.b16 %v6840, %v6836
    %v6937 = vpack.c.b16 %v6841, %v6837
    %v6938 = vpack.c.b16 %v6842, %v6838
    %v6939 = vpack.c.b16 %v6843, %v6839
    %v6940 = vpack.c.b16 %v6848, %v6844
    %v6941 = vpack.c.b16 %v6849, %v6845
    %v6942 = vpack.c.b16 %v6850, %v6846
    %v6943 = vpack.c.b16 %v6851, %v6847
    %v6944 = vpack.c.b16 %v6856, %v6852
    %v6945 = vpack.c.b16 %v6857, %v6853
    %v6946 = vpack.c.b16 %v6858, %v6854
    %v6947 = vpack.c.b16 %v6859, %v6855
    %v6948 = vpack.c.b16 %v6864, %v6860
    %v6949 = vpack.c.b16 %v6865, %v6861
    %v6950 = vpack.c.b16 %v6866, %v6862
    %v6951 = vpack.c.b16 %v6867, %v6863
    %v6952 = vpack.c.b16 %v6872, %v6868
    %v6953 = vpack.c.b16 %v6873, %v6869
    %v6954 = vpack.c.b16 %v6874, %v6870
    %v6955 = vpack.c.b16 %v6875, %v6871
    %v6956 = vpack.c.b16 %v6880, %v6876
    %v6957 = vpack.c.b16 %v6881, %v6877
    %v6958 = vpack.c.b16 %v6882, %v6878
    %v6959 = vpack.c.b16 %v6883, %v6879
    %v6960 = vpack.c.b16 %v6888, %v6884
    %v6961 = vpack.c.b16 %v6889, %v6885
    %v6962 = vpack.c.b16 %v6890, %v6886
    %v6963 = vpack.c.b16 %v6891, %v6887
    %v6964 = vpack.c.b16 %v6896, %v6892
    %v6965 = vpack.c.b16 %v6897, %v6893
    %v6966 = vpack.c.b16 %v6898, %v6894
    %v6967 = vpack.c.b16 %v6899, %v6895
    %v6968 = vpack.c.b16 %v6904, %v6900
    %v6969 = vpack.c.b16 %v6905, %v6901
    %v6970 = vpack.c.b16 %v6906, %v6902
    %v6971 = vpack.c.b16 %v6907, %v6903
    %7036 = vmatprep.subr.bf16.mxu0 %v6937
    %7037 = vmatpush1.bf16.msra.mxu0 %v6936
    %7038 = vmatprep.subr.bf16.mxu0 %v6933
    %7039 = vmatpush1.bf16.msra.mxu0 %v6932
    %7040 = vmatprep.subr.bf16.mxu0 %v6929
    %7041 = vmatpush1.bf16.msra.mxu0 %v6928
    %7042 = vmatprep.subr.bf16.mxu0 %v6925
    %7043 = vmatpush1.bf16.msra.mxu0 %v6924
    %7044 = vmatprep.subr.bf16.mxu0 %v6921
    %7045 = vmatpush1.bf16.msra.mxu0 %v6920
    %7046 = vmatprep.subr.bf16.mxu0 %v6917
    %7047 = vmatpush1.bf16.msra.mxu0 %v6916
    %7048 = vmatprep.subr.bf16.mxu0 %v6913
    %7049 = vmatpush1.bf16.msra.mxu0 %v6912
    %7050 = vmatprep.subr.bf16.mxu0 %v6909
    %7051 = vmatpush1.bf16.msra.mxu0 %v6908
    %7052 = vmatprep.subr.bf16.mxu0 %v6969
    %7053 = vmatpush2.bf16.msra.mxu0 %v6968
    %7054 = vmatprep.subr.bf16.mxu0 %v6965
    %7055 = vmatpush2.bf16.msra.mxu0 %v6964
    %7056 = vmatprep.subr.bf16.mxu0 %v6961
    %7057 = vmatpush2.bf16.msra.mxu0 %v6960
    %7058 = vmatprep.subr.bf16.mxu0 %v6957
    %7059 = vmatpush2.bf16.msra.mxu0 %v6956
    %7060 = vmatprep.subr.bf16.mxu0 %v6953
    %7061 = vmatpush2.bf16.msra.mxu0 %v6952
    %7062 = vmatprep.subr.bf16.mxu0 %v6949
    %7063 = vmatpush2.bf16.msra.mxu0 %v6948
    %7064 = vmatprep.subr.bf16.mxu0 %v6945
    %7065 = vmatpush2.bf16.msra.mxu0 %v6944
    %7066 = vmatprep.subr.bf16.mxu0 %v6941
    %7067 = vmatpush2.bf16.msra.mxu0 %v6940
    %7068 = vmatprep.mubr.bf16.mxu0 %v6713
    %7069 = vmatmul.mubr.bf16.gmra.mxu0 %v6712
    %v7070 = vpop.f32.mrf.mxu0
    %v7071 = vadd.f32 %v6692, %v7070
    %v7072 = vpop.f32.mrf.mxu0
    %v7073 = vadd.f32 %v6696, %v7072
    %v7074 = vpop.f32.mrf.mxu0
    %v7075 = vpop.f32.mrf.mxu0
    %7076 = vdwg.mxu0
    %7077 = vmatprep.subr.bf16.mxu0 %v6939
    %7078 = vmatpush1.bf16.msra.mxu0 %v6938
    %7079 = vmatprep.subr.bf16.mxu0 %v6935
    %7080 = vmatpush1.bf16.msra.mxu0 %v6934
    %7081 = vmatprep.subr.bf16.mxu0 %v6931
    %7082 = vmatpush1.bf16.msra.mxu0 %v6930
    %7083 = vmatprep.subr.bf16.mxu0 %v6927
    %7084 = vmatpush1.bf16.msra.mxu0 %v6926
    %7085 = vmatprep.subr.bf16.mxu0 %v6923
    %7086 = vmatpush1.bf16.msra.mxu0 %v6922
    %7087 = vmatprep.subr.bf16.mxu0 %v6919
    %7088 = vmatpush1.bf16.msra.mxu0 %v6918
    %7089 = vmatprep.subr.bf16.mxu0 %v6915
    %7090 = vmatpush1.bf16.msra.mxu0 %v6914
    %7091 = vmatprep.subr.bf16.mxu0 %v6911
    %7092 = vmatpush1.bf16.msra.mxu0 %v6910
    %7093 = vmatprep.subr.bf16.mxu0 %v6971
    %7094 = vmatpush2.bf16.msra.mxu0 %v6970
    %7095 = vmatprep.subr.bf16.mxu0 %v6967
    %7096 = vmatpush2.bf16.msra.mxu0 %v6966
    %7097 = vmatprep.subr.bf16.mxu0 %v6963
    %7098 = vmatpush2.bf16.msra.mxu0 %v6962
    %7099 = vmatprep.subr.bf16.mxu0 %v6959
    %7100 = vmatpush2.bf16.msra.mxu0 %v6958
    %7101 = vmatprep.subr.bf16.mxu0 %v6955
    %7102 = vmatpush2.bf16.msra.mxu0 %v6954
    %7103 = vmatprep.subr.bf16.mxu0 %v6951
    %7104 = vmatpush2.bf16.msra.mxu0 %v6950
    %7105 = vmatprep.subr.bf16.mxu0 %v6947
    %7106 = vmatpush2.bf16.msra.mxu0 %v6946
    %7107 = vmatprep.subr.bf16.mxu0 %v6943
    %7108 = vmatpush2.bf16.msra.mxu0 %v6942
    %7109 = vmatprep.mubr.bf16.mxu0 %v6713
    %7110 = vmatmul.mubr.bf16.gmra.mxu0 %v6712
    %v7111 = vpop.f32.mrf.mxu0
    %v7112 = vadd.f32 %v6700, %v7111
    %v7113 = vpop.f32.mrf.mxu0
    %v7114 = vadd.f32 %v6704, %v7113
    %v7115 = vpop.f32.mrf.mxu0
    %v7116 = vpop.f32.mrf.mxu0
    %7117 = vdwg.mxu0
    %v7118 = vxor.u32 %v7071, 2147483648
    %v7119 = vmul.f32 %v7118, 1.442695
    %v7120 = vpow.pop %v7119
    %v7121 = vadd.f32 %v7120, 1.0
    %v7122 = vrcp.pop %v7121
    %v7123 = vmul.f32 1.0, %v7122
    %v7124 = vxor.u32 %v7073, 2147483648
    %v7125 = vmul.f32 %v7124, 1.442695
    %v7126 = vpow.pop %v7125
    %v7127 = vadd.f32 %v7126, 1.0
    %v7128 = vrcp.pop %v7127
    %v7129 = vmul.f32 1.0, %v7128
    %v7130 = vtanh.pop %v7112
    %v7131 = vxor.u32 %v7114, 2147483648
    %v7132 = vmul.f32 %v7131, 1.442695
    %v7133 = vpow.pop %v7132
    %v7134 = vadd.f32 %v7133, 1.0
    %v7135 = vrcp.pop %v7134
    %v7136 = vmul.f32 1.0, %v7135
    %v7137 = vmul.f32 %v7129, %v6622
    %v7138 = vmul.f32 %v7123, %v7130
    %v7139 = vadd.f32 %v7137, %v7138
    %v7140 = vtanh.pop %v7139
    %v7141 = vmul.f32 %v7136, %v7140
    %7142 = vst [vmem:[#allocation2] sm:$0xff] %v7139
    %v7143 = vpack.c.bf16 %v7141, %v7141
    %7144 = vst [vmem:[#allocation3 + $0x4] sm:$0xf] %v7143
    %v7145 = vld [vmem:[%s8] sm:$0xf]
    %v7146 = vld [vmem:[%s8 + $0x4] sm:$0xf]
    %v7147 = vld [vmem:[%s8 + $0x8] sm:$0xf]
    %v7148 = vld [vmem:[%s8 + $0xc] sm:$0xf]
    %v7149 = vld [vmem:[%s8 + $0x10] sm:$0xf]
    %v7150 = vld [vmem:[%s8 + $0x14] sm:$0xf]
    %v7151 = vld [vmem:[%s8 + $0x18] sm:$0xf]
    %v7152 = vld [vmem:[%s8 + $0x1c] sm:$0xf]
    %v7153 = vld [vmem:[%s8 + $0x20] sm:$0xf]
    %v7154 = vld [vmem:[%s8 + $0x24] sm:$0xf]
    %v7155 = vld [vmem:[%s8 + $0x28] sm:$0xf]
    %v7156 = vld [vmem:[%s8 + $0x2c] sm:$0xf]
    %v7157 = vld [vmem:[%s8 + $0x30] sm:$0xf]
    %v7158 = vld [vmem:[%s8 + $0x34] sm:$0xf]
    %v7159 = vld [vmem:[%s8 + $0x38] sm:$0xf]
    %v7160 = vld [vmem:[%s8 + $0x3c] sm:$0xf]
    %v7161 = vld [vmem:[%s9] sm:$0x1]
    %v7163 = vlaneseq
    %v7164 = vshrl.u32 %v7163, 7
    %v7165 = vsub.s32 0, %v7164
    %v7166 = vrot.slane %v7161, %v7165
    %v7184 = vunpack.c.l.b16 %v7145
    %v7185 = vunpack.c.l.b16 %v7146
    %v7186 = vunpack.c.l.b16 %v7147
    %v7187 = vunpack.c.l.b16 %v7148
    %v7188 = vunpack.c.l.b16 %v7149
    %v7189 = vunpack.c.l.b16 %v7150
    %v7190 = vunpack.c.l.b16 %v7151
    %v7191 = vunpack.c.l.b16 %v7152
    %v7192 = vunpack.c.l.b16 %v7153
    %v7193 = vunpack.c.l.b16 %v7154
    %v7194 = vunpack.c.l.b16 %v7155
    %v7195 = vunpack.c.l.b16 %v7156
    %v7196 = vunpack.c.l.b16 %v7157
    %v7197 = vunpack.c.l.b16 %v7158
    %v7198 = vunpack.c.l.b16 %v7159
    %v7199 = vunpack.c.l.b16 %v7160
    %v7200 = vpack.c.b16 %v7185, %v7184
    %v7201 = vpack.c.b16 %v7187, %v7186
    %v7202 = vpack.c.b16 %v7189, %v7188
    %v7203 = vpack.c.b16 %v7191, %v7190
    %v7204 = vpack.c.b16 %v7193, %v7192
    %v7205 = vpack.c.b16 %v7195, %v7194
    %v7206 = vpack.c.b16 %v7197, %v7196
    %v7207 = vpack.c.b16 %v7199, %v7198
    %7216 = vmatprep.subr.bf16.mxu0 0
    %7217 = vmatpush1.bf16.msra.mxu0 %v7207
    %7218 = vmatprep.subr.bf16.mxu0 0
    %7219 = vmatpush1.bf16.msra.mxu0 %v7206
    %7220 = vmatprep.subr.bf16.mxu0 0
    %7221 = vmatpush1.bf16.msra.mxu0 %v7205
    %7222 = vmatprep.subr.bf16.mxu0 0
    %7223 = vmatpush1.bf16.msra.mxu0 %v7204
    %7224 = vmatprep.subr.bf16.mxu0 0
    %7225 = vmatpush1.bf16.msra.mxu0 %v7203
    %7226 = vmatprep.subr.bf16.mxu0 0
    %7227 = vmatpush1.bf16.msra.mxu0 %v7202
    %7228 = vmatprep.subr.bf16.mxu0 0
    %7229 = vmatpush1.bf16.msra.mxu0 %v7201
    %7230 = vmatprep.subr.bf16.mxu0 0
    %7231 = vmatpush1.bf16.msra.mxu0 %v7200
    %7232 = vmatprep.subr.bf16.mxu0 0
    %7233 = vmatpush2.bf16.msra.mxu0 0
    %7234 = vmatprep.subr.bf16.mxu0 0
    %7235 = vmatpush2.bf16.msra.mxu0 0
    %7236 = vmatprep.subr.bf16.mxu0 0
    %7237 = vmatpush2.bf16.msra.mxu0 0
    %7238 = vmatprep.subr.bf16.mxu0 0
    %7239 = vmatpush2.bf16.msra.mxu0 0
    %7240 = vmatprep.subr.bf16.mxu0 0
    %7241 = vmatpush2.bf16.msra.mxu0 0
    %7242 = vmatprep.subr.bf16.mxu0 0
    %7243 = vmatpush2.bf16.msra.mxu0 0
    %7244 = vmatprep.subr.bf16.mxu0 0
    %7245 = vmatpush2.bf16.msra.mxu0 0
    %7246 = vmatprep.subr.bf16.mxu0 0
    %7247 = vmatpush2.bf16.msra.mxu0 0
    %7248 = vmatprep.mubr.bf16.mxu0 0
    %7249 = vmatmul.mubr.bf16.gmra.mxu0 %v7143
    %v7250 = vpop.f32.mrf.mxu0
    %v7251 = vadd.f32 %v7166, %v7250
    %v7252 = vpop.f32.mrf.mxu0
    %v7253 = vpop.f32.mrf.mxu0
    %v7254 = vpop.f32.mrf.mxu0
    %7255 = vdwg.mxu0
    %s7256 = scalar_lea.vmem [#allocation9], 32
    %7257 = vst [vmem:[%s7256] sm:$0xff] %v7251
    %s7258 = sld [smem:[#allocation4 + $0x4]]
    %p7259 = scmp.ne.s32.totalorder %s7258, 0
    // Predicated region
    $region74: #{seq2seq_forward.1} parent=1 // pred_check
      %p7260 = pneg %p7259
    $region75: #{seq2seq_forward.1} parent=1 // pred_check_branch
      %7262 = sbr.rel (%p7260) target = $region77
    $region76: #{seq2seq_forward.1} parent=1 // pred_region
      %s7263 = scalar_lea.vmem %s2, 16
      %v7264 = vld [vmem:[%s7263] sm:$0xf]
      %7265 = vst [vmem:[#allocation3] sm:$0xf] %v7264
    $region77: #{seq2seq_forward.1} parent=1 // pred_fallthru
      _
    %p7266 = scmp.eq.s32.totalorder %s7258, 0
    // Predicated region
    $region78: #{seq2seq_forward.1} parent=1 // pred_check
      %p7267 = pneg %p7266
    $region79: #{seq2seq_forward.1} parent=1 // pred_check_branch
      %7269 = sbr.rel (%p7267) target = $region81
    $region80: #{seq2seq_forward.1} parent=1 // pred_region
      %7270 = vmax.xlane.f32.xlu0 %v7251
      %v7271 = vpop.xlane.xlu0 %7270
      %v7272 = vlaneseq
      %v7273 = vand.u32 %v7272, 127
      %vm7274 = vcmp.eq.f32.partialorder %v7251, %v7271
      %v7275 = vsel %vm7274, %v7273, 128
      %v7276 = vand.u32 %v7275, 65535
      %v7277 = vshra.s32 %v7275, 16
      %v7278 = vcvt.s32.f32 %v7276
      %v7279 = vcvt.s32.f32 %v7277
      %7280 = vmin.xlane.f32.xlu0 %v7279
      %v7281 = vpop.xlane.xlu0 %7280
      %vm7282 = vcmp.eq.f32.partialorder %v7279, %v7281
      %v7283 = vsel %vm7282, %v7278, inf
      %7284 = vmin.xlane.f32.xlu0 %v7283
      %v7285 = vpop.xlane.xlu0 %7284
      %v7286 = vcvt.f32.s32 %v7285
      %v7287 = vcvt.f32.s32 %v7281
      %v7288 = vshll.u32 %v7287, 16
      %v7289 = vadd.s32 %v7288, %v7286
      %vm7290 = vcmp.eq.s32.totalorder %v7273, %v7289
      %v7291 = vsel %vm7290, 1, 0
      %v7292 = vcvt.s32.f32 %v7291
      %v7293 = vpack.c.bf16 %v7292, %v7292
      %v7294 = vld [vmem:[%s3] sm:$0xf]
      %v7295 = vld [vmem:[%s3 + $0x4] sm:$0xf]
      %v7296 = vld [vmem:[%s3 + $0x8] sm:$0xf]
      %v7297 = vld [vmem:[%s3 + $0xc] sm:$0xf]
      %v7298 = vld [vmem:[%s3 + $0x10] sm:$0xf]
      %v7299 = vld [vmem:[%s3 + $0x14] sm:$0xf]
      %v7300 = vld [vmem:[%s3 + $0x18] sm:$0xf]
      %v7301 = vld [vmem:[%s3 + $0x1c] sm:$0xf]
      %v7302 = vld [vmem:[%s3 + $0x20] sm:$0xf]
      %v7303 = vld [vmem:[%s3 + $0x24] sm:$0xf]
      %v7304 = vld [vmem:[%s3 + $0x28] sm:$0xf]
      %v7305 = vld [vmem:[%s3 + $0x2c] sm:$0xf]
      %v7306 = vld [vmem:[%s3 + $0x30] sm:$0xf]
      %v7307 = vld [vmem:[%s3 + $0x34] sm:$0xf]
      %v7308 = vld [vmem:[%s3 + $0x38] sm:$0xf]
      %v7309 = vld [vmem:[%s3 + $0x3c] sm:$0xf]
      %v7326 = vunpack.c.l.b16 %v7294
      %v7327 = vunpack.c.l.b16 %v7295
      %v7328 = vunpack.c.l.b16 %v7296
      %v7329 = vunpack.c.l.b16 %v7297
      %v7330 = vunpack.c.l.b16 %v7298
      %v7331 = vunpack.c.l.b16 %v7299
      %v7332 = vunpack.c.l.b16 %v7300
      %v7333 = vunpack.c.l.b16 %v7301
      %v7334 = vunpack.c.l.b16 %v7302
      %v7335 = vunpack.c.l.b16 %v7303
      %v7336 = vunpack.c.l.b16 %v7304
      %v7337 = vunpack.c.l.b16 %v7305
      %v7338 = vunpack.c.l.b16 %v7306
      %v7339 = vunpack.c.l.b16 %v7307
      %v7340 = vunpack.c.l.b16 %v7308
      %v7341 = vunpack.c.l.b16 %v7309
      %v7342 = vpack.c.b16 %v7327, %v7326
      %v7343 = vpack.c.b16 %v7329, %v7328
      %v7344 = vpack.c.b16 %v7331, %v7330
      %v7345 = vpack.c.b16 %v7333, %v7332
      %v7346 = vpack.c.b16 %v7335, %v7334
      %v7347 = vpack.c.b16 %v7337, %v7336
      %v7348 = vpack.c.b16 %v7339, %v7338
      %v7349 = vpack.c.b16 %v7341, %v7340
      %7358 = vmatprep.subr.bf16.mxu0 0
      %7359 = vmatpush1.bf16.msra.mxu0 %v7349
      %7360 = vmatprep.subr.bf16.mxu0 0
      %7361 = vmatpush1.bf16.msra.mxu0 %v7348
      %7362 = vmatprep.subr.bf16.mxu0 0
      %7363 = vmatpush1.bf16.msra.mxu0 %v7347
      %7364 = vmatprep.subr.bf16.mxu0 0
      %7365 = vmatpush1.bf16.msra.mxu0 %v7346
      %7366 = vmatprep.subr.bf16.mxu0 0
      %7367 = vmatpush1.bf16.msra.mxu0 %v7345
      %7368 = vmatprep.subr.bf16.mxu0 0
      %7369 = vmatpush1.bf16.msra.mxu0 %v7344
      %7370 = vmatprep.subr.bf16.mxu0 0
      %7371 = vmatpush1.bf16.msra.mxu0 %v7343
      %7372 = vmatprep.subr.bf16.mxu0 0
      %7373 = vmatpush1.bf16.msra.mxu0 %v7342
      %7374 = vmatprep.subr.bf16.mxu0 0
      %7375 = vmatpush2.bf16.msra.mxu0 0
      %7376 = vmatprep.subr.bf16.mxu0 0
      %7377 = vmatpush2.bf16.msra.mxu0 0
      %7378 = vmatprep.subr.bf16.mxu0 0
      %7379 = vmatpush2.bf16.msra.mxu0 0
      %7380 = vmatprep.subr.bf16.mxu0 0
      %7381 = vmatpush2.bf16.msra.mxu0 0
      %7382 = vmatprep.subr.bf16.mxu0 0
      %7383 = vmatpush2.bf16.msra.mxu0 0
      %7384 = vmatprep.subr.bf16.mxu0 0
      %7385 = vmatpush2.bf16.msra.mxu0 0
      %7386 = vmatprep.subr.bf16.mxu0 0
      %7387 = vmatpush2.bf16.msra.mxu0 0
      %7388 = vmatprep.subr.bf16.mxu0 0
      %7389 = vmatpush2.bf16.msra.mxu0 0
      %7390 = vmatprep.mubr.bf16.mxu0 0
      %7391 = vmatmul.mubr.bf16.gmra.mxu0 %v7293
      %v7392 = vpop.f32.mrf.mxu0
      %v7393 = vadd.f32 0.0, %v7392
      %v7394 = vpop.f32.mrf.mxu0
      %v7395 = vpop.f32.mrf.mxu0
      %v7396 = vpop.f32.mrf.mxu0
      %7397 = vdwg.mxu0
      %v7398 = vpack.c.bf16 %v7393, %v7393
      %7399 = vst [vmem:[#allocation3] sm:$0xf] %v7398
    $region81: #{seq2seq_forward.1} parent=1 // pred_fallthru
      _
    %v7400 = vld [vmem:[#allocation3] sm:$0xff]
    %v7401 = vld [vmem:[#allocation2] sm:$0xff]
    %v7402 = vld [vmem:[#allocation8] sm:$0xff]
    %v7403 = vld [vmem:[#allocation8 + $0x8] sm:$0xff]
    %v7404 = vld [vmem:[#allocation8 + $0x10] sm:$0xff]
    %v7405 = vld [vmem:[#allocation8 + $0x18] sm:$0xff]
    %v7406 = vld [vmem:[#allocation8 + $0x20] sm:$0xff]
    %v7407 = vld [vmem:[#allocation8 + $0x28] sm:$0xff]
    %v7408 = vld [vmem:[#allocation8 + $0x30] sm:$0xff]
    %v7409 = vld [vmem:[#allocation8 + $0x38] sm:$0xff]
    %v7410 = vld [vmem:[#allocation8 + $0x40] sm:$0xff]
    %v7411 = vld [vmem:[#allocation8 + $0x48] sm:$0xff]
    %v7412 = vld [vmem:[#allocation8 + $0x50] sm:$0xff]
    %v7413 = vld [vmem:[#allocation8 + $0x58] sm:$0xff]
    %v7414 = vld [vmem:[#allocation8 + $0x60] sm:$0xff]
    %v7415 = vld [vmem:[#allocation8 + $0x68] sm:$0xff]
    %v7416 = vld [vmem:[#allocation8 + $0x70] sm:$0xff]
    %v7417 = vld [vmem:[#allocation8 + $0x78] sm:$0xff]
    %v7418 = vld [vmem:[#allocation8 + $0x80] sm:$0xff]
    %v7419 = vld [vmem:[#allocation8 + $0x88] sm:$0xff]
    %v7420 = vld [vmem:[#allocation8 + $0x90] sm:$0xff]
    %v7421 = vld [vmem:[#allocation8 + $0x98] sm:$0xff]
    %v7422 = vld [vmem:[#allocation8 + $0xa0] sm:$0xff]
    %v7423 = vld [vmem:[#allocation8 + $0xa8] sm:$0xff]
    %v7424 = vld [vmem:[#allocation8 + $0xb0] sm:$0xff]
    %v7425 = vld [vmem:[#allocation8 + $0xb8] sm:$0xff]
    %v7426 = vld [vmem:[#allocation8 + $0xc0] sm:$0xff]
    %v7427 = vld [vmem:[#allocation8 + $0xc8] sm:$0xff]
    %v7428 = vld [vmem:[#allocation8 + $0xd0] sm:$0xff]
    %v7429 = vld [vmem:[#allocation8 + $0xd8] sm:$0xff]
    %v7430 = vld [vmem:[#allocation8 + $0xe0] sm:$0xff]
    %v7431 = vld [vmem:[#allocation8 + $0xe8] sm:$0xff]
    %v7432 = vld [vmem:[#allocation8 + $0xf0] sm:$0xff]
    %v7433 = vld [vmem:[#allocation8 + $0xf8] sm:$0xff]
    %v7434 = vld [vmem:[#allocation8 + $0x100] sm:$0xff]
    %v7435 = vld [vmem:[#allocation8 + $0x108] sm:$0xff]
    %v7436 = vld [vmem:[#allocation8 + $0x110] sm:$0xff]
    %v7437 = vld [vmem:[#allocation8 + $0x118] sm:$0xff]
    %v7438 = vld [vmem:[#allocation8 + $0x120] sm:$0xff]
    %v7439 = vld [vmem:[#allocation8 + $0x128] sm:$0xff]
    %v7440 = vld [vmem:[#allocation8 + $0x130] sm:$0xff]
    %v7441 = vld [vmem:[#allocation8 + $0x138] sm:$0xff]
    %v7442 = vld [vmem:[#allocation8 + $0x140] sm:$0xff]
    %v7443 = vld [vmem:[#allocation8 + $0x148] sm:$0xff]
    %v7444 = vld [vmem:[#allocation8 + $0x150] sm:$0xff]
    %v7445 = vld [vmem:[#allocation8 + $0x158] sm:$0xff]
    %v7446 = vld [vmem:[#allocation8 + $0x160] sm:$0xff]
    %v7447 = vld [vmem:[#allocation8 + $0x168] sm:$0xff]
    %v7448 = vld [vmem:[#allocation8 + $0x170] sm:$0xff]
    %v7449 = vld [vmem:[#allocation8 + $0x178] sm:$0xff]
    %v7450 = vld [vmem:[#allocation8 + $0x180] sm:$0xff]
    %v7451 = vld [vmem:[#allocation8 + $0x188] sm:$0xff]
    %v7452 = vld [vmem:[#allocation8 + $0x190] sm:$0xff]
    %v7453 = vld [vmem:[#allocation8 + $0x198] sm:$0xff]
    %v7454 = vld [vmem:[#allocation8 + $0x1a0] sm:$0xff]
    %v7455 = vld [vmem:[#allocation8 + $0x1a8] sm:$0xff]
    %v7456 = vld [vmem:[#allocation8 + $0x1b0] sm:$0xff]
    %v7457 = vld [vmem:[#allocation8 + $0x1b8] sm:$0xff]
    %v7458 = vld [vmem:[#allocation8 + $0x1c0] sm:$0xff]
    %v7459 = vld [vmem:[#allocation8 + $0x1c8] sm:$0xff]
    %v7460 = vld [vmem:[#allocation8 + $0x1d0] sm:$0xff]
    %v7461 = vld [vmem:[#allocation8 + $0x1d8] sm:$0xff]
    %v7462 = vld [vmem:[#allocation8 + $0x1e0] sm:$0xff]
    %v7463 = vld [vmem:[#allocation8 + $0x1e8] sm:$0xff]
    %v7464 = vld [vmem:[#allocation8 + $0x1f0] sm:$0xff]
    %v7465 = vld [vmem:[#allocation8 + $0x1f8] sm:$0xff]
    %v7466 = vld [vmem:[%s7] sm:$0xf]
    %v7468 = vlaneseq
    %v7469 = vshrl.u32 %v7468, 7
    %v7470 = vsub.s32 0, %v7469
    %v7471 = vrot.slane %v7466, %v7470
    %v7472 = vlaneseq
    %v7473 = vshrl.u32 %v7472, 7
    %v7474 = vsub.s32 1, %v7473
    %v7475 = vrot.slane %v7466, %v7474
    %v7476 = vlaneseq
    %v7477 = vshrl.u32 %v7476, 7
    %v7478 = vsub.s32 2, %v7477
    %v7479 = vrot.slane %v7466, %v7478
    %v7480 = vlaneseq
    %v7481 = vshrl.u32 %v7480, 7
    %v7482 = vsub.s32 3, %v7481
    %v7483 = vrot.slane %v7466, %v7482
    %v7489 = vunpack.c.l.b16 %v7400
    %v7490 = vunpack.c.h.b16 %v7400
    %v7491 = vpack.c.b16 %v7489, %v7489
    %v7492 = vpack.c.b16 %v7490, %v7490
    %v7559 = vunpack.c.l.b16 %v7402
    %v7560 = vunpack.c.h.b16 %v7402
    %v7561 = vunpack.c.l.b16 %v7403
    %v7562 = vunpack.c.h.b16 %v7403
    %v7563 = vunpack.c.l.b16 %v7404
    %v7564 = vunpack.c.h.b16 %v7404
    %v7565 = vunpack.c.l.b16 %v7405
    %v7566 = vunpack.c.h.b16 %v7405
    %v7567 = vunpack.c.l.b16 %v7406
    %v7568 = vunpack.c.h.b16 %v7406
    %v7569 = vunpack.c.l.b16 %v7407
    %v7570 = vunpack.c.h.b16 %v7407
    %v7571 = vunpack.c.l.b16 %v7408
    %v7572 = vunpack.c.h.b16 %v7408
    %v7573 = vunpack.c.l.b16 %v7409
    %v7574 = vunpack.c.h.b16 %v7409
    %v7575 = vunpack.c.l.b16 %v7410
    %v7576 = vunpack.c.h.b16 %v7410
    %v7577 = vunpack.c.l.b16 %v7411
    %v7578 = vunpack.c.h.b16 %v7411
    %v7579 = vunpack.c.l.b16 %v7412
    %v7580 = vunpack.c.h.b16 %v7412
    %v7581 = vunpack.c.l.b16 %v7413
    %v7582 = vunpack.c.h.b16 %v7413
    %v7583 = vunpack.c.l.b16 %v7414
    %v7584 = vunpack.c.h.b16 %v7414
    %v7585 = vunpack.c.l.b16 %v7415
    %v7586 = vunpack.c.h.b16 %v7415
    %v7587 = vunpack.c.l.b16 %v7416
    %v7588 = vunpack.c.h.b16 %v7416
    %v7589 = vunpack.c.l.b16 %v7417
    %v7590 = vunpack.c.h.b16 %v7417
    %v7591 = vunpack.c.l.b16 %v7418
    %v7592 = vunpack.c.h.b16 %v7418
    %v7593 = vunpack.c.l.b16 %v7419
    %v7594 = vunpack.c.h.b16 %v7419
    %v7595 = vunpack.c.l.b16 %v7420
    %v7596 = vunpack.c.h.b16 %v7420
    %v7597 = vunpack.c.l.b16 %v7421
    %v7598 = vunpack.c.h.b16 %v7421
    %v7599 = vunpack.c.l.b16 %v7422
    %v7600 = vunpack.c.h.b16 %v7422
    %v7601 = vunpack.c.l.b16 %v7423
    %v7602 = vunpack.c.h.b16 %v7423
    %v7603 = vunpack.c.l.b16 %v7424
    %v7604 = vunpack.c.h.b16 %v7424
    %v7605 = vunpack.c.l.b16 %v7425
    %v7606 = vunpack.c.h.b16 %v7425
    %v7607 = vunpack.c.l.b16 %v7426
    %v7608 = vunpack.c.h.b16 %v7426
    %v7609 = vunpack.c.l.b16 %v7427
    %v7610 = vunpack.c.h.b16 %v7427
    %v7611 = vunpack.c.l.b16 %v7428
    %v7612 = vunpack.c.h.b16 %v7428
    %v7613 = vunpack.c.l.b16 %v7429
    %v7614 = vunpack.c.h.b16 %v7429
    %v7615 = vunpack.c.l.b16 %v7430
    %v7616 = vunpack.c.h.b16 %v7430
    %v7617 = vunpack.c.l.b16 %v7431
    %v7618 = vunpack.c.h.b16 %v7431
    %v7619 = vunpack.c.l.b16 %v7432
    %v7620 = vunpack.c.h.b16 %v7432
    %v7621 = vunpack.c.l.b16 %v7433
    %v7622 = vunpack.c.h.b16 %v7433
    %v7623 = vunpack.c.l.b16 %v7434
    %v7624 = vunpack.c.h.b16 %v7434
    %v7625 = vunpack.c.l.b16 %v7435
    %v7626 = vunpack.c.h.b16 %v7435
    %v7627 = vunpack.c.l.b16 %v7436
    %v7628 = vunpack.c.h.b16 %v7436
    %v7629 = vunpack.c.l.b16 %v7437
    %v7630 = vunpack.c.h.b16 %v7437
    %v7631 = vunpack.c.l.b16 %v7438
    %v7632 = vunpack.c.h.b16 %v7438
    %v7633 = vunpack.c.l.b16 %v7439
    %v7634 = vunpack.c.h.b16 %v7439
    %v7635 = vunpack.c.l.b16 %v7440
    %v7636 = vunpack.c.h.b16 %v7440
    %v7637 = vunpack.c.l.b16 %v7441
    %v7638 = vunpack.c.h.b16 %v7441
    %v7639 = vunpack.c.l.b16 %v7442
    %v7640 = vunpack.c.h.b16 %v7442
    %v7641 = vunpack.c.l.b16 %v7443
    %v7642 = vunpack.c.h.b16 %v7443
    %v7643 = vunpack.c.l.b16 %v7444
    %v7644 = vunpack.c.h.b16 %v7444
    %v7645 = vunpack.c.l.b16 %v7445
    %v7646 = vunpack.c.h.b16 %v7445
    %v7647 = vunpack.c.l.b16 %v7446
    %v7648 = vunpack.c.h.b16 %v7446
    %v7649 = vunpack.c.l.b16 %v7447
    %v7650 = vunpack.c.h.b16 %v7447
    %v7651 = vunpack.c.l.b16 %v7448
    %v7652 = vunpack.c.h.b16 %v7448
    %v7653 = vunpack.c.l.b16 %v7449
    %v7654 = vunpack.c.h.b16 %v7449
    %v7655 = vunpack.c.l.b16 %v7450
    %v7656 = vunpack.c.h.b16 %v7450
    %v7657 = vunpack.c.l.b16 %v7451
    %v7658 = vunpack.c.h.b16 %v7451
    %v7659 = vunpack.c.l.b16 %v7452
    %v7660 = vunpack.c.h.b16 %v7452
    %v7661 = vunpack.c.l.b16 %v7453
    %v7662 = vunpack.c.h.b16 %v7453
    %v7663 = vunpack.c.l.b16 %v7454
    %v7664 = vunpack.c.h.b16 %v7454
    %v7665 = vunpack.c.l.b16 %v7455
    %v7666 = vunpack.c.h.b16 %v7455
    %v7667 = vunpack.c.l.b16 %v7456
    %v7668 = vunpack.c.h.b16 %v7456
    %v7669 = vunpack.c.l.b16 %v7457
    %v7670 = vunpack.c.h.b16 %v7457
    %v7671 = vunpack.c.l.b16 %v7458
    %v7672 = vunpack.c.h.b16 %v7458
    %v7673 = vunpack.c.l.b16 %v7459
    %v7674 = vunpack.c.h.b16 %v7459
    %v7675 = vunpack.c.l.b16 %v7460
    %v7676 = vunpack.c.h.b16 %v7460
    %v7677 = vunpack.c.l.b16 %v7461
    %v7678 = vunpack.c.h.b16 %v7461
    %v7679 = vunpack.c.l.b16 %v7462
    %v7680 = vunpack.c.h.b16 %v7462
    %v7681 = vunpack.c.l.b16 %v7463
    %v7682 = vunpack.c.h.b16 %v7463
    %v7683 = vunpack.c.l.b16 %v7464
    %v7684 = vunpack.c.h.b16 %v7464
    %v7685 = vunpack.c.l.b16 %v7465
    %v7686 = vunpack.c.h.b16 %v7465
    %v7687 = vpack.c.b16 %v7563, %v7559
    %v7688 = vpack.c.b16 %v7564, %v7560
    %v7689 = vpack.c.b16 %v7565, %v7561
    %v7690 = vpack.c.b16 %v7566, %v7562
    %v7691 = vpack.c.b16 %v7571, %v7567
    %v7692 = vpack.c.b16 %v7572, %v7568
    %v7693 = vpack.c.b16 %v7573, %v7569
    %v7694 = vpack.c.b16 %v7574, %v7570
    %v7695 = vpack.c.b16 %v7579, %v7575
    %v7696 = vpack.c.b16 %v7580, %v7576
    %v7697 = vpack.c.b16 %v7581, %v7577
    %v7698 = vpack.c.b16 %v7582, %v7578
    %v7699 = vpack.c.b16 %v7587, %v7583
    %v7700 = vpack.c.b16 %v7588, %v7584
    %v7701 = vpack.c.b16 %v7589, %v7585
    %v7702 = vpack.c.b16 %v7590, %v7586
    %v7703 = vpack.c.b16 %v7595, %v7591
    %v7704 = vpack.c.b16 %v7596, %v7592
    %v7705 = vpack.c.b16 %v7597, %v7593
    %v7706 = vpack.c.b16 %v7598, %v7594
    %v7707 = vpack.c.b16 %v7603, %v7599
    %v7708 = vpack.c.b16 %v7604, %v7600
    %v7709 = vpack.c.b16 %v7605, %v7601
    %v7710 = vpack.c.b16 %v7606, %v7602
    %v7711 = vpack.c.b16 %v7611, %v7607
    %v7712 = vpack.c.b16 %v7612, %v7608
    %v7713 = vpack.c.b16 %v7613, %v7609
    %v7714 = vpack.c.b16 %v7614, %v7610
    %v7715 = vpack.c.b16 %v7619, %v7615
    %v7716 = vpack.c.b16 %v7620, %v7616
    %v7717 = vpack.c.b16 %v7621, %v7617
    %v7718 = vpack.c.b16 %v7622, %v7618
    %v7719 = vpack.c.b16 %v7627, %v7623
    %v7720 = vpack.c.b16 %v7628, %v7624
    %v7721 = vpack.c.b16 %v7629, %v7625
    %v7722 = vpack.c.b16 %v7630, %v7626
    %v7723 = vpack.c.b16 %v7635, %v7631
    %v7724 = vpack.c.b16 %v7636, %v7632
    %v7725 = vpack.c.b16 %v7637, %v7633
    %v7726 = vpack.c.b16 %v7638, %v7634
    %v7727 = vpack.c.b16 %v7643, %v7639
    %v7728 = vpack.c.b16 %v7644, %v7640
    %v7729 = vpack.c.b16 %v7645, %v7641
    %v7730 = vpack.c.b16 %v7646, %v7642
    %v7731 = vpack.c.b16 %v7651, %v7647
    %v7732 = vpack.c.b16 %v7652, %v7648
    %v7733 = vpack.c.b16 %v7653, %v7649
    %v7734 = vpack.c.b16 %v7654, %v7650
    %v7735 = vpack.c.b16 %v7659, %v7655
    %v7736 = vpack.c.b16 %v7660, %v7656
    %v7737 = vpack.c.b16 %v7661, %v7657
    %v7738 = vpack.c.b16 %v7662, %v7658
    %v7739 = vpack.c.b16 %v7667, %v7663
    %v7740 = vpack.c.b16 %v7668, %v7664
    %v7741 = vpack.c.b16 %v7669, %v7665
    %v7742 = vpack.c.b16 %v7670, %v7666
    %v7743 = vpack.c.b16 %v7675, %v7671
    %v7744 = vpack.c.b16 %v7676, %v7672
    %v7745 = vpack.c.b16 %v7677, %v7673
    %v7746 = vpack.c.b16 %v7678, %v7674
    %v7747 = vpack.c.b16 %v7683, %v7679
    %v7748 = vpack.c.b16 %v7684, %v7680
    %v7749 = vpack.c.b16 %v7685, %v7681
    %v7750 = vpack.c.b16 %v7686, %v7682
    %7815 = vmatprep.subr.bf16.mxu0 %v7716
    %7816 = vmatpush1.bf16.msra.mxu0 %v7715
    %7817 = vmatprep.subr.bf16.mxu0 %v7712
    %7818 = vmatpush1.bf16.msra.mxu0 %v7711
    %7819 = vmatprep.subr.bf16.mxu0 %v7708
    %7820 = vmatpush1.bf16.msra.mxu0 %v7707
    %7821 = vmatprep.subr.bf16.mxu0 %v7704
    %7822 = vmatpush1.bf16.msra.mxu0 %v7703
    %7823 = vmatprep.subr.bf16.mxu0 %v7700
    %7824 = vmatpush1.bf16.msra.mxu0 %v7699
    %7825 = vmatprep.subr.bf16.mxu0 %v7696
    %7826 = vmatpush1.bf16.msra.mxu0 %v7695
    %7827 = vmatprep.subr.bf16.mxu0 %v7692
    %7828 = vmatpush1.bf16.msra.mxu0 %v7691
    %7829 = vmatprep.subr.bf16.mxu0 %v7688
    %7830 = vmatpush1.bf16.msra.mxu0 %v7687
    %7831 = vmatprep.subr.bf16.mxu0 %v7748
    %7832 = vmatpush2.bf16.msra.mxu0 %v7747
    %7833 = vmatprep.subr.bf16.mxu0 %v7744
    %7834 = vmatpush2.bf16.msra.mxu0 %v7743
    %7835 = vmatprep.subr.bf16.mxu0 %v7740
    %7836 = vmatpush2.bf16.msra.mxu0 %v7739
    %7837 = vmatprep.subr.bf16.mxu0 %v7736
    %7838 = vmatpush2.bf16.msra.mxu0 %v7735
    %7839 = vmatprep.subr.bf16.mxu0 %v7732
    %7840 = vmatpush2.bf16.msra.mxu0 %v7731
    %7841 = vmatprep.subr.bf16.mxu0 %v7728
    %7842 = vmatpush2.bf16.msra.mxu0 %v7727
    %7843 = vmatprep.subr.bf16.mxu0 %v7724
    %7844 = vmatpush2.bf16.msra.mxu0 %v7723
    %7845 = vmatprep.subr.bf16.mxu0 %v7720
    %7846 = vmatpush2.bf16.msra.mxu0 %v7719
    %7847 = vmatprep.mubr.bf16.mxu0 %v7492
    %7848 = vmatmul.mubr.bf16.gmra.mxu0 %v7491
    %v7849 = vpop.f32.mrf.mxu0
    %v7850 = vadd.f32 %v7471, %v7849
    %v7851 = vpop.f32.mrf.mxu0
    %v7852 = vadd.f32 %v7475, %v7851
    %v7853 = vpop.f32.mrf.mxu0
    %v7854 = vpop.f32.mrf.mxu0
    %7855 = vdwg.mxu0
    %7856 = vmatprep.subr.bf16.mxu0 %v7718
    %7857 = vmatpush1.bf16.msra.mxu0 %v7717
    %7858 = vmatprep.subr.bf16.mxu0 %v7714
    %7859 = vmatpush1.bf16.msra.mxu0 %v7713
    %7860 = vmatprep.subr.bf16.mxu0 %v7710
    %7861 = vmatpush1.bf16.msra.mxu0 %v7709
    %7862 = vmatprep.subr.bf16.mxu0 %v7706
    %7863 = vmatpush1.bf16.msra.mxu0 %v7705
    %7864 = vmatprep.subr.bf16.mxu0 %v7702
    %7865 = vmatpush1.bf16.msra.mxu0 %v7701
    %7866 = vmatprep.subr.bf16.mxu0 %v7698
    %7867 = vmatpush1.bf16.msra.mxu0 %v7697
    %7868 = vmatprep.subr.bf16.mxu0 %v7694
    %7869 = vmatpush1.bf16.msra.mxu0 %v7693
    %7870 = vmatprep.subr.bf16.mxu0 %v7690
    %7871 = vmatpush1.bf16.msra.mxu0 %v7689
    %7872 = vmatprep.subr.bf16.mxu0 %v7750
    %7873 = vmatpush2.bf16.msra.mxu0 %v7749
    %7874 = vmatprep.subr.bf16.mxu0 %v7746
    %7875 = vmatpush2.bf16.msra.mxu0 %v7745
    %7876 = vmatprep.subr.bf16.mxu0 %v7742
    %7877 = vmatpush2.bf16.msra.mxu0 %v7741
    %7878 = vmatprep.subr.bf16.mxu0 %v7738
    %7879 = vmatpush2.bf16.msra.mxu0 %v7737
    %7880 = vmatprep.subr.bf16.mxu0 %v7734
    %7881 = vmatpush2.bf16.msra.mxu0 %v7733
    %7882 = vmatprep.subr.bf16.mxu0 %v7730
    %7883 = vmatpush2.bf16.msra.mxu0 %v7729
    %7884 = vmatprep.subr.bf16.mxu0 %v7726
    %7885 = vmatpush2.bf16.msra.mxu0 %v7725
    %7886 = vmatprep.subr.bf16.mxu0 %v7722
    %7887 = vmatpush2.bf16.msra.mxu0 %v7721
    %7888 = vmatprep.mubr.bf16.mxu0 %v7492
    %7889 = vmatmul.mubr.bf16.gmra.mxu0 %v7491
    %v7890 = vpop.f32.mrf.mxu0
    %v7891 = vadd.f32 %v7479, %v7890
    %v7892 = vpop.f32.mrf.mxu0
    %v7893 = vadd.f32 %v7483, %v7892
    %v7894 = vpop.f32.mrf.mxu0
    %v7895 = vpop.f32.mrf.mxu0
    %7896 = vdwg.mxu0
    %v7897 = vxor.u32 %v7850, 2147483648
    %v7898 = vmul.f32 %v7897, 1.442695
    %v7899 = vpow.pop %v7898
    %v7900 = vadd.f32 %v7899, 1.0
    %v7901 = vrcp.pop %v7900
    %v7902 = vmul.f32 1.0, %v7901
    %v7903 = vxor.u32 %v7852, 2147483648
    %v7904 = vmul.f32 %v7903, 1.442695
    %v7905 = vpow.pop %v7904
    %v7906 = vadd.f32 %v7905, 1.0
    %v7907 = vrcp.pop %v7906
    %v7908 = vmul.f32 1.0, %v7907
    %v7909 = vtanh.pop %v7891
    %v7910 = vxor.u32 %v7893, 2147483648
    %v7911 = vmul.f32 %v7910, 1.442695
    %v7912 = vpow.pop %v7911
    %v7913 = vadd.f32 %v7912, 1.0
    %v7914 = vrcp.pop %v7913
    %v7915 = vmul.f32 1.0, %v7914
    %v7916 = vmul.f32 %v7908, %v7401
    %v7917 = vmul.f32 %v7902, %v7909
    %v7918 = vadd.f32 %v7916, %v7917
    %v7919 = vtanh.pop %v7918
    %v7920 = vmul.f32 %v7915, %v7919
    %7921 = vst [vmem:[#allocation2] sm:$0xff] %v7918
    %v7922 = vpack.c.bf16 %v7920, %v7920
    %7923 = vst [vmem:[#allocation3 + $0x4] sm:$0xf] %v7922
    %v7924 = vld [vmem:[%s8] sm:$0xf]
    %v7925 = vld [vmem:[%s8 + $0x4] sm:$0xf]
    %v7926 = vld [vmem:[%s8 + $0x8] sm:$0xf]
    %v7927 = vld [vmem:[%s8 + $0xc] sm:$0xf]
    %v7928 = vld [vmem:[%s8 + $0x10] sm:$0xf]
    %v7929 = vld [vmem:[%s8 + $0x14] sm:$0xf]
    %v7930 = vld [vmem:[%s8 + $0x18] sm:$0xf]
    %v7931 = vld [vmem:[%s8 + $0x1c] sm:$0xf]
    %v7932 = vld [vmem:[%s8 + $0x20] sm:$0xf]
    %v7933 = vld [vmem:[%s8 + $0x24] sm:$0xf]
    %v7934 = vld [vmem:[%s8 + $0x28] sm:$0xf]
    %v7935 = vld [vmem:[%s8 + $0x2c] sm:$0xf]
    %v7936 = vld [vmem:[%s8 + $0x30] sm:$0xf]
    %v7937 = vld [vmem:[%s8 + $0x34] sm:$0xf]
    %v7938 = vld [vmem:[%s8 + $0x38] sm:$0xf]
    %v7939 = vld [vmem:[%s8 + $0x3c] sm:$0xf]
    %v7940 = vld [vmem:[%s9] sm:$0x1]
    %v7942 = vlaneseq
    %v7943 = vshrl.u32 %v7942, 7
    %v7944 = vsub.s32 0, %v7943
    %v7945 = vrot.slane %v7940, %v7944
    %v7963 = vunpack.c.l.b16 %v7924
    %v7964 = vunpack.c.l.b16 %v7925
    %v7965 = vunpack.c.l.b16 %v7926
    %v7966 = vunpack.c.l.b16 %v7927
    %v7967 = vunpack.c.l.b16 %v7928
    %v7968 = vunpack.c.l.b16 %v7929
    %v7969 = vunpack.c.l.b16 %v7930
    %v7970 = vunpack.c.l.b16 %v7931
    %v7971 = vunpack.c.l.b16 %v7932
    %v7972 = vunpack.c.l.b16 %v7933
    %v7973 = vunpack.c.l.b16 %v7934
    %v7974 = vunpack.c.l.b16 %v7935
    %v7975 = vunpack.c.l.b16 %v7936
    %v7976 = vunpack.c.l.b16 %v7937
    %v7977 = vunpack.c.l.b16 %v7938
    %v7978 = vunpack.c.l.b16 %v7939
    %v7979 = vpack.c.b16 %v7964, %v7963
    %v7980 = vpack.c.b16 %v7966, %v7965
    %v7981 = vpack.c.b16 %v7968, %v7967
    %v7982 = vpack.c.b16 %v7970, %v7969
    %v7983 = vpack.c.b16 %v7972, %v7971
    %v7984 = vpack.c.b16 %v7974, %v7973
    %v7985 = vpack.c.b16 %v7976, %v7975
    %v7986 = vpack.c.b16 %v7978, %v7977
    %7995 = vmatprep.subr.bf16.mxu0 0
    %7996 = vmatpush1.bf16.msra.mxu0 %v7986
    %7997 = vmatprep.subr.bf16.mxu0 0
    %7998 = vmatpush1.bf16.msra.mxu0 %v7985
    %7999 = vmatprep.subr.bf16.mxu0 0
    %8000 = vmatpush1.bf16.msra.mxu0 %v7984
    %8001 = vmatprep.subr.bf16.mxu0 0
    %8002 = vmatpush1.bf16.msra.mxu0 %v7983
    %8003 = vmatprep.subr.bf16.mxu0 0
    %8004 = vmatpush1.bf16.msra.mxu0 %v7982
    %8005 = vmatprep.subr.bf16.mxu0 0
    %8006 = vmatpush1.bf16.msra.mxu0 %v7981
    %8007 = vmatprep.subr.bf16.mxu0 0
    %8008 = vmatpush1.bf16.msra.mxu0 %v7980
    %8009 = vmatprep.subr.bf16.mxu0 0
    %8010 = vmatpush1.bf16.msra.mxu0 %v7979
    %8011 = vmatprep.subr.bf16.mxu0 0
    %8012 = vmatpush2.bf16.msra.mxu0 0
    %8013 = vmatprep.subr.bf16.mxu0 0
    %8014 = vmatpush2.bf16.msra.mxu0 0
    %8015 = vmatprep.subr.bf16.mxu0 0
    %8016 = vmatpush2.bf16.msra.mxu0 0
    %8017 = vmatprep.subr.bf16.mxu0 0
    %8018 = vmatpush2.bf16.msra.mxu0 0
    %8019 = vmatprep.subr.bf16.mxu0 0
    %8020 = vmatpush2.bf16.msra.mxu0 0
    %8021 = vmatprep.subr.bf16.mxu0 0
    %8022 = vmatpush2.bf16.msra.mxu0 0
    %8023 = vmatprep.subr.bf16.mxu0 0
    %8024 = vmatpush2.bf16.msra.mxu0 0
    %8025 = vmatprep.subr.bf16.mxu0 0
    %8026 = vmatpush2.bf16.msra.mxu0 0
    %8027 = vmatprep.mubr.bf16.mxu0 0
    %8028 = vmatmul.mubr.bf16.gmra.mxu0 %v7922
    %v8029 = vpop.f32.mrf.mxu0
    %v8030 = vadd.f32 %v7945, %v8029
    %v8031 = vpop.f32.mrf.mxu0
    %v8032 = vpop.f32.mrf.mxu0
    %v8033 = vpop.f32.mrf.mxu0
    %8034 = vdwg.mxu0
    %s8035 = scalar_lea.vmem [#allocation9], 40
    %8036 = vst [vmem:[%s8035] sm:$0xff] %v8030
    %s8037 = sld [smem:[#allocation4 + $0x5]]
    %p8038 = scmp.ne.s32.totalorder %s8037, 0
    // Predicated region
    $region82: #{seq2seq_forward.1} parent=1 // pred_check
      %p8039 = pneg %p8038
    $region83: #{seq2seq_forward.1} parent=1 // pred_check_branch
      %8041 = sbr.rel (%p8039) target = $region85
    $region84: #{seq2seq_forward.1} parent=1 // pred_region
      %s8042 = scalar_lea.vmem %s2, 20
      %v8043 = vld [vmem:[%s8042] sm:$0xf]
      %8044 = vst [vmem:[#allocation3] sm:$0xf] %v8043
    $region85: #{seq2seq_forward.1} parent=1 // pred_fallthru
      _
    %p8045 = scmp.eq.s32.totalorder %s8037, 0
    // Predicated region
    $region86: #{seq2seq_forward.1} parent=1 // pred_check
      %p8046 = pneg %p8045
    $region87: #{seq2seq_forward.1} parent=1 // pred_check_branch
      %8048 = sbr.rel (%p8046) target = $region89
    $region88: #{seq2seq_forward.1} parent=1 // pred_region
      %8049 = vmax.xlane.f32.xlu0 %v8030
      %v8050 = vpop.xlane.xlu0 %8049
      %v8051 = vlaneseq
      %v8052 = vand.u32 %v8051, 127
      %vm8053 = vcmp.eq.f32.partialorder %v8030, %v8050
      %v8054 = vsel %vm8053, %v8052, 128
      %v8055 = vand.u32 %v8054, 65535
      %v8056 = vshra.s32 %v8054, 16
      %v8057 = vcvt.s32.f32 %v8055
      %v8058 = vcvt.s32.f32 %v8056
      %8059 = vmin.xlane.f32.xlu0 %v8058
      %v8060 = vpop.xlane.xlu0 %8059
      %vm8061 = vcmp.eq.f32.partialorder %v8058, %v8060
      %v8062 = vsel %vm8061, %v8057, inf
      %8063 = vmin.xlane.f32.xlu0 %v8062
      %v8064 = vpop.xlane.xlu0 %8063
      %v8065 = vcvt.f32.s32 %v8064
      %v8066 = vcvt.f32.s32 %v8060
      %v8067 = vshll.u32 %v8066, 16
      %v8068 = vadd.s32 %v8067, %v8065
      %vm8069 = vcmp.eq.s32.totalorder %v8052, %v8068
      %v8070 = vsel %vm8069, 1, 0
      %v8071 = vcvt.s32.f32 %v8070
      %v8072 = vpack.c.bf16 %v8071, %v8071
      %v8073 = vld [vmem:[%s3] sm:$0xf]
      %v8074 = vld [vmem:[%s3 + $0x4] sm:$0xf]
      %v8075 = vld [vmem:[%s3 + $0x8] sm:$0xf]
      %v8076 = vld [vmem:[%s3 + $0xc] sm:$0xf]
      %v8077 = vld [vmem:[%s3 + $0x10] sm:$0xf]
      %v8078 = vld [vmem:[%s3 + $0x14] sm:$0xf]
      %v8079 = vld [vmem:[%s3 + $0x18] sm:$0xf]
      %v8080 = vld [vmem:[%s3 + $0x1c] sm:$0xf]
      %v8081 = vld [vmem:[%s3 + $0x20] sm:$0xf]
      %v8082 = vld [vmem:[%s3 + $0x24] sm:$0xf]
      %v8083 = vld [vmem:[%s3 + $0x28] sm:$0xf]
      %v8084 = vld [vmem:[%s3 + $0x2c] sm:$0xf]
      %v8085 = vld [vmem:[%s3 + $0x30] sm:$0xf]
      %v8086 = vld [vmem:[%s3 + $0x34] sm:$0xf]
      %v8087 = vld [vmem:[%s3 + $0x38] sm:$0xf]
      %v8088 = vld [vmem:[%s3 + $0x3c] sm:$0xf]
      %v8105 = vunpack.c.l.b16 %v8073
      %v8106 = vunpack.c.l.b16 %v8074
      %v8107 = vunpack.c.l.b16 %v8075
      %v8108 = vunpack.c.l.b16 %v8076
      %v8109 = vunpack.c.l.b16 %v8077
      %v8110 = vunpack.c.l.b16 %v8078
      %v8111 = vunpack.c.l.b16 %v8079
      %v8112 = vunpack.c.l.b16 %v8080
      %v8113 = vunpack.c.l.b16 %v8081
      %v8114 = vunpack.c.l.b16 %v8082
      %v8115 = vunpack.c.l.b16 %v8083
      %v8116 = vunpack.c.l.b16 %v8084
      %v8117 = vunpack.c.l.b16 %v8085
      %v8118 = vunpack.c.l.b16 %v8086
      %v8119 = vunpack.c.l.b16 %v8087
      %v8120 = vunpack.c.l.b16 %v8088
      %v8121 = vpack.c.b16 %v8106, %v8105
      %v8122 = vpack.c.b16 %v8108, %v8107
      %v8123 = vpack.c.b16 %v8110, %v8109
      %v8124 = vpack.c.b16 %v8112, %v8111
      %v8125 = vpack.c.b16 %v8114, %v8113
      %v8126 = vpack.c.b16 %v8116, %v8115
      %v8127 = vpack.c.b16 %v8118, %v8117
      %v8128 = vpack.c.b16 %v8120, %v8119
      %8137 = vmatprep.subr.bf16.mxu0 0
      %8138 = vmatpush1.bf16.msra.mxu0 %v8128
      %8139 = vmatprep.subr.bf16.mxu0 0
      %8140 = vmatpush1.bf16.msra.mxu0 %v8127
      %8141 = vmatprep.subr.bf16.mxu0 0
      %8142 = vmatpush1.bf16.msra.mxu0 %v8126
      %8143 = vmatprep.subr.bf16.mxu0 0
      %8144 = vmatpush1.bf16.msra.mxu0 %v8125
      %8145 = vmatprep.subr.bf16.mxu0 0
      %8146 = vmatpush1.bf16.msra.mxu0 %v8124
      %8147 = vmatprep.subr.bf16.mxu0 0
      %8148 = vmatpush1.bf16.msra.mxu0 %v8123
      %8149 = vmatprep.subr.bf16.mxu0 0
      %8150 = vmatpush1.bf16.msra.mxu0 %v8122
      %8151 = vmatprep.subr.bf16.mxu0 0
      %8152 = vmatpush1.bf16.msra.mxu0 %v8121
      %8153 = vmatprep.subr.bf16.mxu0 0
      %8154 = vmatpush2.bf16.msra.mxu0 0
      %8155 = vmatprep.subr.bf16.mxu0 0
      %8156 = vmatpush2.bf16.msra.mxu0 0
      %8157 = vmatprep.subr.bf16.mxu0 0
      %8158 = vmatpush2.bf16.msra.mxu0 0
      %8159 = vmatprep.subr.bf16.mxu0 0
      %8160 = vmatpush2.bf16.msra.mxu0 0
      %8161 = vmatprep.subr.bf16.mxu0 0
      %8162 = vmatpush2.bf16.msra.mxu0 0
      %8163 = vmatprep.subr.bf16.mxu0 0
      %8164 = vmatpush2.bf16.msra.mxu0 0
      %8165 = vmatprep.subr.bf16.mxu0 0
      %8166 = vmatpush2.bf16.msra.mxu0 0
      %8167 = vmatprep.subr.bf16.mxu0 0
      %8168 = vmatpush2.bf16.msra.mxu0 0
      %8169 = vmatprep.mubr.bf16.mxu0 0
      %8170 = vmatmul.mubr.bf16.gmra.mxu0 %v8072
      %v8171 = vpop.f32.mrf.mxu0
      %v8172 = vadd.f32 0.0, %v8171
      %v8173 = vpop.f32.mrf.mxu0
      %v8174 = vpop.f32.mrf.mxu0
      %v8175 = vpop.f32.mrf.mxu0
      %8176 = vdwg.mxu0
      %v8177 = vpack.c.bf16 %v8172, %v8172
      %8178 = vst [vmem:[#allocation3] sm:$0xf] %v8177
    $region89: #{seq2seq_forward.1} parent=1 // pred_fallthru
      _
    %v8179 = vld [vmem:[#allocation3] sm:$0xff]
    %v8180 = vld [vmem:[#allocation2] sm:$0xff]
    %v8181 = vld [vmem:[#allocation8] sm:$0xff]
    %v8182 = vld [vmem:[#allocation8 + $0x8] sm:$0xff]
    %v8183 = vld [vmem:[#allocation8 + $0x10] sm:$0xff]
    %v8184 = vld [vmem:[#allocation8 + $0x18] sm:$0xff]
    %v8185 = vld [vmem:[#allocation8 + $0x20] sm:$0xff]
    %v8186 = vld [vmem:[#allocation8 + $0x28] sm:$0xff]
    %v8187 = vld [vmem:[#allocation8 + $0x30] sm:$0xff]
    %v8188 = vld [vmem:[#allocation8 + $0x38] sm:$0xff]
    %v8189 = vld [vmem:[#allocation8 + $0x40] sm:$0xff]
    %v8190 = vld [vmem:[#allocation8 + $0x48] sm:$0xff]
    %v8191 = vld [vmem:[#allocation8 + $0x50] sm:$0xff]
    %v8192 = vld [vmem:[#allocation8 + $0x58] sm:$0xff]
    %v8193 = vld [vmem:[#allocation8 + $0x60] sm:$0xff]
    %v8194 = vld [vmem:[#allocation8 + $0x68] sm:$0xff]
    %v8195 = vld [vmem:[#allocation8 + $0x70] sm:$0xff]
    %v8196 = vld [vmem:[#allocation8 + $0x78] sm:$0xff]
    %v8197 = vld [vmem:[#allocation8 + $0x80] sm:$0xff]
    %v8198 = vld [vmem:[#allocation8 + $0x88] sm:$0xff]
    %v8199 = vld [vmem:[#allocation8 + $0x90] sm:$0xff]
    %v8200 = vld [vmem:[#allocation8 + $0x98] sm:$0xff]
    %v8201 = vld [vmem:[#allocation8 + $0xa0] sm:$0xff]
    %v8202 = vld [vmem:[#allocation8 + $0xa8] sm:$0xff]
    %v8203 = vld [vmem:[#allocation8 + $0xb0] sm:$0xff]
    %v8204 = vld [vmem:[#allocation8 + $0xb8] sm:$0xff]
    %v8205 = vld [vmem:[#allocation8 + $0xc0] sm:$0xff]
    %v8206 = vld [vmem:[#allocation8 + $0xc8] sm:$0xff]
    %v8207 = vld [vmem:[#allocation8 + $0xd0] sm:$0xff]
    %v8208 = vld [vmem:[#allocation8 + $0xd8] sm:$0xff]
    %v8209 = vld [vmem:[#allocation8 + $0xe0] sm:$0xff]
    %v8210 = vld [vmem:[#allocation8 + $0xe8] sm:$0xff]
    %v8211 = vld [vmem:[#allocation8 + $0xf0] sm:$0xff]
    %v8212 = vld [vmem:[#allocation8 + $0xf8] sm:$0xff]
    %v8213 = vld [vmem:[#allocation8 + $0x100] sm:$0xff]
    %v8214 = vld [vmem:[#allocation8 + $0x108] sm:$0xff]
    %v8215 = vld [vmem:[#allocation8 + $0x110] sm:$0xff]
    %v8216 = vld [vmem:[#allocation8 + $0x118] sm:$0xff]
    %v8217 = vld [vmem:[#allocation8 + $0x120] sm:$0xff]
    %v8218 = vld [vmem:[#allocation8 + $0x128] sm:$0xff]
    %v8219 = vld [vmem:[#allocation8 + $0x130] sm:$0xff]
    %v8220 = vld [vmem:[#allocation8 + $0x138] sm:$0xff]
    %v8221 = vld [vmem:[#allocation8 + $0x140] sm:$0xff]
    %v8222 = vld [vmem:[#allocation8 + $0x148] sm:$0xff]
    %v8223 = vld [vmem:[#allocation8 + $0x150] sm:$0xff]
    %v8224 = vld [vmem:[#allocation8 + $0x158] sm:$0xff]
    %v8225 = vld [vmem:[#allocation8 + $0x160] sm:$0xff]
    %v8226 = vld [vmem:[#allocation8 + $0x168] sm:$0xff]
    %v8227 = vld [vmem:[#allocation8 + $0x170] sm:$0xff]
    %v8228 = vld [vmem:[#allocation8 + $0x178] sm:$0xff]
    %v8229 = vld [vmem:[#allocation8 + $0x180] sm:$0xff]
    %v8230 = vld [vmem:[#allocation8 + $0x188] sm:$0xff]
    %v8231 = vld [vmem:[#allocation8 + $0x190] sm:$0xff]
    %v8232 = vld [vmem:[#allocation8 + $0x198] sm:$0xff]
    %v8233 = vld [vmem:[#allocation8 + $0x1a0] sm:$0xff]
    %v8234 = vld [vmem:[#allocation8 + $0x1a8] sm:$0xff]
    %v8235 = vld [vmem:[#allocation8 + $0x1b0] sm:$0xff]
    %v8236 = vld [vmem:[#allocation8 + $0x1b8] sm:$0xff]
    %v8237 = vld [vmem:[#allocation8 + $0x1c0] sm:$0xff]
    %v8238 = vld [vmem:[#allocation8 + $0x1c8] sm:$0xff]
    %v8239 = vld [vmem:[#allocation8 + $0x1d0] sm:$0xff]
    %v8240 = vld [vmem:[#allocation8 + $0x1d8] sm:$0xff]
    %v8241 = vld [vmem:[#allocation8 + $0x1e0] sm:$0xff]
    %v8242 = vld [vmem:[#allocation8 + $0x1e8] sm:$0xff]
    %v8243 = vld [vmem:[#allocation8 + $0x1f0] sm:$0xff]
    %v8244 = vld [vmem:[#allocation8 + $0x1f8] sm:$0xff]
    %v8245 = vld [vmem:[%s7] sm:$0xf]
    %v8247 = vlaneseq
    %v8248 = vshrl.u32 %v8247, 7
    %v8249 = vsub.s32 0, %v8248
    %v8250 = vrot.slane %v8245, %v8249
    %v8251 = vlaneseq
    %v8252 = vshrl.u32 %v8251, 7
    %v8253 = vsub.s32 1, %v8252
    %v8254 = vrot.slane %v8245, %v8253
    %v8255 = vlaneseq
    %v8256 = vshrl.u32 %v8255, 7
    %v8257 = vsub.s32 2, %v8256
    %v8258 = vrot.slane %v8245, %v8257
    %v8259 = vlaneseq
    %v8260 = vshrl.u32 %v8259, 7
    %v8261 = vsub.s32 3, %v8260
    %v8262 = vrot.slane %v8245, %v8261
    %v8268 = vunpack.c.l.b16 %v8179
    %v8269 = vunpack.c.h.b16 %v8179
    %v8270 = vpack.c.b16 %v8268, %v8268
    %v8271 = vpack.c.b16 %v8269, %v8269
    %v8338 = vunpack.c.l.b16 %v8181
    %v8339 = vunpack.c.h.b16 %v8181
    %v8340 = vunpack.c.l.b16 %v8182
    %v8341 = vunpack.c.h.b16 %v8182
    %v8342 = vunpack.c.l.b16 %v8183
    %v8343 = vunpack.c.h.b16 %v8183
    %v8344 = vunpack.c.l.b16 %v8184
    %v8345 = vunpack.c.h.b16 %v8184
    %v8346 = vunpack.c.l.b16 %v8185
    %v8347 = vunpack.c.h.b16 %v8185
    %v8348 = vunpack.c.l.b16 %v8186
    %v8349 = vunpack.c.h.b16 %v8186
    %v8350 = vunpack.c.l.b16 %v8187
    %v8351 = vunpack.c.h.b16 %v8187
    %v8352 = vunpack.c.l.b16 %v8188
    %v8353 = vunpack.c.h.b16 %v8188
    %v8354 = vunpack.c.l.b16 %v8189
    %v8355 = vunpack.c.h.b16 %v8189
    %v8356 = vunpack.c.l.b16 %v8190
    %v8357 = vunpack.c.h.b16 %v8190
    %v8358 = vunpack.c.l.b16 %v8191
    %v8359 = vunpack.c.h.b16 %v8191
    %v8360 = vunpack.c.l.b16 %v8192
    %v8361 = vunpack.c.h.b16 %v8192
    %v8362 = vunpack.c.l.b16 %v8193
    %v8363 = vunpack.c.h.b16 %v8193
    %v8364 = vunpack.c.l.b16 %v8194
    %v8365 = vunpack.c.h.b16 %v8194
    %v8366 = vunpack.c.l.b16 %v8195
    %v8367 = vunpack.c.h.b16 %v8195
    %v8368 = vunpack.c.l.b16 %v8196
    %v8369 = vunpack.c.h.b16 %v8196
    %v8370 = vunpack.c.l.b16 %v8197
    %v8371 = vunpack.c.h.b16 %v8197
    %v8372 = vunpack.c.l.b16 %v8198
    %v8373 = vunpack.c.h.b16 %v8198
    %v8374 = vunpack.c.l.b16 %v8199
    %v8375 = vunpack.c.h.b16 %v8199
    %v8376 = vunpack.c.l.b16 %v8200
    %v8377 = vunpack.c.h.b16 %v8200
    %v8378 = vunpack.c.l.b16 %v8201
    %v8379 = vunpack.c.h.b16 %v8201
    %v8380 = vunpack.c.l.b16 %v8202
    %v8381 = vunpack.c.h.b16 %v8202
    %v8382 = vunpack.c.l.b16 %v8203
    %v8383 = vunpack.c.h.b16 %v8203
    %v8384 = vunpack.c.l.b16 %v8204
    %v8385 = vunpack.c.h.b16 %v8204
    %v8386 = vunpack.c.l.b16 %v8205
    %v8387 = vunpack.c.h.b16 %v8205
    %v8388 = vunpack.c.l.b16 %v8206
    %v8389 = vunpack.c.h.b16 %v8206
    %v8390 = vunpack.c.l.b16 %v8207
    %v8391 = vunpack.c.h.b16 %v8207
    %v8392 = vunpack.c.l.b16 %v8208
    %v8393 = vunpack.c.h.b16 %v8208
    %v8394 = vunpack.c.l.b16 %v8209
    %v8395 = vunpack.c.h.b16 %v8209
    %v8396 = vunpack.c.l.b16 %v8210
    %v8397 = vunpack.c.h.b16 %v8210
    %v8398 = vunpack.c.l.b16 %v8211
    %v8399 = vunpack.c.h.b16 %v8211
    %v8400 = vunpack.c.l.b16 %v8212
    %v8401 = vunpack.c.h.b16 %v8212
    %v8402 = vunpack.c.l.b16 %v8213
    %v8403 = vunpack.c.h.b16 %v8213
    %v8404 = vunpack.c.l.b16 %v8214
    %v8405 = vunpack.c.h.b16 %v8214
    %v8406 = vunpack.c.l.b16 %v8215
    %v8407 = vunpack.c.h.b16 %v8215
    %v8408 = vunpack.c.l.b16 %v8216
    %v8409 = vunpack.c.h.b16 %v8216
    %v8410 = vunpack.c.l.b16 %v8217
    %v8411 = vunpack.c.h.b16 %v8217
    %v8412 = vunpack.c.l.b16 %v8218
    %v8413 = vunpack.c.h.b16 %v8218
    %v8414 = vunpack.c.l.b16 %v8219
    %v8415 = vunpack.c.h.b16 %v8219
    %v8416 = vunpack.c.l.b16 %v8220
    %v8417 = vunpack.c.h.b16 %v8220
    %v8418 = vunpack.c.l.b16 %v8221
    %v8419 = vunpack.c.h.b16 %v8221
    %v8420 = vunpack.c.l.b16 %v8222
    %v8421 = vunpack.c.h.b16 %v8222
    %v8422 = vunpack.c.l.b16 %v8223
    %v8423 = vunpack.c.h.b16 %v8223
    %v8424 = vunpack.c.l.b16 %v8224
    %v8425 = vunpack.c.h.b16 %v8224
    %v8426 = vunpack.c.l.b16 %v8225
    %v8427 = vunpack.c.h.b16 %v8225
    %v8428 = vunpack.c.l.b16 %v8226
    %v8429 = vunpack.c.h.b16 %v8226
    %v8430 = vunpack.c.l.b16 %v8227
    %v8431 = vunpack.c.h.b16 %v8227
    %v8432 = vunpack.c.l.b16 %v8228
    %v8433 = vunpack.c.h.b16 %v8228
    %v8434 = vunpack.c.l.b16 %v8229
    %v8435 = vunpack.c.h.b16 %v8229
    %v8436 = vunpack.c.l.b16 %v8230
    %v8437 = vunpack.c.h.b16 %v8230
    %v8438 = vunpack.c.l.b16 %v8231
    %v8439 = vunpack.c.h.b16 %v8231
    %v8440 = vunpack.c.l.b16 %v8232
    %v8441 = vunpack.c.h.b16 %v8232
    %v8442 = vunpack.c.l.b16 %v8233
    %v8443 = vunpack.c.h.b16 %v8233
    %v8444 = vunpack.c.l.b16 %v8234
    %v8445 = vunpack.c.h.b16 %v8234
    %v8446 = vunpack.c.l.b16 %v8235
    %v8447 = vunpack.c.h.b16 %v8235
    %v8448 = vunpack.c.l.b16 %v8236
    %v8449 = vunpack.c.h.b16 %v8236
    %v8450 = vunpack.c.l.b16 %v8237
    %v8451 = vunpack.c.h.b16 %v8237
    %v8452 = vunpack.c.l.b16 %v8238
    %v8453 = vunpack.c.h.b16 %v8238
    %v8454 = vunpack.c.l.b16 %v8239
    %v8455 = vunpack.c.h.b16 %v8239
    %v8456 = vunpack.c.l.b16 %v8240
    %v8457 = vunpack.c.h.b16 %v8240
    %v8458 = vunpack.c.l.b16 %v8241
    %v8459 = vunpack.c.h.b16 %v8241
    %v8460 = vunpack.c.l.b16 %v8242
    %v8461 = vunpack.c.h.b16 %v8242
    %v8462 = vunpack.c.l.b16 %v8243
    %v8463 = vunpack.c.h.b16 %v8243
    %v8464 = vunpack.c.l.b16 %v8244
    %v8465 = vunpack.c.h.b16 %v8244
    %v8466 = vpack.c.b16 %v8342, %v8338
    %v8467 = vpack.c.b16 %v8343, %v8339
    %v8468 = vpack.c.b16 %v8344, %v8340
    %v8469 = vpack.c.b16 %v8345, %v8341
    %v8470 = vpack.c.b16 %v8350, %v8346
    %v8471 = vpack.c.b16 %v8351, %v8347
    %v8472 = vpack.c.b16 %v8352, %v8348
    %v8473 = vpack.c.b16 %v8353, %v8349
    %v8474 = vpack.c.b16 %v8358, %v8354
    %v8475 = vpack.c.b16 %v8359, %v8355
    %v8476 = vpack.c.b16 %v8360, %v8356
    %v8477 = vpack.c.b16 %v8361, %v8357
    %v8478 = vpack.c.b16 %v8366, %v8362
    %v8479 = vpack.c.b16 %v8367, %v8363
    %v8480 = vpack.c.b16 %v8368, %v8364
    %v8481 = vpack.c.b16 %v8369, %v8365
    %v8482 = vpack.c.b16 %v8374, %v8370
    %v8483 = vpack.c.b16 %v8375, %v8371
    %v8484 = vpack.c.b16 %v8376, %v8372
    %v8485 = vpack.c.b16 %v8377, %v8373
    %v8486 = vpack.c.b16 %v8382, %v8378
    %v8487 = vpack.c.b16 %v8383, %v8379
    %v8488 = vpack.c.b16 %v8384, %v8380
    %v8489 = vpack.c.b16 %v8385, %v8381
    %v8490 = vpack.c.b16 %v8390, %v8386
    %v8491 = vpack.c.b16 %v8391, %v8387
    %v8492 = vpack.c.b16 %v8392, %v8388
    %v8493 = vpack.c.b16 %v8393, %v8389
    %v8494 = vpack.c.b16 %v8398, %v8394
    %v8495 = vpack.c.b16 %v8399, %v8395
    %v8496 = vpack.c.b16 %v8400, %v8396
    %v8497 = vpack.c.b16 %v8401, %v8397
    %v8498 = vpack.c.b16 %v8406, %v8402
    %v8499 = vpack.c.b16 %v8407, %v8403
    %v8500 = vpack.c.b16 %v8408, %v8404
    %v8501 = vpack.c.b16 %v8409, %v8405
    %v8502 = vpack.c.b16 %v8414, %v8410
    %v8503 = vpack.c.b16 %v8415, %v8411
    %v8504 = vpack.c.b16 %v8416, %v8412
    %v8505 = vpack.c.b16 %v8417, %v8413
    %v8506 = vpack.c.b16 %v8422, %v8418
    %v8507 = vpack.c.b16 %v8423, %v8419
    %v8508 = vpack.c.b16 %v8424, %v8420
    %v8509 = vpack.c.b16 %v8425, %v8421
    %v8510 = vpack.c.b16 %v8430, %v8426
    %v8511 = vpack.c.b16 %v8431, %v8427
    %v8512 = vpack.c.b16 %v8432, %v8428
    %v8513 = vpack.c.b16 %v8433, %v8429
    %v8514 = vpack.c.b16 %v8438, %v8434
    %v8515 = vpack.c.b16 %v8439, %v8435
    %v8516 = vpack.c.b16 %v8440, %v8436
    %v8517 = vpack.c.b16 %v8441, %v8437
    %v8518 = vpack.c.b16 %v8446, %v8442
    %v8519 = vpack.c.b16 %v8447, %v8443
    %v8520 = vpack.c.b16 %v8448, %v8444
    %v8521 = vpack.c.b16 %v8449, %v8445
    %v8522 = vpack.c.b16 %v8454, %v8450
    %v8523 = vpack.c.b16 %v8455, %v8451
    %v8524 = vpack.c.b16 %v8456, %v8452
    %v8525 = vpack.c.b16 %v8457, %v8453
    %v8526 = vpack.c.b16 %v8462, %v8458
    %v8527 = vpack.c.b16 %v8463, %v8459
    %v8528 = vpack.c.b16 %v8464, %v8460
    %v8529 = vpack.c.b16 %v8465, %v8461
    %8594 = vmatprep.subr.bf16.mxu0 %v8495
    %8595 = vmatpush1.bf16.msra.mxu0 %v8494
    %8596 = vmatprep.subr.bf16.mxu0 %v8491
    %8597 = vmatpush1.bf16.msra.mxu0 %v8490
    %8598 = vmatprep.subr.bf16.mxu0 %v8487
    %8599 = vmatpush1.bf16.msra.mxu0 %v8486
    %8600 = vmatprep.subr.bf16.mxu0 %v8483
    %8601 = vmatpush1.bf16.msra.mxu0 %v8482
    %8602 = vmatprep.subr.bf16.mxu0 %v8479
    %8603 = vmatpush1.bf16.msra.mxu0 %v8478
    %8604 = vmatprep.subr.bf16.mxu0 %v8475
    %8605 = vmatpush1.bf16.msra.mxu0 %v8474
    %8606 = vmatprep.subr.bf16.mxu0 %v8471
    %8607 = vmatpush1.bf16.msra.mxu0 %v8470
    %8608 = vmatprep.subr.bf16.mxu0 %v8467
    %8609 = vmatpush1.bf16.msra.mxu0 %v8466
    %8610 = vmatprep.subr.bf16.mxu0 %v8527
    %8611 = vmatpush2.bf16.msra.mxu0 %v8526
    %8612 = vmatprep.subr.bf16.mxu0 %v8523
    %8613 = vmatpush2.bf16.msra.mxu0 %v8522
    %8614 = vmatprep.subr.bf16.mxu0 %v8519
    %8615 = vmatpush2.bf16.msra.mxu0 %v8518
    %8616 = vmatprep.subr.bf16.mxu0 %v8515
    %8617 = vmatpush2.bf16.msra.mxu0 %v8514
    %8618 = vmatprep.subr.bf16.mxu0 %v8511
    %8619 = vmatpush2.bf16.msra.mxu0 %v8510
    %8620 = vmatprep.subr.bf16.mxu0 %v8507
    %8621 = vmatpush2.bf16.msra.mxu0 %v8506
    %8622 = vmatprep.subr.bf16.mxu0 %v8503
    %8623 = vmatpush2.bf16.msra.mxu0 %v8502
    %8624 = vmatprep.subr.bf16.mxu0 %v8499
    %8625 = vmatpush2.bf16.msra.mxu0 %v8498
    %8626 = vmatprep.mubr.bf16.mxu0 %v8271
    %8627 = vmatmul.mubr.bf16.gmra.mxu0 %v8270
    %v8628 = vpop.f32.mrf.mxu0
    %v8629 = vadd.f32 %v8250, %v8628
    %v8630 = vpop.f32.mrf.mxu0
    %v8631 = vadd.f32 %v8254, %v8630
    %v8632 = vpop.f32.mrf.mxu0
    %v8633 = vpop.f32.mrf.mxu0
    %8634 = vdwg.mxu0
    %8635 = vmatprep.subr.bf16.mxu0 %v8497
    %8636 = vmatpush1.bf16.msra.mxu0 %v8496
    %8637 = vmatprep.subr.bf16.mxu0 %v8493
    %8638 = vmatpush1.bf16.msra.mxu0 %v8492
    %8639 = vmatprep.subr.bf16.mxu0 %v8489
    %8640 = vmatpush1.bf16.msra.mxu0 %v8488
    %8641 = vmatprep.subr.bf16.mxu0 %v8485
    %8642 = vmatpush1.bf16.msra.mxu0 %v8484
    %8643 = vmatprep.subr.bf16.mxu0 %v8481
    %8644 = vmatpush1.bf16.msra.mxu0 %v8480
    %8645 = vmatprep.subr.bf16.mxu0 %v8477
    %8646 = vmatpush1.bf16.msra.mxu0 %v8476
    %8647 = vmatprep.subr.bf16.mxu0 %v8473
    %8648 = vmatpush1.bf16.msra.mxu0 %v8472
    %8649 = vmatprep.subr.bf16.mxu0 %v8469
    %8650 = vmatpush1.bf16.msra.mxu0 %v8468
    %8651 = vmatprep.subr.bf16.mxu0 %v8529
    %8652 = vmatpush2.bf16.msra.mxu0 %v8528
    %8653 = vmatprep.subr.bf16.mxu0 %v8525
    %8654 = vmatpush2.bf16.msra.mxu0 %v8524
    %8655 = vmatprep.subr.bf16.mxu0 %v8521
    %8656 = vmatpush2.bf16.msra.mxu0 %v8520
    %8657 = vmatprep.subr.bf16.mxu0 %v8517
    %8658 = vmatpush2.bf16.msra.mxu0 %v8516
    %8659 = vmatprep.subr.bf16.mxu0 %v8513
    %8660 = vmatpush2.bf16.msra.mxu0 %v8512
    %8661 = vmatprep.subr.bf16.mxu0 %v8509
    %8662 = vmatpush2.bf16.msra.mxu0 %v8508
    %8663 = vmatprep.subr.bf16.mxu0 %v8505
    %8664 = vmatpush2.bf16.msra.mxu0 %v8504
    %8665 = vmatprep.subr.bf16.mxu0 %v8501
    %8666 = vmatpush2.bf16.msra.mxu0 %v8500
    %8667 = vmatprep.mubr.bf16.mxu0 %v8271
    %8668 = vmatmul.mubr.bf16.gmra.mxu0 %v8270
    %v8669 = vpop.f32.mrf.mxu0
    %v8670 = vadd.f32 %v8258, %v8669
    %v8671 = vpop.f32.mrf.mxu0
    %v8672 = vadd.f32 %v8262, %v8671
    %v8673 = vpop.f32.mrf.mxu0
    %v8674 = vpop.f32.mrf.mxu0
    %8675 = vdwg.mxu0
    %v8676 = vxor.u32 %v8629, 2147483648
    %v8677 = vmul.f32 %v8676, 1.442695
    %v8678 = vpow.pop %v8677
    %v8679 = vadd.f32 %v8678, 1.0
    %v8680 = vrcp.pop %v8679
    %v8681 = vmul.f32 1.0, %v8680
    %v8682 = vxor.u32 %v8631, 2147483648
    %v8683 = vmul.f32 %v8682, 1.442695
    %v8684 = vpow.pop %v8683
    %v8685 = vadd.f32 %v8684, 1.0
    %v8686 = vrcp.pop %v8685
    %v8687 = vmul.f32 1.0, %v8686
    %v8688 = vtanh.pop %v8670
    %v8689 = vxor.u32 %v8672, 2147483648
    %v8690 = vmul.f32 %v8689, 1.442695
    %v8691 = vpow.pop %v8690
    %v8692 = vadd.f32 %v8691, 1.0
    %v8693 = vrcp.pop %v8692
    %v8694 = vmul.f32 1.0, %v8693
    %v8695 = vmul.f32 %v8687, %v8180
    %v8696 = vmul.f32 %v8681, %v8688
    %v8697 = vadd.f32 %v8695, %v8696
    %v8698 = vtanh.pop %v8697
    %v8699 = vmul.f32 %v8694, %v8698
    %8700 = vst [vmem:[#allocation2] sm:$0xff] %v8697
    %v8701 = vpack.c.bf16 %v8699, %v8699
    %8702 = vst [vmem:[#allocation3 + $0x4] sm:$0xf] %v8701
    %v8703 = vld [vmem:[%s8] sm:$0xf]
    %v8704 = vld [vmem:[%s8 + $0x4] sm:$0xf]
    %v8705 = vld [vmem:[%s8 + $0x8] sm:$0xf]
    %v8706 = vld [vmem:[%s8 + $0xc] sm:$0xf]
    %v8707 = vld [vmem:[%s8 + $0x10] sm:$0xf]
    %v8708 = vld [vmem:[%s8 + $0x14] sm:$0xf]
    %v8709 = vld [vmem:[%s8 + $0x18] sm:$0xf]
    %v8710 = vld [vmem:[%s8 + $0x1c] sm:$0xf]
    %v8711 = vld [vmem:[%s8 + $0x20] sm:$0xf]
    %v8712 = vld [vmem:[%s8 + $0x24] sm:$0xf]
    %v8713 = vld [vmem:[%s8 + $0x28] sm:$0xf]
    %v8714 = vld [vmem:[%s8 + $0x2c] sm:$0xf]
    %v8715 = vld [vmem:[%s8 + $0x30] sm:$0xf]
    %v8716 = vld [vmem:[%s8 + $0x34] sm:$0xf]
    %v8717 = vld [vmem:[%s8 + $0x38] sm:$0xf]
    %v8718 = vld [vmem:[%s8 + $0x3c] sm:$0xf]
    %v8719 = vld [vmem:[%s9] sm:$0x1]
    %v8721 = vlaneseq
    %v8722 = vshrl.u32 %v8721, 7
    %v8723 = vsub.s32 0, %v8722
    %v8724 = vrot.slane %v8719, %v8723
    %v8742 = vunpack.c.l.b16 %v8703
    %v8743 = vunpack.c.l.b16 %v8704
    %v8744 = vunpack.c.l.b16 %v8705
    %v8745 = vunpack.c.l.b16 %v8706
    %v8746 = vunpack.c.l.b16 %v8707
    %v8747 = vunpack.c.l.b16 %v8708
    %v8748 = vunpack.c.l.b16 %v8709
    %v8749 = vunpack.c.l.b16 %v8710
    %v8750 = vunpack.c.l.b16 %v8711
    %v8751 = vunpack.c.l.b16 %v8712
    %v8752 = vunpack.c.l.b16 %v8713
    %v8753 = vunpack.c.l.b16 %v8714
    %v8754 = vunpack.c.l.b16 %v8715
    %v8755 = vunpack.c.l.b16 %v8716
    %v8756 = vunpack.c.l.b16 %v8717
    %v8757 = vunpack.c.l.b16 %v8718
    %v8758 = vpack.c.b16 %v8743, %v8742
    %v8759 = vpack.c.b16 %v8745, %v8744
    %v8760 = vpack.c.b16 %v8747, %v8746
    %v8761 = vpack.c.b16 %v8749, %v8748
    %v8762 = vpack.c.b16 %v8751, %v8750
    %v8763 = vpack.c.b16 %v8753, %v8752
    %v8764 = vpack.c.b16 %v8755, %v8754
    %v8765 = vpack.c.b16 %v8757, %v8756
    %8774 = vmatprep.subr.bf16.mxu0 0
    %8775 = vmatpush1.bf16.msra.mxu0 %v8765
    %8776 = vmatprep.subr.bf16.mxu0 0
    %8777 = vmatpush1.bf16.msra.mxu0 %v8764
    %8778 = vmatprep.subr.bf16.mxu0 0
    %8779 = vmatpush1.bf16.msra.mxu0 %v8763
    %8780 = vmatprep.subr.bf16.mxu0 0
    %8781 = vmatpush1.bf16.msra.mxu0 %v8762
    %8782 = vmatprep.subr.bf16.mxu0 0
    %8783 = vmatpush1.bf16.msra.mxu0 %v8761
    %8784 = vmatprep.subr.bf16.mxu0 0
    %8785 = vmatpush1.bf16.msra.mxu0 %v8760
    %8786 = vmatprep.subr.bf16.mxu0 0
    %8787 = vmatpush1.bf16.msra.mxu0 %v8759
    %8788 = vmatprep.subr.bf16.mxu0 0
    %8789 = vmatpush1.bf16.msra.mxu0 %v8758
    %8790 = vmatprep.subr.bf16.mxu0 0
    %8791 = vmatpush2.bf16.msra.mxu0 0
    %8792 = vmatprep.subr.bf16.mxu0 0
    %8793 = vmatpush2.bf16.msra.mxu0 0
    %8794 = vmatprep.subr.bf16.mxu0 0
    %8795 = vmatpush2.bf16.msra.mxu0 0
    %8796 = vmatprep.subr.bf16.mxu0 0
    %8797 = vmatpush2.bf16.msra.mxu0 0
    %8798 = vmatprep.subr.bf16.mxu0 0
    %8799 = vmatpush2.bf16.msra.mxu0 0
    %8800 = vmatprep.subr.bf16.mxu0 0
    %8801 = vmatpush2.bf16.msra.mxu0 0
    %8802 = vmatprep.subr.bf16.mxu0 0
    %8803 = vmatpush2.bf16.msra.mxu0 0
    %8804 = vmatprep.subr.bf16.mxu0 0
    %8805 = vmatpush2.bf16.msra.mxu0 0
    %8806 = vmatprep.mubr.bf16.mxu0 0
    %8807 = vmatmul.mubr.bf16.gmra.mxu0 %v8701
    %v8808 = vpop.f32.mrf.mxu0
    %v8809 = vadd.f32 %v8724, %v8808
    %v8810 = vpop.f32.mrf.mxu0
    %v8811 = vpop.f32.mrf.mxu0
    %v8812 = vpop.f32.mrf.mxu0
    %8813 = vdwg.mxu0
    %s8814 = scalar_lea.vmem [#allocation9], 48
    %8815 = vst [vmem:[%s8814] sm:$0xff] %v8809
    %s8816 = sld [smem:[#allocation4 + $0x6]]
    %p8817 = scmp.ne.s32.totalorder %s8816, 0
    // Predicated region
    $region90: #{seq2seq_forward.1} parent=1 // pred_check
      %p8818 = pneg %p8817
    $region91: #{seq2seq_forward.1} parent=1 // pred_check_branch
      %8820 = sbr.rel (%p8818) target = $region93
    $region92: #{seq2seq_forward.1} parent=1 // pred_region
      %s8821 = scalar_lea.vmem %s2, 24
      %v8822 = vld [vmem:[%s8821] sm:$0xf]
      %8823 = vst [vmem:[#allocation3] sm:$0xf] %v8822
    $region93: #{seq2seq_forward.1} parent=1 // pred_fallthru
      _
    %p8824 = scmp.eq.s32.totalorder %s8816, 0
    // Predicated region
    $region94: #{seq2seq_forward.1} parent=1 // pred_check
      %p8825 = pneg %p8824
    $region95: #{seq2seq_forward.1} parent=1 // pred_check_branch
      %8827 = sbr.rel (%p8825) target = $region97
    $region96: #{seq2seq_forward.1} parent=1 // pred_region
      %8828 = vmax.xlane.f32.xlu0 %v8809
      %v8829 = vpop.xlane.xlu0 %8828
      %v8830 = vlaneseq
      %v8831 = vand.u32 %v8830, 127
      %vm8832 = vcmp.eq.f32.partialorder %v8809, %v8829
      %v8833 = vsel %vm8832, %v8831, 128
      %v8834 = vand.u32 %v8833, 65535
      %v8835 = vshra.s32 %v8833, 16
      %v8836 = vcvt.s32.f32 %v8834
      %v8837 = vcvt.s32.f32 %v8835
      %8838 = vmin.xlane.f32.xlu0 %v8837
      %v8839 = vpop.xlane.xlu0 %8838
      %vm8840 = vcmp.eq.f32.partialorder %v8837, %v8839
      %v8841 = vsel %vm8840, %v8836, inf
      %8842 = vmin.xlane.f32.xlu0 %v8841
      %v8843 = vpop.xlane.xlu0 %8842
      %v8844 = vcvt.f32.s32 %v8843
      %v8845 = vcvt.f32.s32 %v8839
      %v8846 = vshll.u32 %v8845, 16
      %v8847 = vadd.s32 %v8846, %v8844
      %vm8848 = vcmp.eq.s32.totalorder %v8831, %v8847
      %v8849 = vsel %vm8848, 1, 0
      %v8850 = vcvt.s32.f32 %v8849
      %v8851 = vpack.c.bf16 %v8850, %v8850
      %v8852 = vld [vmem:[%s3] sm:$0xf]
      %v8853 = vld [vmem:[%s3 + $0x4] sm:$0xf]
      %v8854 = vld [vmem:[%s3 + $0x8] sm:$0xf]
      %v8855 = vld [vmem:[%s3 + $0xc] sm:$0xf]
      %v8856 = vld [vmem:[%s3 + $0x10] sm:$0xf]
      %v8857 = vld [vmem:[%s3 + $0x14] sm:$0xf]
      %v8858 = vld [vmem:[%s3 + $0x18] sm:$0xf]
      %v8859 = vld [vmem:[%s3 + $0x1c] sm:$0xf]
      %v8860 = vld [vmem:[%s3 + $0x20] sm:$0xf]
      %v8861 = vld [vmem:[%s3 + $0x24] sm:$0xf]
      %v8862 = vld [vmem:[%s3 + $0x28] sm:$0xf]
      %v8863 = vld [vmem:[%s3 + $0x2c] sm:$0xf]
      %v8864 = vld [vmem:[%s3 + $0x30] sm:$0xf]
      %v8865 = vld [vmem:[%s3 + $0x34] sm:$0xf]
      %v8866 = vld [vmem:[%s3 + $0x38] sm:$0xf]
      %v8867 = vld [vmem:[%s3 + $0x3c] sm:$0xf]
      %v8884 = vunpack.c.l.b16 %v8852
      %v8885 = vunpack.c.l.b16 %v8853
      %v8886 = vunpack.c.l.b16 %v8854
      %v8887 = vunpack.c.l.b16 %v8855
      %v8888 = vunpack.c.l.b16 %v8856
      %v8889 = vunpack.c.l.b16 %v8857
      %v8890 = vunpack.c.l.b16 %v8858
      %v8891 = vunpack.c.l.b16 %v8859
      %v8892 = vunpack.c.l.b16 %v8860
      %v8893 = vunpack.c.l.b16 %v8861
      %v8894 = vunpack.c.l.b16 %v8862
      %v8895 = vunpack.c.l.b16 %v8863
      %v8896 = vunpack.c.l.b16 %v8864
      %v8897 = vunpack.c.l.b16 %v8865
      %v8898 = vunpack.c.l.b16 %v8866
      %v8899 = vunpack.c.l.b16 %v8867
      %v8900 = vpack.c.b16 %v8885, %v8884
      %v8901 = vpack.c.b16 %v8887, %v8886
      %v8902 = vpack.c.b16 %v8889, %v8888
      %v8903 = vpack.c.b16 %v8891, %v8890
      %v8904 = vpack.c.b16 %v8893, %v8892
      %v8905 = vpack.c.b16 %v8895, %v8894
      %v8906 = vpack.c.b16 %v8897, %v8896
      %v8907 = vpack.c.b16 %v8899, %v8898
      %8916 = vmatprep.subr.bf16.mxu0 0
      %8917 = vmatpush1.bf16.msra.mxu0 %v8907
      %8918 = vmatprep.subr.bf16.mxu0 0
      %8919 = vmatpush1.bf16.msra.mxu0 %v8906
      %8920 = vmatprep.subr.bf16.mxu0 0
      %8921 = vmatpush1.bf16.msra.mxu0 %v8905
      %8922 = vmatprep.subr.bf16.mxu0 0
      %8923 = vmatpush1.bf16.msra.mxu0 %v8904
      %8924 = vmatprep.subr.bf16.mxu0 0
      %8925 = vmatpush1.bf16.msra.mxu0 %v8903
      %8926 = vmatprep.subr.bf16.mxu0 0
      %8927 = vmatpush1.bf16.msra.mxu0 %v8902
      %8928 = vmatprep.subr.bf16.mxu0 0
      %8929 = vmatpush1.bf16.msra.mxu0 %v8901
      %8930 = vmatprep.subr.bf16.mxu0 0
      %8931 = vmatpush1.bf16.msra.mxu0 %v8900
      %8932 = vmatprep.subr.bf16.mxu0 0
      %8933 = vmatpush2.bf16.msra.mxu0 0
      %8934 = vmatprep.subr.bf16.mxu0 0
      %8935 = vmatpush2.bf16.msra.mxu0 0
      %8936 = vmatprep.subr.bf16.mxu0 0
      %8937 = vmatpush2.bf16.msra.mxu0 0
      %8938 = vmatprep.subr.bf16.mxu0 0
      %8939 = vmatpush2.bf16.msra.mxu0 0
      %8940 = vmatprep.subr.bf16.mxu0 0
      %8941 = vmatpush2.bf16.msra.mxu0 0
      %8942 = vmatprep.subr.bf16.mxu0 0
      %8943 = vmatpush2.bf16.msra.mxu0 0
      %8944 = vmatprep.subr.bf16.mxu0 0
      %8945 = vmatpush2.bf16.msra.mxu0 0
      %8946 = vmatprep.subr.bf16.mxu0 0
      %8947 = vmatpush2.bf16.msra.mxu0 0
      %8948 = vmatprep.mubr.bf16.mxu0 0
      %8949 = vmatmul.mubr.bf16.gmra.mxu0 %v8851
      %v8950 = vpop.f32.mrf.mxu0
      %v8951 = vadd.f32 0.0, %v8950
      %v8952 = vpop.f32.mrf.mxu0
      %v8953 = vpop.f32.mrf.mxu0
      %v8954 = vpop.f32.mrf.mxu0
      %8955 = vdwg.mxu0
      %v8956 = vpack.c.bf16 %v8951, %v8951
      %8957 = vst [vmem:[#allocation3] sm:$0xf] %v8956
    $region97: #{seq2seq_forward.1} parent=1 // pred_fallthru
      _
    %v8958 = vld [vmem:[#allocation3] sm:$0xff]
    %v8959 = vld [vmem:[#allocation2] sm:$0xff]
    %v8960 = vld [vmem:[#allocation8] sm:$0xff]
    %v8961 = vld [vmem:[#allocation8 + $0x8] sm:$0xff]
    %v8962 = vld [vmem:[#allocation8 + $0x10] sm:$0xff]
    %v8963 = vld [vmem:[#allocation8 + $0x18] sm:$0xff]
    %v8964 = vld [vmem:[#allocation8 + $0x20] sm:$0xff]
    %v8965 = vld [vmem:[#allocation8 + $0x28] sm:$0xff]
    %v8966 = vld [vmem:[#allocation8 + $0x30] sm:$0xff]
    %v8967 = vld [vmem:[#allocation8 + $0x38] sm:$0xff]
    %v8968 = vld [vmem:[#allocation8 + $0x40] sm:$0xff]
    %v8969 = vld [vmem:[#allocation8 + $0x48] sm:$0xff]
    %v8970 = vld [vmem:[#allocation8 + $0x50] sm:$0xff]
    %v8971 = vld [vmem:[#allocation8 + $0x58] sm:$0xff]
    %v8972 = vld [vmem:[#allocation8 + $0x60] sm:$0xff]
    %v8973 = vld [vmem:[#allocation8 + $0x68] sm:$0xff]
    %v8974 = vld [vmem:[#allocation8 + $0x70] sm:$0xff]
    %v8975 = vld [vmem:[#allocation8 + $0x78] sm:$0xff]
    %v8976 = vld [vmem:[#allocation8 + $0x80] sm:$0xff]
    %v8977 = vld [vmem:[#allocation8 + $0x88] sm:$0xff]
    %v8978 = vld [vmem:[#allocation8 + $0x90] sm:$0xff]
    %v8979 = vld [vmem:[#allocation8 + $0x98] sm:$0xff]
    %v8980 = vld [vmem:[#allocation8 + $0xa0] sm:$0xff]
    %v8981 = vld [vmem:[#allocation8 + $0xa8] sm:$0xff]
    %v8982 = vld [vmem:[#allocation8 + $0xb0] sm:$0xff]
    %v8983 = vld [vmem:[#allocation8 + $0xb8] sm:$0xff]
    %v8984 = vld [vmem:[#allocation8 + $0xc0] sm:$0xff]
    %v8985 = vld [vmem:[#allocation8 + $0xc8] sm:$0xff]
    %v8986 = vld [vmem:[#allocation8 + $0xd0] sm:$0xff]
    %v8987 = vld [vmem:[#allocation8 + $0xd8] sm:$0xff]
    %v8988 = vld [vmem:[#allocation8 + $0xe0] sm:$0xff]
    %v8989 = vld [vmem:[#allocation8 + $0xe8] sm:$0xff]
    %v8990 = vld [vmem:[#allocation8 + $0xf0] sm:$0xff]
    %v8991 = vld [vmem:[#allocation8 + $0xf8] sm:$0xff]
    %v8992 = vld [vmem:[#allocation8 + $0x100] sm:$0xff]
    %v8993 = vld [vmem:[#allocation8 + $0x108] sm:$0xff]
    %v8994 = vld [vmem:[#allocation8 + $0x110] sm:$0xff]
    %v8995 = vld [vmem:[#allocation8 + $0x118] sm:$0xff]
    %v8996 = vld [vmem:[#allocation8 + $0x120] sm:$0xff]
    %v8997 = vld [vmem:[#allocation8 + $0x128] sm:$0xff]
    %v8998 = vld [vmem:[#allocation8 + $0x130] sm:$0xff]
    %v8999 = vld [vmem:[#allocation8 + $0x138] sm:$0xff]
    %v9000 = vld [vmem:[#allocation8 + $0x140] sm:$0xff]
    %v9001 = vld [vmem:[#allocation8 + $0x148] sm:$0xff]
    %v9002 = vld [vmem:[#allocation8 + $0x150] sm:$0xff]
    %v9003 = vld [vmem:[#allocation8 + $0x158] sm:$0xff]
    %v9004 = vld [vmem:[#allocation8 + $0x160] sm:$0xff]
    %v9005 = vld [vmem:[#allocation8 + $0x168] sm:$0xff]
    %v9006 = vld [vmem:[#allocation8 + $0x170] sm:$0xff]
    %v9007 = vld [vmem:[#allocation8 + $0x178] sm:$0xff]
    %v9008 = vld [vmem:[#allocation8 + $0x180] sm:$0xff]
    %v9009 = vld [vmem:[#allocation8 + $0x188] sm:$0xff]
    %v9010 = vld [vmem:[#allocation8 + $0x190] sm:$0xff]
    %v9011 = vld [vmem:[#allocation8 + $0x198] sm:$0xff]
    %v9012 = vld [vmem:[#allocation8 + $0x1a0] sm:$0xff]
    %v9013 = vld [vmem:[#allocation8 + $0x1a8] sm:$0xff]
    %v9014 = vld [vmem:[#allocation8 + $0x1b0] sm:$0xff]
    %v9015 = vld [vmem:[#allocation8 + $0x1b8] sm:$0xff]
    %v9016 = vld [vmem:[#allocation8 + $0x1c0] sm:$0xff]
    %v9017 = vld [vmem:[#allocation8 + $0x1c8] sm:$0xff]
    %v9018 = vld [vmem:[#allocation8 + $0x1d0] sm:$0xff]
    %v9019 = vld [vmem:[#allocation8 + $0x1d8] sm:$0xff]
    %v9020 = vld [vmem:[#allocation8 + $0x1e0] sm:$0xff]
    %v9021 = vld [vmem:[#allocation8 + $0x1e8] sm:$0xff]
    %v9022 = vld [vmem:[#allocation8 + $0x1f0] sm:$0xff]
    %v9023 = vld [vmem:[#allocation8 + $0x1f8] sm:$0xff]
    %v9024 = vld [vmem:[%s7] sm:$0xf]
    %v9026 = vlaneseq
    %v9027 = vshrl.u32 %v9026, 7
    %v9028 = vsub.s32 0, %v9027
    %v9029 = vrot.slane %v9024, %v9028
    %v9030 = vlaneseq
    %v9031 = vshrl.u32 %v9030, 7
    %v9032 = vsub.s32 1, %v9031
    %v9033 = vrot.slane %v9024, %v9032
    %v9034 = vlaneseq
    %v9035 = vshrl.u32 %v9034, 7
    %v9036 = vsub.s32 2, %v9035
    %v9037 = vrot.slane %v9024, %v9036
    %v9038 = vlaneseq
    %v9039 = vshrl.u32 %v9038, 7
    %v9040 = vsub.s32 3, %v9039
    %v9041 = vrot.slane %v9024, %v9040
    %v9047 = vunpack.c.l.b16 %v8958
    %v9048 = vunpack.c.h.b16 %v8958
    %v9049 = vpack.c.b16 %v9047, %v9047
    %v9050 = vpack.c.b16 %v9048, %v9048
    %v9117 = vunpack.c.l.b16 %v8960
    %v9118 = vunpack.c.h.b16 %v8960
    %v9119 = vunpack.c.l.b16 %v8961
    %v9120 = vunpack.c.h.b16 %v8961
    %v9121 = vunpack.c.l.b16 %v8962
    %v9122 = vunpack.c.h.b16 %v8962
    %v9123 = vunpack.c.l.b16 %v8963
    %v9124 = vunpack.c.h.b16 %v8963
    %v9125 = vunpack.c.l.b16 %v8964
    %v9126 = vunpack.c.h.b16 %v8964
    %v9127 = vunpack.c.l.b16 %v8965
    %v9128 = vunpack.c.h.b16 %v8965
    %v9129 = vunpack.c.l.b16 %v8966
    %v9130 = vunpack.c.h.b16 %v8966
    %v9131 = vunpack.c.l.b16 %v8967
    %v9132 = vunpack.c.h.b16 %v8967
    %v9133 = vunpack.c.l.b16 %v8968
    %v9134 = vunpack.c.h.b16 %v8968
    %v9135 = vunpack.c.l.b16 %v8969
    %v9136 = vunpack.c.h.b16 %v8969
    %v9137 = vunpack.c.l.b16 %v8970
    %v9138 = vunpack.c.h.b16 %v8970
    %v9139 = vunpack.c.l.b16 %v8971
    %v9140 = vunpack.c.h.b16 %v8971
    %v9141 = vunpack.c.l.b16 %v8972
    %v9142 = vunpack.c.h.b16 %v8972
    %v9143 = vunpack.c.l.b16 %v8973
    %v9144 = vunpack.c.h.b16 %v8973
    %v9145 = vunpack.c.l.b16 %v8974
    %v9146 = vunpack.c.h.b16 %v8974
    %v9147 = vunpack.c.l.b16 %v8975
    %v9148 = vunpack.c.h.b16 %v8975
    %v9149 = vunpack.c.l.b16 %v8976
    %v9150 = vunpack.c.h.b16 %v8976
    %v9151 = vunpack.c.l.b16 %v8977
    %v9152 = vunpack.c.h.b16 %v8977
    %v9153 = vunpack.c.l.b16 %v8978
    %v9154 = vunpack.c.h.b16 %v8978
    %v9155 = vunpack.c.l.b16 %v8979
    %v9156 = vunpack.c.h.b16 %v8979
    %v9157 = vunpack.c.l.b16 %v8980
    %v9158 = vunpack.c.h.b16 %v8980
    %v9159 = vunpack.c.l.b16 %v8981
    %v9160 = vunpack.c.h.b16 %v8981
    %v9161 = vunpack.c.l.b16 %v8982
    %v9162 = vunpack.c.h.b16 %v8982
    %v9163 = vunpack.c.l.b16 %v8983
    %v9164 = vunpack.c.h.b16 %v8983
    %v9165 = vunpack.c.l.b16 %v8984
    %v9166 = vunpack.c.h.b16 %v8984
    %v9167 = vunpack.c.l.b16 %v8985
    %v9168 = vunpack.c.h.b16 %v8985
    %v9169 = vunpack.c.l.b16 %v8986
    %v9170 = vunpack.c.h.b16 %v8986
    %v9171 = vunpack.c.l.b16 %v8987
    %v9172 = vunpack.c.h.b16 %v8987
    %v9173 = vunpack.c.l.b16 %v8988
    %v9174 = vunpack.c.h.b16 %v8988
    %v9175 = vunpack.c.l.b16 %v8989
    %v9176 = vunpack.c.h.b16 %v8989
    %v9177 = vunpack.c.l.b16 %v8990
    %v9178 = vunpack.c.h.b16 %v8990
    %v9179 = vunpack.c.l.b16 %v8991
    %v9180 = vunpack.c.h.b16 %v8991
    %v9181 = vunpack.c.l.b16 %v8992
    %v9182 = vunpack.c.h.b16 %v8992
    %v9183 = vunpack.c.l.b16 %v8993
    %v9184 = vunpack.c.h.b16 %v8993
    %v9185 = vunpack.c.l.b16 %v8994
    %v9186 = vunpack.c.h.b16 %v8994
    %v9187 = vunpack.c.l.b16 %v8995
    %v9188 = vunpack.c.h.b16 %v8995
    %v9189 = vunpack.c.l.b16 %v8996
    %v9190 = vunpack.c.h.b16 %v8996
    %v9191 = vunpack.c.l.b16 %v8997
    %v9192 = vunpack.c.h.b16 %v8997
    %v9193 = vunpack.c.l.b16 %v8998
    %v9194 = vunpack.c.h.b16 %v8998
    %v9195 = vunpack.c.l.b16 %v8999
    %v9196 = vunpack.c.h.b16 %v8999
    %v9197 = vunpack.c.l.b16 %v9000
    %v9198 = vunpack.c.h.b16 %v9000
    %v9199 = vunpack.c.l.b16 %v9001
    %v9200 = vunpack.c.h.b16 %v9001
    %v9201 = vunpack.c.l.b16 %v9002
    %v9202 = vunpack.c.h.b16 %v9002
    %v9203 = vunpack.c.l.b16 %v9003
    %v9204 = vunpack.c.h.b16 %v9003
    %v9205 = vunpack.c.l.b16 %v9004
    %v9206 = vunpack.c.h.b16 %v9004
    %v9207 = vunpack.c.l.b16 %v9005
    %v9208 = vunpack.c.h.b16 %v9005
    %v9209 = vunpack.c.l.b16 %v9006
    %v9210 = vunpack.c.h.b16 %v9006
    %v9211 = vunpack.c.l.b16 %v9007
    %v9212 = vunpack.c.h.b16 %v9007
    %v9213 = vunpack.c.l.b16 %v9008
    %v9214 = vunpack.c.h.b16 %v9008
    %v9215 = vunpack.c.l.b16 %v9009
    %v9216 = vunpack.c.h.b16 %v9009
    %v9217 = vunpack.c.l.b16 %v9010
    %v9218 = vunpack.c.h.b16 %v9010
    %v9219 = vunpack.c.l.b16 %v9011
    %v9220 = vunpack.c.h.b16 %v9011
    %v9221 = vunpack.c.l.b16 %v9012
    %v9222 = vunpack.c.h.b16 %v9012
    %v9223 = vunpack.c.l.b16 %v9013
    %v9224 = vunpack.c.h.b16 %v9013
    %v9225 = vunpack.c.l.b16 %v9014
    %v9226 = vunpack.c.h.b16 %v9014
    %v9227 = vunpack.c.l.b16 %v9015
    %v9228 = vunpack.c.h.b16 %v9015
    %v9229 = vunpack.c.l.b16 %v9016
    %v9230 = vunpack.c.h.b16 %v9016
    %v9231 = vunpack.c.l.b16 %v9017
    %v9232 = vunpack.c.h.b16 %v9017
    %v9233 = vunpack.c.l.b16 %v9018
    %v9234 = vunpack.c.h.b16 %v9018
    %v9235 = vunpack.c.l.b16 %v9019
    %v9236 = vunpack.c.h.b16 %v9019
    %v9237 = vunpack.c.l.b16 %v9020
    %v9238 = vunpack.c.h.b16 %v9020
    %v9239 = vunpack.c.l.b16 %v9021
    %v9240 = vunpack.c.h.b16 %v9021
    %v9241 = vunpack.c.l.b16 %v9022
    %v9242 = vunpack.c.h.b16 %v9022
    %v9243 = vunpack.c.l.b16 %v9023
    %v9244 = vunpack.c.h.b16 %v9023
    %v9245 = vpack.c.b16 %v9121, %v9117
    %v9246 = vpack.c.b16 %v9122, %v9118
    %v9247 = vpack.c.b16 %v9123, %v9119
    %v9248 = vpack.c.b16 %v9124, %v9120
    %v9249 = vpack.c.b16 %v9129, %v9125
    %v9250 = vpack.c.b16 %v9130, %v9126
    %v9251 = vpack.c.b16 %v9131, %v9127
    %v9252 = vpack.c.b16 %v9132, %v9128
    %v9253 = vpack.c.b16 %v9137, %v9133
    %v9254 = vpack.c.b16 %v9138, %v9134
    %v9255 = vpack.c.b16 %v9139, %v9135
    %v9256 = vpack.c.b16 %v9140, %v9136
    %v9257 = vpack.c.b16 %v9145, %v9141
    %v9258 = vpack.c.b16 %v9146, %v9142
    %v9259 = vpack.c.b16 %v9147, %v9143
    %v9260 = vpack.c.b16 %v9148, %v9144
    %v9261 = vpack.c.b16 %v9153, %v9149
    %v9262 = vpack.c.b16 %v9154, %v9150
    %v9263 = vpack.c.b16 %v9155, %v9151
    %v9264 = vpack.c.b16 %v9156, %v9152
    %v9265 = vpack.c.b16 %v9161, %v9157
    %v9266 = vpack.c.b16 %v9162, %v9158
    %v9267 = vpack.c.b16 %v9163, %v9159
    %v9268 = vpack.c.b16 %v9164, %v9160
    %v9269 = vpack.c.b16 %v9169, %v9165
    %v9270 = vpack.c.b16 %v9170, %v9166
    %v9271 = vpack.c.b16 %v9171, %v9167
    %v9272 = vpack.c.b16 %v9172, %v9168
    %v9273 = vpack.c.b16 %v9177, %v9173
    %v9274 = vpack.c.b16 %v9178, %v9174
    %v9275 = vpack.c.b16 %v9179, %v9175
    %v9276 = vpack.c.b16 %v9180, %v9176
    %v9277 = vpack.c.b16 %v9185, %v9181
    %v9278 = vpack.c.b16 %v9186, %v9182
    %v9279 = vpack.c.b16 %v9187, %v9183
    %v9280 = vpack.c.b16 %v9188, %v9184
    %v9281 = vpack.c.b16 %v9193, %v9189
    %v9282 = vpack.c.b16 %v9194, %v9190
    %v9283 = vpack.c.b16 %v9195, %v9191
    %v9284 = vpack.c.b16 %v9196, %v9192
    %v9285 = vpack.c.b16 %v9201, %v9197
    %v9286 = vpack.c.b16 %v9202, %v9198
    %v9287 = vpack.c.b16 %v9203, %v9199
    %v9288 = vpack.c.b16 %v9204, %v9200
    %v9289 = vpack.c.b16 %v9209, %v9205
    %v9290 = vpack.c.b16 %v9210, %v9206
    %v9291 = vpack.c.b16 %v9211, %v9207
    %v9292 = vpack.c.b16 %v9212, %v9208
    %v9293 = vpack.c.b16 %v9217, %v9213
    %v9294 = vpack.c.b16 %v9218, %v9214
    %v9295 = vpack.c.b16 %v9219, %v9215
    %v9296 = vpack.c.b16 %v9220, %v9216
    %v9297 = vpack.c.b16 %v9225, %v9221
    %v9298 = vpack.c.b16 %v9226, %v9222
    %v9299 = vpack.c.b16 %v9227, %v9223
    %v9300 = vpack.c.b16 %v9228, %v9224
    %v9301 = vpack.c.b16 %v9233, %v9229
    %v9302 = vpack.c.b16 %v9234, %v9230
    %v9303 = vpack.c.b16 %v9235, %v9231
    %v9304 = vpack.c.b16 %v9236, %v9232
    %v9305 = vpack.c.b16 %v9241, %v9237
    %v9306 = vpack.c.b16 %v9242, %v9238
    %v9307 = vpack.c.b16 %v9243, %v9239
    %v9308 = vpack.c.b16 %v9244, %v9240
    %9373 = vmatprep.subr.bf16.mxu0 %v9274
    %9374 = vmatpush1.bf16.msra.mxu0 %v9273
    %9375 = vmatprep.subr.bf16.mxu0 %v9270
    %9376 = vmatpush1.bf16.msra.mxu0 %v9269
    %9377 = vmatprep.subr.bf16.mxu0 %v9266
    %9378 = vmatpush1.bf16.msra.mxu0 %v9265
    %9379 = vmatprep.subr.bf16.mxu0 %v9262
    %9380 = vmatpush1.bf16.msra.mxu0 %v9261
    %9381 = vmatprep.subr.bf16.mxu0 %v9258
    %9382 = vmatpush1.bf16.msra.mxu0 %v9257
    %9383 = vmatprep.subr.bf16.mxu0 %v9254
    %9384 = vmatpush1.bf16.msra.mxu0 %v9253
    %9385 = vmatprep.subr.bf16.mxu0 %v9250
    %9386 = vmatpush1.bf16.msra.mxu0 %v9249
    %9387 = vmatprep.subr.bf16.mxu0 %v9246
    %9388 = vmatpush1.bf16.msra.mxu0 %v9245
    %9389 = vmatprep.subr.bf16.mxu0 %v9306
    %9390 = vmatpush2.bf16.msra.mxu0 %v9305
    %9391 = vmatprep.subr.bf16.mxu0 %v9302
    %9392 = vmatpush2.bf16.msra.mxu0 %v9301
    %9393 = vmatprep.subr.bf16.mxu0 %v9298
    %9394 = vmatpush2.bf16.msra.mxu0 %v9297
    %9395 = vmatprep.subr.bf16.mxu0 %v9294
    %9396 = vmatpush2.bf16.msra.mxu0 %v9293
    %9397 = vmatprep.subr.bf16.mxu0 %v9290
    %9398 = vmatpush2.bf16.msra.mxu0 %v9289
    %9399 = vmatprep.subr.bf16.mxu0 %v9286
    %9400 = vmatpush2.bf16.msra.mxu0 %v9285
    %9401 = vmatprep.subr.bf16.mxu0 %v9282
    %9402 = vmatpush2.bf16.msra.mxu0 %v9281
    %9403 = vmatprep.subr.bf16.mxu0 %v9278
    %9404 = vmatpush2.bf16.msra.mxu0 %v9277
    %9405 = vmatprep.mubr.bf16.mxu0 %v9050
    %9406 = vmatmul.mubr.bf16.gmra.mxu0 %v9049
    %v9407 = vpop.f32.mrf.mxu0
    %v9408 = vadd.f32 %v9029, %v9407
    %v9409 = vpop.f32.mrf.mxu0
    %v9410 = vadd.f32 %v9033, %v9409
    %v9411 = vpop.f32.mrf.mxu0
    %v9412 = vpop.f32.mrf.mxu0
    %9413 = vdwg.mxu0
    %9414 = vmatprep.subr.bf16.mxu0 %v9276
    %9415 = vmatpush1.bf16.msra.mxu0 %v9275
    %9416 = vmatprep.subr.bf16.mxu0 %v9272
    %9417 = vmatpush1.bf16.msra.mxu0 %v9271
    %9418 = vmatprep.subr.bf16.mxu0 %v9268
    %9419 = vmatpush1.bf16.msra.mxu0 %v9267
    %9420 = vmatprep.subr.bf16.mxu0 %v9264
    %9421 = vmatpush1.bf16.msra.mxu0 %v9263
    %9422 = vmatprep.subr.bf16.mxu0 %v9260
    %9423 = vmatpush1.bf16.msra.mxu0 %v9259
    %9424 = vmatprep.subr.bf16.mxu0 %v9256
    %9425 = vmatpush1.bf16.msra.mxu0 %v9255
    %9426 = vmatprep.subr.bf16.mxu0 %v9252
    %9427 = vmatpush1.bf16.msra.mxu0 %v9251
    %9428 = vmatprep.subr.bf16.mxu0 %v9248
    %9429 = vmatpush1.bf16.msra.mxu0 %v9247
    %9430 = vmatprep.subr.bf16.mxu0 %v9308
    %9431 = vmatpush2.bf16.msra.mxu0 %v9307
    %9432 = vmatprep.subr.bf16.mxu0 %v9304
    %9433 = vmatpush2.bf16.msra.mxu0 %v9303
    %9434 = vmatprep.subr.bf16.mxu0 %v9300
    %9435 = vmatpush2.bf16.msra.mxu0 %v9299
    %9436 = vmatprep.subr.bf16.mxu0 %v9296
    %9437 = vmatpush2.bf16.msra.mxu0 %v9295
    %9438 = vmatprep.subr.bf16.mxu0 %v9292
    %9439 = vmatpush2.bf16.msra.mxu0 %v9291
    %9440 = vmatprep.subr.bf16.mxu0 %v9288
    %9441 = vmatpush2.bf16.msra.mxu0 %v9287
    %9442 = vmatprep.subr.bf16.mxu0 %v9284
    %9443 = vmatpush2.bf16.msra.mxu0 %v9283
    %9444 = vmatprep.subr.bf16.mxu0 %v9280
    %9445 = vmatpush2.bf16.msra.mxu0 %v9279
    %9446 = vmatprep.mubr.bf16.mxu0 %v9050
    %9447 = vmatmul.mubr.bf16.gmra.mxu0 %v9049
    %v9448 = vpop.f32.mrf.mxu0
    %v9449 = vadd.f32 %v9037, %v9448
    %v9450 = vpop.f32.mrf.mxu0
    %v9451 = vadd.f32 %v9041, %v9450
    %v9452 = vpop.f32.mrf.mxu0
    %v9453 = vpop.f32.mrf.mxu0
    %9454 = vdwg.mxu0
    %v9455 = vxor.u32 %v9408, 2147483648
    %v9456 = vmul.f32 %v9455, 1.442695
    %v9457 = vpow.pop %v9456
    %v9458 = vadd.f32 %v9457, 1.0
    %v9459 = vrcp.pop %v9458
    %v9460 = vmul.f32 1.0, %v9459
    %v9461 = vxor.u32 %v9410, 2147483648
    %v9462 = vmul.f32 %v9461, 1.442695
    %v9463 = vpow.pop %v9462
    %v9464 = vadd.f32 %v9463, 1.0
    %v9465 = vrcp.pop %v9464
    %v9466 = vmul.f32 1.0, %v9465
    %v9467 = vtanh.pop %v9449
    %v9468 = vxor.u32 %v9451, 2147483648
    %v9469 = vmul.f32 %v9468, 1.442695
    %v9470 = vpow.pop %v9469
    %v9471 = vadd.f32 %v9470, 1.0
    %v9472 = vrcp.pop %v9471
    %v9473 = vmul.f32 1.0, %v9472
    %v9474 = vmul.f32 %v9466, %v8959
    %v9475 = vmul.f32 %v9460, %v9467
    %v9476 = vadd.f32 %v9474, %v9475
    %v9477 = vtanh.pop %v9476
    %v9478 = vmul.f32 %v9473, %v9477
    %9479 = vst [vmem:[#allocation2] sm:$0xff] %v9476
    %v9480 = vpack.c.bf16 %v9478, %v9478
    %9481 = vst [vmem:[#allocation3 + $0x4] sm:$0xf] %v9480
    %v9482 = vld [vmem:[%s8] sm:$0xf]
    %v9483 = vld [vmem:[%s8 + $0x4] sm:$0xf]
    %v9484 = vld [vmem:[%s8 + $0x8] sm:$0xf]
    %v9485 = vld [vmem:[%s8 + $0xc] sm:$0xf]
    %v9486 = vld [vmem:[%s8 + $0x10] sm:$0xf]
    %v9487 = vld [vmem:[%s8 + $0x14] sm:$0xf]
    %v9488 = vld [vmem:[%s8 + $0x18] sm:$0xf]
    %v9489 = vld [vmem:[%s8 + $0x1c] sm:$0xf]
    %v9490 = vld [vmem:[%s8 + $0x20] sm:$0xf]
    %v9491 = vld [vmem:[%s8 + $0x24] sm:$0xf]
    %v9492 = vld [vmem:[%s8 + $0x28] sm:$0xf]
    %v9493 = vld [vmem:[%s8 + $0x2c] sm:$0xf]
    %v9494 = vld [vmem:[%s8 + $0x30] sm:$0xf]
    %v9495 = vld [vmem:[%s8 + $0x34] sm:$0xf]
    %v9496 = vld [vmem:[%s8 + $0x38] sm:$0xf]
    %v9497 = vld [vmem:[%s8 + $0x3c] sm:$0xf]
    %v9498 = vld [vmem:[%s9] sm:$0x1]
    %v9500 = vlaneseq
    %v9501 = vshrl.u32 %v9500, 7
    %v9502 = vsub.s32 0, %v9501
    %v9503 = vrot.slane %v9498, %v9502
    %v9521 = vunpack.c.l.b16 %v9482
    %v9522 = vunpack.c.l.b16 %v9483
    %v9523 = vunpack.c.l.b16 %v9484
    %v9524 = vunpack.c.l.b16 %v9485
    %v9525 = vunpack.c.l.b16 %v9486
    %v9526 = vunpack.c.l.b16 %v9487
    %v9527 = vunpack.c.l.b16 %v9488
    %v9528 = vunpack.c.l.b16 %v9489
    %v9529 = vunpack.c.l.b16 %v9490
    %v9530 = vunpack.c.l.b16 %v9491
    %v9531 = vunpack.c.l.b16 %v9492
    %v9532 = vunpack.c.l.b16 %v9493
    %v9533 = vunpack.c.l.b16 %v9494
    %v9534 = vunpack.c.l.b16 %v9495
    %v9535 = vunpack.c.l.b16 %v9496
    %v9536 = vunpack.c.l.b16 %v9497
    %v9537 = vpack.c.b16 %v9522, %v9521
    %v9538 = vpack.c.b16 %v9524, %v9523
    %v9539 = vpack.c.b16 %v9526, %v9525
    %v9540 = vpack.c.b16 %v9528, %v9527
    %v9541 = vpack.c.b16 %v9530, %v9529
    %v9542 = vpack.c.b16 %v9532, %v9531
    %v9543 = vpack.c.b16 %v9534, %v9533
    %v9544 = vpack.c.b16 %v9536, %v9535
    %9553 = vmatprep.subr.bf16.mxu0 0
    %9554 = vmatpush1.bf16.msra.mxu0 %v9544
    %9555 = vmatprep.subr.bf16.mxu0 0
    %9556 = vmatpush1.bf16.msra.mxu0 %v9543
    %9557 = vmatprep.subr.bf16.mxu0 0
    %9558 = vmatpush1.bf16.msra.mxu0 %v9542
    %9559 = vmatprep.subr.bf16.mxu0 0
    %9560 = vmatpush1.bf16.msra.mxu0 %v9541
    %9561 = vmatprep.subr.bf16.mxu0 0
    %9562 = vmatpush1.bf16.msra.mxu0 %v9540
    %9563 = vmatprep.subr.bf16.mxu0 0
    %9564 = vmatpush1.bf16.msra.mxu0 %v9539
    %9565 = vmatprep.subr.bf16.mxu0 0
    %9566 = vmatpush1.bf16.msra.mxu0 %v9538
    %9567 = vmatprep.subr.bf16.mxu0 0
    %9568 = vmatpush1.bf16.msra.mxu0 %v9537
    %9569 = vmatprep.subr.bf16.mxu0 0
    %9570 = vmatpush2.bf16.msra.mxu0 0
    %9571 = vmatprep.subr.bf16.mxu0 0
    %9572 = vmatpush2.bf16.msra.mxu0 0
    %9573 = vmatprep.subr.bf16.mxu0 0
    %9574 = vmatpush2.bf16.msra.mxu0 0
    %9575 = vmatprep.subr.bf16.mxu0 0
    %9576 = vmatpush2.bf16.msra.mxu0 0
    %9577 = vmatprep.subr.bf16.mxu0 0
    %9578 = vmatpush2.bf16.msra.mxu0 0
    %9579 = vmatprep.subr.bf16.mxu0 0
    %9580 = vmatpush2.bf16.msra.mxu0 0
    %9581 = vmatprep.subr.bf16.mxu0 0
    %9582 = vmatpush2.bf16.msra.mxu0 0
    %9583 = vmatprep.subr.bf16.mxu0 0
    %9584 = vmatpush2.bf16.msra.mxu0 0
    %9585 = vmatprep.mubr.bf16.mxu0 0
    %9586 = vmatmul.mubr.bf16.gmra.mxu0 %v9480
    %v9587 = vpop.f32.mrf.mxu0
    %v9588 = vadd.f32 %v9503, %v9587
    %v9589 = vpop.f32.mrf.mxu0
    %v9590 = vpop.f32.mrf.mxu0
    %v9591 = vpop.f32.mrf.mxu0
    %9592 = vdwg.mxu0
    %s9593 = scalar_lea.vmem [#allocation9], 56
    %9594 = vst [vmem:[%s9593] sm:$0xff] %v9588
    // Predicated region
    $region98: #{seq2seq_forward.1} parent=1 // pred_check
      _
    $region99: #{seq2seq_forward.1} parent=1 // pred_check_branch
      %9596 = sbr.rel (0) target = $region101
    $region100: #{seq2seq_forward.1} parent=1 // pred_region
      %s9598 = ssub.s32 1024, 1024
      %9599 = vsyncadd [#allocation6], %s9598
      %s9600 = sshll.u32 [#allocation9], 4
      %s9601 = int_to_ptr.vmem [resolvable:$true] %s9600
      %9606 = dma.vmem_to_hbm [thread:$0]  %s9601, 1024, %s10, [#allocation6], 128, 128, 8
    $region101: #{seq2seq_forward.1} parent=1 // pred_fallthru
      _
    // Predicated region
    $region102: #{seq2seq_forward.1} parent=1 // pred_check
      _
    $region103: #{seq2seq_forward.1} parent=1 // pred_check_branch
      %9608 = sbr.rel (0) target = $region105
    $region104: #{seq2seq_forward.1} parent=1 // pred_region
      %9609 = dma.done [#allocation6], 1024
    $region105: #{seq2seq_forward.1} parent=1 // pred_fallthru
      _
    %9610 = vsyncpa [#allocation5], 1
    %9611 = vsyncpa [#allocation6], 1
    %9612 = vsyncpa [#allocation7], 1

</llo_original>
